<compile_context>
chip_gen: v7x
topology: tpu7x:2x2x1
jax: 0.10.0
libtpu: 0.0.40
codegen_flags: <defaults>
</compile_context>

<pallas_src>
import numpy as np

import jax
import jax.numpy as jnp
from jax import lax
from jax.experimental import pallas as pl
from jax.experimental.pallas import tpu as pltpu


# ----------------------------------------------------------------------------
# Parameters (mirrors ConvPrecondNet.__init__ layer construction)
# ----------------------------------------------------------------------------
def init_conv_precond_params(key, in_ch, out_ch, kernel_size,
                             num_layers=3, hidden_ch=32):
    """Returns (conv_specs, program, convs, alphas).

    conv_specs : list of (c_in, c_out) per Conv2d, in construction order
    program    : list of ('conv', conv_idx) / ('act', act_idx) in forward order
    convs      : list of (w (C_out, C_in, K, K), b (C_out,)) float32
    alphas     : (n_act,) float32 -- per-PReLU scalar weights
    """
    conv_specs = [(in_ch, hidden_ch)]
    program = [("conv", 0), ("act", 0)]
    n_act = 1
    for _ in range(num_layers - 2):
        conv_specs.append((hidden_ch, hidden_ch))
        program.append(("conv", len(conv_specs) - 1))
        program.append(("act", n_act))
        n_act += 1
        conv_specs.append((hidden_ch, out_ch))
        program.append(("conv", len(conv_specs) - 1))

    convs = []
    for ci, co in conv_specs:
        key, kw, kb = jax.random.split(key, 3)
        fan_in = ci * kernel_size * kernel_size
        bound = 1.0 / float(np.sqrt(fan_in))
        w = jax.random.uniform(kw, (co, ci, kernel_size, kernel_size),
                               jnp.float32, minval=-bound, maxval=bound)
        b = jax.random.uniform(kb, (co,), jnp.float32,
                               minval=-bound, maxval=bound)
        convs.append((w, b))

    # nn.PReLU() default init is 0.25; use distinct values to exercise indexing.
    alphas = jnp.array([0.25 + 0.05 * j for j in range(n_act)], jnp.float32)
    return conv_specs, program, convs, alphas


def prepare_params(convs, kernel_size):
    """One-time weight re-layout (hoisted out of the forward path):

    weight -> im2col layout (C_out, K*K*C_in) with flat index (kh*K + kw)*C_in + c,
    matching the in-kernel tap stacking; bias -> (C_out, 1) column."""
    K = kernel_size
    ws, bs = [], []
    for w, b in convs:
        co, ci = w.shape[0], w.shape[1]
        wf = jnp.transpose(w, (0, 2, 3, 1)).reshape(co, K * K * ci)
        ws.append(wf)
        bs.append(b.reshape(co, 1))
    return ws, bs


# ----------------------------------------------------------------------------
# Fused Pallas forward
# ----------------------------------------------------------------------------
def build_conv_precond_forward(conv_specs, program, kernel_size, B, H, W):
    K = kernel_size
    assert K % 2 == 1, ("padding='same' path implemented for odd kernel_size "
                        "(symmetric padding, matches PyTorch for odd K)")
    p = (K - 1) // 2
    Hp, Wp = H + 2 * p, W + 2 * p
    n_img = 2 * B                      # B real planes + B imag planes
    Q = Hp * Wp                        # padded pixels per image
    M = n_img * Q                      # real flattened lane width
    Mp = ((M + 127) // 128) * 128      # lane width padded to 128-multiple
    R = p * Wp + p                     # max |tap offset| in the flattened layout
    L = ((R + 127) // 128) * 128       # lane-aligned left halo (>= R)
    R_pad = ((R + 127) // 128) * 128   # lane-aligned right halo
    total_w = L + Mp + R_pad           # activation scratch width
    n_conv = len(conv_specs)
    in_c = conv_specs[0][0]
    c_max = max(max(ci, co) for ci, co in conv_specs)
    ci_max = max(ci for ci, _ in conv_specs)

    # --- parse program into stages: conv + (optional) following activation ---
    stages = []
    cur = in_c
    i = 0
    while i < len(program):
        kind, idx = program[i]
        assert kind == "conv", "each stage must start with a conv"
        ci, co = conv_specs[idx]
        assert ci == cur, "inconsistent conv channel chain"
        cur = co
        act_idx = None
        if i + 1 < len(program) and program[i + 1][0] == "act":
            act_idx = program[i + 1][1]
            i += 1
        stages.append((ci, co, idx, act_idx))
        i += 1
    final_c = cur
    n_stage = len(stages)

    # --- precomputed 0/1 float masks over the flattened, lane-padded layout ---
    inter = np.zeros((n_img, Hp, Wp), np.float32)
    inter[:, p:p + H, p:p + W] = 1.0
    trilm = np.zeros((n_img, Hp, Wp), np.float32)
    trilm[:, p:p + H, p:p + W] = np.tril(np.ones((H, W), np.float32))
    mm = np.zeros((1, Mp), np.float32)
    mm[0, :M] = inter.reshape(M)
    mf = np.zeros((1, Mp), np.float32)
    mf[0, :M] = trilm.reshape(M)
    mask_mid = jnp.asarray(mm)         # interior (non-padding) pixels
    mask_fin = jnp.asarray(mf)         # interior AND lower-triangular

    def kernel(*refs):
        x_ref, mmid_ref, mfin_ref, alpha_ref = refs[:4]
        w_refs = refs[4:4 + n_conv]
        b_refs = refs[4 + n_conv:4 + 2 * n_conv]
        o_ref = refs[4 + 2 * n_conv]
        xf = refs[4 + 2 * n_conv + 1]      # (c_max, total_w) activation scratch
        col = refs[4 + 2 * n_conv + 2]     # (K*K*ci_max, Mp) im2col scratch

        # Zero only the halo margins (left + right) for all rows; the interior
        # [L, L+Mp) is fully overwritten before it is ever read.
        xf[:, 0:L] = jnp.zeros((c_max, L), jnp.float32)
        xf[:, L + Mp:L + Mp + R_pad] = jnp.zeros((c_max, R_pad), jnp.float32)
        # Input already arrives zero-padded ('same' padding + lane tail).
        xf[:in_c, L:L + Mp] = x_ref[...]

        mmid = mmid_ref[...]               # (1, Mp) 0/1 interior mask
        for s, (ci, co, conv_idx, act_idx) in enumerate(stages):
            # --- im2col: stack the K*K shifted activation slices -------------
            for t in range(K * K):         # static, fully unrolled
                kh, kw = t // K, t % K
                off = (kh - p) * Wp + (kw - p)
                col[t * ci:(t + 1) * ci, :] = xf[:ci, L + off:L + off + Mp]

            # --- one MXU matmul per layer (contraction = K*K*ci) --------------
            acc = jnp.dot(w_refs[conv_idx][...], col[:K * K * ci, :],
                          preferred_element_type=jnp.float32)

            # --- fused epilogue: bias + mask (+ PReLU), single store ----------
            y = acc + b_refs[conv_idx][...]                   # (co, 1) bias bcast
            if s == n_stage - 1:
                if act_idx is not None:
                    a = alpha_ref[act_idx]
                    y = jnp.where(y >= 0.0, y, a * y)
                # final tril + interior mask, straight to the lane-dense output
                o_ref[...] = y * mfin_ref[...]
            else:
                y = y * mmid                                  # re-zero padding
                if act_idx is not None:
                    a = alpha_ref[act_idx]                    # SMEM scalar
                    y = jnp.where(y >= 0.0, y, a * y)         # PReLU(0) == 0
                xf[:co, L:L + Mp] = y

    in_specs = [
        pl.BlockSpec((in_c, Mp), lambda i: (0, 0)),            # flattened input
        pl.BlockSpec((1, Mp), lambda i: (0, 0)),               # interior mask
        pl.BlockSpec((1, Mp), lambda i: (0, 0)),               # interior & tril
        pl.BlockSpec(memory_space=pltpu.MemorySpace.SMEM),     # PReLU alphas
    ]
    for ci, co in conv_specs:                                  # im2col weights
        in_specs.append(pl.BlockSpec((co, K * K * ci), lambda i: (0, 0)))
    for ci, co in conv_specs:                                  # bias columns
        in_specs.append(pl.BlockSpec((co, 1), lambda i: (0, 0)))

    call = pl.pallas_call(
        kernel,
        out_shape=jax.ShapeDtypeStruct((final_c, Mp), jnp.float32),
        grid=(1,),
        in_specs=in_specs,
        out_specs=pl.BlockSpec((final_c, Mp), lambda i: (0, 0)),
        scratch_shapes=[pltpu.VMEM((c_max, total_w), jnp.float32),
                        pltpu.VMEM((K * K * ci_max, Mp), jnp.float32)],
        compiler_params=pltpu.CompilerParams(
            dimension_semantics=("arbitrary",)),
    )

    @jax.jit
    def forward(ws_flat, bs_col, alphas_vec, x_complex):
        # Split complex input into 2B real planes and flatten to the padded,
        # lane-major layout expected by the kernel (tiny one-time XLA ops).
        xr = jnp.real(x_complex).astype(jnp.float32)
        xi = jnp.imag(x_complex).astype(jnp.float32)
        xs = jnp.concatenate([xr, xi], axis=0)                 # (2B, Cin, H, W)
        xs = jnp.pad(xs, ((0, 0), (0, 0), (p, p), (p, p)))     # (2B, Cin, Hp, Wp)
        xs = jnp.transpose(xs, (1, 0, 2, 3)).reshape(in_c, M)
        xs = jnp.pad(xs, ((0, 0), (0, Mp - M)))                # lane-pad to Mp

        y = call(xs, mask_mid, mask_fin, alphas_vec, *ws_flat, *bs_col)

        y = y[:, :M].reshape(final_c, n_img, Hp, Wp)[:, :, p:p + H, p:p + W]
        y = jnp.transpose(y, (1, 0, 2, 3))                     # (2B, Cout, H, W)
        return lax.complex(y[:B], y[B:])                       # complex64

    return forward


# ----------------------------------------------------------------------------
# Pure-JAX reference (lax.conv) for correctness checking
# ----------------------------------------------------------------------------
def reference_forward(program, convs, alphas, kernel_size, x_complex):
    K = kernel_size
    p = (K - 1) // 2

    def run(z):
        for kind, idx in program:
            if kind == "conv":
                w, b = convs[idx]
                z = lax.conv_general_dilated(
                    z, w, window_strides=(1, 1), padding=[(p, p), (p, p)],
                    dimension_numbers=("NCHW", "OIHW", "NCHW"),
                    precision=lax.Precision.HIGHEST)
                z = z + b[None, :, None, None]
            else:
                a = alphas[idx]
                z = jnp.where(z >= 0.0, z, a * z)
        return z

    zr = run(jnp.real(x_complex))
    zi = run(jnp.imag(x_complex))
    return lax.complex(jnp.tril(zr), jnp.tril(zi))


# ----------------------------------------------------------------------------
if __name__ == "__main__":
    # ConvPrecondNet(in_ch=2, out_ch=2, kernel_size=3) with default
    # num_layers=3, hidden_ch=32; small square "DD matrix" input 16x16.
    in_ch, out_ch, kernel_size = 2, 2, 3
    num_layers, hidden_ch = 3, 32
    B, H, W = 2, 16, 16

    key = jax.random.PRNGKey(0)
    kp, kr, ki = jax.random.split(key, 3)
    conv_specs, program, convs, alphas = init_conv_precond_params(
        kp, in_ch, out_ch, kernel_size, num_layers, hidden_ch)
    ws_flat, bs_col = prepare_params(convs, kernel_size)

    x_real = jax.random.normal(kr, (B, in_ch, H, W), jnp.float32)
    x_imag = jax.random.normal(ki, (B, in_ch, H, W), jnp.float32)
    x = lax.complex(x_real, x_imag)                            # complex64

    forward = build_conv_precond_forward(conv_specs, program, kernel_size, B, H, W)
    out = forward(ws_flat, bs_col, alphas, x)
    out = jax.block_until_ready(out)

    ref = reference_forward(program, convs, alphas, kernel_size, x)
    assert out.shape == (B, out_ch, H, W), out.shape
    assert out.dtype == jnp.complex64, out.dtype
    # Tolerance only covers MXU f32 precision-mode differences vs the
    # HIGHEST-precision XLA conv reference; layout bugs would be O(0.1-1) errors.
    assert jnp.allclose(out, ref, atol=2e-2, rtol=2e-2), (
        "mismatch vs reference, max|diff|=%e" % float(jnp.max(jnp.abs(out - ref))))

    print("KERNEL_OK")
</pallas_src>

<mosaic_0001>
module attributes {stable_mosaic.version = 11 : i64} {
  func.func @kernel(%arg0: i32, %arg1: memref<2x1408xf32, #tpu.memory_space<vmem>>, %arg2: memref<1x1408xf32, #tpu.memory_space<vmem>>, %arg3: memref<1x1408xf32, #tpu.memory_space<vmem>>, %arg4: memref<2xf32, #tpu.memory_space<smem>>, %arg5: memref<32x18xf32, #tpu.memory_space<vmem>>, %arg6: memref<32x288xf32, #tpu.memory_space<vmem>>, %arg7: memref<2x288xf32, #tpu.memory_space<vmem>>, %arg8: memref<32x1xf32, #tpu.memory_space<vmem>>, %arg9: memref<32x1xf32, #tpu.memory_space<vmem>>, %arg10: memref<2x1xf32, #tpu.memory_space<vmem>>, %arg11: memref<2x1408xf32, #tpu.memory_space<vmem>>, %arg12: memref<32x1664xf32, #tpu.memory_space<vmem>>, %arg13: memref<288x1408xf32, #tpu.memory_space<vmem>>) attributes {dimension_semantics = [#tpu.dimension_semantics<arbitrary>], iteration_bounds = array<i64: 1>, scalar_prefetch = 0 : i64, scratch_operands = 2 : i64, tpu.core_type = #tpu.core_type<tc>, window_params = [{pipeline_mode = #tpu.pipeline_mode<synchronous>, transform_indices = @transform_0, window_bounds = array<i64: 2, 1408>}, {pipeline_mode = #tpu.pipeline_mode<synchronous>, transform_indices = @transform_1, window_bounds = array<i64: 1, 1408>}, {pipeline_mode = #tpu.pipeline_mode<synchronous>, transform_indices = @transform_2, window_bounds = array<i64: 1, 1408>}, {transform_indices = @transform_3, window_bounds = array<i64: 2>}, {pipeline_mode = #tpu.pipeline_mode<synchronous>, transform_indices = @transform_4, window_bounds = array<i64: 32, 18>}, {pipeline_mode = #tpu.pipeline_mode<synchronous>, transform_indices = @transform_5, window_bounds = array<i64: 32, 288>}, {pipeline_mode = #tpu.pipeline_mode<synchronous>, transform_indices = @transform_6, window_bounds = array<i64: 2, 288>}, {pipeline_mode = #tpu.pipeline_mode<synchronous>, transform_indices = @transform_7, window_bounds = array<i64: 32, 1>}, {pipeline_mode = #tpu.pipeline_mode<synchronous>, transform_indices = @transform_8, window_bounds = array<i64: 32, 1>}, {pipeline_mode = #tpu.pipeline_mode<synchronous>, transform_indices = @transform_9, window_bounds = array<i64: 2, 1>}, {pipeline_mode = #tpu.pipeline_mode<synchronous>, transform_indices = @transform_10, window_bounds = array<i64: 2, 1408>}]} {
    %cst = arith.constant 0.000000e+00 : f32
    %0 = vector.broadcast %cst : f32 to vector<32x128xf32>
    %c0 = arith.constant 0 : index
    %c0_0 = arith.constant 0 : index
    %1 = vector.load %arg12[%c0, %c0_0] : memref<32x1664xf32, #tpu.memory_space<vmem>>, vector<32x128xf32>
    tpu.vector_store %arg12[%c0, %c0_0], %0 {strides = array<i32>} : memref<32x1664xf32, #tpu.memory_space<vmem>>, vector<32x128xf32>,
    %cst_1 = arith.constant 0.000000e+00 : f32
    %2 = vector.broadcast %cst_1 : f32 to vector<32x128xf32>
    %c0_2 = arith.constant 0 : index
    %c1536 = arith.constant 1536 : index
    %3 = vector.load %arg12[%c0_2, %c1536] : memref<32x1664xf32, #tpu.memory_space<vmem>>, vector<32x128xf32>
    tpu.vector_store %arg12[%c0_2, %c1536], %2 {strides = array<i32>} : memref<32x1664xf32, #tpu.memory_space<vmem>>, vector<32x128xf32>,
    %c0_3 = arith.constant 0 : index
    %c0_4 = arith.constant 0 : index
    %4 = vector.load %arg1[%c0_3, %c0_4] : memref<2x1408xf32, #tpu.memory_space<vmem>>, vector<2x1408xf32>
    %c0_5 = arith.constant 0 : index
    %c128 = arith.constant 128 : index
    %5 = vector.load %arg12[%c0_5, %c128] : memref<32x1664xf32, #tpu.memory_space<vmem>>, vector<2x1408xf32>
    tpu.vector_store %arg12[%c0_5, %c128], %4 {strides = array<i32>} : memref<32x1664xf32, #tpu.memory_space<vmem>>, vector<2x1408xf32>,
    %c0_6 = arith.constant 0 : index
    %c0_7 = arith.constant 0 : index
    %6 = vector.load %arg2[%c0_6, %c0_7] : memref<1x1408xf32, #tpu.memory_space<vmem>>, vector<1x1408xf32>
    %c0_8 = arith.constant 0 : index
    %c109 = arith.constant 109 : index
    %7 = vector.load %arg12[%c0_8, %c109] : memref<32x1664xf32, #tpu.memory_space<vmem>>, vector<2x1408xf32>
    %c0_9 = arith.constant 0 : index
    %c0_10 = arith.constant 0 : index
    %8 = vector.load %arg13[%c0_9, %c0_10] : memref<288x1408xf32, #tpu.memory_space<vmem>>, vector<2x1408xf32>
    tpu.vector_store %arg13[%c0_9, %c0_10], %7 {strides = array<i32>} : memref<288x1408xf32, #tpu.memory_space<vmem>>, vector<2x1408xf32>,
    %c0_11 = arith.constant 0 : index
    %c110 = arith.constant 110 : index
    %9 = vector.load %arg12[%c0_11, %c110] : memref<32x1664xf32, #tpu.memory_space<vmem>>, vector<2x1408xf32>
    %c2 = arith.constant 2 : index
    %c0_12 = arith.constant 0 : index
    %10 = vector.load %arg13[%c2, %c0_12] : memref<288x1408xf32, #tpu.memory_space<vmem>>, vector<2x1408xf32>
    tpu.vector_store %arg13[%c2, %c0_12], %9 {strides = array<i32>} : memref<288x1408xf32, #tpu.memory_space<vmem>>, vector<2x1408xf32>,
    %c0_13 = arith.constant 0 : index
    %c111 = arith.constant 111 : index
    %11 = vector.load %arg12[%c0_13, %c111] : memref<32x1664xf32, #tpu.memory_space<vmem>>, vector<2x1408xf32>
    %c4 = arith.constant 4 : index
    %c0_14 = arith.constant 0 : index
    %12 = vector.load %arg13[%c4, %c0_14] : memref<288x1408xf32, #tpu.memory_space<vmem>>, vector<2x1408xf32>
    tpu.vector_store %arg13[%c4, %c0_14], %11 {strides = array<i32>} : memref<288x1408xf32, #tpu.memory_space<vmem>>, vector<2x1408xf32>,
    %c0_15 = arith.constant 0 : index
    %c127 = arith.constant 127 : index
    %13 = vector.load %arg12[%c0_15, %c127] : memref<32x1664xf32, #tpu.memory_space<vmem>>, vector<2x1408xf32>
    %c6 = arith.constant 6 : index
    %c0_16 = arith.constant 0 : index
    %14 = vector.load %arg13[%c6, %c0_16] : memref<288x1408xf32, #tpu.memory_space<vmem>>, vector<2x1408xf32>
    tpu.vector_store %arg13[%c6, %c0_16], %13 {strides = array<i32>} : memref<288x1408xf32, #tpu.memory_space<vmem>>, vector<2x1408xf32>,
    %c0_17 = arith.constant 0 : index
    %c128_18 = arith.constant 128 : index
    %15 = vector.load %arg12[%c0_17, %c128_18] : memref<32x1664xf32, #tpu.memory_space<vmem>>, vector<2x1408xf32>
    %c8 = arith.constant 8 : index
    %c0_19 = arith.constant 0 : index
    %16 = vector.load %arg13[%c8, %c0_19] : memref<288x1408xf32, #tpu.memory_space<vmem>>, vector<2x1408xf32>
    tpu.vector_store %arg13[%c8, %c0_19], %15 {strides = array<i32>} : memref<288x1408xf32, #tpu.memory_space<vmem>>, vector<2x1408xf32>,
    %c0_20 = arith.constant 0 : index
    %c129 = arith.constant 129 : index
    %17 = vector.load %arg12[%c0_20, %c129] : memref<32x1664xf32, #tpu.memory_space<vmem>>, vector<2x1408xf32>
    %c10 = arith.constant 10 : index
    %c0_21 = arith.constant 0 : index
    %18 = vector.load %arg13[%c10, %c0_21] : memref<288x1408xf32, #tpu.memory_space<vmem>>, vector<2x1408xf32>
    tpu.vector_store %arg13[%c10, %c0_21], %17 {strides = array<i32>} : memref<288x1408xf32, #tpu.memory_space<vmem>>, vector<2x1408xf32>,
    %c0_22 = arith.constant 0 : index
    %c145 = arith.constant 145 : index
    %19 = vector.load %arg12[%c0_22, %c145] : memref<32x1664xf32, #tpu.memory_space<vmem>>, vector<2x1408xf32>
    %c12 = arith.constant 12 : index
    %c0_23 = arith.constant 0 : index
    %20 = vector.load %arg13[%c12, %c0_23] : memref<288x1408xf32, #tpu.memory_space<vmem>>, vector<2x1408xf32>
    tpu.vector_store %arg13[%c12, %c0_23], %19 {strides = array<i32>} : memref<288x1408xf32, #tpu.memory_space<vmem>>, vector<2x1408xf32>,
    %c0_24 = arith.constant 0 : index
    %c146 = arith.constant 146 : index
    %21 = vector.load %arg12[%c0_24, %c146] : memref<32x1664xf32, #tpu.memory_space<vmem>>, vector<2x1408xf32>
    %c14 = arith.constant 14 : index
    %c0_25 = arith.constant 0 : index
    %22 = vector.load %arg13[%c14, %c0_25] : memref<288x1408xf32, #tpu.memory_space<vmem>>, vector<2x1408xf32>
    tpu.vector_store %arg13[%c14, %c0_25], %21 {strides = array<i32>} : memref<288x1408xf32, #tpu.memory_space<vmem>>, vector<2x1408xf32>,
    %c0_26 = arith.constant 0 : index
    %c147 = arith.constant 147 : index
    %23 = vector.load %arg12[%c0_26, %c147] : memref<32x1664xf32, #tpu.memory_space<vmem>>, vector<2x1408xf32>
    %c16 = arith.constant 16 : index
    %c0_27 = arith.constant 0 : index
    %24 = vector.load %arg13[%c16, %c0_27] : memref<288x1408xf32, #tpu.memory_space<vmem>>, vector<2x1408xf32>
    tpu.vector_store %arg13[%c16, %c0_27], %23 {strides = array<i32>} : memref<288x1408xf32, #tpu.memory_space<vmem>>, vector<2x1408xf32>,
    %c0_28 = arith.constant 0 : index
    %c0_29 = arith.constant 0 : index
    %25 = vector.load %arg5[%c0_28, %c0_29] : memref<32x18xf32, #tpu.memory_space<vmem>>, vector<32x18xf32>
    %c0_30 = arith.constant 0 : index
    %c0_31 = arith.constant 0 : index
    %26 = vector.load %arg13[%c0_30, %c0_31] : memref<288x1408xf32, #tpu.memory_space<vmem>>, vector<18x1408xf32>
    %cst_32 = arith.constant dense<0.000000e+00> : vector<32x1408xf32>
    %27 = tpu.matmul %25, %26, %cst_32 {dimension_numbers = #tpu.dot_dimension_numbers<[1], [0], [0], [1], [0, 0, 1, 1], [], []>} : vector<32x18xf32>, vector<18x1408xf32>, vector<32x1408xf32> -> vector<32x1408xf32>
    %c0_33 = arith.constant 0 : index
    %c0_34 = arith.constant 0 : index
    %28 = vector.load %arg8[%c0_33, %c0_34] : memref<32x1xf32, #tpu.memory_space<vmem>>, vector<32x1xf32>
    %29 = vector.broadcast %28 : vector<32x1xf32> to vector<32x1408xf32>
    %30 = arith.addf %27, %29 : vector<32x1408xf32>
    %31 = vector.broadcast %6 : vector<1x1408xf32> to vector<32x1408xf32>
    %32 = arith.mulf %30, %31 : vector<32x1408xf32>
    %c0_35 = arith.constant 0 : index
    %33 = memref.load %arg4[%c0_35] : memref<2xf32, #tpu.memory_space<smem>>
    %cst_36 = arith.constant 0.000000e+00 : f32
    %34 = vector.broadcast %cst_36 : f32 to vector<32x1408xf32>
    %35 = arith.cmpf oge, %32, %34 : vector<32x1408xf32>
    %36 = vector.broadcast %33 : f32 to vector<32x1408xf32>
    %37 = arith.mulf %36, %32 : vector<32x1408xf32>
    %38 = arith.select %35, %32, %37 : vector<32x1408xi1>, vector<32x1408xf32>
    %c0_37 = arith.constant 0 : index
    %c128_38 = arith.constant 128 : index
    %39 = vector.load %arg12[%c0_37, %c128_38] : memref<32x1664xf32, #tpu.memory_space<vmem>>, vector<32x1408xf32>
    tpu.vector_store %arg12[%c0_37, %c128_38], %38 {strides = array<i32>} : memref<32x1664xf32, #tpu.memory_space<vmem>>, vector<32x1408xf32>,
    %c0_39 = arith.constant 0 : index
    %c109_40 = arith.constant 109 : index
    %40 = vector.load %arg12[%c0_39, %c109_40] : memref<32x1664xf32, #tpu.memory_space<vmem>>, vector<32x1408xf32>
    %c0_41 = arith.constant 0 : index
    %c0_42 = arith.constant 0 : index
    %41 = vector.load %arg13[%c0_41, %c0_42] : memref<288x1408xf32, #tpu.memory_space<vmem>>, vector<32x1408xf32>
    tpu.vector_store %arg13[%c0_41, %c0_42], %40 {strides = array<i32>} : memref<288x1408xf32, #tpu.memory_space<vmem>>, vector<32x1408xf32>,
    %c0_43 = arith.constant 0 : index
    %c110_44 = arith.constant 110 : index
    %42 = vector.load %arg12[%c0_43, %c110_44] : memref<32x1664xf32, #tpu.memory_space<vmem>>, vector<32x1408xf32>
    %c32 = arith.constant 32 : index
    %c0_45 = arith.constant 0 : index
    %43 = vector.load %arg13[%c32, %c0_45] : memref<288x1408xf32, #tpu.memory_space<vmem>>, vector<32x1408xf32>
    tpu.vector_store %arg13[%c32, %c0_45], %42 {strides = array<i32>} : memref<288x1408xf32, #tpu.memory_space<vmem>>, vector<32x1408xf32>,
    %c0_46 = arith.constant 0 : index
    %c111_47 = arith.constant 111 : index
    %44 = vector.load %arg12[%c0_46, %c111_47] : memref<32x1664xf32, #tpu.memory_space<vmem>>, vector<32x1408xf32>
    %c64 = arith.constant 64 : index
    %c0_48 = arith.constant 0 : index
    %45 = vector.load %arg13[%c64, %c0_48] : memref<288x1408xf32, #tpu.memory_space<vmem>>, vector<32x1408xf32>
    tpu.vector_store %arg13[%c64, %c0_48], %44 {strides = array<i32>} : memref<288x1408xf32, #tpu.memory_space<vmem>>, vector<32x1408xf32>,
    %c0_49 = arith.constant 0 : index
    %c127_50 = arith.constant 127 : index
    %46 = vector.load %arg12[%c0_49, %c127_50] : memref<32x1664xf32, #tpu.memory_space<vmem>>, vector<32x1408xf32>
    %c96 = arith.constant 96 : index
    %c0_51 = arith.constant 0 : index
    %47 = vector.load %arg13[%c96, %c0_51] : memref<288x1408xf32, #tpu.memory_space<vmem>>, vector<32x1408xf32>
    tpu.vector_store %arg13[%c96, %c0_51], %46 {strides = array<i32>} : memref<288x1408xf32, #tpu.memory_space<vmem>>, vector<32x1408xf32>,
    %c0_52 = arith.constant 0 : index
    %c128_53 = arith.constant 128 : index
    %48 = vector.load %arg12[%c0_52, %c128_53] : memref<32x1664xf32, #tpu.memory_space<vmem>>, vector<32x1408xf32>
    %c128_54 = arith.constant 128 : index
    %c0_55 = arith.constant 0 : index
    %49 = vector.load %arg13[%c128_54, %c0_55] : memref<288x1408xf32, #tpu.memory_space<vmem>>, vector<32x1408xf32>
    tpu.vector_store %arg13[%c128_54, %c0_55], %48 {strides = array<i32>} : memref<288x1408xf32, #tpu.memory_space<vmem>>, vector<32x1408xf32>,
    %c0_56 = arith.constant 0 : index
    %c129_57 = arith.constant 129 : index
    %50 = vector.load %arg12[%c0_56, %c129_57] : memref<32x1664xf32, #tpu.memory_space<vmem>>, vector<32x1408xf32>
    %c160 = arith.constant 160 : index
    %c0_58 = arith.constant 0 : index
    %51 = vector.load %arg13[%c160, %c0_58] : memref<288x1408xf32, #tpu.memory_space<vmem>>, vector<32x1408xf32>
    tpu.vector_store %arg13[%c160, %c0_58], %50 {strides = array<i32>} : memref<288x1408xf32, #tpu.memory_space<vmem>>, vector<32x1408xf32>,
    %c0_59 = arith.constant 0 : index
    %c145_60 = arith.constant 145 : index
    %52 = vector.load %arg12[%c0_59, %c145_60] : memref<32x1664xf32, #tpu.memory_space<vmem>>, vector<32x1408xf32>
    %c192 = arith.constant 192 : index
    %c0_61 = arith.constant 0 : index
    %53 = vector.load %arg13[%c192, %c0_61] : memref<288x1408xf32, #tpu.memory_space<vmem>>, vector<32x1408xf32>
    tpu.vector_store %arg13[%c192, %c0_61], %52 {strides = array<i32>} : memref<288x1408xf32, #tpu.memory_space<vmem>>, vector<32x1408xf32>,
    %c0_62 = arith.constant 0 : index
    %c146_63 = arith.constant 146 : index
    %54 = vector.load %arg12[%c0_62, %c146_63] : memref<32x1664xf32, #tpu.memory_space<vmem>>, vector<32x1408xf32>
    %c224 = arith.constant 224 : index
    %c0_64 = arith.constant 0 : index
    %55 = vector.load %arg13[%c224, %c0_64] : memref<288x1408xf32, #tpu.memory_space<vmem>>, vector<32x1408xf32>
    tpu.vector_store %arg13[%c224, %c0_64], %54 {strides = array<i32>} : memref<288x1408xf32, #tpu.memory_space<vmem>>, vector<32x1408xf32>,
    %c0_65 = arith.constant 0 : index
    %c147_66 = arith.constant 147 : index
    %56 = vector.load %arg12[%c0_65, %c147_66] : memref<32x1664xf32, #tpu.memory_space<vmem>>, vector<32x1408xf32>
    %c256 = arith.constant 256 : index
    %c0_67 = arith.constant 0 : index
    %57 = vector.load %arg13[%c256, %c0_67] : memref<288x1408xf32, #tpu.memory_space<vmem>>, vector<32x1408xf32>
    tpu.vector_store %arg13[%c256, %c0_67], %56 {strides = array<i32>} : memref<288x1408xf32, #tpu.memory_space<vmem>>, vector<32x1408xf32>,
    %c0_68 = arith.constant 0 : index
    %c0_69 = arith.constant 0 : index
    %58 = vector.load %arg6[%c0_68, %c0_69] : memref<32x288xf32, #tpu.memory_space<vmem>>, vector<32x288xf32>
    %c0_70 = arith.constant 0 : index
    %c0_71 = arith.constant 0 : index
    %59 = vector.load %arg13[%c0_70, %c0_71] : memref<288x1408xf32, #tpu.memory_space<vmem>>, vector<288x1408xf32>
    %cst_72 = arith.constant dense<0.000000e+00> : vector<32x1408xf32>
    %60 = tpu.matmul %58, %59, %cst_72 {dimension_numbers = #tpu.dot_dimension_numbers<[1], [0], [0], [1], [0, 0, 1, 1], [], []>} : vector<32x288xf32>, vector<288x1408xf32>, vector<32x1408xf32> -> vector<32x1408xf32>
    %c0_73 = arith.constant 0 : index
    %c0_74 = arith.constant 0 : index
    %61 = vector.load %arg9[%c0_73, %c0_74] : memref<32x1xf32, #tpu.memory_space<vmem>>, vector<32x1xf32>
    %62 = vector.broadcast %61 : vector<32x1xf32> to vector<32x1408xf32>
    %63 = arith.addf %60, %62 : vector<32x1408xf32>
    %64 = vector.broadcast %6 : vector<1x1408xf32> to vector<32x1408xf32>
    %65 = arith.mulf %63, %64 : vector<32x1408xf32>
    %c1 = arith.constant 1 : index
    %66 = memref.load %arg4[%c1] : memref<2xf32, #tpu.memory_space<smem>>
    %cst_75 = arith.constant 0.000000e+00 : f32
    %67 = vector.broadcast %cst_75 : f32 to vector<32x1408xf32>
    %68 = arith.cmpf oge, %65, %67 : vector<32x1408xf32>
    %69 = vector.broadcast %66 : f32 to vector<32x1408xf32>
    %70 = arith.mulf %69, %65 : vector<32x1408xf32>
    %71 = arith.select %68, %65, %70 : vector<32x1408xi1>, vector<32x1408xf32>
    %c0_76 = arith.constant 0 : index
    %c128_77 = arith.constant 128 : index
    %72 = vector.load %arg12[%c0_76, %c128_77] : memref<32x1664xf32, #tpu.memory_space<vmem>>, vector<32x1408xf32>
    tpu.vector_store %arg12[%c0_76, %c128_77], %71 {strides = array<i32>} : memref<32x1664xf32, #tpu.memory_space<vmem>>, vector<32x1408xf32>,
    %c0_78 = arith.constant 0 : index
    %c109_79 = arith.constant 109 : index
    %73 = vector.load %arg12[%c0_78, %c109_79] : memref<32x1664xf32, #tpu.memory_space<vmem>>, vector<32x1408xf32>
    %c0_80 = arith.constant 0 : index
    %c0_81 = arith.constant 0 : index
    %74 = vector.load %arg13[%c0_80, %c0_81] : memref<288x1408xf32, #tpu.memory_space<vmem>>, vector<32x1408xf32>
    tpu.vector_store %arg13[%c0_80, %c0_81], %73 {strides = array<i32>} : memref<288x1408xf32, #tpu.memory_space<vmem>>, vector<32x1408xf32>,
    %c0_82 = arith.constant 0 : index
    %c110_83 = arith.constant 110 : index
    %75 = vector.load %arg12[%c0_82, %c110_83] : memref<32x1664xf32, #tpu.memory_space<vmem>>, vector<32x1408xf32>
    %c32_84 = arith.constant 32 : index
    %c0_85 = arith.constant 0 : index
    %76 = vector.load %arg13[%c32_84, %c0_85] : memref<288x1408xf32, #tpu.memory_space<vmem>>, vector<32x1408xf32>
    tpu.vector_store %arg13[%c32_84, %c0_85], %75 {strides = array<i32>} : memref<288x1408xf32, #tpu.memory_space<vmem>>, vector<32x1408xf32>,
    %c0_86 = arith.constant 0 : index
    %c111_87 = arith.constant 111 : index
    %77 = vector.load %arg12[%c0_86, %c111_87] : memref<32x1664xf32, #tpu.memory_space<vmem>>, vector<32x1408xf32>
    %c64_88 = arith.constant 64 : index
    %c0_89 = arith.constant 0 : index
    %78 = vector.load %arg13[%c64_88, %c0_89] : memref<288x1408xf32, #tpu.memory_space<vmem>>, vector<32x1408xf32>
    tpu.vector_store %arg13[%c64_88, %c0_89], %77 {strides = array<i32>} : memref<288x1408xf32, #tpu.memory_space<vmem>>, vector<32x1408xf32>,
    %c0_90 = arith.constant 0 : index
    %c127_91 = arith.constant 127 : index
    %79 = vector.load %arg12[%c0_90, %c127_91] : memref<32x1664xf32, #tpu.memory_space<vmem>>, vector<32x1408xf32>
    %c96_92 = arith.constant 96 : index
    %c0_93 = arith.constant 0 : index
    %80 = vector.load %arg13[%c96_92, %c0_93] : memref<288x1408xf32, #tpu.memory_space<vmem>>, vector<32x1408xf32>
    tpu.vector_store %arg13[%c96_92, %c0_93], %79 {strides = array<i32>} : memref<288x1408xf32, #tpu.memory_space<vmem>>, vector<32x1408xf32>,
    %c0_94 = arith.constant 0 : index
    %c128_95 = arith.constant 128 : index
    %81 = vector.load %arg12[%c0_94, %c128_95] : memref<32x1664xf32, #tpu.memory_space<vmem>>, vector<32x1408xf32>
    %c128_96 = arith.constant 128 : index
    %c0_97 = arith.constant 0 : index
    %82 = vector.load %arg13[%c128_96, %c0_97] : memref<288x1408xf32, #tpu.memory_space<vmem>>, vector<32x1408xf32>
    tpu.vector_store %arg13[%c128_96, %c0_97], %81 {strides = array<i32>} : memref<288x1408xf32, #tpu.memory_space<vmem>>, vector<32x1408xf32>,
    %c0_98 = arith.constant 0 : index
    %c129_99 = arith.constant 129 : index
    %83 = vector.load %arg12[%c0_98, %c129_99] : memref<32x1664xf32, #tpu.memory_space<vmem>>, vector<32x1408xf32>
    %c160_100 = arith.constant 160 : index
    %c0_101 = arith.constant 0 : index
    %84 = vector.load %arg13[%c160_100, %c0_101] : memref<288x1408xf32, #tpu.memory_space<vmem>>, vector<32x1408xf32>
    tpu.vector_store %arg13[%c160_100, %c0_101], %83 {strides = array<i32>} : memref<288x1408xf32, #tpu.memory_space<vmem>>, vector<32x1408xf32>,
    %c0_102 = arith.constant 0 : index
    %c145_103 = arith.constant 145 : index
    %85 = vector.load %arg12[%c0_102, %c145_103] : memref<32x1664xf32, #tpu.memory_space<vmem>>, vector<32x1408xf32>
    %c192_104 = arith.constant 192 : index
    %c0_105 = arith.constant 0 : index
    %86 = vector.load %arg13[%c192_104, %c0_105] : memref<288x1408xf32, #tpu.memory_space<vmem>>, vector<32x1408xf32>
    tpu.vector_store %arg13[%c192_104, %c0_105], %85 {strides = array<i32>} : memref<288x1408xf32, #tpu.memory_space<vmem>>, vector<32x1408xf32>,
    %c0_106 = arith.constant 0 : index
    %c146_107 = arith.constant 146 : index
    %87 = vector.load %arg12[%c0_106, %c146_107] : memref<32x1664xf32, #tpu.memory_space<vmem>>, vector<32x1408xf32>
    %c224_108 = arith.constant 224 : index
    %c0_109 = arith.constant 0 : index
    %88 = vector.load %arg13[%c224_108, %c0_109] : memref<288x1408xf32, #tpu.memory_space<vmem>>, vector<32x1408xf32>
    tpu.vector_store %arg13[%c224_108, %c0_109], %87 {strides = array<i32>} : memref<288x1408xf32, #tpu.memory_space<vmem>>, vector<32x1408xf32>,
    %c0_110 = arith.constant 0 : index
    %c147_111 = arith.constant 147 : index
    %89 = vector.load %arg12[%c0_110, %c147_111] : memref<32x1664xf32, #tpu.memory_space<vmem>>, vector<32x1408xf32>
    %c256_112 = arith.constant 256 : index
    %c0_113 = arith.constant 0 : index
    %90 = vector.load %arg13[%c256_112, %c0_113] : memref<288x1408xf32, #tpu.memory_space<vmem>>, vector<32x1408xf32>
    tpu.vector_store %arg13[%c256_112, %c0_113], %89 {strides = array<i32>} : memref<288x1408xf32, #tpu.memory_space<vmem>>, vector<32x1408xf32>,
    %c0_114 = arith.constant 0 : index
    %c0_115 = arith.constant 0 : index
    %91 = vector.load %arg7[%c0_114, %c0_115] : memref<2x288xf32, #tpu.memory_space<vmem>>, vector<2x288xf32>
    %c0_116 = arith.constant 0 : index
    %c0_117 = arith.constant 0 : index
    %92 = vector.load %arg13[%c0_116, %c0_117] : memref<288x1408xf32, #tpu.memory_space<vmem>>, vector<288x1408xf32>
    %cst_118 = arith.constant dense<0.000000e+00> : vector<2x1408xf32>
    %93 = tpu.matmul %91, %92, %cst_118 {dimension_numbers = #tpu.dot_dimension_numbers<[1], [0], [0], [1], [0, 0, 1, 1], [], []>} : vector<2x288xf32>, vector<288x1408xf32>, vector<2x1408xf32> -> vector<2x1408xf32>
    %c0_119 = arith.constant 0 : index
    %c0_120 = arith.constant 0 : index
    %94 = vector.load %arg10[%c0_119, %c0_120] : memref<2x1xf32, #tpu.memory_space<vmem>>, vector<2x1xf32>
    %95 = vector.broadcast %94 : vector<2x1xf32> to vector<2x1408xf32>
    %96 = arith.addf %93, %95 : vector<2x1408xf32>
    %c0_121 = arith.constant 0 : index
    %c0_122 = arith.constant 0 : index
    %97 = vector.load %arg3[%c0_121, %c0_122] : memref<1x1408xf32, #tpu.memory_space<vmem>>, vector<1x1408xf32>
    %98 = vector.broadcast %97 : vector<1x1408xf32> to vector<2x1408xf32>
    %99 = arith.mulf %96, %98 : vector<2x1408xf32>
    %c0_123 = arith.constant 0 : index
    %c0_124 = arith.constant 0 : index
    %100 = vector.load %arg11[%c0_123, %c0_124] : memref<2x1408xf32, #tpu.memory_space<vmem>>, vector<2x1408xf32>
    tpu.vector_store %arg11[%c0_123, %c0_124], %99 {strides = array<i32>} : memref<2x1408xf32, #tpu.memory_space<vmem>>, vector<2x1408xf32>,
    return
  }
  func.func @transform_0(%arg0: i32) -> (i32, i32) {
    %c0_i32 = arith.constant 0 : i32
    %c0_i32_0 = arith.constant 0 : i32
    %c0_i32_1 = arith.constant 0 : i32
    return %c0_i32, %c0_i32_0 : i32, i32
  }
  func.func @transform_1(%arg0: i32) -> (i32, i32) {
    %c0_i32 = arith.constant 0 : i32
    %c0_i32_0 = arith.constant 0 : i32
    %c0_i32_1 = arith.constant 0 : i32
    return %c0_i32, %c0_i32_0 : i32, i32
  }
  func.func @transform_2(%arg0: i32) -> (i32, i32) {
    %c0_i32 = arith.constant 0 : i32
    %c0_i32_0 = arith.constant 0 : i32
    %c0_i32_1 = arith.constant 0 : i32
    return %c0_i32, %c0_i32_0 : i32, i32
  }
  func.func @transform_3(%arg0: i32) -> i32 {
    %c0_i32 = arith.constant 0 : i32
    %c0_i32_0 = arith.constant 0 : i32
    return %c0_i32 : i32
  }
  func.func @transform_4(%arg0: i32) -> (i32, i32) {
    %c0_i32 = arith.constant 0 : i32
    %c0_i32_0 = arith.constant 0 : i32
    %c0_i32_1 = arith.constant 0 : i32
    return %c0_i32, %c0_i32_0 : i32, i32
  }
  func.func @transform_5(%arg0: i32) -> (i32, i32) {
    %c0_i32 = arith.constant 0 : i32
    %c0_i32_0 = arith.constant 0 : i32
    %c0_i32_1 = arith.constant 0 : i32
    return %c0_i32, %c0_i32_0 : i32, i32
  }
  func.func @transform_6(%arg0: i32) -> (i32, i32) {
    %c0_i32 = arith.constant 0 : i32
    %c0_i32_0 = arith.constant 0 : i32
    %c0_i32_1 = arith.constant 0 : i32
    return %c0_i32, %c0_i32_0 : i32, i32
  }
  func.func @transform_7(%arg0: i32) -> (i32, i32) {
    %c0_i32 = arith.constant 0 : i32
    %c0_i32_0 = arith.constant 0 : i32
    %c0_i32_1 = arith.constant 0 : i32
    return %c0_i32, %c0_i32_0 : i32, i32
  }
  func.func @transform_8(%arg0: i32) -> (i32, i32) {
    %c0_i32 = arith.constant 0 : i32
    %c0_i32_0 = arith.constant 0 : i32
    %c0_i32_1 = arith.constant 0 : i32
    return %c0_i32, %c0_i32_0 : i32, i32
  }
  func.func @transform_9(%arg0: i32) -> (i32, i32) {
    %c0_i32 = arith.constant 0 : i32
    %c0_i32_0 = arith.constant 0 : i32
    %c0_i32_1 = arith.constant 0 : i32
    return %c0_i32, %c0_i32_0 : i32, i32
  }
  func.func @transform_10(%arg0: i32) -> (i32, i32) {
    %c0_i32 = arith.constant 0 : i32
    %c0_i32_0 = arith.constant 0 : i32
    %c0_i32_1 = arith.constant 0 : i32
    return %c0_i32, %c0_i32_0 : i32, i32
  }
}

</mosaic_0001>

<llo_original>
// kernel: custom-call.1
$region0: #{custom-call.1}
  %s0 = inlined_call_operand.hbm [shape: c64[2,2,16,16], index: 0, kind: input, shape index: {}]
  %s1 = inlined_call_operand.vmem [shape: f32[2,2,16,16], index: 1, kind: output, shape index: {}]
  %s2 = scalar_lea.hbm %s0, 1024
  $region1: #{custom-call.1} parent=0
    #allocation0 [shape = 's32[1]{0}', space=sflag, size = 0x4, scoped, tag = 'scoped memory for custom-call.1']
    %3 = vsyncpa [#allocation0], 0
    %s4 = sshll.u32 %s1, 4
    %s5 = int_to_ptr.vmem [resolvable:$true] %s4
    %7 = dma.hbm_to_vmem [thread:$0]  %s2, 1024, %s5, [#allocation0]
    %8 = dma.done [#allocation0], 1024
    %9 = vsyncpa [#allocation0], 1

// kernel: custom-call
$region0: #{custom-call}
  %s0 = inlined_call_operand.hbm [shape: c64[2,2,16,16], index: 0, kind: input, shape index: {}]
  %s1 = inlined_call_operand.vmem [shape: f32[2,2,16,16], index: 1, kind: output, shape index: {}]
  $region1: #{custom-call} parent=0
    #allocation0 [shape = 's32[1]{0}', space=sflag, size = 0x4, scoped, tag = 'scoped memory for custom-call']
    %2 = vsyncpa [#allocation0], 0
    %s3 = sshll.u32 %s1, 4
    %s4 = int_to_ptr.vmem [resolvable:$true] %s3
    %6 = dma.hbm_to_vmem [thread:$0]  %s0, 1024, %s4, [#allocation0]
    %7 = dma.done [#allocation0], 1024
    %8 = vsyncpa [#allocation0], 1

// kernel: custom-call.2
$region0: #{custom-call.2}
  %s0 = inlined_call_operand.vmem [shape: f32[2,2,16,16], index: 0, kind: input, shape index: {}]
  %s1 = inlined_call_operand.vmem [shape: f32[2,2,16,16], index: 1, kind: input, shape index: {}]
  %s2 = inlined_call_operand.vmem [shape: c64[2,2,16,16], index: 2, kind: output, shape index: {}]
  %s4 = scalar_lea.vmem %s2, 64
  %v5 = vld [vmem:[%s0] sm:$0xff]
  %6 = vst [vmem:[%s2] sm:$0xff] %v5
  %s7 = scalar_lea.vmem %s2, 8
  %s8 = scalar_lea.vmem %s0, 8
  %v9 = vld [vmem:[%s8] sm:$0xff]
  %10 = vst [vmem:[%s7] sm:$0xff] %v9
  %s11 = scalar_lea.vmem %s2, 16
  %s12 = scalar_lea.vmem %s0, 16
  %v13 = vld [vmem:[%s12] sm:$0xff]
  %14 = vst [vmem:[%s11] sm:$0xff] %v13
  %s15 = scalar_lea.vmem %s2, 24
  %s16 = scalar_lea.vmem %s0, 24
  %v17 = vld [vmem:[%s16] sm:$0xff]
  %18 = vst [vmem:[%s15] sm:$0xff] %v17
  %s19 = scalar_lea.vmem %s2, 32
  %s20 = scalar_lea.vmem %s0, 32
  %v21 = vld [vmem:[%s20] sm:$0xff]
  %22 = vst [vmem:[%s19] sm:$0xff] %v21
  %s23 = scalar_lea.vmem %s2, 40
  %s24 = scalar_lea.vmem %s0, 40
  %v25 = vld [vmem:[%s24] sm:$0xff]
  %26 = vst [vmem:[%s23] sm:$0xff] %v25
  %s27 = scalar_lea.vmem %s2, 48
  %s28 = scalar_lea.vmem %s0, 48
  %v29 = vld [vmem:[%s28] sm:$0xff]
  %30 = vst [vmem:[%s27] sm:$0xff] %v29
  %s31 = scalar_lea.vmem %s2, 56
  %s32 = scalar_lea.vmem %s0, 56
  %v33 = vld [vmem:[%s32] sm:$0xff]
  %34 = vst [vmem:[%s31] sm:$0xff] %v33
  %v35 = vld [vmem:[%s1] sm:$0xff]
  %36 = vst [vmem:[%s4] sm:$0xff] %v35
  %s37 = scalar_lea.vmem %s4, 8
  %s38 = scalar_lea.vmem %s1, 8
  %v39 = vld [vmem:[%s38] sm:$0xff]
  %40 = vst [vmem:[%s37] sm:$0xff] %v39
  %s41 = scalar_lea.vmem %s4, 16
  %s42 = scalar_lea.vmem %s1, 16
  %v43 = vld [vmem:[%s42] sm:$0xff]
  %44 = vst [vmem:[%s41] sm:$0xff] %v43
  %s45 = scalar_lea.vmem %s4, 24
  %s46 = scalar_lea.vmem %s1, 24
  %v47 = vld [vmem:[%s46] sm:$0xff]
  %48 = vst [vmem:[%s45] sm:$0xff] %v47
  %s49 = scalar_lea.vmem %s4, 32
  %s50 = scalar_lea.vmem %s1, 32
  %v51 = vld [vmem:[%s50] sm:$0xff]
  %52 = vst [vmem:[%s49] sm:$0xff] %v51
  %s53 = scalar_lea.vmem %s4, 40
  %s54 = scalar_lea.vmem %s1, 40
  %v55 = vld [vmem:[%s54] sm:$0xff]
  %56 = vst [vmem:[%s53] sm:$0xff] %v55
  %s57 = scalar_lea.vmem %s4, 48
  %s58 = scalar_lea.vmem %s1, 48
  %v59 = vld [vmem:[%s58] sm:$0xff]
  %60 = vst [vmem:[%s57] sm:$0xff] %v59
  %s61 = scalar_lea.vmem %s4, 56
  %s62 = scalar_lea.vmem %s1, 56
  %v63 = vld [vmem:[%s62] sm:$0xff]
  %64 = vst [vmem:[%s61] sm:$0xff] %v63

// kernel: forward.1
$region0: #{forward.1}
  #allocation0 [shape = 'u32[]', space=smem, size = 0x4, offset = 0x4, fixed_abs, tag = 'smem constant byte address 0x4 - core index']
  #allocation1 [shape = 'u32[144,128]{1,0:T(1,128)}', space=vmem, size = 0x12000, scoped, tag = 'internal scratch']
  #allocation2 [shape = 'f32[32,1664]{1,0:T(8,128)}', space=vmem, size = 0x34000, scoped, tag = 'scratch operand']
  #allocation3 [shape = 'f32[288,1408]{1,0:T(8,128)}', space=vmem, size = 0x18c000, scoped, tag = 'scratch operand']
  %s0 = inlined_call_operand.vmem [shape: f32[2,1408], index: 0, kind: input, shape index: {}]
  %s1 = inlined_call_operand.vmem [shape: f32[1,1408], index: 1, kind: input, shape index: {}]
  %s2 = inlined_call_operand.vmem [shape: f32[1,1408], index: 2, kind: input, shape index: {}]
  %s3 = inlined_call_operand.vmem [shape: f32[2], index: 3, kind: input, shape index: {}]
  %s4 = inlined_call_operand.vmem [shape: f32[32,18], index: 4, kind: input, shape index: {}]
  %s5 = inlined_call_operand.vmem [shape: f32[32,288], index: 5, kind: input, shape index: {}]
  %s6 = inlined_call_operand.vmem [shape: f32[2,288], index: 6, kind: input, shape index: {}]
  %s7 = inlined_call_operand.vmem [shape: f32[32,1], index: 7, kind: input, shape index: {}]
  %s8 = inlined_call_operand.vmem [shape: f32[32,1], index: 8, kind: input, shape index: {}]
  %s9 = inlined_call_operand.vmem [shape: f32[2,1], index: 9, kind: input, shape index: {}]
  %s10 = inlined_call_operand.vmem [shape: f32[2,1408], index: 10, kind: output, shape index: {}]
  %s11 = sld [smem:[#allocation0]]
  $region54: #{forward.1} parent=0
    _
  %s13 = ssub.s32 1, %s11
  %s14 = scalar_select 0, %s13, %s11
  $region1: #{forward.1} parent=0
    #allocation4 [shape = 'u8[512]{0}', space=smem, size = 0x200, scoped, tag = 'input window, operand 3, single buffered']
    #allocation5 [shape = 's32[1]{0}', space=sflag, size = 0x4, scoped, tag = 'scoped memory for forward.1']
    %15 = vsyncpa [#allocation5], 0
    // Predicated region
    $region2: #{forward.1} parent=1 // pred_check
      _
    $region3: #{forward.1} parent=1 // pred_check_branch
      %17 = sbr.rel (0) target = $region5
    $region4: #{forward.1} parent=1 // pred_region
      _
    $region5: #{forward.1} parent=1 // pred_fallthru
      _
    // Predicated region
    $region6: #{forward.1} parent=1 // pred_check
      _
    $region7: #{forward.1} parent=1 // pred_check_branch
      %19 = sbr.rel (0) target = $region9
    $region8: #{forward.1} parent=1 // pred_region
      _
    $region9: #{forward.1} parent=1 // pred_fallthru
      _
    // Predicated region
    $region10: #{forward.1} parent=1 // pred_check
      _
    $region11: #{forward.1} parent=1 // pred_check_branch
      %21 = sbr.rel (0) target = $region13
    $region12: #{forward.1} parent=1 // pred_region
      _
    $region13: #{forward.1} parent=1 // pred_fallthru
      _
    // Predicated region
    $region14: #{forward.1} parent=1 // pred_check
      _
    $region15: #{forward.1} parent=1 // pred_check_branch
      %23 = sbr.rel (0) target = $region17
    $region16: #{forward.1} parent=1 // pred_region
      %s25 = ssub.s32 16, 16
      %26 = vsyncadd [#allocation5], %s25
      %s28 = sshll.u32 %s3, 4
      %s29 = int_to_ptr.vmem [resolvable:$true] %s28
      %31 = dma.vmem_to_smem %s29, 16, [#allocation4], [#allocation5]
    $region17: #{forward.1} parent=1 // pred_fallthru
      _
    // Predicated region
    $region18: #{forward.1} parent=1 // pred_check
      _
    $region19: #{forward.1} parent=1 // pred_check_branch
      %33 = sbr.rel (0) target = $region21
    $region20: #{forward.1} parent=1 // pred_region
      _
    $region21: #{forward.1} parent=1 // pred_fallthru
      _
    // Predicated region
    $region22: #{forward.1} parent=1 // pred_check
      _
    $region23: #{forward.1} parent=1 // pred_check_branch
      %35 = sbr.rel (0) target = $region25
    $region24: #{forward.1} parent=1 // pred_region
      _
    $region25: #{forward.1} parent=1 // pred_fallthru
      _
    // Predicated region
    $region26: #{forward.1} parent=1 // pred_check
      _
    $region27: #{forward.1} parent=1 // pred_check_branch
      %37 = sbr.rel (0) target = $region29
    $region28: #{forward.1} parent=1 // pred_region
      _
    $region29: #{forward.1} parent=1 // pred_fallthru
      _
    // Predicated region
    $region30: #{forward.1} parent=1 // pred_check
      _
    $region31: #{forward.1} parent=1 // pred_check_branch
      %39 = sbr.rel (0) target = $region33
    $region32: #{forward.1} parent=1 // pred_region
      _
    $region33: #{forward.1} parent=1 // pred_fallthru
      _
    // Predicated region
    $region34: #{forward.1} parent=1 // pred_check
      _
    $region35: #{forward.1} parent=1 // pred_check_branch
      %41 = sbr.rel (0) target = $region37
    $region36: #{forward.1} parent=1 // pred_region
      _
    $region37: #{forward.1} parent=1 // pred_fallthru
      _
    // Predicated region
    $region38: #{forward.1} parent=1 // pred_check
      _
    $region39: #{forward.1} parent=1 // pred_check_branch
      %43 = sbr.rel (0) target = $region41
    $region40: #{forward.1} parent=1 // pred_region
      _
    $region41: #{forward.1} parent=1 // pred_fallthru
      _
    // Predicated region
    $region42: #{forward.1} parent=1 // pred_check
      _
    $region43: #{forward.1} parent=1 // pred_check_branch
      %45 = sbr.rel (0) target = $region45
    $region44: #{forward.1} parent=1 // pred_region
      %46 = dma.done [#allocation5], 16
    $region45: #{forward.1} parent=1 // pred_fallthru
      _
    %47 = sfence
    %48 = vst [vmem:[#allocation2] sm:$0xff] 0.0
    %49 = vst [vmem:[#allocation2 + $0x68] sm:$0xff] 0.0
    %50 = vst [vmem:[#allocation2 + $0xd0] sm:$0xff] 0.0
    %51 = vst [vmem:[#allocation2 + $0x138] sm:$0xff] 0.0
    %52 = vst [vmem:[#allocation2 + $0x60] sm:$0xff] 0.0
    %53 = vst [vmem:[#allocation2 + $0xc8] sm:$0xff] 0.0
    %54 = vst [vmem:[#allocation2 + $0x130] sm:$0xff] 0.0
    %55 = vst [vmem:[#allocation2 + $0x198] sm:$0xff] 0.0
    %v56 = vld [vmem:[%s0] sm:$0xff]
    %v57 = vld [vmem:[%s0 + $0x8] sm:$0xff]
    %v58 = vld [vmem:[%s0 + $0x10] sm:$0x3f]
    %v62 = vcombine.high %v56, %v56
    %v64 = vunpack.c.l.s4 1983009808
    %v65 = vunpack.c.0.s8 %v64
    %v66 = vlaneseq
    %v67 = vshrl.u32 %v66, 7
    %v68 = vsub.s32 %v65, %v67
    %v69 = vrot.slane %v56, %v68
    %v71 = vunpack.c.l.s4 1983009808
    %v72 = vunpack.c.0.s8 %v71
    %v73 = vlaneseq
    %v74 = vshrl.u32 %v73, 7
    %v75 = vsub.s32 %v72, %v74
    %v76 = vrot.slane %v62, %v75
    %v77 = vcombine.high %v69, %v69
    %v78 = vcombine.high %v76, %v76
    %v79 = vcombine.high %v57, %v57
    %v81 = vunpack.c.l.s4 1983009808
    %v82 = vunpack.c.0.s8 %v81
    %v83 = vlaneseq
    %v84 = vshrl.u32 %v83, 7
    %v85 = vsub.s32 %v82, %v84
    %v86 = vrot.slane %v57, %v85
    %v88 = vunpack.c.l.s4 1983009808
    %v89 = vunpack.c.0.s8 %v88
    %v90 = vlaneseq
    %v91 = vshrl.u32 %v90, 7
    %v92 = vsub.s32 %v89, %v91
    %v93 = vrot.slane %v79, %v92
    %v94 = vcombine.high %v86, %v86
    %v95 = vcombine.high %v93, %v93
    %v96 = vcombine.high %v58, %v58
    %v98 = vunpack.c.l.s4 1983009808
    %v99 = vunpack.c.0.s8 %v98
    %v100 = vlaneseq
    %v101 = vshrl.u32 %v100, 7
    %v102 = vsub.s32 %v99, %v101
    %v103 = vrot.slane %v58, %v102
    %v105 = vunpack.c.l.s4 1983009808
    %v106 = vunpack.c.0.s8 %v105
    %v107 = vlaneseq
    %v108 = vshrl.u32 %v107, 7
    %v109 = vsub.s32 %v106, %v108
    %v110 = vrot.slane %v96, %v109
    %v111 = vcombine.high %v103, %v103
    %123 = vst [vmem:[#allocation2 + $0x8] sm:$0x3] %v69
    %124 = vst [vmem:[#allocation2 + $0x10] sm:$0x3] %v77
    %125 = vst [vmem:[#allocation2 + $0x18] sm:$0x3] %v76
    %126 = vst [vmem:[#allocation2 + $0x20] sm:$0x3] %v78
    %127 = vst [vmem:[#allocation2 + $0x28] sm:$0x3] %v86
    %128 = vst [vmem:[#allocation2 + $0x30] sm:$0x3] %v94
    %129 = vst [vmem:[#allocation2 + $0x38] sm:$0x3] %v93
    %130 = vst [vmem:[#allocation2 + $0x40] sm:$0x3] %v95
    %131 = vst [vmem:[#allocation2 + $0x48] sm:$0x3] %v103
    %132 = vst [vmem:[#allocation2 + $0x50] sm:$0x3] %v111
    %133 = vst [vmem:[#allocation2 + $0x58] sm:$0x3] %v110
    %v134 = vld [vmem:[%s1] sm:$0xff]
    %v135 = vld [vmem:[%s1 + $0x8] sm:$0x7]
    %v136 = vld [vmem:[#allocation2] sm:$0x3]
    %v137 = vld [vmem:[#allocation2 + $0x8] sm:$0x3]
    %v138 = vld [vmem:[#allocation2 + $0x10] sm:$0x3]
    %v139 = vld [vmem:[#allocation2 + $0x18] sm:$0x3]
    %v140 = vld [vmem:[#allocation2 + $0x20] sm:$0x3]
    %v141 = vld [vmem:[#allocation2 + $0x28] sm:$0x3]
    %v142 = vld [vmem:[#allocation2 + $0x30] sm:$0x3]
    %v143 = vld [vmem:[#allocation2 + $0x38] sm:$0x3]
    %v144 = vld [vmem:[#allocation2 + $0x40] sm:$0x3]
    %v145 = vld [vmem:[#allocation2 + $0x48] sm:$0x3]
    %v146 = vld [vmem:[#allocation2 + $0x50] sm:$0x3]
    %v147 = vld [vmem:[#allocation2 + $0x58] sm:$0x3]
    %160 = vrot.lane.b32.xlu0 %v136, 19
    %v161 = vpop.permute.xlu0 %160
    %162 = vrot.lane.b32.xlu0 %v137, 19
    %v163 = vpop.permute.xlu0 %162
    %164 = vrot.lane.b32.xlu0 %v138, 19
    %v165 = vpop.permute.xlu0 %164
    %166 = vrot.lane.b32.xlu0 %v139, 19
    %v167 = vpop.permute.xlu0 %166
    %168 = vrot.lane.b32.xlu0 %v140, 19
    %v169 = vpop.permute.xlu0 %168
    %170 = vrot.lane.b32.xlu0 %v141, 19
    %v171 = vpop.permute.xlu0 %170
    %172 = vrot.lane.b32.xlu0 %v142, 19
    %v173 = vpop.permute.xlu0 %172
    %174 = vrot.lane.b32.xlu0 %v143, 19
    %v175 = vpop.permute.xlu0 %174
    %176 = vrot.lane.b32.xlu0 %v144, 19
    %v177 = vpop.permute.xlu0 %176
    %178 = vrot.lane.b32.xlu0 %v145, 19
    %v179 = vpop.permute.xlu0 %178
    %180 = vrot.lane.b32.xlu0 %v146, 19
    %v181 = vpop.permute.xlu0 %180
    %182 = vrot.lane.b32.xlu0 %v147, 19
    %v183 = vpop.permute.xlu0 %182
    %vm184 = vcmask 154624
    %v185 = vsel %vm184, %v161, %v163
    %v186 = vsel %vm184, %v163, %v165
    %v187 = vsel %vm184, %v165, %v167
    %v188 = vsel %vm184, %v167, %v169
    %v189 = vsel %vm184, %v169, %v171
    %v190 = vsel %vm184, %v171, %v173
    %v191 = vsel %vm184, %v173, %v175
    %v192 = vsel %vm184, %v175, %v177
    %v193 = vsel %vm184, %v177, %v179
    %v194 = vsel %vm184, %v179, %v181
    %v195 = vsel %vm184, %v181, %v183
    %207 = vst [vmem:[#allocation3] sm:$0x3] %v185
    %208 = vst [vmem:[#allocation3 + $0x8] sm:$0x3] %v186
    %209 = vst [vmem:[#allocation3 + $0x10] sm:$0x3] %v187
    %210 = vst [vmem:[#allocation3 + $0x18] sm:$0x3] %v188
    %211 = vst [vmem:[#allocation3 + $0x20] sm:$0x3] %v189
    %212 = vst [vmem:[#allocation3 + $0x28] sm:$0x3] %v190
    %213 = vst [vmem:[#allocation3 + $0x30] sm:$0x3] %v191
    %214 = vst [vmem:[#allocation3 + $0x38] sm:$0x3] %v192
    %215 = vst [vmem:[#allocation3 + $0x40] sm:$0x3] %v193
    %216 = vst [vmem:[#allocation3 + $0x48] sm:$0x3] %v194
    %217 = vst [vmem:[#allocation3 + $0x50] sm:$0x3] %v195
    %v218 = vld [vmem:[#allocation2] sm:$0x3]
    %v219 = vld [vmem:[#allocation2 + $0x8] sm:$0x3]
    %v220 = vld [vmem:[#allocation2 + $0x10] sm:$0x3]
    %v221 = vld [vmem:[#allocation2 + $0x18] sm:$0x3]
    %v222 = vld [vmem:[#allocation2 + $0x20] sm:$0x3]
    %v223 = vld [vmem:[#allocation2 + $0x28] sm:$0x3]
    %v224 = vld [vmem:[#allocation2 + $0x30] sm:$0x3]
    %v225 = vld [vmem:[#allocation2 + $0x38] sm:$0x3]
    %v226 = vld [vmem:[#allocation2 + $0x40] sm:$0x3]
    %v227 = vld [vmem:[#allocation2 + $0x48] sm:$0x3]
    %v228 = vld [vmem:[#allocation2 + $0x50] sm:$0x3]
    %v229 = vld [vmem:[#allocation2 + $0x58] sm:$0x3]
    %v242 = vrot.slane %v218, 6
    %v243 = vrot.slane %v219, 6
    %v244 = vrot.slane %v220, 6
    %v245 = vrot.slane %v221, 6
    %v246 = vrot.slane %v222, 6
    %v247 = vrot.slane %v223, 6
    %v248 = vrot.slane %v224, 6
    %v249 = vrot.slane %v225, 6
    %v250 = vrot.slane %v226, 6
    %v251 = vrot.slane %v227, 6
    %v252 = vrot.slane %v228, 6
    %v253 = vrot.slane %v229, 6
    %254 = vrot.lane.b32.xlu0 %v242, 18
    %v255 = vpop.permute.xlu0 %254
    %256 = vrot.lane.b32.xlu0 %v243, 18
    %v257 = vpop.permute.xlu0 %256
    %258 = vrot.lane.b32.xlu0 %v244, 18
    %v259 = vpop.permute.xlu0 %258
    %260 = vrot.lane.b32.xlu0 %v245, 18
    %v261 = vpop.permute.xlu0 %260
    %262 = vrot.lane.b32.xlu0 %v246, 18
    %v263 = vpop.permute.xlu0 %262
    %264 = vrot.lane.b32.xlu0 %v247, 18
    %v265 = vpop.permute.xlu0 %264
    %266 = vrot.lane.b32.xlu0 %v248, 18
    %v267 = vpop.permute.xlu0 %266
    %268 = vrot.lane.b32.xlu0 %v249, 18
    %v269 = vpop.permute.xlu0 %268
    %270 = vrot.lane.b32.xlu0 %v250, 18
    %v271 = vpop.permute.xlu0 %270
    %272 = vrot.lane.b32.xlu0 %v251, 18
    %v273 = vpop.permute.xlu0 %272
    %274 = vrot.lane.b32.xlu0 %v252, 18
    %v275 = vpop.permute.xlu0 %274
    %276 = vrot.lane.b32.xlu0 %v253, 18
    %v277 = vpop.permute.xlu0 %276
    %vm278 = vcmask 146432
    %v279 = vsel %vm278, %v255, %v257
    %v280 = vsel %vm278, %v257, %v259
    %v281 = vsel %vm278, %v259, %v261
    %v282 = vsel %vm278, %v261, %v263
    %v283 = vsel %vm278, %v263, %v265
    %v284 = vsel %vm278, %v265, %v267
    %v285 = vsel %vm278, %v267, %v269
    %v286 = vsel %vm278, %v269, %v271
    %v287 = vsel %vm278, %v271, %v273
    %v288 = vsel %vm278, %v273, %v275
    %v289 = vsel %vm278, %v275, %v277
    %301 = vst [vmem:[#allocation3] sm:$0xc] %v279
    %302 = vst [vmem:[#allocation3 + $0x8] sm:$0xc] %v280
    %303 = vst [vmem:[#allocation3 + $0x10] sm:$0xc] %v281
    %304 = vst [vmem:[#allocation3 + $0x18] sm:$0xc] %v282
    %305 = vst [vmem:[#allocation3 + $0x20] sm:$0xc] %v283
    %306 = vst [vmem:[#allocation3 + $0x28] sm:$0xc] %v284
    %307 = vst [vmem:[#allocation3 + $0x30] sm:$0xc] %v285
    %308 = vst [vmem:[#allocation3 + $0x38] sm:$0xc] %v286
    %309 = vst [vmem:[#allocation3 + $0x40] sm:$0xc] %v287
    %310 = vst [vmem:[#allocation3 + $0x48] sm:$0xc] %v288
    %311 = vst [vmem:[#allocation3 + $0x50] sm:$0xc] %v289
    %v312 = vld [vmem:[#allocation2] sm:$0x3]
    %v313 = vld [vmem:[#allocation2 + $0x8] sm:$0x3]
    %v314 = vld [vmem:[#allocation2 + $0x10] sm:$0x3]
    %v315 = vld [vmem:[#allocation2 + $0x18] sm:$0x3]
    %v316 = vld [vmem:[#allocation2 + $0x20] sm:$0x3]
    %v317 = vld [vmem:[#allocation2 + $0x28] sm:$0x3]
    %v318 = vld [vmem:[#allocation2 + $0x30] sm:$0x3]
    %v319 = vld [vmem:[#allocation2 + $0x38] sm:$0x3]
    %v320 = vld [vmem:[#allocation2 + $0x40] sm:$0x3]
    %v321 = vld [vmem:[#allocation2 + $0x48] sm:$0x3]
    %v322 = vld [vmem:[#allocation2 + $0x50] sm:$0x3]
    %v323 = vld [vmem:[#allocation2 + $0x58] sm:$0x3]
    %v336 = vrot.slane %v312, 4
    %v337 = vrot.slane %v313, 4
    %v338 = vrot.slane %v314, 4
    %v339 = vrot.slane %v315, 4
    %v340 = vrot.slane %v316, 4
    %v341 = vrot.slane %v317, 4
    %v342 = vrot.slane %v318, 4
    %v343 = vrot.slane %v319, 4
    %v344 = vrot.slane %v320, 4
    %v345 = vrot.slane %v321, 4
    %v346 = vrot.slane %v322, 4
    %v347 = vrot.slane %v323, 4
    %348 = vrot.lane.b32.xlu0 %v336, 17
    %v349 = vpop.permute.xlu0 %348
    %350 = vrot.lane.b32.xlu0 %v337, 17
    %v351 = vpop.permute.xlu0 %350
    %352 = vrot.lane.b32.xlu0 %v338, 17
    %v353 = vpop.permute.xlu0 %352
    %354 = vrot.lane.b32.xlu0 %v339, 17
    %v355 = vpop.permute.xlu0 %354
    %356 = vrot.lane.b32.xlu0 %v340, 17
    %v357 = vpop.permute.xlu0 %356
    %358 = vrot.lane.b32.xlu0 %v341, 17
    %v359 = vpop.permute.xlu0 %358
    %360 = vrot.lane.b32.xlu0 %v342, 17
    %v361 = vpop.permute.xlu0 %360
    %362 = vrot.lane.b32.xlu0 %v343, 17
    %v363 = vpop.permute.xlu0 %362
    %364 = vrot.lane.b32.xlu0 %v344, 17
    %v365 = vpop.permute.xlu0 %364
    %366 = vrot.lane.b32.xlu0 %v345, 17
    %v367 = vpop.permute.xlu0 %366
    %368 = vrot.lane.b32.xlu0 %v346, 17
    %v369 = vpop.permute.xlu0 %368
    %370 = vrot.lane.b32.xlu0 %v347, 17
    %v371 = vpop.permute.xlu0 %370
    %vm372 = vcmask 138240
    %v373 = vsel %vm372, %v349, %v351
    %v374 = vsel %vm372, %v351, %v353
    %v375 = vsel %vm372, %v353, %v355
    %v376 = vsel %vm372, %v355, %v357
    %v377 = vsel %vm372, %v357, %v359
    %v378 = vsel %vm372, %v359, %v361
    %v379 = vsel %vm372, %v361, %v363
    %v380 = vsel %vm372, %v363, %v365
    %v381 = vsel %vm372, %v365, %v367
    %v382 = vsel %vm372, %v367, %v369
    %v383 = vsel %vm372, %v369, %v371
    %395 = vst [vmem:[#allocation3] sm:$0x30] %v373
    %396 = vst [vmem:[#allocation3 + $0x8] sm:$0x30] %v374
    %397 = vst [vmem:[#allocation3 + $0x10] sm:$0x30] %v375
    %398 = vst [vmem:[#allocation3 + $0x18] sm:$0x30] %v376
    %399 = vst [vmem:[#allocation3 + $0x20] sm:$0x30] %v377
    %400 = vst [vmem:[#allocation3 + $0x28] sm:$0x30] %v378
    %401 = vst [vmem:[#allocation3 + $0x30] sm:$0x30] %v379
    %402 = vst [vmem:[#allocation3 + $0x38] sm:$0x30] %v380
    %403 = vst [vmem:[#allocation3 + $0x40] sm:$0x30] %v381
    %404 = vst [vmem:[#allocation3 + $0x48] sm:$0x30] %v382
    %405 = vst [vmem:[#allocation3 + $0x50] sm:$0x30] %v383
    %v406 = vld [vmem:[#allocation2] sm:$0x3]
    %v407 = vld [vmem:[#allocation2 + $0x8] sm:$0x3]
    %v408 = vld [vmem:[#allocation2 + $0x10] sm:$0x3]
    %v409 = vld [vmem:[#allocation2 + $0x18] sm:$0x3]
    %v410 = vld [vmem:[#allocation2 + $0x20] sm:$0x3]
    %v411 = vld [vmem:[#allocation2 + $0x28] sm:$0x3]
    %v412 = vld [vmem:[#allocation2 + $0x30] sm:$0x3]
    %v413 = vld [vmem:[#allocation2 + $0x38] sm:$0x3]
    %v414 = vld [vmem:[#allocation2 + $0x40] sm:$0x3]
    %v415 = vld [vmem:[#allocation2 + $0x48] sm:$0x3]
    %v416 = vld [vmem:[#allocation2 + $0x50] sm:$0x3]
    %v417 = vld [vmem:[#allocation2 + $0x58] sm:$0x3]
    %v430 = vrot.slane %v406, 2
    %v431 = vrot.slane %v407, 2
    %v432 = vrot.slane %v408, 2
    %v433 = vrot.slane %v409, 2
    %v434 = vrot.slane %v410, 2
    %v435 = vrot.slane %v411, 2
    %v436 = vrot.slane %v412, 2
    %v437 = vrot.slane %v413, 2
    %v438 = vrot.slane %v414, 2
    %v439 = vrot.slane %v415, 2
    %v440 = vrot.slane %v416, 2
    %v441 = vrot.slane %v417, 2
    %442 = vrot.lane.b32.xlu0 %v430, 1
    %v443 = vpop.permute.xlu0 %442
    %444 = vrot.lane.b32.xlu0 %v431, 1
    %v445 = vpop.permute.xlu0 %444
    %446 = vrot.lane.b32.xlu0 %v432, 1
    %v447 = vpop.permute.xlu0 %446
    %448 = vrot.lane.b32.xlu0 %v433, 1
    %v449 = vpop.permute.xlu0 %448
    %450 = vrot.lane.b32.xlu0 %v434, 1
    %v451 = vpop.permute.xlu0 %450
    %452 = vrot.lane.b32.xlu0 %v435, 1
    %v453 = vpop.permute.xlu0 %452
    %454 = vrot.lane.b32.xlu0 %v436, 1
    %v455 = vpop.permute.xlu0 %454
    %456 = vrot.lane.b32.xlu0 %v437, 1
    %v457 = vpop.permute.xlu0 %456
    %458 = vrot.lane.b32.xlu0 %v438, 1
    %v459 = vpop.permute.xlu0 %458
    %460 = vrot.lane.b32.xlu0 %v439, 1
    %v461 = vpop.permute.xlu0 %460
    %462 = vrot.lane.b32.xlu0 %v440, 1
    %v463 = vpop.permute.xlu0 %462
    %464 = vrot.lane.b32.xlu0 %v441, 1
    %v465 = vpop.permute.xlu0 %464
    %vm466 = vcmask 7168
    %v467 = vsel %vm466, %v443, %v445
    %v468 = vsel %vm466, %v445, %v447
    %v469 = vsel %vm466, %v447, %v449
    %v470 = vsel %vm466, %v449, %v451
    %v471 = vsel %vm466, %v451, %v453
    %v472 = vsel %vm466, %v453, %v455
    %v473 = vsel %vm466, %v455, %v457
    %v474 = vsel %vm466, %v457, %v459
    %v475 = vsel %vm466, %v459, %v461
    %v476 = vsel %vm466, %v461, %v463
    %v477 = vsel %vm466, %v463, %v465
    %489 = vst [vmem:[#allocation3] sm:$0xc0] %v467
    %490 = vst [vmem:[#allocation3 + $0x8] sm:$0xc0] %v468
    %491 = vst [vmem:[#allocation3 + $0x10] sm:$0xc0] %v469
    %492 = vst [vmem:[#allocation3 + $0x18] sm:$0xc0] %v470
    %493 = vst [vmem:[#allocation3 + $0x20] sm:$0xc0] %v471
    %494 = vst [vmem:[#allocation3 + $0x28] sm:$0xc0] %v472
    %495 = vst [vmem:[#allocation3 + $0x30] sm:$0xc0] %v473
    %496 = vst [vmem:[#allocation3 + $0x38] sm:$0xc0] %v474
    %497 = vst [vmem:[#allocation3 + $0x40] sm:$0xc0] %v475
    %498 = vst [vmem:[#allocation3 + $0x48] sm:$0xc0] %v476
    %499 = vst [vmem:[#allocation3 + $0x50] sm:$0xc0] %v477
    %v500 = vld [vmem:[#allocation2 + $0x8] sm:$0x3]
    %v501 = vld [vmem:[#allocation2 + $0x10] sm:$0x3]
    %v502 = vld [vmem:[#allocation2 + $0x18] sm:$0x3]
    %v503 = vld [vmem:[#allocation2 + $0x20] sm:$0x3]
    %v504 = vld [vmem:[#allocation2 + $0x28] sm:$0x3]
    %v505 = vld [vmem:[#allocation2 + $0x30] sm:$0x3]
    %v506 = vld [vmem:[#allocation2 + $0x38] sm:$0x3]
    %v507 = vld [vmem:[#allocation2 + $0x40] sm:$0x3]
    %v508 = vld [vmem:[#allocation2 + $0x48] sm:$0x3]
    %v509 = vld [vmem:[#allocation2 + $0x50] sm:$0x3]
    %v510 = vld [vmem:[#allocation2 + $0x58] sm:$0x3]
    %511 = vst [vmem:[#allocation3 + $0x58] sm:$0x3] %v500
    %512 = vst [vmem:[#allocation3 + $0x60] sm:$0x3] %v501
    %513 = vst [vmem:[#allocation3 + $0x68] sm:$0x3] %v502
    %514 = vst [vmem:[#allocation3 + $0x70] sm:$0x3] %v503
    %515 = vst [vmem:[#allocation3 + $0x78] sm:$0x3] %v504
    %516 = vst [vmem:[#allocation3 + $0x80] sm:$0x3] %v505
    %517 = vst [vmem:[#allocation3 + $0x88] sm:$0x3] %v506
    %518 = vst [vmem:[#allocation3 + $0x90] sm:$0x3] %v507
    %519 = vst [vmem:[#allocation3 + $0x98] sm:$0x3] %v508
    %520 = vst [vmem:[#allocation3 + $0xa0] sm:$0x3] %v509
    %521 = vst [vmem:[#allocation3 + $0xa8] sm:$0x3] %v510
    %v522 = vld [vmem:[#allocation2 + $0x8] sm:$0x3]
    %v523 = vld [vmem:[#allocation2 + $0x10] sm:$0x3]
    %v524 = vld [vmem:[#allocation2 + $0x18] sm:$0x3]
    %v525 = vld [vmem:[#allocation2 + $0x20] sm:$0x3]
    %v526 = vld [vmem:[#allocation2 + $0x28] sm:$0x3]
    %v527 = vld [vmem:[#allocation2 + $0x30] sm:$0x3]
    %v528 = vld [vmem:[#allocation2 + $0x38] sm:$0x3]
    %v529 = vld [vmem:[#allocation2 + $0x40] sm:$0x3]
    %v530 = vld [vmem:[#allocation2 + $0x48] sm:$0x3]
    %v531 = vld [vmem:[#allocation2 + $0x50] sm:$0x3]
    %v532 = vld [vmem:[#allocation2 + $0x58] sm:$0x3]
    %v533 = vld [vmem:[#allocation2 + $0x60] sm:$0x3]
    %v546 = vrot.slane %v522, 6
    %v547 = vrot.slane %v523, 6
    %v548 = vrot.slane %v524, 6
    %v549 = vrot.slane %v525, 6
    %v550 = vrot.slane %v526, 6
    %v551 = vrot.slane %v527, 6
    %v552 = vrot.slane %v528, 6
    %v553 = vrot.slane %v529, 6
    %v554 = vrot.slane %v530, 6
    %v555 = vrot.slane %v531, 6
    %v556 = vrot.slane %v532, 6
    %v557 = vrot.slane %v533, 6
    %558 = vrot.lane.b32.xlu0 %v546, 127
    %v559 = vpop.permute.xlu0 %558
    %560 = vrot.lane.b32.xlu0 %v547, 127
    %v561 = vpop.permute.xlu0 %560
    %562 = vrot.lane.b32.xlu0 %v548, 127
    %v563 = vpop.permute.xlu0 %562
    %564 = vrot.lane.b32.xlu0 %v549, 127
    %v565 = vpop.permute.xlu0 %564
    %566 = vrot.lane.b32.xlu0 %v550, 127
    %v567 = vpop.permute.xlu0 %566
    %568 = vrot.lane.b32.xlu0 %v551, 127
    %v569 = vpop.permute.xlu0 %568
    %570 = vrot.lane.b32.xlu0 %v552, 127
    %v571 = vpop.permute.xlu0 %570
    %572 = vrot.lane.b32.xlu0 %v553, 127
    %v573 = vpop.permute.xlu0 %572
    %574 = vrot.lane.b32.xlu0 %v554, 127
    %v575 = vpop.permute.xlu0 %574
    %576 = vrot.lane.b32.xlu0 %v555, 127
    %v577 = vpop.permute.xlu0 %576
    %578 = vrot.lane.b32.xlu0 %v556, 127
    %v579 = vpop.permute.xlu0 %578
    %580 = vrot.lane.b32.xlu0 %v557, 127
    %v581 = vpop.permute.xlu0 %580
    %vm582 = vcmask 1039360
    %v583 = vsel %vm582, %v559, %v561
    %v584 = vsel %vm582, %v561, %v563
    %v585 = vsel %vm582, %v563, %v565
    %v586 = vsel %vm582, %v565, %v567
    %v587 = vsel %vm582, %v567, %v569
    %v588 = vsel %vm582, %v569, %v571
    %v589 = vsel %vm582, %v571, %v573
    %v590 = vsel %vm582, %v573, %v575
    %v591 = vsel %vm582, %v575, %v577
    %v592 = vsel %vm582, %v577, %v579
    %v593 = vsel %vm582, %v579, %v581
    %605 = vst [vmem:[#allocation3 + $0x58] sm:$0xc] %v583
    %606 = vst [vmem:[#allocation3 + $0x60] sm:$0xc] %v584
    %607 = vst [vmem:[#allocation3 + $0x68] sm:$0xc] %v585
    %608 = vst [vmem:[#allocation3 + $0x70] sm:$0xc] %v586
    %609 = vst [vmem:[#allocation3 + $0x78] sm:$0xc] %v587
    %610 = vst [vmem:[#allocation3 + $0x80] sm:$0xc] %v588
    %611 = vst [vmem:[#allocation3 + $0x88] sm:$0xc] %v589
    %612 = vst [vmem:[#allocation3 + $0x90] sm:$0xc] %v590
    %613 = vst [vmem:[#allocation3 + $0x98] sm:$0xc] %v591
    %614 = vst [vmem:[#allocation3 + $0xa0] sm:$0xc] %v592
    %615 = vst [vmem:[#allocation3 + $0xa8] sm:$0xc] %v593
    %v616 = vld [vmem:[#allocation2 + $0x8] sm:$0x3]
    %v617 = vld [vmem:[#allocation2 + $0x10] sm:$0x3]
    %v618 = vld [vmem:[#allocation2 + $0x18] sm:$0x3]
    %v619 = vld [vmem:[#allocation2 + $0x20] sm:$0x3]
    %v620 = vld [vmem:[#allocation2 + $0x28] sm:$0x3]
    %v621 = vld [vmem:[#allocation2 + $0x30] sm:$0x3]
    %v622 = vld [vmem:[#allocation2 + $0x38] sm:$0x3]
    %v623 = vld [vmem:[#allocation2 + $0x40] sm:$0x3]
    %v624 = vld [vmem:[#allocation2 + $0x48] sm:$0x3]
    %v625 = vld [vmem:[#allocation2 + $0x50] sm:$0x3]
    %v626 = vld [vmem:[#allocation2 + $0x58] sm:$0x3]
    %v627 = vld [vmem:[#allocation2 + $0x60] sm:$0x3]
    %v640 = vrot.slane %v616, 4
    %v641 = vrot.slane %v617, 4
    %v642 = vrot.slane %v618, 4
    %v643 = vrot.slane %v619, 4
    %v644 = vrot.slane %v620, 4
    %v645 = vrot.slane %v621, 4
    %v646 = vrot.slane %v622, 4
    %v647 = vrot.slane %v623, 4
    %v648 = vrot.slane %v624, 4
    %v649 = vrot.slane %v625, 4
    %v650 = vrot.slane %v626, 4
    %v651 = vrot.slane %v627, 4
    %652 = vrot.lane.b32.xlu0 %v640, 111
    %v653 = vpop.permute.xlu0 %652
    %654 = vrot.lane.b32.xlu0 %v641, 111
    %v655 = vpop.permute.xlu0 %654
    %656 = vrot.lane.b32.xlu0 %v642, 111
    %v657 = vpop.permute.xlu0 %656
    %658 = vrot.lane.b32.xlu0 %v643, 111
    %v659 = vpop.permute.xlu0 %658
    %660 = vrot.lane.b32.xlu0 %v644, 111
    %v661 = vpop.permute.xlu0 %660
    %662 = vrot.lane.b32.xlu0 %v645, 111
    %v663 = vpop.permute.xlu0 %662
    %664 = vrot.lane.b32.xlu0 %v646, 111
    %v665 = vpop.permute.xlu0 %664
    %666 = vrot.lane.b32.xlu0 %v647, 111
    %v667 = vpop.permute.xlu0 %666
    %668 = vrot.lane.b32.xlu0 %v648, 111
    %v669 = vpop.permute.xlu0 %668
    %670 = vrot.lane.b32.xlu0 %v649, 111
    %v671 = vpop.permute.xlu0 %670
    %672 = vrot.lane.b32.xlu0 %v650, 111
    %v673 = vpop.permute.xlu0 %672
    %674 = vrot.lane.b32.xlu0 %v651, 111
    %v675 = vpop.permute.xlu0 %674
    %vm676 = vcmask 908288
    %v677 = vsel %vm676, %v653, %v655
    %v678 = vsel %vm676, %v655, %v657
    %v679 = vsel %vm676, %v657, %v659
    %v680 = vsel %vm676, %v659, %v661
    %v681 = vsel %vm676, %v661, %v663
    %v682 = vsel %vm676, %v663, %v665
    %v683 = vsel %vm676, %v665, %v667
    %v684 = vsel %vm676, %v667, %v669
    %v685 = vsel %vm676, %v669, %v671
    %v686 = vsel %vm676, %v671, %v673
    %v687 = vsel %vm676, %v673, %v675
    %699 = vst [vmem:[#allocation3 + $0x58] sm:$0x30] %v677
    %700 = vst [vmem:[#allocation3 + $0x60] sm:$0x30] %v678
    %701 = vst [vmem:[#allocation3 + $0x68] sm:$0x30] %v679
    %702 = vst [vmem:[#allocation3 + $0x70] sm:$0x30] %v680
    %703 = vst [vmem:[#allocation3 + $0x78] sm:$0x30] %v681
    %704 = vst [vmem:[#allocation3 + $0x80] sm:$0x30] %v682
    %705 = vst [vmem:[#allocation3 + $0x88] sm:$0x30] %v683
    %706 = vst [vmem:[#allocation3 + $0x90] sm:$0x30] %v684
    %707 = vst [vmem:[#allocation3 + $0x98] sm:$0x30] %v685
    %708 = vst [vmem:[#allocation3 + $0xa0] sm:$0x30] %v686
    %709 = vst [vmem:[#allocation3 + $0xa8] sm:$0x30] %v687
    %v710 = vld [vmem:[#allocation2 + $0x8] sm:$0x3]
    %v711 = vld [vmem:[#allocation2 + $0x10] sm:$0x3]
    %v712 = vld [vmem:[#allocation2 + $0x18] sm:$0x3]
    %v713 = vld [vmem:[#allocation2 + $0x20] sm:$0x3]
    %v714 = vld [vmem:[#allocation2 + $0x28] sm:$0x3]
    %v715 = vld [vmem:[#allocation2 + $0x30] sm:$0x3]
    %v716 = vld [vmem:[#allocation2 + $0x38] sm:$0x3]
    %v717 = vld [vmem:[#allocation2 + $0x40] sm:$0x3]
    %v718 = vld [vmem:[#allocation2 + $0x48] sm:$0x3]
    %v719 = vld [vmem:[#allocation2 + $0x50] sm:$0x3]
    %v720 = vld [vmem:[#allocation2 + $0x58] sm:$0x3]
    %v721 = vld [vmem:[#allocation2 + $0x60] sm:$0x3]
    %v734 = vrot.slane %v710, 2
    %v735 = vrot.slane %v711, 2
    %v736 = vrot.slane %v712, 2
    %v737 = vrot.slane %v713, 2
    %v738 = vrot.slane %v714, 2
    %v739 = vrot.slane %v715, 2
    %v740 = vrot.slane %v716, 2
    %v741 = vrot.slane %v717, 2
    %v742 = vrot.slane %v718, 2
    %v743 = vrot.slane %v719, 2
    %v744 = vrot.slane %v720, 2
    %v745 = vrot.slane %v721, 2
    %746 = vrot.lane.b32.xlu0 %v734, 110
    %v747 = vpop.permute.xlu0 %746
    %748 = vrot.lane.b32.xlu0 %v735, 110
    %v749 = vpop.permute.xlu0 %748
    %750 = vrot.lane.b32.xlu0 %v736, 110
    %v751 = vpop.permute.xlu0 %750
    %752 = vrot.lane.b32.xlu0 %v737, 110
    %v753 = vpop.permute.xlu0 %752
    %754 = vrot.lane.b32.xlu0 %v738, 110
    %v755 = vpop.permute.xlu0 %754
    %756 = vrot.lane.b32.xlu0 %v739, 110
    %v757 = vpop.permute.xlu0 %756
    %758 = vrot.lane.b32.xlu0 %v740, 110
    %v759 = vpop.permute.xlu0 %758
    %760 = vrot.lane.b32.xlu0 %v741, 110
    %v761 = vpop.permute.xlu0 %760
    %762 = vrot.lane.b32.xlu0 %v742, 110
    %v763 = vpop.permute.xlu0 %762
    %764 = vrot.lane.b32.xlu0 %v743, 110
    %v765 = vpop.permute.xlu0 %764
    %766 = vrot.lane.b32.xlu0 %v744, 110
    %v767 = vpop.permute.xlu0 %766
    %768 = vrot.lane.b32.xlu0 %v745, 110
    %v769 = vpop.permute.xlu0 %768
    %vm770 = vcmask 900096
    %v771 = vsel %vm770, %v747, %v749
    %v772 = vsel %vm770, %v749, %v751
    %v773 = vsel %vm770, %v751, %v753
    %v774 = vsel %vm770, %v753, %v755
    %v775 = vsel %vm770, %v755, %v757
    %v776 = vsel %vm770, %v757, %v759
    %v777 = vsel %vm770, %v759, %v761
    %v778 = vsel %vm770, %v761, %v763
    %v779 = vsel %vm770, %v763, %v765
    %v780 = vsel %vm770, %v765, %v767
    %v781 = vsel %vm770, %v767, %v769
    %793 = vst [vmem:[#allocation3 + $0x58] sm:$0xc0] %v771
    %794 = vst [vmem:[#allocation3 + $0x60] sm:$0xc0] %v772
    %795 = vst [vmem:[#allocation3 + $0x68] sm:$0xc0] %v773
    %796 = vst [vmem:[#allocation3 + $0x70] sm:$0xc0] %v774
    %797 = vst [vmem:[#allocation3 + $0x78] sm:$0xc0] %v775
    %798 = vst [vmem:[#allocation3 + $0x80] sm:$0xc0] %v776
    %799 = vst [vmem:[#allocation3 + $0x88] sm:$0xc0] %v777
    %800 = vst [vmem:[#allocation3 + $0x90] sm:$0xc0] %v778
    %801 = vst [vmem:[#allocation3 + $0x98] sm:$0xc0] %v779
    %802 = vst [vmem:[#allocation3 + $0xa0] sm:$0xc0] %v780
    %803 = vst [vmem:[#allocation3 + $0xa8] sm:$0xc0] %v781
    %v804 = vld [vmem:[#allocation2 + $0x8] sm:$0x3]
    %v805 = vld [vmem:[#allocation2 + $0x10] sm:$0x3]
    %v806 = vld [vmem:[#allocation2 + $0x18] sm:$0x3]
    %v807 = vld [vmem:[#allocation2 + $0x20] sm:$0x3]
    %v808 = vld [vmem:[#allocation2 + $0x28] sm:$0x3]
    %v809 = vld [vmem:[#allocation2 + $0x30] sm:$0x3]
    %v810 = vld [vmem:[#allocation2 + $0x38] sm:$0x3]
    %v811 = vld [vmem:[#allocation2 + $0x40] sm:$0x3]
    %v812 = vld [vmem:[#allocation2 + $0x48] sm:$0x3]
    %v813 = vld [vmem:[#allocation2 + $0x50] sm:$0x3]
    %v814 = vld [vmem:[#allocation2 + $0x58] sm:$0x3]
    %v815 = vld [vmem:[#allocation2 + $0x60] sm:$0x3]
    %828 = vrot.lane.b32.xlu0 %v804, 109
    %v829 = vpop.permute.xlu0 %828
    %830 = vrot.lane.b32.xlu0 %v805, 109
    %v831 = vpop.permute.xlu0 %830
    %832 = vrot.lane.b32.xlu0 %v806, 109
    %v833 = vpop.permute.xlu0 %832
    %834 = vrot.lane.b32.xlu0 %v807, 109
    %v835 = vpop.permute.xlu0 %834
    %836 = vrot.lane.b32.xlu0 %v808, 109
    %v837 = vpop.permute.xlu0 %836
    %838 = vrot.lane.b32.xlu0 %v809, 109
    %v839 = vpop.permute.xlu0 %838
    %840 = vrot.lane.b32.xlu0 %v810, 109
    %v841 = vpop.permute.xlu0 %840
    %842 = vrot.lane.b32.xlu0 %v811, 109
    %v843 = vpop.permute.xlu0 %842
    %844 = vrot.lane.b32.xlu0 %v812, 109
    %v845 = vpop.permute.xlu0 %844
    %846 = vrot.lane.b32.xlu0 %v813, 109
    %v847 = vpop.permute.xlu0 %846
    %848 = vrot.lane.b32.xlu0 %v814, 109
    %v849 = vpop.permute.xlu0 %848
    %850 = vrot.lane.b32.xlu0 %v815, 109
    %v851 = vpop.permute.xlu0 %850
    %vm852 = vcmask 891904
    %v853 = vsel %vm852, %v829, %v831
    %v854 = vsel %vm852, %v831, %v833
    %v855 = vsel %vm852, %v833, %v835
    %v856 = vsel %vm852, %v835, %v837
    %v857 = vsel %vm852, %v837, %v839
    %v858 = vsel %vm852, %v839, %v841
    %v859 = vsel %vm852, %v841, %v843
    %v860 = vsel %vm852, %v843, %v845
    %v861 = vsel %vm852, %v845, %v847
    %v862 = vsel %vm852, %v847, %v849
    %v863 = vsel %vm852, %v849, %v851
    %875 = vst [vmem:[#allocation3 + $0xb0] sm:$0x3] %v853
    %876 = vst [vmem:[#allocation3 + $0xb8] sm:$0x3] %v854
    %877 = vst [vmem:[#allocation3 + $0xc0] sm:$0x3] %v855
    %878 = vst [vmem:[#allocation3 + $0xc8] sm:$0x3] %v856
    %879 = vst [vmem:[#allocation3 + $0xd0] sm:$0x3] %v857
    %880 = vst [vmem:[#allocation3 + $0xd8] sm:$0x3] %v858
    %881 = vst [vmem:[#allocation3 + $0xe0] sm:$0x3] %v859
    %882 = vst [vmem:[#allocation3 + $0xe8] sm:$0x3] %v860
    %883 = vst [vmem:[#allocation3 + $0xf0] sm:$0x3] %v861
    %884 = vst [vmem:[#allocation3 + $0xf8] sm:$0x3] %v862
    %885 = vst [vmem:[#allocation3 + $0x100] sm:$0x3] %v863
    %v886 = vld [vmem:[%s4] sm:$0xff]
    %v887 = vld [vmem:[%s4 + $0x8] sm:$0xff]
    %v888 = vld [vmem:[%s4 + $0x10] sm:$0xff]
    %v889 = vld [vmem:[%s4 + $0x18] sm:$0xff]
    %v890 = vld [vmem:[#allocation3] sm:$0xff]
    %v891 = vld [vmem:[#allocation3 + $0x8] sm:$0xff]
    %v892 = vld [vmem:[#allocation3 + $0x10] sm:$0xff]
    %v893 = vld [vmem:[#allocation3 + $0x18] sm:$0xff]
    %v894 = vld [vmem:[#allocation3 + $0x20] sm:$0xff]
    %v895 = vld [vmem:[#allocation3 + $0x28] sm:$0xff]
    %v896 = vld [vmem:[#allocation3 + $0x30] sm:$0xff]
    %v897 = vld [vmem:[#allocation3 + $0x38] sm:$0xff]
    %v898 = vld [vmem:[#allocation3 + $0x40] sm:$0xff]
    %v899 = vld [vmem:[#allocation3 + $0x48] sm:$0xff]
    %v900 = vld [vmem:[#allocation3 + $0x50] sm:$0xff]
    %v901 = vld [vmem:[#allocation3 + $0x58] sm:$0xff]
    %v902 = vld [vmem:[#allocation3 + $0x60] sm:$0xff]
    %v903 = vld [vmem:[#allocation3 + $0x68] sm:$0xff]
    %v904 = vld [vmem:[#allocation3 + $0x70] sm:$0xff]
    %v905 = vld [vmem:[#allocation3 + $0x78] sm:$0xff]
    %v906 = vld [vmem:[#allocation3 + $0x80] sm:$0xff]
    %v907 = vld [vmem:[#allocation3 + $0x88] sm:$0xff]
    %v908 = vld [vmem:[#allocation3 + $0x90] sm:$0xff]
    %v909 = vld [vmem:[#allocation3 + $0x98] sm:$0xff]
    %v910 = vld [vmem:[#allocation3 + $0xa0] sm:$0xff]
    %v911 = vld [vmem:[#allocation3 + $0xa8] sm:$0xff]
    %v912 = vld [vmem:[#allocation3 + $0xb0] sm:$0x3]
    %v913 = vld [vmem:[#allocation3 + $0xb8] sm:$0x3]
    %v914 = vld [vmem:[#allocation3 + $0xc0] sm:$0x3]
    %v915 = vld [vmem:[#allocation3 + $0xc8] sm:$0x3]
    %v916 = vld [vmem:[#allocation3 + $0xd0] sm:$0x3]
    %v917 = vld [vmem:[#allocation3 + $0xd8] sm:$0x3]
    %v918 = vld [vmem:[#allocation3 + $0xe0] sm:$0x3]
    %v919 = vld [vmem:[#allocation3 + $0xe8] sm:$0x3]
    %v920 = vld [vmem:[#allocation3 + $0xf0] sm:$0x3]
    %v921 = vld [vmem:[#allocation3 + $0xf8] sm:$0x3]
    %v922 = vld [vmem:[#allocation3 + $0x100] sm:$0x3]
    %v923 = vld [vmem:[%s7] sm:$0xff]
    %v924 = vld [vmem:[%s7 + $0x8] sm:$0xff]
    %v925 = vld [vmem:[%s7 + $0x10] sm:$0xff]
    %v926 = vld [vmem:[%s7 + $0x18] sm:$0xff]
    %928 = vset.pattern.permute.xlu0 0
    %929 = vperm.xlu0 %928, %v923
    %v930 = vpop.permute.xlu0 %929
    %933 = vset.pattern.permute.xlu0 0
    %934 = vperm.xlu0 %933, %v924
    %v935 = vpop.permute.xlu0 %934
    %938 = vset.pattern.permute.xlu0 0
    %939 = vperm.xlu0 %938, %v925
    %v940 = vpop.permute.xlu0 %939
    %943 = vset.pattern.permute.xlu0 0
    %944 = vperm.xlu0 %943, %v926
    %v945 = vpop.permute.xlu0 %944
    %v948 = vsel %vm278, %v886, 0
    %v951 = vsel %vm278, %v887, 0
    %v954 = vsel %vm278, %v888, 0
    %v957 = vsel %vm278, %v889, 0
    %vm959 = vcmask 1041408
    %v961 = vsel %vm959, %v912, 0
    %v964 = vsel %vm959, %v913, 0
    %v967 = vsel %vm959, %v914, 0
    %v970 = vsel %vm959, %v915, 0
    %v973 = vsel %vm959, %v916, 0
    %v976 = vsel %vm959, %v917, 0
    %v979 = vsel %vm959, %v918, 0
    %v982 = vsel %vm959, %v919, 0
    %v985 = vsel %vm959, %v920, 0
    %v988 = vsel %vm959, %v921, 0
    %v991 = vsel %vm959, %v922, 0
    %993 = vmatprep.subr.mxu0 %v891
    %994 = vmatpush1.msra.mxu0 %v890
    %995 = vmatprep.subr.mxu0 %v902
    %996 = vmatpush1.msra.mxu0 %v901
    %997 = vmatprep.subr.mxu0 %v964
    %998 = vmatpush1.msra.mxu0 %v961
    %999 = vmatprep.subr.mxu0 0.0
    %1000 = vmatpush1.msra.mxu0 0.0
    %1001 = vmatprep.subr.mxu0 0.0
    %1002 = vmatpush1.msra.mxu0 0.0
    %1003 = vmatprep.subr.mxu0 0.0
    %1004 = vmatpush1.msra.mxu0 0.0
    %1005 = vmatprep.subr.mxu0 0.0
    %1006 = vmatpush1.msra.mxu0 0.0
    %1007 = vmatprep.subr.mxu0 0.0
    %1008 = vmatpush1.msra.mxu0 0.0
    %1009 = vmatprep.subr.mxu0 0.0
    %1010 = vmatpush1.msra.mxu0 0.0
    %1011 = vmatprep.subr.mxu0 0.0
    %1012 = vmatpush1.msra.mxu0 0.0
    %1013 = vmatprep.subr.mxu0 0.0
    %1014 = vmatpush1.msra.mxu0 0.0
    %1015 = vmatprep.subr.mxu0 0.0
    %1016 = vmatpush1.msra.mxu0 0.0
    %1017 = vmatprep.subr.mxu0 0.0
    %1018 = vmatpush1.msra.mxu0 0.0
    %1019 = vmatprep.subr.mxu0 0.0
    %1020 = vmatpush1.msra.mxu0 0.0
    %1021 = vmatprep.subr.mxu0 0.0
    %1022 = vmatpush1.msra.mxu0 0.0
    %1023 = vmatprep.subr.mxu0 0.0
    %1024 = vmatpush1.msra.mxu0 0.0
    %1025 = vmatprep.subr.mxu0 0.0
    %1026 = vmatpush1.msra.mxu0 0.0
    %1027 = vmatprep.subr.mxu0 0.0
    %1028 = vmatpush1.msra.mxu0 0.0
    %1029 = vmatprep.subr.mxu0 0.0
    %1030 = vmatpush1.msra.mxu0 0.0
    %1031 = vmatprep.subr.mxu0 0.0
    %1032 = vmatpush1.msra.mxu0 0.0
    %1033 = vmatprep.subr.mxu0 0.0
    %1034 = vmatpush1.msra.mxu0 0.0
    %1035 = vmatprep.subr.mxu0 0.0
    %1036 = vmatpush1.msra.mxu0 0.0
    %1037 = vmatprep.subr.mxu0 0.0
    %1038 = vmatpush1.msra.mxu0 0.0
    %1039 = vmatprep.subr.mxu0 0.0
    %1040 = vmatpush1.msra.mxu0 0.0
    %1041 = vmatprep.subr.mxu0 0.0
    %1042 = vmatpush1.msra.mxu0 0.0
    %1043 = vmatprep.subr.mxu0 0.0
    %1044 = vmatpush1.msra.mxu0 0.0
    %1045 = vmatprep.subr.mxu0 0.0
    %1046 = vmatpush1.msra.mxu0 0.0
    %1047 = vmatprep.subr.mxu0 0.0
    %1048 = vmatpush1.msra.mxu0 0.0
    %1049 = vmatprep.subr.mxu0 0.0
    %1050 = vmatpush1.msra.mxu0 0.0
    %1051 = vmatprep.subr.mxu0 0.0
    %1052 = vmatpush1.msra.mxu0 0.0
    %1053 = vmatprep.subr.mxu0 0.0
    %1054 = vmatpush1.msra.mxu0 0.0
    %1055 = vmatprep.subr.mxu0 0.0
    %1056 = vmatpush1.msra.mxu0 0.0
    %1057 = vmatprep.mubr.f32.mxu0 0.0
    %1058 = vmatmul.mubr.f32.gmra.mrb[0].mxu0 %v948
    %v1059 = vpop.f32.mrb[0].mxu0
    %v1060 = vadd.f32 %v930, %v1059
    %v1061 = vpop.f32.mrb[0].mxu0
    %v1062 = vadd.f32 %v930, %v1061
    %1063 = vmatprep.mubr.f32.mxu0 0.0
    %1064 = vmatmul.mubr.f32.gmra.mrb[0].mxu0 %v951
    %v1065 = vpop.f32.mrb[0].mxu0
    %v1066 = vadd.f32 %v935, %v1065
    %v1067 = vpop.f32.mrb[0].mxu0
    %v1068 = vadd.f32 %v935, %v1067
    %1069 = vmatprep.mubr.f32.mxu0 0.0
    %1070 = vmatmul.mubr.f32.gmra.mrb[0].mxu0 %v954
    %v1071 = vpop.f32.mrb[0].mxu0
    %v1072 = vadd.f32 %v940, %v1071
    %v1073 = vpop.f32.mrb[0].mxu0
    %v1074 = vadd.f32 %v940, %v1073
    %1075 = vmatprep.mubr.f32.mxu0 0.0
    %1076 = vmatmul.mubr.f32.gmra.mrb[0].mxu0 %v957
    %v1077 = vpop.f32.mrb[0].mxu0
    %v1078 = vadd.f32 %v945, %v1077
    %v1079 = vpop.f32.mrb[0].mxu0
    %v1080 = vadd.f32 %v945, %v1079
    %1081 = vdwg.mxu0
    %1082 = vmatprep.subr.mxu0 %v893
    %1083 = vmatpush1.msra.mxu0 %v892
    %1084 = vmatprep.subr.mxu0 %v904
    %1085 = vmatpush1.msra.mxu0 %v903
    %1086 = vmatprep.subr.mxu0 %v970
    %1087 = vmatpush1.msra.mxu0 %v967
    %1088 = vmatprep.subr.mxu0 0.0
    %1089 = vmatpush1.msra.mxu0 0.0
    %1090 = vmatprep.subr.mxu0 0.0
    %1091 = vmatpush1.msra.mxu0 0.0
    %1092 = vmatprep.subr.mxu0 0.0
    %1093 = vmatpush1.msra.mxu0 0.0
    %1094 = vmatprep.subr.mxu0 0.0
    %1095 = vmatpush1.msra.mxu0 0.0
    %1096 = vmatprep.subr.mxu0 0.0
    %1097 = vmatpush1.msra.mxu0 0.0
    %1098 = vmatprep.subr.mxu0 0.0
    %1099 = vmatpush1.msra.mxu0 0.0
    %1100 = vmatprep.subr.mxu0 0.0
    %1101 = vmatpush1.msra.mxu0 0.0
    %1102 = vmatprep.subr.mxu0 0.0
    %1103 = vmatpush1.msra.mxu0 0.0
    %1104 = vmatprep.subr.mxu0 0.0
    %1105 = vmatpush1.msra.mxu0 0.0
    %1106 = vmatprep.subr.mxu0 0.0
    %1107 = vmatpush1.msra.mxu0 0.0
    %1108 = vmatprep.subr.mxu0 0.0
    %1109 = vmatpush1.msra.mxu0 0.0
    %1110 = vmatprep.subr.mxu0 0.0
    %1111 = vmatpush1.msra.mxu0 0.0
    %1112 = vmatprep.subr.mxu0 0.0
    %1113 = vmatpush1.msra.mxu0 0.0
    %1114 = vmatprep.subr.mxu0 0.0
    %1115 = vmatpush1.msra.mxu0 0.0
    %1116 = vmatprep.subr.mxu0 0.0
    %1117 = vmatpush1.msra.mxu0 0.0
    %1118 = vmatprep.subr.mxu0 0.0
    %1119 = vmatpush1.msra.mxu0 0.0
    %1120 = vmatprep.subr.mxu0 0.0
    %1121 = vmatpush1.msra.mxu0 0.0
    %1122 = vmatprep.subr.mxu0 0.0
    %1123 = vmatpush1.msra.mxu0 0.0
    %1124 = vmatprep.subr.mxu0 0.0
    %1125 = vmatpush1.msra.mxu0 0.0
    %1126 = vmatprep.subr.mxu0 0.0
    %1127 = vmatpush1.msra.mxu0 0.0
    %1128 = vmatprep.subr.mxu0 0.0
    %1129 = vmatpush1.msra.mxu0 0.0
    %1130 = vmatprep.subr.mxu0 0.0
    %1131 = vmatpush1.msra.mxu0 0.0
    %1132 = vmatprep.subr.mxu0 0.0
    %1133 = vmatpush1.msra.mxu0 0.0
    %1134 = vmatprep.subr.mxu0 0.0
    %1135 = vmatpush1.msra.mxu0 0.0
    %1136 = vmatprep.subr.mxu0 0.0
    %1137 = vmatpush1.msra.mxu0 0.0
    %1138 = vmatprep.subr.mxu0 0.0
    %1139 = vmatpush1.msra.mxu0 0.0
    %1140 = vmatprep.subr.mxu0 0.0
    %1141 = vmatpush1.msra.mxu0 0.0
    %1142 = vmatprep.subr.mxu0 0.0
    %1143 = vmatpush1.msra.mxu0 0.0
    %1144 = vmatprep.subr.mxu0 0.0
    %1145 = vmatpush1.msra.mxu0 0.0
    %1146 = vmatprep.mubr.f32.mxu0 0.0
    %1147 = vmatmul.mubr.f32.gmra.mrb[0].mxu0 %v948
    %v1148 = vpop.f32.mrb[0].mxu0
    %v1149 = vadd.f32 %v930, %v1148
    %v1150 = vpop.f32.mrb[0].mxu0
    %v1151 = vadd.f32 %v930, %v1150
    %1152 = vmatprep.mubr.f32.mxu0 0.0
    %1153 = vmatmul.mubr.f32.gmra.mrb[0].mxu0 %v951
    %v1154 = vpop.f32.mrb[0].mxu0
    %v1155 = vadd.f32 %v935, %v1154
    %v1156 = vpop.f32.mrb[0].mxu0
    %v1157 = vadd.f32 %v935, %v1156
    %1158 = vmatprep.mubr.f32.mxu0 0.0
    %1159 = vmatmul.mubr.f32.gmra.mrb[0].mxu0 %v954
    %v1160 = vpop.f32.mrb[0].mxu0
    %v1161 = vadd.f32 %v940, %v1160
    %v1162 = vpop.f32.mrb[0].mxu0
    %v1163 = vadd.f32 %v940, %v1162
    %1164 = vmatprep.mubr.f32.mxu0 0.0
    %1165 = vmatmul.mubr.f32.gmra.mrb[0].mxu0 %v957
    %v1166 = vpop.f32.mrb[0].mxu0
    %v1167 = vadd.f32 %v945, %v1166
    %v1168 = vpop.f32.mrb[0].mxu0
    %v1169 = vadd.f32 %v945, %v1168
    %1170 = vdwg.mxu0
    %1171 = vmatprep.subr.mxu0 %v895
    %1172 = vmatpush1.msra.mxu0 %v894
    %1173 = vmatprep.subr.mxu0 %v906
    %1174 = vmatpush1.msra.mxu0 %v905
    %1175 = vmatprep.subr.mxu0 %v976
    %1176 = vmatpush1.msra.mxu0 %v973
    %1177 = vmatprep.subr.mxu0 0.0
    %1178 = vmatpush1.msra.mxu0 0.0
    %1179 = vmatprep.subr.mxu0 0.0
    %1180 = vmatpush1.msra.mxu0 0.0
    %1181 = vmatprep.subr.mxu0 0.0
    %1182 = vmatpush1.msra.mxu0 0.0
    %1183 = vmatprep.subr.mxu0 0.0
    %1184 = vmatpush1.msra.mxu0 0.0
    %1185 = vmatprep.subr.mxu0 0.0
    %1186 = vmatpush1.msra.mxu0 0.0
    %1187 = vmatprep.subr.mxu0 0.0
    %1188 = vmatpush1.msra.mxu0 0.0
    %1189 = vmatprep.subr.mxu0 0.0
    %1190 = vmatpush1.msra.mxu0 0.0
    %1191 = vmatprep.subr.mxu0 0.0
    %1192 = vmatpush1.msra.mxu0 0.0
    %1193 = vmatprep.subr.mxu0 0.0
    %1194 = vmatpush1.msra.mxu0 0.0
    %1195 = vmatprep.subr.mxu0 0.0
    %1196 = vmatpush1.msra.mxu0 0.0
    %1197 = vmatprep.subr.mxu0 0.0
    %1198 = vmatpush1.msra.mxu0 0.0
    %1199 = vmatprep.subr.mxu0 0.0
    %1200 = vmatpush1.msra.mxu0 0.0
    %1201 = vmatprep.subr.mxu0 0.0
    %1202 = vmatpush1.msra.mxu0 0.0
    %1203 = vmatprep.subr.mxu0 0.0
    %1204 = vmatpush1.msra.mxu0 0.0
    %1205 = vmatprep.subr.mxu0 0.0
    %1206 = vmatpush1.msra.mxu0 0.0
    %1207 = vmatprep.subr.mxu0 0.0
    %1208 = vmatpush1.msra.mxu0 0.0
    %1209 = vmatprep.subr.mxu0 0.0
    %1210 = vmatpush1.msra.mxu0 0.0
    %1211 = vmatprep.subr.mxu0 0.0
    %1212 = vmatpush1.msra.mxu0 0.0
    %1213 = vmatprep.subr.mxu0 0.0
    %1214 = vmatpush1.msra.mxu0 0.0
    %1215 = vmatprep.subr.mxu0 0.0
    %1216 = vmatpush1.msra.mxu0 0.0
    %1217 = vmatprep.subr.mxu0 0.0
    %1218 = vmatpush1.msra.mxu0 0.0
    %1219 = vmatprep.subr.mxu0 0.0
    %1220 = vmatpush1.msra.mxu0 0.0
    %1221 = vmatprep.subr.mxu0 0.0
    %1222 = vmatpush1.msra.mxu0 0.0
    %1223 = vmatprep.subr.mxu0 0.0
    %1224 = vmatpush1.msra.mxu0 0.0
    %1225 = vmatprep.subr.mxu0 0.0
    %1226 = vmatpush1.msra.mxu0 0.0
    %1227 = vmatprep.subr.mxu0 0.0
    %1228 = vmatpush1.msra.mxu0 0.0
    %1229 = vmatprep.subr.mxu0 0.0
    %1230 = vmatpush1.msra.mxu0 0.0
    %1231 = vmatprep.subr.mxu0 0.0
    %1232 = vmatpush1.msra.mxu0 0.0
    %1233 = vmatprep.subr.mxu0 0.0
    %1234 = vmatpush1.msra.mxu0 0.0
    %1235 = vmatprep.mubr.f32.mxu0 0.0
    %1236 = vmatmul.mubr.f32.gmra.mrb[0].mxu0 %v948
    %v1237 = vpop.f32.mrb[0].mxu0
    %v1238 = vadd.f32 %v930, %v1237
    %v1239 = vpop.f32.mrb[0].mxu0
    %v1240 = vadd.f32 %v930, %v1239
    %1241 = vmatprep.mubr.f32.mxu0 0.0
    %1242 = vmatmul.mubr.f32.gmra.mrb[0].mxu0 %v951
    %v1243 = vpop.f32.mrb[0].mxu0
    %v1244 = vadd.f32 %v935, %v1243
    %v1245 = vpop.f32.mrb[0].mxu0
    %v1246 = vadd.f32 %v935, %v1245
    %1247 = vmatprep.mubr.f32.mxu0 0.0
    %1248 = vmatmul.mubr.f32.gmra.mrb[0].mxu0 %v954
    %v1249 = vpop.f32.mrb[0].mxu0
    %v1250 = vadd.f32 %v940, %v1249
    %v1251 = vpop.f32.mrb[0].mxu0
    %v1252 = vadd.f32 %v940, %v1251
    %1253 = vmatprep.mubr.f32.mxu0 0.0
    %1254 = vmatmul.mubr.f32.gmra.mrb[0].mxu0 %v957
    %v1255 = vpop.f32.mrb[0].mxu0
    %v1256 = vadd.f32 %v945, %v1255
    %v1257 = vpop.f32.mrb[0].mxu0
    %v1258 = vadd.f32 %v945, %v1257
    %1259 = vdwg.mxu0
    %1260 = vmatprep.subr.mxu0 %v897
    %1261 = vmatpush1.msra.mxu0 %v896
    %1262 = vmatprep.subr.mxu0 %v908
    %1263 = vmatpush1.msra.mxu0 %v907
    %1264 = vmatprep.subr.mxu0 %v982
    %1265 = vmatpush1.msra.mxu0 %v979
    %1266 = vmatprep.subr.mxu0 0.0
    %1267 = vmatpush1.msra.mxu0 0.0
    %1268 = vmatprep.subr.mxu0 0.0
    %1269 = vmatpush1.msra.mxu0 0.0
    %1270 = vmatprep.subr.mxu0 0.0
    %1271 = vmatpush1.msra.mxu0 0.0
    %1272 = vmatprep.subr.mxu0 0.0
    %1273 = vmatpush1.msra.mxu0 0.0
    %1274 = vmatprep.subr.mxu0 0.0
    %1275 = vmatpush1.msra.mxu0 0.0
    %1276 = vmatprep.subr.mxu0 0.0
    %1277 = vmatpush1.msra.mxu0 0.0
    %1278 = vmatprep.subr.mxu0 0.0
    %1279 = vmatpush1.msra.mxu0 0.0
    %1280 = vmatprep.subr.mxu0 0.0
    %1281 = vmatpush1.msra.mxu0 0.0
    %1282 = vmatprep.subr.mxu0 0.0
    %1283 = vmatpush1.msra.mxu0 0.0
    %1284 = vmatprep.subr.mxu0 0.0
    %1285 = vmatpush1.msra.mxu0 0.0
    %1286 = vmatprep.subr.mxu0 0.0
    %1287 = vmatpush1.msra.mxu0 0.0
    %1288 = vmatprep.subr.mxu0 0.0
    %1289 = vmatpush1.msra.mxu0 0.0
    %1290 = vmatprep.subr.mxu0 0.0
    %1291 = vmatpush1.msra.mxu0 0.0
    %1292 = vmatprep.subr.mxu0 0.0
    %1293 = vmatpush1.msra.mxu0 0.0
    %1294 = vmatprep.subr.mxu0 0.0
    %1295 = vmatpush1.msra.mxu0 0.0
    %1296 = vmatprep.subr.mxu0 0.0
    %1297 = vmatpush1.msra.mxu0 0.0
    %1298 = vmatprep.subr.mxu0 0.0
    %1299 = vmatpush1.msra.mxu0 0.0
    %1300 = vmatprep.subr.mxu0 0.0
    %1301 = vmatpush1.msra.mxu0 0.0
    %1302 = vmatprep.subr.mxu0 0.0
    %1303 = vmatpush1.msra.mxu0 0.0
    %1304 = vmatprep.subr.mxu0 0.0
    %1305 = vmatpush1.msra.mxu0 0.0
    %1306 = vmatprep.subr.mxu0 0.0
    %1307 = vmatpush1.msra.mxu0 0.0
    %1308 = vmatprep.subr.mxu0 0.0
    %1309 = vmatpush1.msra.mxu0 0.0
    %1310 = vmatprep.subr.mxu0 0.0
    %1311 = vmatpush1.msra.mxu0 0.0
    %1312 = vmatprep.subr.mxu0 0.0
    %1313 = vmatpush1.msra.mxu0 0.0
    %1314 = vmatprep.subr.mxu0 0.0
    %1315 = vmatpush1.msra.mxu0 0.0
    %1316 = vmatprep.subr.mxu0 0.0
    %1317 = vmatpush1.msra.mxu0 0.0
    %1318 = vmatprep.subr.mxu0 0.0
    %1319 = vmatpush1.msra.mxu0 0.0
    %1320 = vmatprep.subr.mxu0 0.0
    %1321 = vmatpush1.msra.mxu0 0.0
    %1322 = vmatprep.subr.mxu0 0.0
    %1323 = vmatpush1.msra.mxu0 0.0
    %1324 = vmatprep.mubr.f32.mxu0 0.0
    %1325 = vmatmul.mubr.f32.gmra.mrb[0].mxu0 %v948
    %v1326 = vpop.f32.mrb[0].mxu0
    %v1327 = vadd.f32 %v930, %v1326
    %v1328 = vpop.f32.mrb[0].mxu0
    %v1329 = vadd.f32 %v930, %v1328
    %1330 = vmatprep.mubr.f32.mxu0 0.0
    %1331 = vmatmul.mubr.f32.gmra.mrb[0].mxu0 %v951
    %v1332 = vpop.f32.mrb[0].mxu0
    %v1333 = vadd.f32 %v935, %v1332
    %v1334 = vpop.f32.mrb[0].mxu0
    %v1335 = vadd.f32 %v935, %v1334
    %1336 = vmatprep.mubr.f32.mxu0 0.0
    %1337 = vmatmul.mubr.f32.gmra.mrb[0].mxu0 %v954
    %v1338 = vpop.f32.mrb[0].mxu0
    %v1339 = vadd.f32 %v940, %v1338
    %v1340 = vpop.f32.mrb[0].mxu0
    %v1341 = vadd.f32 %v940, %v1340
    %1342 = vmatprep.mubr.f32.mxu0 0.0
    %1343 = vmatmul.mubr.f32.gmra.mrb[0].mxu0 %v957
    %v1344 = vpop.f32.mrb[0].mxu0
    %v1345 = vadd.f32 %v945, %v1344
    %v1346 = vpop.f32.mrb[0].mxu0
    %v1347 = vadd.f32 %v945, %v1346
    %1348 = vdwg.mxu0
    %1349 = vmatprep.subr.mxu0 %v899
    %1350 = vmatpush1.msra.mxu0 %v898
    %1351 = vmatprep.subr.mxu0 %v910
    %1352 = vmatpush1.msra.mxu0 %v909
    %1353 = vmatprep.subr.mxu0 %v988
    %1354 = vmatpush1.msra.mxu0 %v985
    %1355 = vmatprep.subr.mxu0 0.0
    %1356 = vmatpush1.msra.mxu0 0.0
    %1357 = vmatprep.subr.mxu0 0.0
    %1358 = vmatpush1.msra.mxu0 0.0
    %1359 = vmatprep.subr.mxu0 0.0
    %1360 = vmatpush1.msra.mxu0 0.0
    %1361 = vmatprep.subr.mxu0 0.0
    %1362 = vmatpush1.msra.mxu0 0.0
    %1363 = vmatprep.subr.mxu0 0.0
    %1364 = vmatpush1.msra.mxu0 0.0
    %1365 = vmatprep.subr.mxu0 0.0
    %1366 = vmatpush1.msra.mxu0 0.0
    %1367 = vmatprep.subr.mxu0 0.0
    %1368 = vmatpush1.msra.mxu0 0.0
    %1369 = vmatprep.subr.mxu0 0.0
    %1370 = vmatpush1.msra.mxu0 0.0
    %1371 = vmatprep.subr.mxu0 0.0
    %1372 = vmatpush1.msra.mxu0 0.0
    %1373 = vmatprep.subr.mxu0 0.0
    %1374 = vmatpush1.msra.mxu0 0.0
    %1375 = vmatprep.subr.mxu0 0.0
    %1376 = vmatpush1.msra.mxu0 0.0
    %1377 = vmatprep.subr.mxu0 0.0
    %1378 = vmatpush1.msra.mxu0 0.0
    %1379 = vmatprep.subr.mxu0 0.0
    %1380 = vmatpush1.msra.mxu0 0.0
    %1381 = vmatprep.subr.mxu0 0.0
    %1382 = vmatpush1.msra.mxu0 0.0
    %1383 = vmatprep.subr.mxu0 0.0
    %1384 = vmatpush1.msra.mxu0 0.0
    %1385 = vmatprep.subr.mxu0 0.0
    %1386 = vmatpush1.msra.mxu0 0.0
    %1387 = vmatprep.subr.mxu0 0.0
    %1388 = vmatpush1.msra.mxu0 0.0
    %1389 = vmatprep.subr.mxu0 0.0
    %1390 = vmatpush1.msra.mxu0 0.0
    %1391 = vmatprep.subr.mxu0 0.0
    %1392 = vmatpush1.msra.mxu0 0.0
    %1393 = vmatprep.subr.mxu0 0.0
    %1394 = vmatpush1.msra.mxu0 0.0
    %1395 = vmatprep.subr.mxu0 0.0
    %1396 = vmatpush1.msra.mxu0 0.0
    %1397 = vmatprep.subr.mxu0 0.0
    %1398 = vmatpush1.msra.mxu0 0.0
    %1399 = vmatprep.subr.mxu0 0.0
    %1400 = vmatpush1.msra.mxu0 0.0
    %1401 = vmatprep.subr.mxu0 0.0
    %1402 = vmatpush1.msra.mxu0 0.0
    %1403 = vmatprep.subr.mxu0 0.0
    %1404 = vmatpush1.msra.mxu0 0.0
    %1405 = vmatprep.subr.mxu0 0.0
    %1406 = vmatpush1.msra.mxu0 0.0
    %1407 = vmatprep.subr.mxu0 0.0
    %1408 = vmatpush1.msra.mxu0 0.0
    %1409 = vmatprep.subr.mxu0 0.0
    %1410 = vmatpush1.msra.mxu0 0.0
    %1411 = vmatprep.subr.mxu0 0.0
    %1412 = vmatpush1.msra.mxu0 0.0
    %1413 = vmatprep.mubr.f32.mxu0 0.0
    %1414 = vmatmul.mubr.f32.gmra.mrb[0].mxu0 %v948
    %v1415 = vpop.f32.mrb[0].mxu0
    %v1416 = vadd.f32 %v930, %v1415
    %v1417 = vpop.f32.mrb[0].mxu0
    %v1418 = vadd.f32 %v930, %v1417
    %1419 = vmatprep.mubr.f32.mxu0 0.0
    %1420 = vmatmul.mubr.f32.gmra.mrb[0].mxu0 %v951
    %v1421 = vpop.f32.mrb[0].mxu0
    %v1422 = vadd.f32 %v935, %v1421
    %v1423 = vpop.f32.mrb[0].mxu0
    %v1424 = vadd.f32 %v935, %v1423
    %1425 = vmatprep.mubr.f32.mxu0 0.0
    %1426 = vmatmul.mubr.f32.gmra.mrb[0].mxu0 %v954
    %v1427 = vpop.f32.mrb[0].mxu0
    %v1428 = vadd.f32 %v940, %v1427
    %v1429 = vpop.f32.mrb[0].mxu0
    %v1430 = vadd.f32 %v940, %v1429
    %1431 = vmatprep.mubr.f32.mxu0 0.0
    %1432 = vmatmul.mubr.f32.gmra.mrb[0].mxu0 %v957
    %v1433 = vpop.f32.mrb[0].mxu0
    %v1434 = vadd.f32 %v945, %v1433
    %v1435 = vpop.f32.mrb[0].mxu0
    %v1436 = vadd.f32 %v945, %v1435
    %1437 = vdwg.mxu0
    %1438 = vmatprep.subr.mxu0 0.0
    %1439 = vmatpush1.msra.mxu0 %v900
    %1440 = vmatprep.subr.mxu0 0.0
    %1441 = vmatpush1.msra.mxu0 %v911
    %1442 = vmatprep.subr.mxu0 0.0
    %1443 = vmatpush1.msra.mxu0 %v991
    %1444 = vmatprep.subr.mxu0 0.0
    %1445 = vmatpush1.msra.mxu0 0.0
    %1446 = vmatprep.subr.mxu0 0.0
    %1447 = vmatpush1.msra.mxu0 0.0
    %1448 = vmatprep.subr.mxu0 0.0
    %1449 = vmatpush1.msra.mxu0 0.0
    %1450 = vmatprep.subr.mxu0 0.0
    %1451 = vmatpush1.msra.mxu0 0.0
    %1452 = vmatprep.subr.mxu0 0.0
    %1453 = vmatpush1.msra.mxu0 0.0
    %1454 = vmatprep.subr.mxu0 0.0
    %1455 = vmatpush1.msra.mxu0 0.0
    %1456 = vmatprep.subr.mxu0 0.0
    %1457 = vmatpush1.msra.mxu0 0.0
    %1458 = vmatprep.subr.mxu0 0.0
    %1459 = vmatpush1.msra.mxu0 0.0
    %1460 = vmatprep.subr.mxu0 0.0
    %1461 = vmatpush1.msra.mxu0 0.0
    %1462 = vmatprep.subr.mxu0 0.0
    %1463 = vmatpush1.msra.mxu0 0.0
    %1464 = vmatprep.subr.mxu0 0.0
    %1465 = vmatpush1.msra.mxu0 0.0
    %1466 = vmatprep.subr.mxu0 0.0
    %1467 = vmatpush1.msra.mxu0 0.0
    %1468 = vmatprep.subr.mxu0 0.0
    %1469 = vmatpush1.msra.mxu0 0.0
    %1470 = vmatprep.subr.mxu0 0.0
    %1471 = vmatpush1.msra.mxu0 0.0
    %1472 = vmatprep.subr.mxu0 0.0
    %1473 = vmatpush1.msra.mxu0 0.0
    %1474 = vmatprep.subr.mxu0 0.0
    %1475 = vmatpush1.msra.mxu0 0.0
    %1476 = vmatprep.subr.mxu0 0.0
    %1477 = vmatpush1.msra.mxu0 0.0
    %1478 = vmatprep.subr.mxu0 0.0
    %1479 = vmatpush1.msra.mxu0 0.0
    %1480 = vmatprep.subr.mxu0 0.0
    %1481 = vmatpush1.msra.mxu0 0.0
    %1482 = vmatprep.subr.mxu0 0.0
    %1483 = vmatpush1.msra.mxu0 0.0
    %1484 = vmatprep.subr.mxu0 0.0
    %1485 = vmatpush1.msra.mxu0 0.0
    %1486 = vmatprep.subr.mxu0 0.0
    %1487 = vmatpush1.msra.mxu0 0.0
    %1488 = vmatprep.subr.mxu0 0.0
    %1489 = vmatpush1.msra.mxu0 0.0
    %1490 = vmatprep.subr.mxu0 0.0
    %1491 = vmatpush1.msra.mxu0 0.0
    %1492 = vmatprep.subr.mxu0 0.0
    %1493 = vmatpush1.msra.mxu0 0.0
    %1494 = vmatprep.subr.mxu0 0.0
    %1495 = vmatpush1.msra.mxu0 0.0
    %1496 = vmatprep.subr.mxu0 0.0
    %1497 = vmatpush1.msra.mxu0 0.0
    %1498 = vmatprep.subr.mxu0 0.0
    %1499 = vmatpush1.msra.mxu0 0.0
    %1500 = vmatprep.subr.mxu0 0.0
    %1501 = vmatpush1.msra.mxu0 0.0
    %1502 = vmatprep.mubr.f32.mxu0 0.0
    %1503 = vmatmul.mubr.f32.gmra.mrb[0].mxu0 %v948
    %v1504 = vpop.f32.mrb[0].mxu0
    %v1505 = vadd.f32 %v930, %v1504
    %v1506 = vpop.f32.mrb[0].mxu0
    %1507 = vmatprep.mubr.f32.mxu0 0.0
    %1508 = vmatmul.mubr.f32.gmra.mrb[0].mxu0 %v951
    %v1509 = vpop.f32.mrb[0].mxu0
    %v1510 = vadd.f32 %v935, %v1509
    %v1511 = vpop.f32.mrb[0].mxu0
    %1512 = vmatprep.mubr.f32.mxu0 0.0
    %1513 = vmatmul.mubr.f32.gmra.mrb[0].mxu0 %v954
    %v1514 = vpop.f32.mrb[0].mxu0
    %v1515 = vadd.f32 %v940, %v1514
    %v1516 = vpop.f32.mrb[0].mxu0
    %1517 = vmatprep.mubr.f32.mxu0 0.0
    %1518 = vmatmul.mubr.f32.gmra.mrb[0].mxu0 %v957
    %v1519 = vpop.f32.mrb[0].mxu0
    %v1520 = vadd.f32 %v945, %v1519
    %v1521 = vpop.f32.mrb[0].mxu0
    %1522 = vdwg.mxu0
    %v1525 = vlaneseq
    %v1526 = vshrl.u32 %v1525, 7
    %v1527 = vsub.s32 0, %v1526
    %v1528 = vrot.slane %v134, %v1527
    %v1529 = vlaneseq
    %v1530 = vshrl.u32 %v1529, 7
    %v1531 = vsub.s32 1, %v1530
    %v1532 = vrot.slane %v134, %v1531
    %v1533 = vlaneseq
    %v1534 = vshrl.u32 %v1533, 7
    %v1535 = vsub.s32 2, %v1534
    %v1536 = vrot.slane %v134, %v1535
    %v1537 = vlaneseq
    %v1538 = vshrl.u32 %v1537, 7
    %v1539 = vsub.s32 3, %v1538
    %v1540 = vrot.slane %v134, %v1539
    %v1541 = vlaneseq
    %v1542 = vshrl.u32 %v1541, 7
    %v1543 = vsub.s32 4, %v1542
    %v1544 = vrot.slane %v134, %v1543
    %v1545 = vlaneseq
    %v1546 = vshrl.u32 %v1545, 7
    %v1547 = vsub.s32 5, %v1546
    %v1548 = vrot.slane %v134, %v1547
    %v1549 = vlaneseq
    %v1550 = vshrl.u32 %v1549, 7
    %v1551 = vsub.s32 6, %v1550
    %v1552 = vrot.slane %v134, %v1551
    %v1553 = vlaneseq
    %v1554 = vshrl.u32 %v1553, 7
    %v1555 = vsub.s32 7, %v1554
    %v1556 = vrot.slane %v134, %v1555
    %v1557 = vlaneseq
    %v1558 = vshrl.u32 %v1557, 7
    %v1559 = vsub.s32 0, %v1558
    %v1560 = vrot.slane %v135, %v1559
    %v1561 = vlaneseq
    %v1562 = vshrl.u32 %v1561, 7
    %v1563 = vsub.s32 1, %v1562
    %v1564 = vrot.slane %v135, %v1563
    %v1565 = vlaneseq
    %v1566 = vshrl.u32 %v1565, 7
    %v1567 = vsub.s32 2, %v1566
    %v1568 = vrot.slane %v135, %v1567
    %v1580 = vmul.f32 %v1060, %v1528
    %v1581 = vmul.f32 %v1062, %v1532
    %v1582 = vmul.f32 %v1149, %v1536
    %v1583 = vmul.f32 %v1151, %v1540
    %v1584 = vmul.f32 %v1238, %v1544
    %v1585 = vmul.f32 %v1240, %v1548
    %v1586 = vmul.f32 %v1327, %v1552
    %v1587 = vmul.f32 %v1329, %v1556
    %v1588 = vmul.f32 %v1416, %v1560
    %v1589 = vmul.f32 %v1418, %v1564
    %v1590 = vmul.f32 %v1505, %v1568
    %v1591 = vmul.f32 %v1066, %v1528
    %v1592 = vmul.f32 %v1068, %v1532
    %v1593 = vmul.f32 %v1155, %v1536
    %v1594 = vmul.f32 %v1157, %v1540
    %v1595 = vmul.f32 %v1244, %v1544
    %v1596 = vmul.f32 %v1246, %v1548
    %v1597 = vmul.f32 %v1333, %v1552
    %v1598 = vmul.f32 %v1335, %v1556
    %v1599 = vmul.f32 %v1422, %v1560
    %v1600 = vmul.f32 %v1424, %v1564
    %v1601 = vmul.f32 %v1510, %v1568
    %v1602 = vmul.f32 %v1072, %v1528
    %v1603 = vmul.f32 %v1074, %v1532
    %v1604 = vmul.f32 %v1161, %v1536
    %v1605 = vmul.f32 %v1163, %v1540
    %v1606 = vmul.f32 %v1250, %v1544
    %v1607 = vmul.f32 %v1252, %v1548
    %v1608 = vmul.f32 %v1339, %v1552
    %v1609 = vmul.f32 %v1341, %v1556
    %v1610 = vmul.f32 %v1428, %v1560
    %v1611 = vmul.f32 %v1430, %v1564
    %v1612 = vmul.f32 %v1515, %v1568
    %v1613 = vmul.f32 %v1078, %v1528
    %v1614 = vmul.f32 %v1080, %v1532
    %v1615 = vmul.f32 %v1167, %v1536
    %v1616 = vmul.f32 %v1169, %v1540
    %v1617 = vmul.f32 %v1256, %v1544
    %v1618 = vmul.f32 %v1258, %v1548
    %v1619 = vmul.f32 %v1345, %v1552
    %v1620 = vmul.f32 %v1347, %v1556
    %v1621 = vmul.f32 %v1434, %v1560
    %v1622 = vmul.f32 %v1436, %v1564
    %v1623 = vmul.f32 %v1520, %v1568
    %s1624 = sld [smem:[#allocation4]]
    %vm1625 = vcmp.ge.f32.partialorder %v1580, 0.0
    %vm1626 = vcmp.ge.f32.partialorder %v1581, 0.0
    %vm1627 = vcmp.ge.f32.partialorder %v1582, 0.0
    %vm1628 = vcmp.ge.f32.partialorder %v1583, 0.0
    %vm1629 = vcmp.ge.f32.partialorder %v1584, 0.0
    %vm1630 = vcmp.ge.f32.partialorder %v1585, 0.0
    %vm1631 = vcmp.ge.f32.partialorder %v1586, 0.0
    %vm1632 = vcmp.ge.f32.partialorder %v1587, 0.0
    %vm1633 = vcmp.ge.f32.partialorder %v1588, 0.0
    %vm1634 = vcmp.ge.f32.partialorder %v1589, 0.0
    %vm1635 = vcmp.ge.f32.partialorder %v1590, 0.0
    %vm1636 = vcmp.ge.f32.partialorder %v1591, 0.0
    %vm1637 = vcmp.ge.f32.partialorder %v1592, 0.0
    %vm1638 = vcmp.ge.f32.partialorder %v1593, 0.0
    %vm1639 = vcmp.ge.f32.partialorder %v1594, 0.0
    %vm1640 = vcmp.ge.f32.partialorder %v1595, 0.0
    %vm1641 = vcmp.ge.f32.partialorder %v1596, 0.0
    %vm1642 = vcmp.ge.f32.partialorder %v1597, 0.0
    %vm1643 = vcmp.ge.f32.partialorder %v1598, 0.0
    %vm1644 = vcmp.ge.f32.partialorder %v1599, 0.0
    %vm1645 = vcmp.ge.f32.partialorder %v1600, 0.0
    %vm1646 = vcmp.ge.f32.partialorder %v1601, 0.0
    %vm1647 = vcmp.ge.f32.partialorder %v1602, 0.0
    %vm1648 = vcmp.ge.f32.partialorder %v1603, 0.0
    %vm1649 = vcmp.ge.f32.partialorder %v1604, 0.0
    %vm1650 = vcmp.ge.f32.partialorder %v1605, 0.0
    %vm1651 = vcmp.ge.f32.partialorder %v1606, 0.0
    %vm1652 = vcmp.ge.f32.partialorder %v1607, 0.0
    %vm1653 = vcmp.ge.f32.partialorder %v1608, 0.0
    %vm1654 = vcmp.ge.f32.partialorder %v1609, 0.0
    %vm1655 = vcmp.ge.f32.partialorder %v1610, 0.0
    %vm1656 = vcmp.ge.f32.partialorder %v1611, 0.0
    %vm1657 = vcmp.ge.f32.partialorder %v1612, 0.0
    %vm1658 = vcmp.ge.f32.partialorder %v1613, 0.0
    %vm1659 = vcmp.ge.f32.partialorder %v1614, 0.0
    %vm1660 = vcmp.ge.f32.partialorder %v1615, 0.0
    %vm1661 = vcmp.ge.f32.partialorder %v1616, 0.0
    %vm1662 = vcmp.ge.f32.partialorder %v1617, 0.0
    %vm1663 = vcmp.ge.f32.partialorder %v1618, 0.0
    %vm1664 = vcmp.ge.f32.partialorder %v1619, 0.0
    %vm1665 = vcmp.ge.f32.partialorder %v1620, 0.0
    %vm1666 = vcmp.ge.f32.partialorder %v1621, 0.0
    %vm1667 = vcmp.ge.f32.partialorder %v1622, 0.0
    %vm1668 = vcmp.ge.f32.partialorder %v1623, 0.0
    %v1669 = vstv %s1624
    %v1670 = vmul.f32 %v1669, %v1580
    %v1671 = vmul.f32 %v1669, %v1581
    %v1672 = vmul.f32 %v1669, %v1582
    %v1673 = vmul.f32 %v1669, %v1583
    %v1674 = vmul.f32 %v1669, %v1584
    %v1675 = vmul.f32 %v1669, %v1585
    %v1676 = vmul.f32 %v1669, %v1586
    %v1677 = vmul.f32 %v1669, %v1587
    %v1678 = vmul.f32 %v1669, %v1588
    %v1679 = vmul.f32 %v1669, %v1589
    %v1680 = vmul.f32 %v1669, %v1590
    %v1681 = vmul.f32 %v1669, %v1591
    %v1682 = vmul.f32 %v1669, %v1592
    %v1683 = vmul.f32 %v1669, %v1593
    %v1684 = vmul.f32 %v1669, %v1594
    %v1685 = vmul.f32 %v1669, %v1595
    %v1686 = vmul.f32 %v1669, %v1596
    %v1687 = vmul.f32 %v1669, %v1597
    %v1688 = vmul.f32 %v1669, %v1598
    %v1689 = vmul.f32 %v1669, %v1599
    %v1690 = vmul.f32 %v1669, %v1600
    %v1691 = vmul.f32 %v1669, %v1601
    %v1692 = vmul.f32 %v1669, %v1602
    %v1693 = vmul.f32 %v1669, %v1603
    %v1694 = vmul.f32 %v1669, %v1604
    %v1695 = vmul.f32 %v1669, %v1605
    %v1696 = vmul.f32 %v1669, %v1606
    %v1697 = vmul.f32 %v1669, %v1607
    %v1698 = vmul.f32 %v1669, %v1608
    %v1699 = vmul.f32 %v1669, %v1609
    %v1700 = vmul.f32 %v1669, %v1610
    %v1701 = vmul.f32 %v1669, %v1611
    %v1702 = vmul.f32 %v1669, %v1612
    %v1703 = vmul.f32 %v1669, %v1613
    %v1704 = vmul.f32 %v1669, %v1614
    %v1705 = vmul.f32 %v1669, %v1615
    %v1706 = vmul.f32 %v1669, %v1616
    %v1707 = vmul.f32 %v1669, %v1617
    %v1708 = vmul.f32 %v1669, %v1618
    %v1709 = vmul.f32 %v1669, %v1619
    %v1710 = vmul.f32 %v1669, %v1620
    %v1711 = vmul.f32 %v1669, %v1621
    %v1712 = vmul.f32 %v1669, %v1622
    %v1713 = vmul.f32 %v1669, %v1623
    %v1714 = vsel %vm1625, %v1580, %v1670
    %v1715 = vsel %vm1626, %v1581, %v1671
    %v1716 = vsel %vm1627, %v1582, %v1672
    %v1717 = vsel %vm1628, %v1583, %v1673
    %v1718 = vsel %vm1629, %v1584, %v1674
    %v1719 = vsel %vm1630, %v1585, %v1675
    %v1720 = vsel %vm1631, %v1586, %v1676
    %v1721 = vsel %vm1632, %v1587, %v1677
    %v1722 = vsel %vm1633, %v1588, %v1678
    %v1723 = vsel %vm1634, %v1589, %v1679
    %v1724 = vsel %vm1635, %v1590, %v1680
    %v1725 = vsel %vm1636, %v1591, %v1681
    %v1726 = vsel %vm1637, %v1592, %v1682
    %v1727 = vsel %vm1638, %v1593, %v1683
    %v1728 = vsel %vm1639, %v1594, %v1684
    %v1729 = vsel %vm1640, %v1595, %v1685
    %v1730 = vsel %vm1641, %v1596, %v1686
    %v1731 = vsel %vm1642, %v1597, %v1687
    %v1732 = vsel %vm1643, %v1598, %v1688
    %v1733 = vsel %vm1644, %v1599, %v1689
    %v1734 = vsel %vm1645, %v1600, %v1690
    %v1735 = vsel %vm1646, %v1601, %v1691
    %v1736 = vsel %vm1647, %v1602, %v1692
    %v1737 = vsel %vm1648, %v1603, %v1693
    %v1738 = vsel %vm1649, %v1604, %v1694
    %v1739 = vsel %vm1650, %v1605, %v1695
    %v1740 = vsel %vm1651, %v1606, %v1696
    %v1741 = vsel %vm1652, %v1607, %v1697
    %v1742 = vsel %vm1653, %v1608, %v1698
    %v1743 = vsel %vm1654, %v1609, %v1699
    %v1744 = vsel %vm1655, %v1610, %v1700
    %v1745 = vsel %vm1656, %v1611, %v1701
    %v1746 = vsel %vm1657, %v1612, %v1702
    %v1747 = vsel %vm1658, %v1613, %v1703
    %v1748 = vsel %vm1659, %v1614, %v1704
    %v1749 = vsel %vm1660, %v1615, %v1705
    %v1750 = vsel %vm1661, %v1616, %v1706
    %v1751 = vsel %vm1662, %v1617, %v1707
    %v1752 = vsel %vm1663, %v1618, %v1708
    %v1753 = vsel %vm1664, %v1619, %v1709
    %v1754 = vsel %vm1665, %v1620, %v1710
    %v1755 = vsel %vm1666, %v1621, %v1711
    %v1756 = vsel %vm1667, %v1622, %v1712
    %v1757 = vsel %vm1668, %v1623, %v1713
    %1758 = vst [vmem:[#allocation2 + $0x8] sm:$0xff] %v1714
    %1759 = vst [vmem:[#allocation2 + $0x10] sm:$0xff] %v1715
    %1760 = vst [vmem:[#allocation2 + $0x18] sm:$0xff] %v1716
    %1761 = vst [vmem:[#allocation2 + $0x20] sm:$0xff] %v1717
    %1762 = vst [vmem:[#allocation2 + $0x28] sm:$0xff] %v1718
    %1763 = vst [vmem:[#allocation2 + $0x30] sm:$0xff] %v1719
    %1764 = vst [vmem:[#allocation2 + $0x38] sm:$0xff] %v1720
    %1765 = vst [vmem:[#allocation2 + $0x40] sm:$0xff] %v1721
    %1766 = vst [vmem:[#allocation2 + $0x48] sm:$0xff] %v1722
    %1767 = vst [vmem:[#allocation2 + $0x50] sm:$0xff] %v1723
    %1768 = vst [vmem:[#allocation2 + $0x58] sm:$0xff] %v1724
    %1769 = vst [vmem:[#allocation2 + $0x70] sm:$0xff] %v1725
    %1770 = vst [vmem:[#allocation2 + $0x78] sm:$0xff] %v1726
    %1771 = vst [vmem:[#allocation2 + $0x80] sm:$0xff] %v1727
    %1772 = vst [vmem:[#allocation2 + $0x88] sm:$0xff] %v1728
    %1773 = vst [vmem:[#allocation2 + $0x90] sm:$0xff] %v1729
    %1774 = vst [vmem:[#allocation2 + $0x98] sm:$0xff] %v1730
    %1775 = vst [vmem:[#allocation2 + $0xa0] sm:$0xff] %v1731
    %1776 = vst [vmem:[#allocation2 + $0xa8] sm:$0xff] %v1732
    %1777 = vst [vmem:[#allocation2 + $0xb0] sm:$0xff] %v1733
    %1778 = vst [vmem:[#allocation2 + $0xb8] sm:$0xff] %v1734
    %1779 = vst [vmem:[#allocation2 + $0xc0] sm:$0xff] %v1735
    %1780 = vst [vmem:[#allocation2 + $0xd8] sm:$0xff] %v1736
    %1781 = vst [vmem:[#allocation2 + $0xe0] sm:$0xff] %v1737
    %1782 = vst [vmem:[#allocation2 + $0xe8] sm:$0xff] %v1738
    %1783 = vst [vmem:[#allocation2 + $0xf0] sm:$0xff] %v1739
    %1784 = vst [vmem:[#allocation2 + $0xf8] sm:$0xff] %v1740
    %1785 = vst [vmem:[#allocation2 + $0x100] sm:$0xff] %v1741
    %1786 = vst [vmem:[#allocation2 + $0x108] sm:$0xff] %v1742
    %1787 = vst [vmem:[#allocation2 + $0x110] sm:$0xff] %v1743
    %1788 = vst [vmem:[#allocation2 + $0x118] sm:$0xff] %v1744
    %1789 = vst [vmem:[#allocation2 + $0x120] sm:$0xff] %v1745
    %1790 = vst [vmem:[#allocation2 + $0x128] sm:$0xff] %v1746
    %1791 = vst [vmem:[#allocation2 + $0x140] sm:$0xff] %v1747
    %1792 = vst [vmem:[#allocation2 + $0x148] sm:$0xff] %v1748
    %1793 = vst [vmem:[#allocation2 + $0x150] sm:$0xff] %v1749
    %1794 = vst [vmem:[#allocation2 + $0x158] sm:$0xff] %v1750
    %1795 = vst [vmem:[#allocation2 + $0x160] sm:$0xff] %v1751
    %1796 = vst [vmem:[#allocation2 + $0x168] sm:$0xff] %v1752
    %1797 = vst [vmem:[#allocation2 + $0x170] sm:$0xff] %v1753
    %1798 = vst [vmem:[#allocation2 + $0x178] sm:$0xff] %v1754
    %1799 = vst [vmem:[#allocation2 + $0x180] sm:$0xff] %v1755
    %1800 = vst [vmem:[#allocation2 + $0x188] sm:$0xff] %v1756
    %1801 = vst [vmem:[#allocation2 + $0x190] sm:$0xff] %v1757
    %v1802 = vld [vmem:[#allocation2] sm:$0xff]
    %v1803 = vld [vmem:[#allocation2 + $0x8] sm:$0xff]
    %v1804 = vld [vmem:[#allocation2 + $0x10] sm:$0xff]
    %v1805 = vld [vmem:[#allocation2 + $0x18] sm:$0xff]
    %v1806 = vld [vmem:[#allocation2 + $0x20] sm:$0xff]
    %v1807 = vld [vmem:[#allocation2 + $0x28] sm:$0xff]
    %v1808 = vld [vmem:[#allocation2 + $0x30] sm:$0xff]
    %v1809 = vld [vmem:[#allocation2 + $0x38] sm:$0xff]
    %v1810 = vld [vmem:[#allocation2 + $0x40] sm:$0xff]
    %v1811 = vld [vmem:[#allocation2 + $0x48] sm:$0xff]
    %v1812 = vld [vmem:[#allocation2 + $0x50] sm:$0xff]
    %v1813 = vld [vmem:[#allocation2 + $0x58] sm:$0xff]
    %v1814 = vld [vmem:[#allocation2 + $0x68] sm:$0xff]
    %v1815 = vld [vmem:[#allocation2 + $0x70] sm:$0xff]
    %v1816 = vld [vmem:[#allocation2 + $0x78] sm:$0xff]
    %v1817 = vld [vmem:[#allocation2 + $0x80] sm:$0xff]
    %v1818 = vld [vmem:[#allocation2 + $0x88] sm:$0xff]
    %v1819 = vld [vmem:[#allocation2 + $0x90] sm:$0xff]
    %v1820 = vld [vmem:[#allocation2 + $0x98] sm:$0xff]
    %v1821 = vld [vmem:[#allocation2 + $0xa0] sm:$0xff]
    %v1822 = vld [vmem:[#allocation2 + $0xa8] sm:$0xff]
    %v1823 = vld [vmem:[#allocation2 + $0xb0] sm:$0xff]
    %v1824 = vld [vmem:[#allocation2 + $0xb8] sm:$0xff]
    %v1825 = vld [vmem:[#allocation2 + $0xc0] sm:$0xff]
    %v1826 = vld [vmem:[#allocation2 + $0xd0] sm:$0xff]
    %v1827 = vld [vmem:[#allocation2 + $0xd8] sm:$0xff]
    %v1828 = vld [vmem:[#allocation2 + $0xe0] sm:$0xff]
    %v1829 = vld [vmem:[#allocation2 + $0xe8] sm:$0xff]
    %v1830 = vld [vmem:[#allocation2 + $0xf0] sm:$0xff]
    %v1831 = vld [vmem:[#allocation2 + $0xf8] sm:$0xff]
    %v1832 = vld [vmem:[#allocation2 + $0x100] sm:$0xff]
    %v1833 = vld [vmem:[#allocation2 + $0x108] sm:$0xff]
    %v1834 = vld [vmem:[#allocation2 + $0x110] sm:$0xff]
    %v1835 = vld [vmem:[#allocation2 + $0x118] sm:$0xff]
    %v1836 = vld [vmem:[#allocation2 + $0x120] sm:$0xff]
    %v1837 = vld [vmem:[#allocation2 + $0x128] sm:$0xff]
    %v1838 = vld [vmem:[#allocation2 + $0x138] sm:$0xff]
    %v1839 = vld [vmem:[#allocation2 + $0x140] sm:$0xff]
    %v1840 = vld [vmem:[#allocation2 + $0x148] sm:$0xff]
    %v1841 = vld [vmem:[#allocation2 + $0x150] sm:$0xff]
    %v1842 = vld [vmem:[#allocation2 + $0x158] sm:$0xff]
    %v1843 = vld [vmem:[#allocation2 + $0x160] sm:$0xff]
    %v1844 = vld [vmem:[#allocation2 + $0x168] sm:$0xff]
    %v1845 = vld [vmem:[#allocation2 + $0x170] sm:$0xff]
    %v1846 = vld [vmem:[#allocation2 + $0x178] sm:$0xff]
    %v1847 = vld [vmem:[#allocation2 + $0x180] sm:$0xff]
    %v1848 = vld [vmem:[#allocation2 + $0x188] sm:$0xff]
    %v1849 = vld [vmem:[#allocation2 + $0x190] sm:$0xff]
    %1898 = vrot.lane.b32.xlu0 %v1802, 19
    %v1899 = vpop.permute.xlu0 %1898
    %1900 = vrot.lane.b32.xlu0 %v1803, 19
    %v1901 = vpop.permute.xlu0 %1900
    %1902 = vrot.lane.b32.xlu0 %v1804, 19
    %v1903 = vpop.permute.xlu0 %1902
    %1904 = vrot.lane.b32.xlu0 %v1805, 19
    %v1905 = vpop.permute.xlu0 %1904
    %1906 = vrot.lane.b32.xlu0 %v1806, 19
    %v1907 = vpop.permute.xlu0 %1906
    %1908 = vrot.lane.b32.xlu0 %v1807, 19
    %v1909 = vpop.permute.xlu0 %1908
    %1910 = vrot.lane.b32.xlu0 %v1808, 19
    %v1911 = vpop.permute.xlu0 %1910
    %1912 = vrot.lane.b32.xlu0 %v1809, 19
    %v1913 = vpop.permute.xlu0 %1912
    %1914 = vrot.lane.b32.xlu0 %v1810, 19
    %v1915 = vpop.permute.xlu0 %1914
    %1916 = vrot.lane.b32.xlu0 %v1811, 19
    %v1917 = vpop.permute.xlu0 %1916
    %1918 = vrot.lane.b32.xlu0 %v1812, 19
    %v1919 = vpop.permute.xlu0 %1918
    %1920 = vrot.lane.b32.xlu0 %v1813, 19
    %v1921 = vpop.permute.xlu0 %1920
    %1922 = vrot.lane.b32.xlu0 %v1814, 19
    %v1923 = vpop.permute.xlu0 %1922
    %1924 = vrot.lane.b32.xlu0 %v1815, 19
    %v1925 = vpop.permute.xlu0 %1924
    %1926 = vrot.lane.b32.xlu0 %v1816, 19
    %v1927 = vpop.permute.xlu0 %1926
    %1928 = vrot.lane.b32.xlu0 %v1817, 19
    %v1929 = vpop.permute.xlu0 %1928
    %1930 = vrot.lane.b32.xlu0 %v1818, 19
    %v1931 = vpop.permute.xlu0 %1930
    %1932 = vrot.lane.b32.xlu0 %v1819, 19
    %v1933 = vpop.permute.xlu0 %1932
    %1934 = vrot.lane.b32.xlu0 %v1820, 19
    %v1935 = vpop.permute.xlu0 %1934
    %1936 = vrot.lane.b32.xlu0 %v1821, 19
    %v1937 = vpop.permute.xlu0 %1936
    %1938 = vrot.lane.b32.xlu0 %v1822, 19
    %v1939 = vpop.permute.xlu0 %1938
    %1940 = vrot.lane.b32.xlu0 %v1823, 19
    %v1941 = vpop.permute.xlu0 %1940
    %1942 = vrot.lane.b32.xlu0 %v1824, 19
    %v1943 = vpop.permute.xlu0 %1942
    %1944 = vrot.lane.b32.xlu0 %v1825, 19
    %v1945 = vpop.permute.xlu0 %1944
    %1946 = vrot.lane.b32.xlu0 %v1826, 19
    %v1947 = vpop.permute.xlu0 %1946
    %1948 = vrot.lane.b32.xlu0 %v1827, 19
    %v1949 = vpop.permute.xlu0 %1948
    %1950 = vrot.lane.b32.xlu0 %v1828, 19
    %v1951 = vpop.permute.xlu0 %1950
    %1952 = vrot.lane.b32.xlu0 %v1829, 19
    %v1953 = vpop.permute.xlu0 %1952
    %1954 = vrot.lane.b32.xlu0 %v1830, 19
    %v1955 = vpop.permute.xlu0 %1954
    %1956 = vrot.lane.b32.xlu0 %v1831, 19
    %v1957 = vpop.permute.xlu0 %1956
    %1958 = vrot.lane.b32.xlu0 %v1832, 19
    %v1959 = vpop.permute.xlu0 %1958
    %1960 = vrot.lane.b32.xlu0 %v1833, 19
    %v1961 = vpop.permute.xlu0 %1960
    %1962 = vrot.lane.b32.xlu0 %v1834, 19
    %v1963 = vpop.permute.xlu0 %1962
    %1964 = vrot.lane.b32.xlu0 %v1835, 19
    %v1965 = vpop.permute.xlu0 %1964
    %1966 = vrot.lane.b32.xlu0 %v1836, 19
    %v1967 = vpop.permute.xlu0 %1966
    %1968 = vrot.lane.b32.xlu0 %v1837, 19
    %v1969 = vpop.permute.xlu0 %1968
    %1970 = vrot.lane.b32.xlu0 %v1838, 19
    %v1971 = vpop.permute.xlu0 %1970
    %1972 = vrot.lane.b32.xlu0 %v1839, 19
    %v1973 = vpop.permute.xlu0 %1972
    %1974 = vrot.lane.b32.xlu0 %v1840, 19
    %v1975 = vpop.permute.xlu0 %1974
    %1976 = vrot.lane.b32.xlu0 %v1841, 19
    %v1977 = vpop.permute.xlu0 %1976
    %1978 = vrot.lane.b32.xlu0 %v1842, 19
    %v1979 = vpop.permute.xlu0 %1978
    %1980 = vrot.lane.b32.xlu0 %v1843, 19
    %v1981 = vpop.permute.xlu0 %1980
    %1982 = vrot.lane.b32.xlu0 %v1844, 19
    %v1983 = vpop.permute.xlu0 %1982
    %1984 = vrot.lane.b32.xlu0 %v1845, 19
    %v1985 = vpop.permute.xlu0 %1984
    %1986 = vrot.lane.b32.xlu0 %v1846, 19
    %v1987 = vpop.permute.xlu0 %1986
    %1988 = vrot.lane.b32.xlu0 %v1847, 19
    %v1989 = vpop.permute.xlu0 %1988
    %1990 = vrot.lane.b32.xlu0 %v1848, 19
    %v1991 = vpop.permute.xlu0 %1990
    %1992 = vrot.lane.b32.xlu0 %v1849, 19
    %v1993 = vpop.permute.xlu0 %1992
    %v1994 = vsel %vm184, %v1899, %v1901
    %v1995 = vsel %vm184, %v1901, %v1903
    %v1996 = vsel %vm184, %v1903, %v1905
    %v1997 = vsel %vm184, %v1905, %v1907
    %v1998 = vsel %vm184, %v1907, %v1909
    %v1999 = vsel %vm184, %v1909, %v1911
    %v2000 = vsel %vm184, %v1911, %v1913
    %v2001 = vsel %vm184, %v1913, %v1915
    %v2002 = vsel %vm184, %v1915, %v1917
    %v2003 = vsel %vm184, %v1917, %v1919
    %v2004 = vsel %vm184, %v1919, %v1921
    %v2005 = vsel %vm184, %v1923, %v1925
    %v2006 = vsel %vm184, %v1925, %v1927
    %v2007 = vsel %vm184, %v1927, %v1929
    %v2008 = vsel %vm184, %v1929, %v1931
    %v2009 = vsel %vm184, %v1931, %v1933
    %v2010 = vsel %vm184, %v1933, %v1935
    %v2011 = vsel %vm184, %v1935, %v1937
    %v2012 = vsel %vm184, %v1937, %v1939
    %v2013 = vsel %vm184, %v1939, %v1941
    %v2014 = vsel %vm184, %v1941, %v1943
    %v2015 = vsel %vm184, %v1943, %v1945
    %v2016 = vsel %vm184, %v1947, %v1949
    %v2017 = vsel %vm184, %v1949, %v1951
    %v2018 = vsel %vm184, %v1951, %v1953
    %v2019 = vsel %vm184, %v1953, %v1955
    %v2020 = vsel %vm184, %v1955, %v1957
    %v2021 = vsel %vm184, %v1957, %v1959
    %v2022 = vsel %vm184, %v1959, %v1961
    %v2023 = vsel %vm184, %v1961, %v1963
    %v2024 = vsel %vm184, %v1963, %v1965
    %v2025 = vsel %vm184, %v1965, %v1967
    %v2026 = vsel %vm184, %v1967, %v1969
    %v2027 = vsel %vm184, %v1971, %v1973
    %v2028 = vsel %vm184, %v1973, %v1975
    %v2029 = vsel %vm184, %v1975, %v1977
    %v2030 = vsel %vm184, %v1977, %v1979
    %v2031 = vsel %vm184, %v1979, %v1981
    %v2032 = vsel %vm184, %v1981, %v1983
    %v2033 = vsel %vm184, %v1983, %v1985
    %v2034 = vsel %vm184, %v1985, %v1987
    %v2035 = vsel %vm184, %v1987, %v1989
    %v2036 = vsel %vm184, %v1989, %v1991
    %v2037 = vsel %vm184, %v1991, %v1993
    %2082 = vst [vmem:[#allocation3] sm:$0xff] %v1994
    %2083 = vst [vmem:[#allocation3 + $0x8] sm:$0xff] %v1995
    %2084 = vst [vmem:[#allocation3 + $0x10] sm:$0xff] %v1996
    %2085 = vst [vmem:[#allocation3 + $0x18] sm:$0xff] %v1997
    %2086 = vst [vmem:[#allocation3 + $0x20] sm:$0xff] %v1998
    %2087 = vst [vmem:[#allocation3 + $0x28] sm:$0xff] %v1999
    %2088 = vst [vmem:[#allocation3 + $0x30] sm:$0xff] %v2000
    %2089 = vst [vmem:[#allocation3 + $0x38] sm:$0xff] %v2001
    %2090 = vst [vmem:[#allocation3 + $0x40] sm:$0xff] %v2002
    %2091 = vst [vmem:[#allocation3 + $0x48] sm:$0xff] %v2003
    %2092 = vst [vmem:[#allocation3 + $0x50] sm:$0xff] %v2004
    %2093 = vst [vmem:[#allocation3 + $0x58] sm:$0xff] %v2005
    %2094 = vst [vmem:[#allocation3 + $0x60] sm:$0xff] %v2006
    %2095 = vst [vmem:[#allocation3 + $0x68] sm:$0xff] %v2007
    %2096 = vst [vmem:[#allocation3 + $0x70] sm:$0xff] %v2008
    %2097 = vst [vmem:[#allocation3 + $0x78] sm:$0xff] %v2009
    %2098 = vst [vmem:[#allocation3 + $0x80] sm:$0xff] %v2010
    %2099 = vst [vmem:[#allocation3 + $0x88] sm:$0xff] %v2011
    %2100 = vst [vmem:[#allocation3 + $0x90] sm:$0xff] %v2012
    %2101 = vst [vmem:[#allocation3 + $0x98] sm:$0xff] %v2013
    %2102 = vst [vmem:[#allocation3 + $0xa0] sm:$0xff] %v2014
    %2103 = vst [vmem:[#allocation3 + $0xa8] sm:$0xff] %v2015
    %2104 = vst [vmem:[#allocation3 + $0xb0] sm:$0xff] %v2016
    %2105 = vst [vmem:[#allocation3 + $0xb8] sm:$0xff] %v2017
    %2106 = vst [vmem:[#allocation3 + $0xc0] sm:$0xff] %v2018
    %2107 = vst [vmem:[#allocation3 + $0xc8] sm:$0xff] %v2019
    %2108 = vst [vmem:[#allocation3 + $0xd0] sm:$0xff] %v2020
    %2109 = vst [vmem:[#allocation3 + $0xd8] sm:$0xff] %v2021
    %2110 = vst [vmem:[#allocation3 + $0xe0] sm:$0xff] %v2022
    %2111 = vst [vmem:[#allocation3 + $0xe8] sm:$0xff] %v2023
    %2112 = vst [vmem:[#allocation3 + $0xf0] sm:$0xff] %v2024
    %2113 = vst [vmem:[#allocation3 + $0xf8] sm:$0xff] %v2025
    %2114 = vst [vmem:[#allocation3 + $0x100] sm:$0xff] %v2026
    %2115 = vst [vmem:[#allocation3 + $0x108] sm:$0xff] %v2027
    %2116 = vst [vmem:[#allocation3 + $0x110] sm:$0xff] %v2028
    %2117 = vst [vmem:[#allocation3 + $0x118] sm:$0xff] %v2029
    %2118 = vst [vmem:[#allocation3 + $0x120] sm:$0xff] %v2030
    %2119 = vst [vmem:[#allocation3 + $0x128] sm:$0xff] %v2031
    %2120 = vst [vmem:[#allocation3 + $0x130] sm:$0xff] %v2032
    %2121 = vst [vmem:[#allocation3 + $0x138] sm:$0xff] %v2033
    %2122 = vst [vmem:[#allocation3 + $0x140] sm:$0xff] %v2034
    %2123 = vst [vmem:[#allocation3 + $0x148] sm:$0xff] %v2035
    %2124 = vst [vmem:[#allocation3 + $0x150] sm:$0xff] %v2036
    %2125 = vst [vmem:[#allocation3 + $0x158] sm:$0xff] %v2037
    %v2126 = vld [vmem:[#allocation2] sm:$0xff]
    %v2127 = vld [vmem:[#allocation2 + $0x8] sm:$0xff]
    %v2128 = vld [vmem:[#allocation2 + $0x10] sm:$0xff]
    %v2129 = vld [vmem:[#allocation2 + $0x18] sm:$0xff]
    %v2130 = vld [vmem:[#allocation2 + $0x20] sm:$0xff]
    %v2131 = vld [vmem:[#allocation2 + $0x28] sm:$0xff]
    %v2132 = vld [vmem:[#allocation2 + $0x30] sm:$0xff]
    %v2133 = vld [vmem:[#allocation2 + $0x38] sm:$0xff]
    %v2134 = vld [vmem:[#allocation2 + $0x40] sm:$0xff]
    %v2135 = vld [vmem:[#allocation2 + $0x48] sm:$0xff]
    %v2136 = vld [vmem:[#allocation2 + $0x50] sm:$0xff]
    %v2137 = vld [vmem:[#allocation2 + $0x58] sm:$0xff]
    %v2138 = vld [vmem:[#allocation2 + $0x68] sm:$0xff]
    %v2139 = vld [vmem:[#allocation2 + $0x70] sm:$0xff]
    %v2140 = vld [vmem:[#allocation2 + $0x78] sm:$0xff]
    %v2141 = vld [vmem:[#allocation2 + $0x80] sm:$0xff]
    %v2142 = vld [vmem:[#allocation2 + $0x88] sm:$0xff]
    %v2143 = vld [vmem:[#allocation2 + $0x90] sm:$0xff]
    %v2144 = vld [vmem:[#allocation2 + $0x98] sm:$0xff]
    %v2145 = vld [vmem:[#allocation2 + $0xa0] sm:$0xff]
    %v2146 = vld [vmem:[#allocation2 + $0xa8] sm:$0xff]
    %v2147 = vld [vmem:[#allocation2 + $0xb0] sm:$0xff]
    %v2148 = vld [vmem:[#allocation2 + $0xb8] sm:$0xff]
    %v2149 = vld [vmem:[#allocation2 + $0xc0] sm:$0xff]
    %v2150 = vld [vmem:[#allocation2 + $0xd0] sm:$0xff]
    %v2151 = vld [vmem:[#allocation2 + $0xd8] sm:$0xff]
    %v2152 = vld [vmem:[#allocation2 + $0xe0] sm:$0xff]
    %v2153 = vld [vmem:[#allocation2 + $0xe8] sm:$0xff]
    %v2154 = vld [vmem:[#allocation2 + $0xf0] sm:$0xff]
    %v2155 = vld [vmem:[#allocation2 + $0xf8] sm:$0xff]
    %v2156 = vld [vmem:[#allocation2 + $0x100] sm:$0xff]
    %v2157 = vld [vmem:[#allocation2 + $0x108] sm:$0xff]
    %v2158 = vld [vmem:[#allocation2 + $0x110] sm:$0xff]
    %v2159 = vld [vmem:[#allocation2 + $0x118] sm:$0xff]
    %v2160 = vld [vmem:[#allocation2 + $0x120] sm:$0xff]
    %v2161 = vld [vmem:[#allocation2 + $0x128] sm:$0xff]
    %v2162 = vld [vmem:[#allocation2 + $0x138] sm:$0xff]
    %v2163 = vld [vmem:[#allocation2 + $0x140] sm:$0xff]
    %v2164 = vld [vmem:[#allocation2 + $0x148] sm:$0xff]
    %v2165 = vld [vmem:[#allocation2 + $0x150] sm:$0xff]
    %v2166 = vld [vmem:[#allocation2 + $0x158] sm:$0xff]
    %v2167 = vld [vmem:[#allocation2 + $0x160] sm:$0xff]
    %v2168 = vld [vmem:[#allocation2 + $0x168] sm:$0xff]
    %v2169 = vld [vmem:[#allocation2 + $0x170] sm:$0xff]
    %v2170 = vld [vmem:[#allocation2 + $0x178] sm:$0xff]
    %v2171 = vld [vmem:[#allocation2 + $0x180] sm:$0xff]
    %v2172 = vld [vmem:[#allocation2 + $0x188] sm:$0xff]
    %v2173 = vld [vmem:[#allocation2 + $0x190] sm:$0xff]
    %2222 = vrot.lane.b32.xlu0 %v2126, 18
    %v2223 = vpop.permute.xlu0 %2222
    %2224 = vrot.lane.b32.xlu0 %v2127, 18
    %v2225 = vpop.permute.xlu0 %2224
    %2226 = vrot.lane.b32.xlu0 %v2128, 18
    %v2227 = vpop.permute.xlu0 %2226
    %2228 = vrot.lane.b32.xlu0 %v2129, 18
    %v2229 = vpop.permute.xlu0 %2228
    %2230 = vrot.lane.b32.xlu0 %v2130, 18
    %v2231 = vpop.permute.xlu0 %2230
    %2232 = vrot.lane.b32.xlu0 %v2131, 18
    %v2233 = vpop.permute.xlu0 %2232
    %2234 = vrot.lane.b32.xlu0 %v2132, 18
    %v2235 = vpop.permute.xlu0 %2234
    %2236 = vrot.lane.b32.xlu0 %v2133, 18
    %v2237 = vpop.permute.xlu0 %2236
    %2238 = vrot.lane.b32.xlu0 %v2134, 18
    %v2239 = vpop.permute.xlu0 %2238
    %2240 = vrot.lane.b32.xlu0 %v2135, 18
    %v2241 = vpop.permute.xlu0 %2240
    %2242 = vrot.lane.b32.xlu0 %v2136, 18
    %v2243 = vpop.permute.xlu0 %2242
    %2244 = vrot.lane.b32.xlu0 %v2137, 18
    %v2245 = vpop.permute.xlu0 %2244
    %2246 = vrot.lane.b32.xlu0 %v2138, 18
    %v2247 = vpop.permute.xlu0 %2246
    %2248 = vrot.lane.b32.xlu0 %v2139, 18
    %v2249 = vpop.permute.xlu0 %2248
    %2250 = vrot.lane.b32.xlu0 %v2140, 18
    %v2251 = vpop.permute.xlu0 %2250
    %2252 = vrot.lane.b32.xlu0 %v2141, 18
    %v2253 = vpop.permute.xlu0 %2252
    %2254 = vrot.lane.b32.xlu0 %v2142, 18
    %v2255 = vpop.permute.xlu0 %2254
    %2256 = vrot.lane.b32.xlu0 %v2143, 18
    %v2257 = vpop.permute.xlu0 %2256
    %2258 = vrot.lane.b32.xlu0 %v2144, 18
    %v2259 = vpop.permute.xlu0 %2258
    %2260 = vrot.lane.b32.xlu0 %v2145, 18
    %v2261 = vpop.permute.xlu0 %2260
    %2262 = vrot.lane.b32.xlu0 %v2146, 18
    %v2263 = vpop.permute.xlu0 %2262
    %2264 = vrot.lane.b32.xlu0 %v2147, 18
    %v2265 = vpop.permute.xlu0 %2264
    %2266 = vrot.lane.b32.xlu0 %v2148, 18
    %v2267 = vpop.permute.xlu0 %2266
    %2268 = vrot.lane.b32.xlu0 %v2149, 18
    %v2269 = vpop.permute.xlu0 %2268
    %2270 = vrot.lane.b32.xlu0 %v2150, 18
    %v2271 = vpop.permute.xlu0 %2270
    %2272 = vrot.lane.b32.xlu0 %v2151, 18
    %v2273 = vpop.permute.xlu0 %2272
    %2274 = vrot.lane.b32.xlu0 %v2152, 18
    %v2275 = vpop.permute.xlu0 %2274
    %2276 = vrot.lane.b32.xlu0 %v2153, 18
    %v2277 = vpop.permute.xlu0 %2276
    %2278 = vrot.lane.b32.xlu0 %v2154, 18
    %v2279 = vpop.permute.xlu0 %2278
    %2280 = vrot.lane.b32.xlu0 %v2155, 18
    %v2281 = vpop.permute.xlu0 %2280
    %2282 = vrot.lane.b32.xlu0 %v2156, 18
    %v2283 = vpop.permute.xlu0 %2282
    %2284 = vrot.lane.b32.xlu0 %v2157, 18
    %v2285 = vpop.permute.xlu0 %2284
    %2286 = vrot.lane.b32.xlu0 %v2158, 18
    %v2287 = vpop.permute.xlu0 %2286
    %2288 = vrot.lane.b32.xlu0 %v2159, 18
    %v2289 = vpop.permute.xlu0 %2288
    %2290 = vrot.lane.b32.xlu0 %v2160, 18
    %v2291 = vpop.permute.xlu0 %2290
    %2292 = vrot.lane.b32.xlu0 %v2161, 18
    %v2293 = vpop.permute.xlu0 %2292
    %2294 = vrot.lane.b32.xlu0 %v2162, 18
    %v2295 = vpop.permute.xlu0 %2294
    %2296 = vrot.lane.b32.xlu0 %v2163, 18
    %v2297 = vpop.permute.xlu0 %2296
    %2298 = vrot.lane.b32.xlu0 %v2164, 18
    %v2299 = vpop.permute.xlu0 %2298
    %2300 = vrot.lane.b32.xlu0 %v2165, 18
    %v2301 = vpop.permute.xlu0 %2300
    %2302 = vrot.lane.b32.xlu0 %v2166, 18
    %v2303 = vpop.permute.xlu0 %2302
    %2304 = vrot.lane.b32.xlu0 %v2167, 18
    %v2305 = vpop.permute.xlu0 %2304
    %2306 = vrot.lane.b32.xlu0 %v2168, 18
    %v2307 = vpop.permute.xlu0 %2306
    %2308 = vrot.lane.b32.xlu0 %v2169, 18
    %v2309 = vpop.permute.xlu0 %2308
    %2310 = vrot.lane.b32.xlu0 %v2170, 18
    %v2311 = vpop.permute.xlu0 %2310
    %2312 = vrot.lane.b32.xlu0 %v2171, 18
    %v2313 = vpop.permute.xlu0 %2312
    %2314 = vrot.lane.b32.xlu0 %v2172, 18
    %v2315 = vpop.permute.xlu0 %2314
    %2316 = vrot.lane.b32.xlu0 %v2173, 18
    %v2317 = vpop.permute.xlu0 %2316
    %v2318 = vsel %vm278, %v2223, %v2225
    %v2319 = vsel %vm278, %v2225, %v2227
    %v2320 = vsel %vm278, %v2227, %v2229
    %v2321 = vsel %vm278, %v2229, %v2231
    %v2322 = vsel %vm278, %v2231, %v2233
    %v2323 = vsel %vm278, %v2233, %v2235
    %v2324 = vsel %vm278, %v2235, %v2237
    %v2325 = vsel %vm278, %v2237, %v2239
    %v2326 = vsel %vm278, %v2239, %v2241
    %v2327 = vsel %vm278, %v2241, %v2243
    %v2328 = vsel %vm278, %v2243, %v2245
    %v2329 = vsel %vm278, %v2247, %v2249
    %v2330 = vsel %vm278, %v2249, %v2251
    %v2331 = vsel %vm278, %v2251, %v2253
    %v2332 = vsel %vm278, %v2253, %v2255
    %v2333 = vsel %vm278, %v2255, %v2257
    %v2334 = vsel %vm278, %v2257, %v2259
    %v2335 = vsel %vm278, %v2259, %v2261
    %v2336 = vsel %vm278, %v2261, %v2263
    %v2337 = vsel %vm278, %v2263, %v2265
    %v2338 = vsel %vm278, %v2265, %v2267
    %v2339 = vsel %vm278, %v2267, %v2269
    %v2340 = vsel %vm278, %v2271, %v2273
    %v2341 = vsel %vm278, %v2273, %v2275
    %v2342 = vsel %vm278, %v2275, %v2277
    %v2343 = vsel %vm278, %v2277, %v2279
    %v2344 = vsel %vm278, %v2279, %v2281
    %v2345 = vsel %vm278, %v2281, %v2283
    %v2346 = vsel %vm278, %v2283, %v2285
    %v2347 = vsel %vm278, %v2285, %v2287
    %v2348 = vsel %vm278, %v2287, %v2289
    %v2349 = vsel %vm278, %v2289, %v2291
    %v2350 = vsel %vm278, %v2291, %v2293
    %v2351 = vsel %vm278, %v2295, %v2297
    %v2352 = vsel %vm278, %v2297, %v2299
    %v2353 = vsel %vm278, %v2299, %v2301
    %v2354 = vsel %vm278, %v2301, %v2303
    %v2355 = vsel %vm278, %v2303, %v2305
    %v2356 = vsel %vm278, %v2305, %v2307
    %v2357 = vsel %vm278, %v2307, %v2309
    %v2358 = vsel %vm278, %v2309, %v2311
    %v2359 = vsel %vm278, %v2311, %v2313
    %v2360 = vsel %vm278, %v2313, %v2315
    %v2361 = vsel %vm278, %v2315, %v2317
    %2406 = vst [vmem:[#allocation3 + $0x160] sm:$0xff] %v2318
    %2407 = vst [vmem:[#allocation3 + $0x168] sm:$0xff] %v2319
    %2408 = vst [vmem:[#allocation3 + $0x170] sm:$0xff] %v2320
    %2409 = vst [vmem:[#allocation3 + $0x178] sm:$0xff] %v2321
    %2410 = vst [vmem:[#allocation3 + $0x180] sm:$0xff] %v2322
    %2411 = vst [vmem:[#allocation3 + $0x188] sm:$0xff] %v2323
    %2412 = vst [vmem:[#allocation3 + $0x190] sm:$0xff] %v2324
    %2413 = vst [vmem:[#allocation3 + $0x198] sm:$0xff] %v2325
    %2414 = vst [vmem:[#allocation3 + $0x1a0] sm:$0xff] %v2326
    %2415 = vst [vmem:[#allocation3 + $0x1a8] sm:$0xff] %v2327
    %2416 = vst [vmem:[#allocation3 + $0x1b0] sm:$0xff] %v2328
    %2417 = vst [vmem:[#allocation3 + $0x1b8] sm:$0xff] %v2329
    %2418 = vst [vmem:[#allocation3 + $0x1c0] sm:$0xff] %v2330
    %2419 = vst [vmem:[#allocation3 + $0x1c8] sm:$0xff] %v2331
    %2420 = vst [vmem:[#allocation3 + $0x1d0] sm:$0xff] %v2332
    %2421 = vst [vmem:[#allocation3 + $0x1d8] sm:$0xff] %v2333
    %2422 = vst [vmem:[#allocation3 + $0x1e0] sm:$0xff] %v2334
    %2423 = vst [vmem:[#allocation3 + $0x1e8] sm:$0xff] %v2335
    %2424 = vst [vmem:[#allocation3 + $0x1f0] sm:$0xff] %v2336
    %2425 = vst [vmem:[#allocation3 + $0x1f8] sm:$0xff] %v2337
    %2426 = vst [vmem:[#allocation3 + $0x200] sm:$0xff] %v2338
    %2427 = vst [vmem:[#allocation3 + $0x208] sm:$0xff] %v2339
    %2428 = vst [vmem:[#allocation3 + $0x210] sm:$0xff] %v2340
    %2429 = vst [vmem:[#allocation3 + $0x218] sm:$0xff] %v2341
    %2430 = vst [vmem:[#allocation3 + $0x220] sm:$0xff] %v2342
    %2431 = vst [vmem:[#allocation3 + $0x228] sm:$0xff] %v2343
    %2432 = vst [vmem:[#allocation3 + $0x230] sm:$0xff] %v2344
    %2433 = vst [vmem:[#allocation3 + $0x238] sm:$0xff] %v2345
    %2434 = vst [vmem:[#allocation3 + $0x240] sm:$0xff] %v2346
    %2435 = vst [vmem:[#allocation3 + $0x248] sm:$0xff] %v2347
    %2436 = vst [vmem:[#allocation3 + $0x250] sm:$0xff] %v2348
    %2437 = vst [vmem:[#allocation3 + $0x258] sm:$0xff] %v2349
    %2438 = vst [vmem:[#allocation3 + $0x260] sm:$0xff] %v2350
    %2439 = vst [vmem:[#allocation3 + $0x268] sm:$0xff] %v2351
    %2440 = vst [vmem:[#allocation3 + $0x270] sm:$0xff] %v2352
    %2441 = vst [vmem:[#allocation3 + $0x278] sm:$0xff] %v2353
    %2442 = vst [vmem:[#allocation3 + $0x280] sm:$0xff] %v2354
    %2443 = vst [vmem:[#allocation3 + $0x288] sm:$0xff] %v2355
    %2444 = vst [vmem:[#allocation3 + $0x290] sm:$0xff] %v2356
    %2445 = vst [vmem:[#allocation3 + $0x298] sm:$0xff] %v2357
    %2446 = vst [vmem:[#allocation3 + $0x2a0] sm:$0xff] %v2358
    %2447 = vst [vmem:[#allocation3 + $0x2a8] sm:$0xff] %v2359
    %2448 = vst [vmem:[#allocation3 + $0x2b0] sm:$0xff] %v2360
    %2449 = vst [vmem:[#allocation3 + $0x2b8] sm:$0xff] %v2361
    %v2450 = vld [vmem:[#allocation2] sm:$0xff]
    %v2451 = vld [vmem:[#allocation2 + $0x8] sm:$0xff]
    %v2452 = vld [vmem:[#allocation2 + $0x10] sm:$0xff]
    %v2453 = vld [vmem:[#allocation2 + $0x18] sm:$0xff]
    %v2454 = vld [vmem:[#allocation2 + $0x20] sm:$0xff]
    %v2455 = vld [vmem:[#allocation2 + $0x28] sm:$0xff]
    %v2456 = vld [vmem:[#allocation2 + $0x30] sm:$0xff]
    %v2457 = vld [vmem:[#allocation2 + $0x38] sm:$0xff]
    %v2458 = vld [vmem:[#allocation2 + $0x40] sm:$0xff]
    %v2459 = vld [vmem:[#allocation2 + $0x48] sm:$0xff]
    %v2460 = vld [vmem:[#allocation2 + $0x50] sm:$0xff]
    %v2461 = vld [vmem:[#allocation2 + $0x58] sm:$0xff]
    %v2462 = vld [vmem:[#allocation2 + $0x68] sm:$0xff]
    %v2463 = vld [vmem:[#allocation2 + $0x70] sm:$0xff]
    %v2464 = vld [vmem:[#allocation2 + $0x78] sm:$0xff]
    %v2465 = vld [vmem:[#allocation2 + $0x80] sm:$0xff]
    %v2466 = vld [vmem:[#allocation2 + $0x88] sm:$0xff]
    %v2467 = vld [vmem:[#allocation2 + $0x90] sm:$0xff]
    %v2468 = vld [vmem:[#allocation2 + $0x98] sm:$0xff]
    %v2469 = vld [vmem:[#allocation2 + $0xa0] sm:$0xff]
    %v2470 = vld [vmem:[#allocation2 + $0xa8] sm:$0xff]
    %v2471 = vld [vmem:[#allocation2 + $0xb0] sm:$0xff]
    %v2472 = vld [vmem:[#allocation2 + $0xb8] sm:$0xff]
    %v2473 = vld [vmem:[#allocation2 + $0xc0] sm:$0xff]
    %v2474 = vld [vmem:[#allocation2 + $0xd0] sm:$0xff]
    %v2475 = vld [vmem:[#allocation2 + $0xd8] sm:$0xff]
    %v2476 = vld [vmem:[#allocation2 + $0xe0] sm:$0xff]
    %v2477 = vld [vmem:[#allocation2 + $0xe8] sm:$0xff]
    %v2478 = vld [vmem:[#allocation2 + $0xf0] sm:$0xff]
    %v2479 = vld [vmem:[#allocation2 + $0xf8] sm:$0xff]
    %v2480 = vld [vmem:[#allocation2 + $0x100] sm:$0xff]
    %v2481 = vld [vmem:[#allocation2 + $0x108] sm:$0xff]
    %v2482 = vld [vmem:[#allocation2 + $0x110] sm:$0xff]
    %v2483 = vld [vmem:[#allocation2 + $0x118] sm:$0xff]
    %v2484 = vld [vmem:[#allocation2 + $0x120] sm:$0xff]
    %v2485 = vld [vmem:[#allocation2 + $0x128] sm:$0xff]
    %v2486 = vld [vmem:[#allocation2 + $0x138] sm:$0xff]
    %v2487 = vld [vmem:[#allocation2 + $0x140] sm:$0xff]
    %v2488 = vld [vmem:[#allocation2 + $0x148] sm:$0xff]
    %v2489 = vld [vmem:[#allocation2 + $0x150] sm:$0xff]
    %v2490 = vld [vmem:[#allocation2 + $0x158] sm:$0xff]
    %v2491 = vld [vmem:[#allocation2 + $0x160] sm:$0xff]
    %v2492 = vld [vmem:[#allocation2 + $0x168] sm:$0xff]
    %v2493 = vld [vmem:[#allocation2 + $0x170] sm:$0xff]
    %v2494 = vld [vmem:[#allocation2 + $0x178] sm:$0xff]
    %v2495 = vld [vmem:[#allocation2 + $0x180] sm:$0xff]
    %v2496 = vld [vmem:[#allocation2 + $0x188] sm:$0xff]
    %v2497 = vld [vmem:[#allocation2 + $0x190] sm:$0xff]
    %2546 = vrot.lane.b32.xlu0 %v2450, 17
    %v2547 = vpop.permute.xlu0 %2546
    %2548 = vrot.lane.b32.xlu0 %v2451, 17
    %v2549 = vpop.permute.xlu0 %2548
    %2550 = vrot.lane.b32.xlu0 %v2452, 17
    %v2551 = vpop.permute.xlu0 %2550
    %2552 = vrot.lane.b32.xlu0 %v2453, 17
    %v2553 = vpop.permute.xlu0 %2552
    %2554 = vrot.lane.b32.xlu0 %v2454, 17
    %v2555 = vpop.permute.xlu0 %2554
    %2556 = vrot.lane.b32.xlu0 %v2455, 17
    %v2557 = vpop.permute.xlu0 %2556
    %2558 = vrot.lane.b32.xlu0 %v2456, 17
    %v2559 = vpop.permute.xlu0 %2558
    %2560 = vrot.lane.b32.xlu0 %v2457, 17
    %v2561 = vpop.permute.xlu0 %2560
    %2562 = vrot.lane.b32.xlu0 %v2458, 17
    %v2563 = vpop.permute.xlu0 %2562
    %2564 = vrot.lane.b32.xlu0 %v2459, 17
    %v2565 = vpop.permute.xlu0 %2564
    %2566 = vrot.lane.b32.xlu0 %v2460, 17
    %v2567 = vpop.permute.xlu0 %2566
    %2568 = vrot.lane.b32.xlu0 %v2461, 17
    %v2569 = vpop.permute.xlu0 %2568
    %2570 = vrot.lane.b32.xlu0 %v2462, 17
    %v2571 = vpop.permute.xlu0 %2570
    %2572 = vrot.lane.b32.xlu0 %v2463, 17
    %v2573 = vpop.permute.xlu0 %2572
    %2574 = vrot.lane.b32.xlu0 %v2464, 17
    %v2575 = vpop.permute.xlu0 %2574
    %2576 = vrot.lane.b32.xlu0 %v2465, 17
    %v2577 = vpop.permute.xlu0 %2576
    %2578 = vrot.lane.b32.xlu0 %v2466, 17
    %v2579 = vpop.permute.xlu0 %2578
    %2580 = vrot.lane.b32.xlu0 %v2467, 17
    %v2581 = vpop.permute.xlu0 %2580
    %2582 = vrot.lane.b32.xlu0 %v2468, 17
    %v2583 = vpop.permute.xlu0 %2582
    %2584 = vrot.lane.b32.xlu0 %v2469, 17
    %v2585 = vpop.permute.xlu0 %2584
    %2586 = vrot.lane.b32.xlu0 %v2470, 17
    %v2587 = vpop.permute.xlu0 %2586
    %2588 = vrot.lane.b32.xlu0 %v2471, 17
    %v2589 = vpop.permute.xlu0 %2588
    %2590 = vrot.lane.b32.xlu0 %v2472, 17
    %v2591 = vpop.permute.xlu0 %2590
    %2592 = vrot.lane.b32.xlu0 %v2473, 17
    %v2593 = vpop.permute.xlu0 %2592
    %2594 = vrot.lane.b32.xlu0 %v2474, 17
    %v2595 = vpop.permute.xlu0 %2594
    %2596 = vrot.lane.b32.xlu0 %v2475, 17
    %v2597 = vpop.permute.xlu0 %2596
    %2598 = vrot.lane.b32.xlu0 %v2476, 17
    %v2599 = vpop.permute.xlu0 %2598
    %2600 = vrot.lane.b32.xlu0 %v2477, 17
    %v2601 = vpop.permute.xlu0 %2600
    %2602 = vrot.lane.b32.xlu0 %v2478, 17
    %v2603 = vpop.permute.xlu0 %2602
    %2604 = vrot.lane.b32.xlu0 %v2479, 17
    %v2605 = vpop.permute.xlu0 %2604
    %2606 = vrot.lane.b32.xlu0 %v2480, 17
    %v2607 = vpop.permute.xlu0 %2606
    %2608 = vrot.lane.b32.xlu0 %v2481, 17
    %v2609 = vpop.permute.xlu0 %2608
    %2610 = vrot.lane.b32.xlu0 %v2482, 17
    %v2611 = vpop.permute.xlu0 %2610
    %2612 = vrot.lane.b32.xlu0 %v2483, 17
    %v2613 = vpop.permute.xlu0 %2612
    %2614 = vrot.lane.b32.xlu0 %v2484, 17
    %v2615 = vpop.permute.xlu0 %2614
    %2616 = vrot.lane.b32.xlu0 %v2485, 17
    %v2617 = vpop.permute.xlu0 %2616
    %2618 = vrot.lane.b32.xlu0 %v2486, 17
    %v2619 = vpop.permute.xlu0 %2618
    %2620 = vrot.lane.b32.xlu0 %v2487, 17
    %v2621 = vpop.permute.xlu0 %2620
    %2622 = vrot.lane.b32.xlu0 %v2488, 17
    %v2623 = vpop.permute.xlu0 %2622
    %2624 = vrot.lane.b32.xlu0 %v2489, 17
    %v2625 = vpop.permute.xlu0 %2624
    %2626 = vrot.lane.b32.xlu0 %v2490, 17
    %v2627 = vpop.permute.xlu0 %2626
    %2628 = vrot.lane.b32.xlu0 %v2491, 17
    %v2629 = vpop.permute.xlu0 %2628
    %2630 = vrot.lane.b32.xlu0 %v2492, 17
    %v2631 = vpop.permute.xlu0 %2630
    %2632 = vrot.lane.b32.xlu0 %v2493, 17
    %v2633 = vpop.permute.xlu0 %2632
    %2634 = vrot.lane.b32.xlu0 %v2494, 17
    %v2635 = vpop.permute.xlu0 %2634
    %2636 = vrot.lane.b32.xlu0 %v2495, 17
    %v2637 = vpop.permute.xlu0 %2636
    %2638 = vrot.lane.b32.xlu0 %v2496, 17
    %v2639 = vpop.permute.xlu0 %2638
    %2640 = vrot.lane.b32.xlu0 %v2497, 17
    %v2641 = vpop.permute.xlu0 %2640
    %v2642 = vsel %vm372, %v2547, %v2549
    %v2643 = vsel %vm372, %v2549, %v2551
    %v2644 = vsel %vm372, %v2551, %v2553
    %v2645 = vsel %vm372, %v2553, %v2555
    %v2646 = vsel %vm372, %v2555, %v2557
    %v2647 = vsel %vm372, %v2557, %v2559
    %v2648 = vsel %vm372, %v2559, %v2561
    %v2649 = vsel %vm372, %v2561, %v2563
    %v2650 = vsel %vm372, %v2563, %v2565
    %v2651 = vsel %vm372, %v2565, %v2567
    %v2652 = vsel %vm372, %v2567, %v2569
    %v2653 = vsel %vm372, %v2571, %v2573
    %v2654 = vsel %vm372, %v2573, %v2575
    %v2655 = vsel %vm372, %v2575, %v2577
    %v2656 = vsel %vm372, %v2577, %v2579
    %v2657 = vsel %vm372, %v2579, %v2581
    %v2658 = vsel %vm372, %v2581, %v2583
    %v2659 = vsel %vm372, %v2583, %v2585
    %v2660 = vsel %vm372, %v2585, %v2587
    %v2661 = vsel %vm372, %v2587, %v2589
    %v2662 = vsel %vm372, %v2589, %v2591
    %v2663 = vsel %vm372, %v2591, %v2593
    %v2664 = vsel %vm372, %v2595, %v2597
    %v2665 = vsel %vm372, %v2597, %v2599
    %v2666 = vsel %vm372, %v2599, %v2601
    %v2667 = vsel %vm372, %v2601, %v2603
    %v2668 = vsel %vm372, %v2603, %v2605
    %v2669 = vsel %vm372, %v2605, %v2607
    %v2670 = vsel %vm372, %v2607, %v2609
    %v2671 = vsel %vm372, %v2609, %v2611
    %v2672 = vsel %vm372, %v2611, %v2613
    %v2673 = vsel %vm372, %v2613, %v2615
    %v2674 = vsel %vm372, %v2615, %v2617
    %v2675 = vsel %vm372, %v2619, %v2621
    %v2676 = vsel %vm372, %v2621, %v2623
    %v2677 = vsel %vm372, %v2623, %v2625
    %v2678 = vsel %vm372, %v2625, %v2627
    %v2679 = vsel %vm372, %v2627, %v2629
    %v2680 = vsel %vm372, %v2629, %v2631
    %v2681 = vsel %vm372, %v2631, %v2633
    %v2682 = vsel %vm372, %v2633, %v2635
    %v2683 = vsel %vm372, %v2635, %v2637
    %v2684 = vsel %vm372, %v2637, %v2639
    %v2685 = vsel %vm372, %v2639, %v2641
    %2730 = vst [vmem:[#allocation3 + $0x2c0] sm:$0xff] %v2642
    %2731 = vst [vmem:[#allocation3 + $0x2c8] sm:$0xff] %v2643
    %2732 = vst [vmem:[#allocation3 + $0x2d0] sm:$0xff] %v2644
    %2733 = vst [vmem:[#allocation3 + $0x2d8] sm:$0xff] %v2645
    %2734 = vst [vmem:[#allocation3 + $0x2e0] sm:$0xff] %v2646
    %2735 = vst [vmem:[#allocation3 + $0x2e8] sm:$0xff] %v2647
    %2736 = vst [vmem:[#allocation3 + $0x2f0] sm:$0xff] %v2648
    %2737 = vst [vmem:[#allocation3 + $0x2f8] sm:$0xff] %v2649
    %2738 = vst [vmem:[#allocation3 + $0x300] sm:$0xff] %v2650
    %2739 = vst [vmem:[#allocation3 + $0x308] sm:$0xff] %v2651
    %2740 = vst [vmem:[#allocation3 + $0x310] sm:$0xff] %v2652
    %2741 = vst [vmem:[#allocation3 + $0x318] sm:$0xff] %v2653
    %2742 = vst [vmem:[#allocation3 + $0x320] sm:$0xff] %v2654
    %2743 = vst [vmem:[#allocation3 + $0x328] sm:$0xff] %v2655
    %2744 = vst [vmem:[#allocation3 + $0x330] sm:$0xff] %v2656
    %2745 = vst [vmem:[#allocation3 + $0x338] sm:$0xff] %v2657
    %2746 = vst [vmem:[#allocation3 + $0x340] sm:$0xff] %v2658
    %2747 = vst [vmem:[#allocation3 + $0x348] sm:$0xff] %v2659
    %2748 = vst [vmem:[#allocation3 + $0x350] sm:$0xff] %v2660
    %2749 = vst [vmem:[#allocation3 + $0x358] sm:$0xff] %v2661
    %2750 = vst [vmem:[#allocation3 + $0x360] sm:$0xff] %v2662
    %2751 = vst [vmem:[#allocation3 + $0x368] sm:$0xff] %v2663
    %2752 = vst [vmem:[#allocation3 + $0x370] sm:$0xff] %v2664
    %2753 = vst [vmem:[#allocation3 + $0x378] sm:$0xff] %v2665
    %2754 = vst [vmem:[#allocation3 + $0x380] sm:$0xff] %v2666
    %2755 = vst [vmem:[#allocation3 + $0x388] sm:$0xff] %v2667
    %2756 = vst [vmem:[#allocation3 + $0x390] sm:$0xff] %v2668
    %2757 = vst [vmem:[#allocation3 + $0x398] sm:$0xff] %v2669
    %2758 = vst [vmem:[#allocation3 + $0x3a0] sm:$0xff] %v2670
    %2759 = vst [vmem:[#allocation3 + $0x3a8] sm:$0xff] %v2671
    %2760 = vst [vmem:[#allocation3 + $0x3b0] sm:$0xff] %v2672
    %2761 = vst [vmem:[#allocation3 + $0x3b8] sm:$0xff] %v2673
    %2762 = vst [vmem:[#allocation3 + $0x3c0] sm:$0xff] %v2674
    %2763 = vst [vmem:[#allocation3 + $0x3c8] sm:$0xff] %v2675
    %2764 = vst [vmem:[#allocation3 + $0x3d0] sm:$0xff] %v2676
    %2765 = vst [vmem:[#allocation3 + $0x3d8] sm:$0xff] %v2677
    %2766 = vst [vmem:[#allocation3 + $0x3e0] sm:$0xff] %v2678
    %2767 = vst [vmem:[#allocation3 + $0x3e8] sm:$0xff] %v2679
    %2768 = vst [vmem:[#allocation3 + $0x3f0] sm:$0xff] %v2680
    %2769 = vst [vmem:[#allocation3 + $0x3f8] sm:$0xff] %v2681
    %2770 = vst [vmem:[#allocation3 + $0x400] sm:$0xff] %v2682
    %2771 = vst [vmem:[#allocation3 + $0x408] sm:$0xff] %v2683
    %2772 = vst [vmem:[#allocation3 + $0x410] sm:$0xff] %v2684
    %2773 = vst [vmem:[#allocation3 + $0x418] sm:$0xff] %v2685
    %v2774 = vld [vmem:[#allocation2] sm:$0xff]
    %v2775 = vld [vmem:[#allocation2 + $0x8] sm:$0xff]
    %v2776 = vld [vmem:[#allocation2 + $0x10] sm:$0xff]
    %v2777 = vld [vmem:[#allocation2 + $0x18] sm:$0xff]
    %v2778 = vld [vmem:[#allocation2 + $0x20] sm:$0xff]
    %v2779 = vld [vmem:[#allocation2 + $0x28] sm:$0xff]
    %v2780 = vld [vmem:[#allocation2 + $0x30] sm:$0xff]
    %v2781 = vld [vmem:[#allocation2 + $0x38] sm:$0xff]
    %v2782 = vld [vmem:[#allocation2 + $0x40] sm:$0xff]
    %v2783 = vld [vmem:[#allocation2 + $0x48] sm:$0xff]
    %v2784 = vld [vmem:[#allocation2 + $0x50] sm:$0xff]
    %v2785 = vld [vmem:[#allocation2 + $0x58] sm:$0xff]
    %v2786 = vld [vmem:[#allocation2 + $0x68] sm:$0xff]
    %v2787 = vld [vmem:[#allocation2 + $0x70] sm:$0xff]
    %v2788 = vld [vmem:[#allocation2 + $0x78] sm:$0xff]
    %v2789 = vld [vmem:[#allocation2 + $0x80] sm:$0xff]
    %v2790 = vld [vmem:[#allocation2 + $0x88] sm:$0xff]
    %v2791 = vld [vmem:[#allocation2 + $0x90] sm:$0xff]
    %v2792 = vld [vmem:[#allocation2 + $0x98] sm:$0xff]
    %v2793 = vld [vmem:[#allocation2 + $0xa0] sm:$0xff]
    %v2794 = vld [vmem:[#allocation2 + $0xa8] sm:$0xff]
    %v2795 = vld [vmem:[#allocation2 + $0xb0] sm:$0xff]
    %v2796 = vld [vmem:[#allocation2 + $0xb8] sm:$0xff]
    %v2797 = vld [vmem:[#allocation2 + $0xc0] sm:$0xff]
    %v2798 = vld [vmem:[#allocation2 + $0xd0] sm:$0xff]
    %v2799 = vld [vmem:[#allocation2 + $0xd8] sm:$0xff]
    %v2800 = vld [vmem:[#allocation2 + $0xe0] sm:$0xff]
    %v2801 = vld [vmem:[#allocation2 + $0xe8] sm:$0xff]
    %v2802 = vld [vmem:[#allocation2 + $0xf0] sm:$0xff]
    %v2803 = vld [vmem:[#allocation2 + $0xf8] sm:$0xff]
    %v2804 = vld [vmem:[#allocation2 + $0x100] sm:$0xff]
    %v2805 = vld [vmem:[#allocation2 + $0x108] sm:$0xff]
    %v2806 = vld [vmem:[#allocation2 + $0x110] sm:$0xff]
    %v2807 = vld [vmem:[#allocation2 + $0x118] sm:$0xff]
    %v2808 = vld [vmem:[#allocation2 + $0x120] sm:$0xff]
    %v2809 = vld [vmem:[#allocation2 + $0x128] sm:$0xff]
    %v2810 = vld [vmem:[#allocation2 + $0x138] sm:$0xff]
    %v2811 = vld [vmem:[#allocation2 + $0x140] sm:$0xff]
    %v2812 = vld [vmem:[#allocation2 + $0x148] sm:$0xff]
    %v2813 = vld [vmem:[#allocation2 + $0x150] sm:$0xff]
    %v2814 = vld [vmem:[#allocation2 + $0x158] sm:$0xff]
    %v2815 = vld [vmem:[#allocation2 + $0x160] sm:$0xff]
    %v2816 = vld [vmem:[#allocation2 + $0x168] sm:$0xff]
    %v2817 = vld [vmem:[#allocation2 + $0x170] sm:$0xff]
    %v2818 = vld [vmem:[#allocation2 + $0x178] sm:$0xff]
    %v2819 = vld [vmem:[#allocation2 + $0x180] sm:$0xff]
    %v2820 = vld [vmem:[#allocation2 + $0x188] sm:$0xff]
    %v2821 = vld [vmem:[#allocation2 + $0x190] sm:$0xff]
    %2870 = vrot.lane.b32.xlu0 %v2774, 1
    %v2871 = vpop.permute.xlu0 %2870
    %2872 = vrot.lane.b32.xlu0 %v2775, 1
    %v2873 = vpop.permute.xlu0 %2872
    %2874 = vrot.lane.b32.xlu0 %v2776, 1
    %v2875 = vpop.permute.xlu0 %2874
    %2876 = vrot.lane.b32.xlu0 %v2777, 1
    %v2877 = vpop.permute.xlu0 %2876
    %2878 = vrot.lane.b32.xlu0 %v2778, 1
    %v2879 = vpop.permute.xlu0 %2878
    %2880 = vrot.lane.b32.xlu0 %v2779, 1
    %v2881 = vpop.permute.xlu0 %2880
    %2882 = vrot.lane.b32.xlu0 %v2780, 1
    %v2883 = vpop.permute.xlu0 %2882
    %2884 = vrot.lane.b32.xlu0 %v2781, 1
    %v2885 = vpop.permute.xlu0 %2884
    %2886 = vrot.lane.b32.xlu0 %v2782, 1
    %v2887 = vpop.permute.xlu0 %2886
    %2888 = vrot.lane.b32.xlu0 %v2783, 1
    %v2889 = vpop.permute.xlu0 %2888
    %2890 = vrot.lane.b32.xlu0 %v2784, 1
    %v2891 = vpop.permute.xlu0 %2890
    %2892 = vrot.lane.b32.xlu0 %v2785, 1
    %v2893 = vpop.permute.xlu0 %2892
    %2894 = vrot.lane.b32.xlu0 %v2786, 1
    %v2895 = vpop.permute.xlu0 %2894
    %2896 = vrot.lane.b32.xlu0 %v2787, 1
    %v2897 = vpop.permute.xlu0 %2896
    %2898 = vrot.lane.b32.xlu0 %v2788, 1
    %v2899 = vpop.permute.xlu0 %2898
    %2900 = vrot.lane.b32.xlu0 %v2789, 1
    %v2901 = vpop.permute.xlu0 %2900
    %2902 = vrot.lane.b32.xlu0 %v2790, 1
    %v2903 = vpop.permute.xlu0 %2902
    %2904 = vrot.lane.b32.xlu0 %v2791, 1
    %v2905 = vpop.permute.xlu0 %2904
    %2906 = vrot.lane.b32.xlu0 %v2792, 1
    %v2907 = vpop.permute.xlu0 %2906
    %2908 = vrot.lane.b32.xlu0 %v2793, 1
    %v2909 = vpop.permute.xlu0 %2908
    %2910 = vrot.lane.b32.xlu0 %v2794, 1
    %v2911 = vpop.permute.xlu0 %2910
    %2912 = vrot.lane.b32.xlu0 %v2795, 1
    %v2913 = vpop.permute.xlu0 %2912
    %2914 = vrot.lane.b32.xlu0 %v2796, 1
    %v2915 = vpop.permute.xlu0 %2914
    %2916 = vrot.lane.b32.xlu0 %v2797, 1
    %v2917 = vpop.permute.xlu0 %2916
    %2918 = vrot.lane.b32.xlu0 %v2798, 1
    %v2919 = vpop.permute.xlu0 %2918
    %2920 = vrot.lane.b32.xlu0 %v2799, 1
    %v2921 = vpop.permute.xlu0 %2920
    %2922 = vrot.lane.b32.xlu0 %v2800, 1
    %v2923 = vpop.permute.xlu0 %2922
    %2924 = vrot.lane.b32.xlu0 %v2801, 1
    %v2925 = vpop.permute.xlu0 %2924
    %2926 = vrot.lane.b32.xlu0 %v2802, 1
    %v2927 = vpop.permute.xlu0 %2926
    %2928 = vrot.lane.b32.xlu0 %v2803, 1
    %v2929 = vpop.permute.xlu0 %2928
    %2930 = vrot.lane.b32.xlu0 %v2804, 1
    %v2931 = vpop.permute.xlu0 %2930
    %2932 = vrot.lane.b32.xlu0 %v2805, 1
    %v2933 = vpop.permute.xlu0 %2932
    %2934 = vrot.lane.b32.xlu0 %v2806, 1
    %v2935 = vpop.permute.xlu0 %2934
    %2936 = vrot.lane.b32.xlu0 %v2807, 1
    %v2937 = vpop.permute.xlu0 %2936
    %2938 = vrot.lane.b32.xlu0 %v2808, 1
    %v2939 = vpop.permute.xlu0 %2938
    %2940 = vrot.lane.b32.xlu0 %v2809, 1
    %v2941 = vpop.permute.xlu0 %2940
    %2942 = vrot.lane.b32.xlu0 %v2810, 1
    %v2943 = vpop.permute.xlu0 %2942
    %2944 = vrot.lane.b32.xlu0 %v2811, 1
    %v2945 = vpop.permute.xlu0 %2944
    %2946 = vrot.lane.b32.xlu0 %v2812, 1
    %v2947 = vpop.permute.xlu0 %2946
    %2948 = vrot.lane.b32.xlu0 %v2813, 1
    %v2949 = vpop.permute.xlu0 %2948
    %2950 = vrot.lane.b32.xlu0 %v2814, 1
    %v2951 = vpop.permute.xlu0 %2950
    %2952 = vrot.lane.b32.xlu0 %v2815, 1
    %v2953 = vpop.permute.xlu0 %2952
    %2954 = vrot.lane.b32.xlu0 %v2816, 1
    %v2955 = vpop.permute.xlu0 %2954
    %2956 = vrot.lane.b32.xlu0 %v2817, 1
    %v2957 = vpop.permute.xlu0 %2956
    %2958 = vrot.lane.b32.xlu0 %v2818, 1
    %v2959 = vpop.permute.xlu0 %2958
    %2960 = vrot.lane.b32.xlu0 %v2819, 1
    %v2961 = vpop.permute.xlu0 %2960
    %2962 = vrot.lane.b32.xlu0 %v2820, 1
    %v2963 = vpop.permute.xlu0 %2962
    %2964 = vrot.lane.b32.xlu0 %v2821, 1
    %v2965 = vpop.permute.xlu0 %2964
    %v2966 = vsel %vm466, %v2871, %v2873
    %v2967 = vsel %vm466, %v2873, %v2875
    %v2968 = vsel %vm466, %v2875, %v2877
    %v2969 = vsel %vm466, %v2877, %v2879
    %v2970 = vsel %vm466, %v2879, %v2881
    %v2971 = vsel %vm466, %v2881, %v2883
    %v2972 = vsel %vm466, %v2883, %v2885
    %v2973 = vsel %vm466, %v2885, %v2887
    %v2974 = vsel %vm466, %v2887, %v2889
    %v2975 = vsel %vm466, %v2889, %v2891
    %v2976 = vsel %vm466, %v2891, %v2893
    %v2977 = vsel %vm466, %v2895, %v2897
    %v2978 = vsel %vm466, %v2897, %v2899
    %v2979 = vsel %vm466, %v2899, %v2901
    %v2980 = vsel %vm466, %v2901, %v2903
    %v2981 = vsel %vm466, %v2903, %v2905
    %v2982 = vsel %vm466, %v2905, %v2907
    %v2983 = vsel %vm466, %v2907, %v2909
    %v2984 = vsel %vm466, %v2909, %v2911
    %v2985 = vsel %vm466, %v2911, %v2913
    %v2986 = vsel %vm466, %v2913, %v2915
    %v2987 = vsel %vm466, %v2915, %v2917
    %v2988 = vsel %vm466, %v2919, %v2921
    %v2989 = vsel %vm466, %v2921, %v2923
    %v2990 = vsel %vm466, %v2923, %v2925
    %v2991 = vsel %vm466, %v2925, %v2927
    %v2992 = vsel %vm466, %v2927, %v2929
    %v2993 = vsel %vm466, %v2929, %v2931
    %v2994 = vsel %vm466, %v2931, %v2933
    %v2995 = vsel %vm466, %v2933, %v2935
    %v2996 = vsel %vm466, %v2935, %v2937
    %v2997 = vsel %vm466, %v2937, %v2939
    %v2998 = vsel %vm466, %v2939, %v2941
    %v2999 = vsel %vm466, %v2943, %v2945
    %v3000 = vsel %vm466, %v2945, %v2947
    %v3001 = vsel %vm466, %v2947, %v2949
    %v3002 = vsel %vm466, %v2949, %v2951
    %v3003 = vsel %vm466, %v2951, %v2953
    %v3004 = vsel %vm466, %v2953, %v2955
    %v3005 = vsel %vm466, %v2955, %v2957
    %v3006 = vsel %vm466, %v2957, %v2959
    %v3007 = vsel %vm466, %v2959, %v2961
    %v3008 = vsel %vm466, %v2961, %v2963
    %v3009 = vsel %vm466, %v2963, %v2965
    %3054 = vst [vmem:[#allocation3 + $0x420] sm:$0xff] %v2966
    %3055 = vst [vmem:[#allocation3 + $0x428] sm:$0xff] %v2967
    %3056 = vst [vmem:[#allocation3 + $0x430] sm:$0xff] %v2968
    %3057 = vst [vmem:[#allocation3 + $0x438] sm:$0xff] %v2969
    %3058 = vst [vmem:[#allocation3 + $0x440] sm:$0xff] %v2970
    %3059 = vst [vmem:[#allocation3 + $0x448] sm:$0xff] %v2971
    %3060 = vst [vmem:[#allocation3 + $0x450] sm:$0xff] %v2972
    %3061 = vst [vmem:[#allocation3 + $0x458] sm:$0xff] %v2973
    %3062 = vst [vmem:[#allocation3 + $0x460] sm:$0xff] %v2974
    %3063 = vst [vmem:[#allocation3 + $0x468] sm:$0xff] %v2975
    %3064 = vst [vmem:[#allocation3 + $0x470] sm:$0xff] %v2976
    %3065 = vst [vmem:[#allocation3 + $0x478] sm:$0xff] %v2977
    %3066 = vst [vmem:[#allocation3 + $0x480] sm:$0xff] %v2978
    %3067 = vst [vmem:[#allocation3 + $0x488] sm:$0xff] %v2979
    %3068 = vst [vmem:[#allocation3 + $0x490] sm:$0xff] %v2980
    %3069 = vst [vmem:[#allocation3 + $0x498] sm:$0xff] %v2981
    %3070 = vst [vmem:[#allocation3 + $0x4a0] sm:$0xff] %v2982
    %3071 = vst [vmem:[#allocation3 + $0x4a8] sm:$0xff] %v2983
    %3072 = vst [vmem:[#allocation3 + $0x4b0] sm:$0xff] %v2984
    %3073 = vst [vmem:[#allocation3 + $0x4b8] sm:$0xff] %v2985
    %3074 = vst [vmem:[#allocation3 + $0x4c0] sm:$0xff] %v2986
    %3075 = vst [vmem:[#allocation3 + $0x4c8] sm:$0xff] %v2987
    %3076 = vst [vmem:[#allocation3 + $0x4d0] sm:$0xff] %v2988
    %3077 = vst [vmem:[#allocation3 + $0x4d8] sm:$0xff] %v2989
    %3078 = vst [vmem:[#allocation3 + $0x4e0] sm:$0xff] %v2990
    %3079 = vst [vmem:[#allocation3 + $0x4e8] sm:$0xff] %v2991
    %3080 = vst [vmem:[#allocation3 + $0x4f0] sm:$0xff] %v2992
    %3081 = vst [vmem:[#allocation3 + $0x4f8] sm:$0xff] %v2993
    %3082 = vst [vmem:[#allocation3 + $0x500] sm:$0xff] %v2994
    %3083 = vst [vmem:[#allocation3 + $0x508] sm:$0xff] %v2995
    %3084 = vst [vmem:[#allocation3 + $0x510] sm:$0xff] %v2996
    %3085 = vst [vmem:[#allocation3 + $0x518] sm:$0xff] %v2997
    %3086 = vst [vmem:[#allocation3 + $0x520] sm:$0xff] %v2998
    %3087 = vst [vmem:[#allocation3 + $0x528] sm:$0xff] %v2999
    %3088 = vst [vmem:[#allocation3 + $0x530] sm:$0xff] %v3000
    %3089 = vst [vmem:[#allocation3 + $0x538] sm:$0xff] %v3001
    %3090 = vst [vmem:[#allocation3 + $0x540] sm:$0xff] %v3002
    %3091 = vst [vmem:[#allocation3 + $0x548] sm:$0xff] %v3003
    %3092 = vst [vmem:[#allocation3 + $0x550] sm:$0xff] %v3004
    %3093 = vst [vmem:[#allocation3 + $0x558] sm:$0xff] %v3005
    %3094 = vst [vmem:[#allocation3 + $0x560] sm:$0xff] %v3006
    %3095 = vst [vmem:[#allocation3 + $0x568] sm:$0xff] %v3007
    %3096 = vst [vmem:[#allocation3 + $0x570] sm:$0xff] %v3008
    %3097 = vst [vmem:[#allocation3 + $0x578] sm:$0xff] %v3009
    %v3098 = vld [vmem:[#allocation2 + $0x8] sm:$0xff]
    %v3099 = vld [vmem:[#allocation2 + $0x10] sm:$0xff]
    %v3100 = vld [vmem:[#allocation2 + $0x18] sm:$0xff]
    %v3101 = vld [vmem:[#allocation2 + $0x20] sm:$0xff]
    %v3102 = vld [vmem:[#allocation2 + $0x28] sm:$0xff]
    %v3103 = vld [vmem:[#allocation2 + $0x30] sm:$0xff]
    %v3104 = vld [vmem:[#allocation2 + $0x38] sm:$0xff]
    %v3105 = vld [vmem:[#allocation2 + $0x40] sm:$0xff]
    %v3106 = vld [vmem:[#allocation2 + $0x48] sm:$0xff]
    %v3107 = vld [vmem:[#allocation2 + $0x50] sm:$0xff]
    %v3108 = vld [vmem:[#allocation2 + $0x58] sm:$0xff]
    %v3109 = vld [vmem:[#allocation2 + $0x70] sm:$0xff]
    %v3110 = vld [vmem:[#allocation2 + $0x78] sm:$0xff]
    %v3111 = vld [vmem:[#allocation2 + $0x80] sm:$0xff]
    %v3112 = vld [vmem:[#allocation2 + $0x88] sm:$0xff]
    %v3113 = vld [vmem:[#allocation2 + $0x90] sm:$0xff]
    %v3114 = vld [vmem:[#allocation2 + $0x98] sm:$0xff]
    %v3115 = vld [vmem:[#allocation2 + $0xa0] sm:$0xff]
    %v3116 = vld [vmem:[#allocation2 + $0xa8] sm:$0xff]
    %v3117 = vld [vmem:[#allocation2 + $0xb0] sm:$0xff]
    %v3118 = vld [vmem:[#allocation2 + $0xb8] sm:$0xff]
    %v3119 = vld [vmem:[#allocation2 + $0xc0] sm:$0xff]
    %v3120 = vld [vmem:[#allocation2 + $0xd8] sm:$0xff]
    %v3121 = vld [vmem:[#allocation2 + $0xe0] sm:$0xff]
    %v3122 = vld [vmem:[#allocation2 + $0xe8] sm:$0xff]
    %v3123 = vld [vmem:[#allocation2 + $0xf0] sm:$0xff]
    %v3124 = vld [vmem:[#allocation2 + $0xf8] sm:$0xff]
    %v3125 = vld [vmem:[#allocation2 + $0x100] sm:$0xff]
    %v3126 = vld [vmem:[#allocation2 + $0x108] sm:$0xff]
    %v3127 = vld [vmem:[#allocation2 + $0x110] sm:$0xff]
    %v3128 = vld [vmem:[#allocation2 + $0x118] sm:$0xff]
    %v3129 = vld [vmem:[#allocation2 + $0x120] sm:$0xff]
    %v3130 = vld [vmem:[#allocation2 + $0x128] sm:$0xff]
    %v3131 = vld [vmem:[#allocation2 + $0x140] sm:$0xff]
    %v3132 = vld [vmem:[#allocation2 + $0x148] sm:$0xff]
    %v3133 = vld [vmem:[#allocation2 + $0x150] sm:$0xff]
    %v3134 = vld [vmem:[#allocation2 + $0x158] sm:$0xff]
    %v3135 = vld [vmem:[#allocation2 + $0x160] sm:$0xff]
    %v3136 = vld [vmem:[#allocation2 + $0x168] sm:$0xff]
    %v3137 = vld [vmem:[#allocation2 + $0x170] sm:$0xff]
    %v3138 = vld [vmem:[#allocation2 + $0x178] sm:$0xff]
    %v3139 = vld [vmem:[#allocation2 + $0x180] sm:$0xff]
    %v3140 = vld [vmem:[#allocation2 + $0x188] sm:$0xff]
    %v3141 = vld [vmem:[#allocation2 + $0x190] sm:$0xff]
    %3142 = vst [vmem:[#allocation3 + $0x580] sm:$0xff] %v3098
    %3143 = vst [vmem:[#allocation3 + $0x588] sm:$0xff] %v3099
    %3144 = vst [vmem:[#allocation3 + $0x590] sm:$0xff] %v3100
    %3145 = vst [vmem:[#allocation3 + $0x598] sm:$0xff] %v3101
    %3146 = vst [vmem:[#allocation3 + $0x5a0] sm:$0xff] %v3102
    %3147 = vst [vmem:[#allocation3 + $0x5a8] sm:$0xff] %v3103
    %3148 = vst [vmem:[#allocation3 + $0x5b0] sm:$0xff] %v3104
    %3149 = vst [vmem:[#allocation3 + $0x5b8] sm:$0xff] %v3105
    %3150 = vst [vmem:[#allocation3 + $0x5c0] sm:$0xff] %v3106
    %3151 = vst [vmem:[#allocation3 + $0x5c8] sm:$0xff] %v3107
    %3152 = vst [vmem:[#allocation3 + $0x5d0] sm:$0xff] %v3108
    %3153 = vst [vmem:[#allocation3 + $0x5d8] sm:$0xff] %v3109
    %3154 = vst [vmem:[#allocation3 + $0x5e0] sm:$0xff] %v3110
    %3155 = vst [vmem:[#allocation3 + $0x5e8] sm:$0xff] %v3111
    %3156 = vst [vmem:[#allocation3 + $0x5f0] sm:$0xff] %v3112
    %3157 = vst [vmem:[#allocation3 + $0x5f8] sm:$0xff] %v3113
    %3158 = vst [vmem:[#allocation3 + $0x600] sm:$0xff] %v3114
    %3159 = vst [vmem:[#allocation3 + $0x608] sm:$0xff] %v3115
    %3160 = vst [vmem:[#allocation3 + $0x610] sm:$0xff] %v3116
    %3161 = vst [vmem:[#allocation3 + $0x618] sm:$0xff] %v3117
    %3162 = vst [vmem:[#allocation3 + $0x620] sm:$0xff] %v3118
    %3163 = vst [vmem:[#allocation3 + $0x628] sm:$0xff] %v3119
    %3164 = vst [vmem:[#allocation3 + $0x630] sm:$0xff] %v3120
    %3165 = vst [vmem:[#allocation3 + $0x638] sm:$0xff] %v3121
    %3166 = vst [vmem:[#allocation3 + $0x640] sm:$0xff] %v3122
    %3167 = vst [vmem:[#allocation3 + $0x648] sm:$0xff] %v3123
    %3168 = vst [vmem:[#allocation3 + $0x650] sm:$0xff] %v3124
    %3169 = vst [vmem:[#allocation3 + $0x658] sm:$0xff] %v3125
    %3170 = vst [vmem:[#allocation3 + $0x660] sm:$0xff] %v3126
    %3171 = vst [vmem:[#allocation3 + $0x668] sm:$0xff] %v3127
    %3172 = vst [vmem:[#allocation3 + $0x670] sm:$0xff] %v3128
    %3173 = vst [vmem:[#allocation3 + $0x678] sm:$0xff] %v3129
    %3174 = vst [vmem:[#allocation3 + $0x680] sm:$0xff] %v3130
    %3175 = vst [vmem:[#allocation3 + $0x688] sm:$0xff] %v3131
    %3176 = vst [vmem:[#allocation3 + $0x690] sm:$0xff] %v3132
    %3177 = vst [vmem:[#allocation3 + $0x698] sm:$0xff] %v3133
    %3178 = vst [vmem:[#allocation3 + $0x6a0] sm:$0xff] %v3134
    %3179 = vst [vmem:[#allocation3 + $0x6a8] sm:$0xff] %v3135
    %3180 = vst [vmem:[#allocation3 + $0x6b0] sm:$0xff] %v3136
    %3181 = vst [vmem:[#allocation3 + $0x6b8] sm:$0xff] %v3137
    %3182 = vst [vmem:[#allocation3 + $0x6c0] sm:$0xff] %v3138
    %3183 = vst [vmem:[#allocation3 + $0x6c8] sm:$0xff] %v3139
    %3184 = vst [vmem:[#allocation3 + $0x6d0] sm:$0xff] %v3140
    %3185 = vst [vmem:[#allocation3 + $0x6d8] sm:$0xff] %v3141
    %v3186 = vld [vmem:[#allocation2 + $0x8] sm:$0xff]
    %v3187 = vld [vmem:[#allocation2 + $0x10] sm:$0xff]
    %v3188 = vld [vmem:[#allocation2 + $0x18] sm:$0xff]
    %v3189 = vld [vmem:[#allocation2 + $0x20] sm:$0xff]
    %v3190 = vld [vmem:[#allocation2 + $0x28] sm:$0xff]
    %v3191 = vld [vmem:[#allocation2 + $0x30] sm:$0xff]
    %v3192 = vld [vmem:[#allocation2 + $0x38] sm:$0xff]
    %v3193 = vld [vmem:[#allocation2 + $0x40] sm:$0xff]
    %v3194 = vld [vmem:[#allocation2 + $0x48] sm:$0xff]
    %v3195 = vld [vmem:[#allocation2 + $0x50] sm:$0xff]
    %v3196 = vld [vmem:[#allocation2 + $0x58] sm:$0xff]
    %v3197 = vld [vmem:[#allocation2 + $0x60] sm:$0xff]
    %v3198 = vld [vmem:[#allocation2 + $0x70] sm:$0xff]
    %v3199 = vld [vmem:[#allocation2 + $0x78] sm:$0xff]
    %v3200 = vld [vmem:[#allocation2 + $0x80] sm:$0xff]
    %v3201 = vld [vmem:[#allocation2 + $0x88] sm:$0xff]
    %v3202 = vld [vmem:[#allocation2 + $0x90] sm:$0xff]
    %v3203 = vld [vmem:[#allocation2 + $0x98] sm:$0xff]
    %v3204 = vld [vmem:[#allocation2 + $0xa0] sm:$0xff]
    %v3205 = vld [vmem:[#allocation2 + $0xa8] sm:$0xff]
    %v3206 = vld [vmem:[#allocation2 + $0xb0] sm:$0xff]
    %v3207 = vld [vmem:[#allocation2 + $0xb8] sm:$0xff]
    %v3208 = vld [vmem:[#allocation2 + $0xc0] sm:$0xff]
    %v3209 = vld [vmem:[#allocation2 + $0xc8] sm:$0xff]
    %v3210 = vld [vmem:[#allocation2 + $0xd8] sm:$0xff]
    %v3211 = vld [vmem:[#allocation2 + $0xe0] sm:$0xff]
    %v3212 = vld [vmem:[#allocation2 + $0xe8] sm:$0xff]
    %v3213 = vld [vmem:[#allocation2 + $0xf0] sm:$0xff]
    %v3214 = vld [vmem:[#allocation2 + $0xf8] sm:$0xff]
    %v3215 = vld [vmem:[#allocation2 + $0x100] sm:$0xff]
    %v3216 = vld [vmem:[#allocation2 + $0x108] sm:$0xff]
    %v3217 = vld [vmem:[#allocation2 + $0x110] sm:$0xff]
    %v3218 = vld [vmem:[#allocation2 + $0x118] sm:$0xff]
    %v3219 = vld [vmem:[#allocation2 + $0x120] sm:$0xff]
    %v3220 = vld [vmem:[#allocation2 + $0x128] sm:$0xff]
    %v3221 = vld [vmem:[#allocation2 + $0x130] sm:$0xff]
    %v3222 = vld [vmem:[#allocation2 + $0x140] sm:$0xff]
    %v3223 = vld [vmem:[#allocation2 + $0x148] sm:$0xff]
    %v3224 = vld [vmem:[#allocation2 + $0x150] sm:$0xff]
    %v3225 = vld [vmem:[#allocation2 + $0x158] sm:$0xff]
    %v3226 = vld [vmem:[#allocation2 + $0x160] sm:$0xff]
    %v3227 = vld [vmem:[#allocation2 + $0x168] sm:$0xff]
    %v3228 = vld [vmem:[#allocation2 + $0x170] sm:$0xff]
    %v3229 = vld [vmem:[#allocation2 + $0x178] sm:$0xff]
    %v3230 = vld [vmem:[#allocation2 + $0x180] sm:$0xff]
    %v3231 = vld [vmem:[#allocation2 + $0x188] sm:$0xff]
    %v3232 = vld [vmem:[#allocation2 + $0x190] sm:$0xff]
    %v3233 = vld [vmem:[#allocation2 + $0x198] sm:$0xff]
    %3282 = vrot.lane.b32.xlu0 %v3186, 127
    %v3283 = vpop.permute.xlu0 %3282
    %3284 = vrot.lane.b32.xlu0 %v3187, 127
    %v3285 = vpop.permute.xlu0 %3284
    %3286 = vrot.lane.b32.xlu0 %v3188, 127
    %v3287 = vpop.permute.xlu0 %3286
    %3288 = vrot.lane.b32.xlu0 %v3189, 127
    %v3289 = vpop.permute.xlu0 %3288
    %3290 = vrot.lane.b32.xlu0 %v3190, 127
    %v3291 = vpop.permute.xlu0 %3290
    %3292 = vrot.lane.b32.xlu0 %v3191, 127
    %v3293 = vpop.permute.xlu0 %3292
    %3294 = vrot.lane.b32.xlu0 %v3192, 127
    %v3295 = vpop.permute.xlu0 %3294
    %3296 = vrot.lane.b32.xlu0 %v3193, 127
    %v3297 = vpop.permute.xlu0 %3296
    %3298 = vrot.lane.b32.xlu0 %v3194, 127
    %v3299 = vpop.permute.xlu0 %3298
    %3300 = vrot.lane.b32.xlu0 %v3195, 127
    %v3301 = vpop.permute.xlu0 %3300
    %3302 = vrot.lane.b32.xlu0 %v3196, 127
    %v3303 = vpop.permute.xlu0 %3302
    %3304 = vrot.lane.b32.xlu0 %v3197, 127
    %v3305 = vpop.permute.xlu0 %3304
    %3306 = vrot.lane.b32.xlu0 %v3198, 127
    %v3307 = vpop.permute.xlu0 %3306
    %3308 = vrot.lane.b32.xlu0 %v3199, 127
    %v3309 = vpop.permute.xlu0 %3308
    %3310 = vrot.lane.b32.xlu0 %v3200, 127
    %v3311 = vpop.permute.xlu0 %3310
    %3312 = vrot.lane.b32.xlu0 %v3201, 127
    %v3313 = vpop.permute.xlu0 %3312
    %3314 = vrot.lane.b32.xlu0 %v3202, 127
    %v3315 = vpop.permute.xlu0 %3314
    %3316 = vrot.lane.b32.xlu0 %v3203, 127
    %v3317 = vpop.permute.xlu0 %3316
    %3318 = vrot.lane.b32.xlu0 %v3204, 127
    %v3319 = vpop.permute.xlu0 %3318
    %3320 = vrot.lane.b32.xlu0 %v3205, 127
    %v3321 = vpop.permute.xlu0 %3320
    %3322 = vrot.lane.b32.xlu0 %v3206, 127
    %v3323 = vpop.permute.xlu0 %3322
    %3324 = vrot.lane.b32.xlu0 %v3207, 127
    %v3325 = vpop.permute.xlu0 %3324
    %3326 = vrot.lane.b32.xlu0 %v3208, 127
    %v3327 = vpop.permute.xlu0 %3326
    %3328 = vrot.lane.b32.xlu0 %v3209, 127
    %v3329 = vpop.permute.xlu0 %3328
    %3330 = vrot.lane.b32.xlu0 %v3210, 127
    %v3331 = vpop.permute.xlu0 %3330
    %3332 = vrot.lane.b32.xlu0 %v3211, 127
    %v3333 = vpop.permute.xlu0 %3332
    %3334 = vrot.lane.b32.xlu0 %v3212, 127
    %v3335 = vpop.permute.xlu0 %3334
    %3336 = vrot.lane.b32.xlu0 %v3213, 127
    %v3337 = vpop.permute.xlu0 %3336
    %3338 = vrot.lane.b32.xlu0 %v3214, 127
    %v3339 = vpop.permute.xlu0 %3338
    %3340 = vrot.lane.b32.xlu0 %v3215, 127
    %v3341 = vpop.permute.xlu0 %3340
    %3342 = vrot.lane.b32.xlu0 %v3216, 127
    %v3343 = vpop.permute.xlu0 %3342
    %3344 = vrot.lane.b32.xlu0 %v3217, 127
    %v3345 = vpop.permute.xlu0 %3344
    %3346 = vrot.lane.b32.xlu0 %v3218, 127
    %v3347 = vpop.permute.xlu0 %3346
    %3348 = vrot.lane.b32.xlu0 %v3219, 127
    %v3349 = vpop.permute.xlu0 %3348
    %3350 = vrot.lane.b32.xlu0 %v3220, 127
    %v3351 = vpop.permute.xlu0 %3350
    %3352 = vrot.lane.b32.xlu0 %v3221, 127
    %v3353 = vpop.permute.xlu0 %3352
    %3354 = vrot.lane.b32.xlu0 %v3222, 127
    %v3355 = vpop.permute.xlu0 %3354
    %3356 = vrot.lane.b32.xlu0 %v3223, 127
    %v3357 = vpop.permute.xlu0 %3356
    %3358 = vrot.lane.b32.xlu0 %v3224, 127
    %v3359 = vpop.permute.xlu0 %3358
    %3360 = vrot.lane.b32.xlu0 %v3225, 127
    %v3361 = vpop.permute.xlu0 %3360
    %3362 = vrot.lane.b32.xlu0 %v3226, 127
    %v3363 = vpop.permute.xlu0 %3362
    %3364 = vrot.lane.b32.xlu0 %v3227, 127
    %v3365 = vpop.permute.xlu0 %3364
    %3366 = vrot.lane.b32.xlu0 %v3228, 127
    %v3367 = vpop.permute.xlu0 %3366
    %3368 = vrot.lane.b32.xlu0 %v3229, 127
    %v3369 = vpop.permute.xlu0 %3368
    %3370 = vrot.lane.b32.xlu0 %v3230, 127
    %v3371 = vpop.permute.xlu0 %3370
    %3372 = vrot.lane.b32.xlu0 %v3231, 127
    %v3373 = vpop.permute.xlu0 %3372
    %3374 = vrot.lane.b32.xlu0 %v3232, 127
    %v3375 = vpop.permute.xlu0 %3374
    %3376 = vrot.lane.b32.xlu0 %v3233, 127
    %v3377 = vpop.permute.xlu0 %3376
    %v3378 = vsel %vm582, %v3283, %v3285
    %v3379 = vsel %vm582, %v3285, %v3287
    %v3380 = vsel %vm582, %v3287, %v3289
    %v3381 = vsel %vm582, %v3289, %v3291
    %v3382 = vsel %vm582, %v3291, %v3293
    %v3383 = vsel %vm582, %v3293, %v3295
    %v3384 = vsel %vm582, %v3295, %v3297
    %v3385 = vsel %vm582, %v3297, %v3299
    %v3386 = vsel %vm582, %v3299, %v3301
    %v3387 = vsel %vm582, %v3301, %v3303
    %v3388 = vsel %vm582, %v3303, %v3305
    %v3389 = vsel %vm582, %v3307, %v3309
    %v3390 = vsel %vm582, %v3309, %v3311
    %v3391 = vsel %vm582, %v3311, %v3313
    %v3392 = vsel %vm582, %v3313, %v3315
    %v3393 = vsel %vm582, %v3315, %v3317
    %v3394 = vsel %vm582, %v3317, %v3319
    %v3395 = vsel %vm582, %v3319, %v3321
    %v3396 = vsel %vm582, %v3321, %v3323
    %v3397 = vsel %vm582, %v3323, %v3325
    %v3398 = vsel %vm582, %v3325, %v3327
    %v3399 = vsel %vm582, %v3327, %v3329
    %v3400 = vsel %vm582, %v3331, %v3333
    %v3401 = vsel %vm582, %v3333, %v3335
    %v3402 = vsel %vm582, %v3335, %v3337
    %v3403 = vsel %vm582, %v3337, %v3339
    %v3404 = vsel %vm582, %v3339, %v3341
    %v3405 = vsel %vm582, %v3341, %v3343
    %v3406 = vsel %vm582, %v3343, %v3345
    %v3407 = vsel %vm582, %v3345, %v3347
    %v3408 = vsel %vm582, %v3347, %v3349
    %v3409 = vsel %vm582, %v3349, %v3351
    %v3410 = vsel %vm582, %v3351, %v3353
    %v3411 = vsel %vm582, %v3355, %v3357
    %v3412 = vsel %vm582, %v3357, %v3359
    %v3413 = vsel %vm582, %v3359, %v3361
    %v3414 = vsel %vm582, %v3361, %v3363
    %v3415 = vsel %vm582, %v3363, %v3365
    %v3416 = vsel %vm582, %v3365, %v3367
    %v3417 = vsel %vm582, %v3367, %v3369
    %v3418 = vsel %vm582, %v3369, %v3371
    %v3419 = vsel %vm582, %v3371, %v3373
    %v3420 = vsel %vm582, %v3373, %v3375
    %v3421 = vsel %vm582, %v3375, %v3377
    %3466 = vst [vmem:[#allocation3 + $0x6e0] sm:$0xff] %v3378
    %3467 = vst [vmem:[#allocation3 + $0x6e8] sm:$0xff] %v3379
    %3468 = vst [vmem:[#allocation3 + $0x6f0] sm:$0xff] %v3380
    %3469 = vst [vmem:[#allocation3 + $0x6f8] sm:$0xff] %v3381
    %3470 = vst [vmem:[#allocation3 + $0x700] sm:$0xff] %v3382
    %3471 = vst [vmem:[#allocation3 + $0x708] sm:$0xff] %v3383
    %3472 = vst [vmem:[#allocation3 + $0x710] sm:$0xff] %v3384
    %3473 = vst [vmem:[#allocation3 + $0x718] sm:$0xff] %v3385
    %3474 = vst [vmem:[#allocation3 + $0x720] sm:$0xff] %v3386
    %3475 = vst [vmem:[#allocation3 + $0x728] sm:$0xff] %v3387
    %3476 = vst [vmem:[#allocation3 + $0x730] sm:$0xff] %v3388
    %3477 = vst [vmem:[#allocation3 + $0x738] sm:$0xff] %v3389
    %3478 = vst [vmem:[#allocation3 + $0x740] sm:$0xff] %v3390
    %3479 = vst [vmem:[#allocation3 + $0x748] sm:$0xff] %v3391
    %3480 = vst [vmem:[#allocation3 + $0x750] sm:$0xff] %v3392
    %3481 = vst [vmem:[#allocation3 + $0x758] sm:$0xff] %v3393
    %3482 = vst [vmem:[#allocation3 + $0x760] sm:$0xff] %v3394
    %3483 = vst [vmem:[#allocation3 + $0x768] sm:$0xff] %v3395
    %3484 = vst [vmem:[#allocation3 + $0x770] sm:$0xff] %v3396
    %3485 = vst [vmem:[#allocation3 + $0x778] sm:$0xff] %v3397
    %3486 = vst [vmem:[#allocation3 + $0x780] sm:$0xff] %v3398
    %3487 = vst [vmem:[#allocation3 + $0x788] sm:$0xff] %v3399
    %3488 = vst [vmem:[#allocation3 + $0x790] sm:$0xff] %v3400
    %3489 = vst [vmem:[#allocation3 + $0x798] sm:$0xff] %v3401
    %3490 = vst [vmem:[#allocation3 + $0x7a0] sm:$0xff] %v3402
    %3491 = vst [vmem:[#allocation3 + $0x7a8] sm:$0xff] %v3403
    %3492 = vst [vmem:[#allocation3 + $0x7b0] sm:$0xff] %v3404
    %3493 = vst [vmem:[#allocation3 + $0x7b8] sm:$0xff] %v3405
    %3494 = vst [vmem:[#allocation3 + $0x7c0] sm:$0xff] %v3406
    %3495 = vst [vmem:[#allocation3 + $0x7c8] sm:$0xff] %v3407
    %3496 = vst [vmem:[#allocation3 + $0x7d0] sm:$0xff] %v3408
    %3497 = vst [vmem:[#allocation3 + $0x7d8] sm:$0xff] %v3409
    %3498 = vst [vmem:[#allocation3 + $0x7e0] sm:$0xff] %v3410
    %3499 = vst [vmem:[#allocation3 + $0x7e8] sm:$0xff] %v3411
    %3500 = vst [vmem:[#allocation3 + $0x7f0] sm:$0xff] %v3412
    %3501 = vst [vmem:[#allocation3 + $0x7f8] sm:$0xff] %v3413
    %3502 = vst [vmem:[#allocation3 + $0x800] sm:$0xff] %v3414
    %3503 = vst [vmem:[#allocation3 + $0x808] sm:$0xff] %v3415
    %3504 = vst [vmem:[#allocation3 + $0x810] sm:$0xff] %v3416
    %3505 = vst [vmem:[#allocation3 + $0x818] sm:$0xff] %v3417
    %3506 = vst [vmem:[#allocation3 + $0x820] sm:$0xff] %v3418
    %3507 = vst [vmem:[#allocation3 + $0x828] sm:$0xff] %v3419
    %3508 = vst [vmem:[#allocation3 + $0x830] sm:$0xff] %v3420
    %3509 = vst [vmem:[#allocation3 + $0x838] sm:$0xff] %v3421
    %v3510 = vld [vmem:[#allocation2 + $0x8] sm:$0xff]
    %v3511 = vld [vmem:[#allocation2 + $0x10] sm:$0xff]
    %v3512 = vld [vmem:[#allocation2 + $0x18] sm:$0xff]
    %v3513 = vld [vmem:[#allocation2 + $0x20] sm:$0xff]
    %v3514 = vld [vmem:[#allocation2 + $0x28] sm:$0xff]
    %v3515 = vld [vmem:[#allocation2 + $0x30] sm:$0xff]
    %v3516 = vld [vmem:[#allocation2 + $0x38] sm:$0xff]
    %v3517 = vld [vmem:[#allocation2 + $0x40] sm:$0xff]
    %v3518 = vld [vmem:[#allocation2 + $0x48] sm:$0xff]
    %v3519 = vld [vmem:[#allocation2 + $0x50] sm:$0xff]
    %v3520 = vld [vmem:[#allocation2 + $0x58] sm:$0xff]
    %v3521 = vld [vmem:[#allocation2 + $0x60] sm:$0xff]
    %v3522 = vld [vmem:[#allocation2 + $0x70] sm:$0xff]
    %v3523 = vld [vmem:[#allocation2 + $0x78] sm:$0xff]
    %v3524 = vld [vmem:[#allocation2 + $0x80] sm:$0xff]
    %v3525 = vld [vmem:[#allocation2 + $0x88] sm:$0xff]
    %v3526 = vld [vmem:[#allocation2 + $0x90] sm:$0xff]
    %v3527 = vld [vmem:[#allocation2 + $0x98] sm:$0xff]
    %v3528 = vld [vmem:[#allocation2 + $0xa0] sm:$0xff]
    %v3529 = vld [vmem:[#allocation2 + $0xa8] sm:$0xff]
    %v3530 = vld [vmem:[#allocation2 + $0xb0] sm:$0xff]
    %v3531 = vld [vmem:[#allocation2 + $0xb8] sm:$0xff]
    %v3532 = vld [vmem:[#allocation2 + $0xc0] sm:$0xff]
    %v3533 = vld [vmem:[#allocation2 + $0xc8] sm:$0xff]
    %v3534 = vld [vmem:[#allocation2 + $0xd8] sm:$0xff]
    %v3535 = vld [vmem:[#allocation2 + $0xe0] sm:$0xff]
    %v3536 = vld [vmem:[#allocation2 + $0xe8] sm:$0xff]
    %v3537 = vld [vmem:[#allocation2 + $0xf0] sm:$0xff]
    %v3538 = vld [vmem:[#allocation2 + $0xf8] sm:$0xff]
    %v3539 = vld [vmem:[#allocation2 + $0x100] sm:$0xff]
    %v3540 = vld [vmem:[#allocation2 + $0x108] sm:$0xff]
    %v3541 = vld [vmem:[#allocation2 + $0x110] sm:$0xff]
    %v3542 = vld [vmem:[#allocation2 + $0x118] sm:$0xff]
    %v3543 = vld [vmem:[#allocation2 + $0x120] sm:$0xff]
    %v3544 = vld [vmem:[#allocation2 + $0x128] sm:$0xff]
    %v3545 = vld [vmem:[#allocation2 + $0x130] sm:$0xff]
    %v3546 = vld [vmem:[#allocation2 + $0x140] sm:$0xff]
    %v3547 = vld [vmem:[#allocation2 + $0x148] sm:$0xff]
    %v3548 = vld [vmem:[#allocation2 + $0x150] sm:$0xff]
    %v3549 = vld [vmem:[#allocation2 + $0x158] sm:$0xff]
    %v3550 = vld [vmem:[#allocation2 + $0x160] sm:$0xff]
    %v3551 = vld [vmem:[#allocation2 + $0x168] sm:$0xff]
    %v3552 = vld [vmem:[#allocation2 + $0x170] sm:$0xff]
    %v3553 = vld [vmem:[#allocation2 + $0x178] sm:$0xff]
    %v3554 = vld [vmem:[#allocation2 + $0x180] sm:$0xff]
    %v3555 = vld [vmem:[#allocation2 + $0x188] sm:$0xff]
    %v3556 = vld [vmem:[#allocation2 + $0x190] sm:$0xff]
    %v3557 = vld [vmem:[#allocation2 + $0x198] sm:$0xff]
    %3606 = vrot.lane.b32.xlu0 %v3510, 111
    %v3607 = vpop.permute.xlu0 %3606
    %3608 = vrot.lane.b32.xlu0 %v3511, 111
    %v3609 = vpop.permute.xlu0 %3608
    %3610 = vrot.lane.b32.xlu0 %v3512, 111
    %v3611 = vpop.permute.xlu0 %3610
    %3612 = vrot.lane.b32.xlu0 %v3513, 111
    %v3613 = vpop.permute.xlu0 %3612
    %3614 = vrot.lane.b32.xlu0 %v3514, 111
    %v3615 = vpop.permute.xlu0 %3614
    %3616 = vrot.lane.b32.xlu0 %v3515, 111
    %v3617 = vpop.permute.xlu0 %3616
    %3618 = vrot.lane.b32.xlu0 %v3516, 111
    %v3619 = vpop.permute.xlu0 %3618
    %3620 = vrot.lane.b32.xlu0 %v3517, 111
    %v3621 = vpop.permute.xlu0 %3620
    %3622 = vrot.lane.b32.xlu0 %v3518, 111
    %v3623 = vpop.permute.xlu0 %3622
    %3624 = vrot.lane.b32.xlu0 %v3519, 111
    %v3625 = vpop.permute.xlu0 %3624
    %3626 = vrot.lane.b32.xlu0 %v3520, 111
    %v3627 = vpop.permute.xlu0 %3626
    %3628 = vrot.lane.b32.xlu0 %v3521, 111
    %v3629 = vpop.permute.xlu0 %3628
    %3630 = vrot.lane.b32.xlu0 %v3522, 111
    %v3631 = vpop.permute.xlu0 %3630
    %3632 = vrot.lane.b32.xlu0 %v3523, 111
    %v3633 = vpop.permute.xlu0 %3632
    %3634 = vrot.lane.b32.xlu0 %v3524, 111
    %v3635 = vpop.permute.xlu0 %3634
    %3636 = vrot.lane.b32.xlu0 %v3525, 111
    %v3637 = vpop.permute.xlu0 %3636
    %3638 = vrot.lane.b32.xlu0 %v3526, 111
    %v3639 = vpop.permute.xlu0 %3638
    %3640 = vrot.lane.b32.xlu0 %v3527, 111
    %v3641 = vpop.permute.xlu0 %3640
    %3642 = vrot.lane.b32.xlu0 %v3528, 111
    %v3643 = vpop.permute.xlu0 %3642
    %3644 = vrot.lane.b32.xlu0 %v3529, 111
    %v3645 = vpop.permute.xlu0 %3644
    %3646 = vrot.lane.b32.xlu0 %v3530, 111
    %v3647 = vpop.permute.xlu0 %3646
    %3648 = vrot.lane.b32.xlu0 %v3531, 111
    %v3649 = vpop.permute.xlu0 %3648
    %3650 = vrot.lane.b32.xlu0 %v3532, 111
    %v3651 = vpop.permute.xlu0 %3650
    %3652 = vrot.lane.b32.xlu0 %v3533, 111
    %v3653 = vpop.permute.xlu0 %3652
    %3654 = vrot.lane.b32.xlu0 %v3534, 111
    %v3655 = vpop.permute.xlu0 %3654
    %3656 = vrot.lane.b32.xlu0 %v3535, 111
    %v3657 = vpop.permute.xlu0 %3656
    %3658 = vrot.lane.b32.xlu0 %v3536, 111
    %v3659 = vpop.permute.xlu0 %3658
    %3660 = vrot.lane.b32.xlu0 %v3537, 111
    %v3661 = vpop.permute.xlu0 %3660
    %3662 = vrot.lane.b32.xlu0 %v3538, 111
    %v3663 = vpop.permute.xlu0 %3662
    %3664 = vrot.lane.b32.xlu0 %v3539, 111
    %v3665 = vpop.permute.xlu0 %3664
    %3666 = vrot.lane.b32.xlu0 %v3540, 111
    %v3667 = vpop.permute.xlu0 %3666
    %3668 = vrot.lane.b32.xlu0 %v3541, 111
    %v3669 = vpop.permute.xlu0 %3668
    %3670 = vrot.lane.b32.xlu0 %v3542, 111
    %v3671 = vpop.permute.xlu0 %3670
    %3672 = vrot.lane.b32.xlu0 %v3543, 111
    %v3673 = vpop.permute.xlu0 %3672
    %3674 = vrot.lane.b32.xlu0 %v3544, 111
    %v3675 = vpop.permute.xlu0 %3674
    %3676 = vrot.lane.b32.xlu0 %v3545, 111
    %v3677 = vpop.permute.xlu0 %3676
    %3678 = vrot.lane.b32.xlu0 %v3546, 111
    %v3679 = vpop.permute.xlu0 %3678
    %3680 = vrot.lane.b32.xlu0 %v3547, 111
    %v3681 = vpop.permute.xlu0 %3680
    %3682 = vrot.lane.b32.xlu0 %v3548, 111
    %v3683 = vpop.permute.xlu0 %3682
    %3684 = vrot.lane.b32.xlu0 %v3549, 111
    %v3685 = vpop.permute.xlu0 %3684
    %3686 = vrot.lane.b32.xlu0 %v3550, 111
    %v3687 = vpop.permute.xlu0 %3686
    %3688 = vrot.lane.b32.xlu0 %v3551, 111
    %v3689 = vpop.permute.xlu0 %3688
    %3690 = vrot.lane.b32.xlu0 %v3552, 111
    %v3691 = vpop.permute.xlu0 %3690
    %3692 = vrot.lane.b32.xlu0 %v3553, 111
    %v3693 = vpop.permute.xlu0 %3692
    %3694 = vrot.lane.b32.xlu0 %v3554, 111
    %v3695 = vpop.permute.xlu0 %3694
    %3696 = vrot.lane.b32.xlu0 %v3555, 111
    %v3697 = vpop.permute.xlu0 %3696
    %3698 = vrot.lane.b32.xlu0 %v3556, 111
    %v3699 = vpop.permute.xlu0 %3698
    %3700 = vrot.lane.b32.xlu0 %v3557, 111
    %v3701 = vpop.permute.xlu0 %3700
    %v3702 = vsel %vm676, %v3607, %v3609
    %v3703 = vsel %vm676, %v3609, %v3611
    %v3704 = vsel %vm676, %v3611, %v3613
    %v3705 = vsel %vm676, %v3613, %v3615
    %v3706 = vsel %vm676, %v3615, %v3617
    %v3707 = vsel %vm676, %v3617, %v3619
    %v3708 = vsel %vm676, %v3619, %v3621
    %v3709 = vsel %vm676, %v3621, %v3623
    %v3710 = vsel %vm676, %v3623, %v3625
    %v3711 = vsel %vm676, %v3625, %v3627
    %v3712 = vsel %vm676, %v3627, %v3629
    %v3713 = vsel %vm676, %v3631, %v3633
    %v3714 = vsel %vm676, %v3633, %v3635
    %v3715 = vsel %vm676, %v3635, %v3637
    %v3716 = vsel %vm676, %v3637, %v3639
    %v3717 = vsel %vm676, %v3639, %v3641
    %v3718 = vsel %vm676, %v3641, %v3643
    %v3719 = vsel %vm676, %v3643, %v3645
    %v3720 = vsel %vm676, %v3645, %v3647
    %v3721 = vsel %vm676, %v3647, %v3649
    %v3722 = vsel %vm676, %v3649, %v3651
    %v3723 = vsel %vm676, %v3651, %v3653
    %v3724 = vsel %vm676, %v3655, %v3657
    %v3725 = vsel %vm676, %v3657, %v3659
    %v3726 = vsel %vm676, %v3659, %v3661
    %v3727 = vsel %vm676, %v3661, %v3663
    %v3728 = vsel %vm676, %v3663, %v3665
    %v3729 = vsel %vm676, %v3665, %v3667
    %v3730 = vsel %vm676, %v3667, %v3669
    %v3731 = vsel %vm676, %v3669, %v3671
    %v3732 = vsel %vm676, %v3671, %v3673
    %v3733 = vsel %vm676, %v3673, %v3675
    %v3734 = vsel %vm676, %v3675, %v3677
    %v3735 = vsel %vm676, %v3679, %v3681
    %v3736 = vsel %vm676, %v3681, %v3683
    %v3737 = vsel %vm676, %v3683, %v3685
    %v3738 = vsel %vm676, %v3685, %v3687
    %v3739 = vsel %vm676, %v3687, %v3689
    %v3740 = vsel %vm676, %v3689, %v3691
    %v3741 = vsel %vm676, %v3691, %v3693
    %v3742 = vsel %vm676, %v3693, %v3695
    %v3743 = vsel %vm676, %v3695, %v3697
    %v3744 = vsel %vm676, %v3697, %v3699
    %v3745 = vsel %vm676, %v3699, %v3701
    %3790 = vst [vmem:[#allocation3 + $0x840] sm:$0xff] %v3702
    %3791 = vst [vmem:[#allocation3 + $0x848] sm:$0xff] %v3703
    %3792 = vst [vmem:[#allocation3 + $0x850] sm:$0xff] %v3704
    %3793 = vst [vmem:[#allocation3 + $0x858] sm:$0xff] %v3705
    %3794 = vst [vmem:[#allocation3 + $0x860] sm:$0xff] %v3706
    %3795 = vst [vmem:[#allocation3 + $0x868] sm:$0xff] %v3707
    %3796 = vst [vmem:[#allocation3 + $0x870] sm:$0xff] %v3708
    %3797 = vst [vmem:[#allocation3 + $0x878] sm:$0xff] %v3709
    %3798 = vst [vmem:[#allocation3 + $0x880] sm:$0xff] %v3710
    %3799 = vst [vmem:[#allocation3 + $0x888] sm:$0xff] %v3711
    %3800 = vst [vmem:[#allocation3 + $0x890] sm:$0xff] %v3712
    %3801 = vst [vmem:[#allocation3 + $0x898] sm:$0xff] %v3713
    %3802 = vst [vmem:[#allocation3 + $0x8a0] sm:$0xff] %v3714
    %3803 = vst [vmem:[#allocation3 + $0x8a8] sm:$0xff] %v3715
    %3804 = vst [vmem:[#allocation3 + $0x8b0] sm:$0xff] %v3716
    %3805 = vst [vmem:[#allocation3 + $0x8b8] sm:$0xff] %v3717
    %3806 = vst [vmem:[#allocation3 + $0x8c0] sm:$0xff] %v3718
    %3807 = vst [vmem:[#allocation3 + $0x8c8] sm:$0xff] %v3719
    %3808 = vst [vmem:[#allocation3 + $0x8d0] sm:$0xff] %v3720
    %3809 = vst [vmem:[#allocation3 + $0x8d8] sm:$0xff] %v3721
    %3810 = vst [vmem:[#allocation3 + $0x8e0] sm:$0xff] %v3722
    %3811 = vst [vmem:[#allocation3 + $0x8e8] sm:$0xff] %v3723
    %3812 = vst [vmem:[#allocation3 + $0x8f0] sm:$0xff] %v3724
    %3813 = vst [vmem:[#allocation3 + $0x8f8] sm:$0xff] %v3725
    %3814 = vst [vmem:[#allocation3 + $0x900] sm:$0xff] %v3726
    %3815 = vst [vmem:[#allocation3 + $0x908] sm:$0xff] %v3727
    %3816 = vst [vmem:[#allocation3 + $0x910] sm:$0xff] %v3728
    %3817 = vst [vmem:[#allocation3 + $0x918] sm:$0xff] %v3729
    %3818 = vst [vmem:[#allocation3 + $0x920] sm:$0xff] %v3730
    %3819 = vst [vmem:[#allocation3 + $0x928] sm:$0xff] %v3731
    %3820 = vst [vmem:[#allocation3 + $0x930] sm:$0xff] %v3732
    %3821 = vst [vmem:[#allocation3 + $0x938] sm:$0xff] %v3733
    %3822 = vst [vmem:[#allocation3 + $0x940] sm:$0xff] %v3734
    %3823 = vst [vmem:[#allocation3 + $0x948] sm:$0xff] %v3735
    %3824 = vst [vmem:[#allocation3 + $0x950] sm:$0xff] %v3736
    %3825 = vst [vmem:[#allocation3 + $0x958] sm:$0xff] %v3737
    %3826 = vst [vmem:[#allocation3 + $0x960] sm:$0xff] %v3738
    %3827 = vst [vmem:[#allocation3 + $0x968] sm:$0xff] %v3739
    %3828 = vst [vmem:[#allocation3 + $0x970] sm:$0xff] %v3740
    %3829 = vst [vmem:[#allocation3 + $0x978] sm:$0xff] %v3741
    %3830 = vst [vmem:[#allocation3 + $0x980] sm:$0xff] %v3742
    %3831 = vst [vmem:[#allocation3 + $0x988] sm:$0xff] %v3743
    %3832 = vst [vmem:[#allocation3 + $0x990] sm:$0xff] %v3744
    %3833 = vst [vmem:[#allocation3 + $0x998] sm:$0xff] %v3745
    %v3834 = vld [vmem:[#allocation2 + $0x8] sm:$0xff]
    %v3835 = vld [vmem:[#allocation2 + $0x10] sm:$0xff]
    %v3836 = vld [vmem:[#allocation2 + $0x18] sm:$0xff]
    %v3837 = vld [vmem:[#allocation2 + $0x20] sm:$0xff]
    %v3838 = vld [vmem:[#allocation2 + $0x28] sm:$0xff]
    %v3839 = vld [vmem:[#allocation2 + $0x30] sm:$0xff]
    %v3840 = vld [vmem:[#allocation2 + $0x38] sm:$0xff]
    %v3841 = vld [vmem:[#allocation2 + $0x40] sm:$0xff]
    %v3842 = vld [vmem:[#allocation2 + $0x48] sm:$0xff]
    %v3843 = vld [vmem:[#allocation2 + $0x50] sm:$0xff]
    %v3844 = vld [vmem:[#allocation2 + $0x58] sm:$0xff]
    %v3845 = vld [vmem:[#allocation2 + $0x60] sm:$0xff]
    %v3846 = vld [vmem:[#allocation2 + $0x70] sm:$0xff]
    %v3847 = vld [vmem:[#allocation2 + $0x78] sm:$0xff]
    %v3848 = vld [vmem:[#allocation2 + $0x80] sm:$0xff]
    %v3849 = vld [vmem:[#allocation2 + $0x88] sm:$0xff]
    %v3850 = vld [vmem:[#allocation2 + $0x90] sm:$0xff]
    %v3851 = vld [vmem:[#allocation2 + $0x98] sm:$0xff]
    %v3852 = vld [vmem:[#allocation2 + $0xa0] sm:$0xff]
    %v3853 = vld [vmem:[#allocation2 + $0xa8] sm:$0xff]
    %v3854 = vld [vmem:[#allocation2 + $0xb0] sm:$0xff]
    %v3855 = vld [vmem:[#allocation2 + $0xb8] sm:$0xff]
    %v3856 = vld [vmem:[#allocation2 + $0xc0] sm:$0xff]
    %v3857 = vld [vmem:[#allocation2 + $0xc8] sm:$0xff]
    %v3858 = vld [vmem:[#allocation2 + $0xd8] sm:$0xff]
    %v3859 = vld [vmem:[#allocation2 + $0xe0] sm:$0xff]
    %v3860 = vld [vmem:[#allocation2 + $0xe8] sm:$0xff]
    %v3861 = vld [vmem:[#allocation2 + $0xf0] sm:$0xff]
    %v3862 = vld [vmem:[#allocation2 + $0xf8] sm:$0xff]
    %v3863 = vld [vmem:[#allocation2 + $0x100] sm:$0xff]
    %v3864 = vld [vmem:[#allocation2 + $0x108] sm:$0xff]
    %v3865 = vld [vmem:[#allocation2 + $0x110] sm:$0xff]
    %v3866 = vld [vmem:[#allocation2 + $0x118] sm:$0xff]
    %v3867 = vld [vmem:[#allocation2 + $0x120] sm:$0xff]
    %v3868 = vld [vmem:[#allocation2 + $0x128] sm:$0xff]
    %v3869 = vld [vmem:[#allocation2 + $0x130] sm:$0xff]
    %v3870 = vld [vmem:[#allocation2 + $0x140] sm:$0xff]
    %v3871 = vld [vmem:[#allocation2 + $0x148] sm:$0xff]
    %v3872 = vld [vmem:[#allocation2 + $0x150] sm:$0xff]
    %v3873 = vld [vmem:[#allocation2 + $0x158] sm:$0xff]
    %v3874 = vld [vmem:[#allocation2 + $0x160] sm:$0xff]
    %v3875 = vld [vmem:[#allocation2 + $0x168] sm:$0xff]
    %v3876 = vld [vmem:[#allocation2 + $0x170] sm:$0xff]
    %v3877 = vld [vmem:[#allocation2 + $0x178] sm:$0xff]
    %v3878 = vld [vmem:[#allocation2 + $0x180] sm:$0xff]
    %v3879 = vld [vmem:[#allocation2 + $0x188] sm:$0xff]
    %v3880 = vld [vmem:[#allocation2 + $0x190] sm:$0xff]
    %v3881 = vld [vmem:[#allocation2 + $0x198] sm:$0xff]
    %3930 = vrot.lane.b32.xlu0 %v3834, 110
    %v3931 = vpop.permute.xlu0 %3930
    %3932 = vrot.lane.b32.xlu0 %v3835, 110
    %v3933 = vpop.permute.xlu0 %3932
    %3934 = vrot.lane.b32.xlu0 %v3836, 110
    %v3935 = vpop.permute.xlu0 %3934
    %3936 = vrot.lane.b32.xlu0 %v3837, 110
    %v3937 = vpop.permute.xlu0 %3936
    %3938 = vrot.lane.b32.xlu0 %v3838, 110
    %v3939 = vpop.permute.xlu0 %3938
    %3940 = vrot.lane.b32.xlu0 %v3839, 110
    %v3941 = vpop.permute.xlu0 %3940
    %3942 = vrot.lane.b32.xlu0 %v3840, 110
    %v3943 = vpop.permute.xlu0 %3942
    %3944 = vrot.lane.b32.xlu0 %v3841, 110
    %v3945 = vpop.permute.xlu0 %3944
    %3946 = vrot.lane.b32.xlu0 %v3842, 110
    %v3947 = vpop.permute.xlu0 %3946
    %3948 = vrot.lane.b32.xlu0 %v3843, 110
    %v3949 = vpop.permute.xlu0 %3948
    %3950 = vrot.lane.b32.xlu0 %v3844, 110
    %v3951 = vpop.permute.xlu0 %3950
    %3952 = vrot.lane.b32.xlu0 %v3845, 110
    %v3953 = vpop.permute.xlu0 %3952
    %3954 = vrot.lane.b32.xlu0 %v3846, 110
    %v3955 = vpop.permute.xlu0 %3954
    %3956 = vrot.lane.b32.xlu0 %v3847, 110
    %v3957 = vpop.permute.xlu0 %3956
    %3958 = vrot.lane.b32.xlu0 %v3848, 110
    %v3959 = vpop.permute.xlu0 %3958
    %3960 = vrot.lane.b32.xlu0 %v3849, 110
    %v3961 = vpop.permute.xlu0 %3960
    %3962 = vrot.lane.b32.xlu0 %v3850, 110
    %v3963 = vpop.permute.xlu0 %3962
    %3964 = vrot.lane.b32.xlu0 %v3851, 110
    %v3965 = vpop.permute.xlu0 %3964
    %3966 = vrot.lane.b32.xlu0 %v3852, 110
    %v3967 = vpop.permute.xlu0 %3966
    %3968 = vrot.lane.b32.xlu0 %v3853, 110
    %v3969 = vpop.permute.xlu0 %3968
    %3970 = vrot.lane.b32.xlu0 %v3854, 110
    %v3971 = vpop.permute.xlu0 %3970
    %3972 = vrot.lane.b32.xlu0 %v3855, 110
    %v3973 = vpop.permute.xlu0 %3972
    %3974 = vrot.lane.b32.xlu0 %v3856, 110
    %v3975 = vpop.permute.xlu0 %3974
    %3976 = vrot.lane.b32.xlu0 %v3857, 110
    %v3977 = vpop.permute.xlu0 %3976
    %3978 = vrot.lane.b32.xlu0 %v3858, 110
    %v3979 = vpop.permute.xlu0 %3978
    %3980 = vrot.lane.b32.xlu0 %v3859, 110
    %v3981 = vpop.permute.xlu0 %3980
    %3982 = vrot.lane.b32.xlu0 %v3860, 110
    %v3983 = vpop.permute.xlu0 %3982
    %3984 = vrot.lane.b32.xlu0 %v3861, 110
    %v3985 = vpop.permute.xlu0 %3984
    %3986 = vrot.lane.b32.xlu0 %v3862, 110
    %v3987 = vpop.permute.xlu0 %3986
    %3988 = vrot.lane.b32.xlu0 %v3863, 110
    %v3989 = vpop.permute.xlu0 %3988
    %3990 = vrot.lane.b32.xlu0 %v3864, 110
    %v3991 = vpop.permute.xlu0 %3990
    %3992 = vrot.lane.b32.xlu0 %v3865, 110
    %v3993 = vpop.permute.xlu0 %3992
    %3994 = vrot.lane.b32.xlu0 %v3866, 110
    %v3995 = vpop.permute.xlu0 %3994
    %3996 = vrot.lane.b32.xlu0 %v3867, 110
    %v3997 = vpop.permute.xlu0 %3996
    %3998 = vrot.lane.b32.xlu0 %v3868, 110
    %v3999 = vpop.permute.xlu0 %3998
    %4000 = vrot.lane.b32.xlu0 %v3869, 110
    %v4001 = vpop.permute.xlu0 %4000
    %4002 = vrot.lane.b32.xlu0 %v3870, 110
    %v4003 = vpop.permute.xlu0 %4002
    %4004 = vrot.lane.b32.xlu0 %v3871, 110
    %v4005 = vpop.permute.xlu0 %4004
    %4006 = vrot.lane.b32.xlu0 %v3872, 110
    %v4007 = vpop.permute.xlu0 %4006
    %4008 = vrot.lane.b32.xlu0 %v3873, 110
    %v4009 = vpop.permute.xlu0 %4008
    %4010 = vrot.lane.b32.xlu0 %v3874, 110
    %v4011 = vpop.permute.xlu0 %4010
    %4012 = vrot.lane.b32.xlu0 %v3875, 110
    %v4013 = vpop.permute.xlu0 %4012
    %4014 = vrot.lane.b32.xlu0 %v3876, 110
    %v4015 = vpop.permute.xlu0 %4014
    %4016 = vrot.lane.b32.xlu0 %v3877, 110
    %v4017 = vpop.permute.xlu0 %4016
    %4018 = vrot.lane.b32.xlu0 %v3878, 110
    %v4019 = vpop.permute.xlu0 %4018
    %4020 = vrot.lane.b32.xlu0 %v3879, 110
    %v4021 = vpop.permute.xlu0 %4020
    %4022 = vrot.lane.b32.xlu0 %v3880, 110
    %v4023 = vpop.permute.xlu0 %4022
    %4024 = vrot.lane.b32.xlu0 %v3881, 110
    %v4025 = vpop.permute.xlu0 %4024
    %v4026 = vsel %vm770, %v3931, %v3933
    %v4027 = vsel %vm770, %v3933, %v3935
    %v4028 = vsel %vm770, %v3935, %v3937
    %v4029 = vsel %vm770, %v3937, %v3939
    %v4030 = vsel %vm770, %v3939, %v3941
    %v4031 = vsel %vm770, %v3941, %v3943
    %v4032 = vsel %vm770, %v3943, %v3945
    %v4033 = vsel %vm770, %v3945, %v3947
    %v4034 = vsel %vm770, %v3947, %v3949
    %v4035 = vsel %vm770, %v3949, %v3951
    %v4036 = vsel %vm770, %v3951, %v3953
    %v4037 = vsel %vm770, %v3955, %v3957
    %v4038 = vsel %vm770, %v3957, %v3959
    %v4039 = vsel %vm770, %v3959, %v3961
    %v4040 = vsel %vm770, %v3961, %v3963
    %v4041 = vsel %vm770, %v3963, %v3965
    %v4042 = vsel %vm770, %v3965, %v3967
    %v4043 = vsel %vm770, %v3967, %v3969
    %v4044 = vsel %vm770, %v3969, %v3971
    %v4045 = vsel %vm770, %v3971, %v3973
    %v4046 = vsel %vm770, %v3973, %v3975
    %v4047 = vsel %vm770, %v3975, %v3977
    %v4048 = vsel %vm770, %v3979, %v3981
    %v4049 = vsel %vm770, %v3981, %v3983
    %v4050 = vsel %vm770, %v3983, %v3985
    %v4051 = vsel %vm770, %v3985, %v3987
    %v4052 = vsel %vm770, %v3987, %v3989
    %v4053 = vsel %vm770, %v3989, %v3991
    %v4054 = vsel %vm770, %v3991, %v3993
    %v4055 = vsel %vm770, %v3993, %v3995
    %v4056 = vsel %vm770, %v3995, %v3997
    %v4057 = vsel %vm770, %v3997, %v3999
    %v4058 = vsel %vm770, %v3999, %v4001
    %v4059 = vsel %vm770, %v4003, %v4005
    %v4060 = vsel %vm770, %v4005, %v4007
    %v4061 = vsel %vm770, %v4007, %v4009
    %v4062 = vsel %vm770, %v4009, %v4011
    %v4063 = vsel %vm770, %v4011, %v4013
    %v4064 = vsel %vm770, %v4013, %v4015
    %v4065 = vsel %vm770, %v4015, %v4017
    %v4066 = vsel %vm770, %v4017, %v4019
    %v4067 = vsel %vm770, %v4019, %v4021
    %v4068 = vsel %vm770, %v4021, %v4023
    %v4069 = vsel %vm770, %v4023, %v4025
    %4114 = vst [vmem:[#allocation3 + $0x9a0] sm:$0xff] %v4026
    %4115 = vst [vmem:[#allocation3 + $0x9a8] sm:$0xff] %v4027
    %4116 = vst [vmem:[#allocation3 + $0x9b0] sm:$0xff] %v4028
    %4117 = vst [vmem:[#allocation3 + $0x9b8] sm:$0xff] %v4029
    %4118 = vst [vmem:[#allocation3 + $0x9c0] sm:$0xff] %v4030
    %4119 = vst [vmem:[#allocation3 + $0x9c8] sm:$0xff] %v4031
    %4120 = vst [vmem:[#allocation3 + $0x9d0] sm:$0xff] %v4032
    %4121 = vst [vmem:[#allocation3 + $0x9d8] sm:$0xff] %v4033
    %4122 = vst [vmem:[#allocation3 + $0x9e0] sm:$0xff] %v4034
    %4123 = vst [vmem:[#allocation3 + $0x9e8] sm:$0xff] %v4035
    %4124 = vst [vmem:[#allocation3 + $0x9f0] sm:$0xff] %v4036
    %4125 = vst [vmem:[#allocation3 + $0x9f8] sm:$0xff] %v4037
    %4126 = vst [vmem:[#allocation3 + $0xa00] sm:$0xff] %v4038
    %4127 = vst [vmem:[#allocation3 + $0xa08] sm:$0xff] %v4039
    %4128 = vst [vmem:[#allocation3 + $0xa10] sm:$0xff] %v4040
    %4129 = vst [vmem:[#allocation3 + $0xa18] sm:$0xff] %v4041
    %4130 = vst [vmem:[#allocation3 + $0xa20] sm:$0xff] %v4042
    %4131 = vst [vmem:[#allocation3 + $0xa28] sm:$0xff] %v4043
    %4132 = vst [vmem:[#allocation3 + $0xa30] sm:$0xff] %v4044
    %4133 = vst [vmem:[#allocation3 + $0xa38] sm:$0xff] %v4045
    %4134 = vst [vmem:[#allocation3 + $0xa40] sm:$0xff] %v4046
    %4135 = vst [vmem:[#allocation3 + $0xa48] sm:$0xff] %v4047
    %4136 = vst [vmem:[#allocation3 + $0xa50] sm:$0xff] %v4048
    %4137 = vst [vmem:[#allocation3 + $0xa58] sm:$0xff] %v4049
    %4138 = vst [vmem:[#allocation3 + $0xa60] sm:$0xff] %v4050
    %4139 = vst [vmem:[#allocation3 + $0xa68] sm:$0xff] %v4051
    %4140 = vst [vmem:[#allocation3 + $0xa70] sm:$0xff] %v4052
    %4141 = vst [vmem:[#allocation3 + $0xa78] sm:$0xff] %v4053
    %4142 = vst [vmem:[#allocation3 + $0xa80] sm:$0xff] %v4054
    %4143 = vst [vmem:[#allocation3 + $0xa88] sm:$0xff] %v4055
    %4144 = vst [vmem:[#allocation3 + $0xa90] sm:$0xff] %v4056
    %4145 = vst [vmem:[#allocation3 + $0xa98] sm:$0xff] %v4057
    %4146 = vst [vmem:[#allocation3 + $0xaa0] sm:$0xff] %v4058
    %4147 = vst [vmem:[#allocation3 + $0xaa8] sm:$0xff] %v4059
    %4148 = vst [vmem:[#allocation3 + $0xab0] sm:$0xff] %v4060
    %4149 = vst [vmem:[#allocation3 + $0xab8] sm:$0xff] %v4061
    %4150 = vst [vmem:[#allocation3 + $0xac0] sm:$0xff] %v4062
    %4151 = vst [vmem:[#allocation3 + $0xac8] sm:$0xff] %v4063
    %4152 = vst [vmem:[#allocation3 + $0xad0] sm:$0xff] %v4064
    %4153 = vst [vmem:[#allocation3 + $0xad8] sm:$0xff] %v4065
    %4154 = vst [vmem:[#allocation3 + $0xae0] sm:$0xff] %v4066
    %4155 = vst [vmem:[#allocation3 + $0xae8] sm:$0xff] %v4067
    %4156 = vst [vmem:[#allocation3 + $0xaf0] sm:$0xff] %v4068
    %4157 = vst [vmem:[#allocation3 + $0xaf8] sm:$0xff] %v4069
    %v4158 = vld [vmem:[#allocation2 + $0x8] sm:$0xff]
    %v4159 = vld [vmem:[#allocation2 + $0x10] sm:$0xff]
    %v4160 = vld [vmem:[#allocation2 + $0x18] sm:$0xff]
    %v4161 = vld [vmem:[#allocation2 + $0x20] sm:$0xff]
    %v4162 = vld [vmem:[#allocation2 + $0x28] sm:$0xff]
    %v4163 = vld [vmem:[#allocation2 + $0x30] sm:$0xff]
    %v4164 = vld [vmem:[#allocation2 + $0x38] sm:$0xff]
    %v4165 = vld [vmem:[#allocation2 + $0x40] sm:$0xff]
    %v4166 = vld [vmem:[#allocation2 + $0x48] sm:$0xff]
    %v4167 = vld [vmem:[#allocation2 + $0x50] sm:$0xff]
    %v4168 = vld [vmem:[#allocation2 + $0x58] sm:$0xff]
    %v4169 = vld [vmem:[#allocation2 + $0x60] sm:$0xff]
    %v4170 = vld [vmem:[#allocation2 + $0x70] sm:$0xff]
    %v4171 = vld [vmem:[#allocation2 + $0x78] sm:$0xff]
    %v4172 = vld [vmem:[#allocation2 + $0x80] sm:$0xff]
    %v4173 = vld [vmem:[#allocation2 + $0x88] sm:$0xff]
    %v4174 = vld [vmem:[#allocation2 + $0x90] sm:$0xff]
    %v4175 = vld [vmem:[#allocation2 + $0x98] sm:$0xff]
    %v4176 = vld [vmem:[#allocation2 + $0xa0] sm:$0xff]
    %v4177 = vld [vmem:[#allocation2 + $0xa8] sm:$0xff]
    %v4178 = vld [vmem:[#allocation2 + $0xb0] sm:$0xff]
    %v4179 = vld [vmem:[#allocation2 + $0xb8] sm:$0xff]
    %v4180 = vld [vmem:[#allocation2 + $0xc0] sm:$0xff]
    %v4181 = vld [vmem:[#allocation2 + $0xc8] sm:$0xff]
    %v4182 = vld [vmem:[#allocation2 + $0xd8] sm:$0xff]
    %v4183 = vld [vmem:[#allocation2 + $0xe0] sm:$0xff]
    %v4184 = vld [vmem:[#allocation2 + $0xe8] sm:$0xff]
    %v4185 = vld [vmem:[#allocation2 + $0xf0] sm:$0xff]
    %v4186 = vld [vmem:[#allocation2 + $0xf8] sm:$0xff]
    %v4187 = vld [vmem:[#allocation2 + $0x100] sm:$0xff]
    %v4188 = vld [vmem:[#allocation2 + $0x108] sm:$0xff]
    %v4189 = vld [vmem:[#allocation2 + $0x110] sm:$0xff]
    %v4190 = vld [vmem:[#allocation2 + $0x118] sm:$0xff]
    %v4191 = vld [vmem:[#allocation2 + $0x120] sm:$0xff]
    %v4192 = vld [vmem:[#allocation2 + $0x128] sm:$0xff]
    %v4193 = vld [vmem:[#allocation2 + $0x130] sm:$0xff]
    %v4194 = vld [vmem:[#allocation2 + $0x140] sm:$0xff]
    %v4195 = vld [vmem:[#allocation2 + $0x148] sm:$0xff]
    %v4196 = vld [vmem:[#allocation2 + $0x150] sm:$0xff]
    %v4197 = vld [vmem:[#allocation2 + $0x158] sm:$0xff]
    %v4198 = vld [vmem:[#allocation2 + $0x160] sm:$0xff]
    %v4199 = vld [vmem:[#allocation2 + $0x168] sm:$0xff]
    %v4200 = vld [vmem:[#allocation2 + $0x170] sm:$0xff]
    %v4201 = vld [vmem:[#allocation2 + $0x178] sm:$0xff]
    %v4202 = vld [vmem:[#allocation2 + $0x180] sm:$0xff]
    %v4203 = vld [vmem:[#allocation2 + $0x188] sm:$0xff]
    %v4204 = vld [vmem:[#allocation2 + $0x190] sm:$0xff]
    %v4205 = vld [vmem:[#allocation2 + $0x198] sm:$0xff]
    %4254 = vrot.lane.b32.xlu0 %v4158, 109
    %v4255 = vpop.permute.xlu0 %4254
    %4256 = vrot.lane.b32.xlu0 %v4159, 109
    %v4257 = vpop.permute.xlu0 %4256
    %4258 = vrot.lane.b32.xlu0 %v4160, 109
    %v4259 = vpop.permute.xlu0 %4258
    %4260 = vrot.lane.b32.xlu0 %v4161, 109
    %v4261 = vpop.permute.xlu0 %4260
    %4262 = vrot.lane.b32.xlu0 %v4162, 109
    %v4263 = vpop.permute.xlu0 %4262
    %4264 = vrot.lane.b32.xlu0 %v4163, 109
    %v4265 = vpop.permute.xlu0 %4264
    %4266 = vrot.lane.b32.xlu0 %v4164, 109
    %v4267 = vpop.permute.xlu0 %4266
    %4268 = vrot.lane.b32.xlu0 %v4165, 109
    %v4269 = vpop.permute.xlu0 %4268
    %4270 = vrot.lane.b32.xlu0 %v4166, 109
    %v4271 = vpop.permute.xlu0 %4270
    %4272 = vrot.lane.b32.xlu0 %v4167, 109
    %v4273 = vpop.permute.xlu0 %4272
    %4274 = vrot.lane.b32.xlu0 %v4168, 109
    %v4275 = vpop.permute.xlu0 %4274
    %4276 = vrot.lane.b32.xlu0 %v4169, 109
    %v4277 = vpop.permute.xlu0 %4276
    %4278 = vrot.lane.b32.xlu0 %v4170, 109
    %v4279 = vpop.permute.xlu0 %4278
    %4280 = vrot.lane.b32.xlu0 %v4171, 109
    %v4281 = vpop.permute.xlu0 %4280
    %4282 = vrot.lane.b32.xlu0 %v4172, 109
    %v4283 = vpop.permute.xlu0 %4282
    %4284 = vrot.lane.b32.xlu0 %v4173, 109
    %v4285 = vpop.permute.xlu0 %4284
    %4286 = vrot.lane.b32.xlu0 %v4174, 109
    %v4287 = vpop.permute.xlu0 %4286
    %4288 = vrot.lane.b32.xlu0 %v4175, 109
    %v4289 = vpop.permute.xlu0 %4288
    %4290 = vrot.lane.b32.xlu0 %v4176, 109
    %v4291 = vpop.permute.xlu0 %4290
    %4292 = vrot.lane.b32.xlu0 %v4177, 109
    %v4293 = vpop.permute.xlu0 %4292
    %4294 = vrot.lane.b32.xlu0 %v4178, 109
    %v4295 = vpop.permute.xlu0 %4294
    %4296 = vrot.lane.b32.xlu0 %v4179, 109
    %v4297 = vpop.permute.xlu0 %4296
    %4298 = vrot.lane.b32.xlu0 %v4180, 109
    %v4299 = vpop.permute.xlu0 %4298
    %4300 = vrot.lane.b32.xlu0 %v4181, 109
    %v4301 = vpop.permute.xlu0 %4300
    %4302 = vrot.lane.b32.xlu0 %v4182, 109
    %v4303 = vpop.permute.xlu0 %4302
    %4304 = vrot.lane.b32.xlu0 %v4183, 109
    %v4305 = vpop.permute.xlu0 %4304
    %4306 = vrot.lane.b32.xlu0 %v4184, 109
    %v4307 = vpop.permute.xlu0 %4306
    %4308 = vrot.lane.b32.xlu0 %v4185, 109
    %v4309 = vpop.permute.xlu0 %4308
    %4310 = vrot.lane.b32.xlu0 %v4186, 109
    %v4311 = vpop.permute.xlu0 %4310
    %4312 = vrot.lane.b32.xlu0 %v4187, 109
    %v4313 = vpop.permute.xlu0 %4312
    %4314 = vrot.lane.b32.xlu0 %v4188, 109
    %v4315 = vpop.permute.xlu0 %4314
    %4316 = vrot.lane.b32.xlu0 %v4189, 109
    %v4317 = vpop.permute.xlu0 %4316
    %4318 = vrot.lane.b32.xlu0 %v4190, 109
    %v4319 = vpop.permute.xlu0 %4318
    %4320 = vrot.lane.b32.xlu0 %v4191, 109
    %v4321 = vpop.permute.xlu0 %4320
    %4322 = vrot.lane.b32.xlu0 %v4192, 109
    %v4323 = vpop.permute.xlu0 %4322
    %4324 = vrot.lane.b32.xlu0 %v4193, 109
    %v4325 = vpop.permute.xlu0 %4324
    %4326 = vrot.lane.b32.xlu0 %v4194, 109
    %v4327 = vpop.permute.xlu0 %4326
    %4328 = vrot.lane.b32.xlu0 %v4195, 109
    %v4329 = vpop.permute.xlu0 %4328
    %4330 = vrot.lane.b32.xlu0 %v4196, 109
    %v4331 = vpop.permute.xlu0 %4330
    %4332 = vrot.lane.b32.xlu0 %v4197, 109
    %v4333 = vpop.permute.xlu0 %4332
    %4334 = vrot.lane.b32.xlu0 %v4198, 109
    %v4335 = vpop.permute.xlu0 %4334
    %4336 = vrot.lane.b32.xlu0 %v4199, 109
    %v4337 = vpop.permute.xlu0 %4336
    %4338 = vrot.lane.b32.xlu0 %v4200, 109
    %v4339 = vpop.permute.xlu0 %4338
    %4340 = vrot.lane.b32.xlu0 %v4201, 109
    %v4341 = vpop.permute.xlu0 %4340
    %4342 = vrot.lane.b32.xlu0 %v4202, 109
    %v4343 = vpop.permute.xlu0 %4342
    %4344 = vrot.lane.b32.xlu0 %v4203, 109
    %v4345 = vpop.permute.xlu0 %4344
    %4346 = vrot.lane.b32.xlu0 %v4204, 109
    %v4347 = vpop.permute.xlu0 %4346
    %4348 = vrot.lane.b32.xlu0 %v4205, 109
    %v4349 = vpop.permute.xlu0 %4348
    %v4350 = vsel %vm852, %v4255, %v4257
    %v4351 = vsel %vm852, %v4257, %v4259
    %v4352 = vsel %vm852, %v4259, %v4261
    %v4353 = vsel %vm852, %v4261, %v4263
    %v4354 = vsel %vm852, %v4263, %v4265
    %v4355 = vsel %vm852, %v4265, %v4267
    %v4356 = vsel %vm852, %v4267, %v4269
    %v4357 = vsel %vm852, %v4269, %v4271
    %v4358 = vsel %vm852, %v4271, %v4273
    %v4359 = vsel %vm852, %v4273, %v4275
    %v4360 = vsel %vm852, %v4275, %v4277
    %v4361 = vsel %vm852, %v4279, %v4281
    %v4362 = vsel %vm852, %v4281, %v4283
    %v4363 = vsel %vm852, %v4283, %v4285
    %v4364 = vsel %vm852, %v4285, %v4287
    %v4365 = vsel %vm852, %v4287, %v4289
    %v4366 = vsel %vm852, %v4289, %v4291
    %v4367 = vsel %vm852, %v4291, %v4293
    %v4368 = vsel %vm852, %v4293, %v4295
    %v4369 = vsel %vm852, %v4295, %v4297
    %v4370 = vsel %vm852, %v4297, %v4299
    %v4371 = vsel %vm852, %v4299, %v4301
    %v4372 = vsel %vm852, %v4303, %v4305
    %v4373 = vsel %vm852, %v4305, %v4307
    %v4374 = vsel %vm852, %v4307, %v4309
    %v4375 = vsel %vm852, %v4309, %v4311
    %v4376 = vsel %vm852, %v4311, %v4313
    %v4377 = vsel %vm852, %v4313, %v4315
    %v4378 = vsel %vm852, %v4315, %v4317
    %v4379 = vsel %vm852, %v4317, %v4319
    %v4380 = vsel %vm852, %v4319, %v4321
    %v4381 = vsel %vm852, %v4321, %v4323
    %v4382 = vsel %vm852, %v4323, %v4325
    %v4383 = vsel %vm852, %v4327, %v4329
    %v4384 = vsel %vm852, %v4329, %v4331
    %v4385 = vsel %vm852, %v4331, %v4333
    %v4386 = vsel %vm852, %v4333, %v4335
    %v4387 = vsel %vm852, %v4335, %v4337
    %v4388 = vsel %vm852, %v4337, %v4339
    %v4389 = vsel %vm852, %v4339, %v4341
    %v4390 = vsel %vm852, %v4341, %v4343
    %v4391 = vsel %vm852, %v4343, %v4345
    %v4392 = vsel %vm852, %v4345, %v4347
    %v4393 = vsel %vm852, %v4347, %v4349
    %4438 = vst [vmem:[#allocation3 + $0xb00] sm:$0xff] %v4350
    %4439 = vst [vmem:[#allocation3 + $0xb08] sm:$0xff] %v4351
    %4440 = vst [vmem:[#allocation3 + $0xb10] sm:$0xff] %v4352
    %4441 = vst [vmem:[#allocation3 + $0xb18] sm:$0xff] %v4353
    %4442 = vst [vmem:[#allocation3 + $0xb20] sm:$0xff] %v4354
    %4443 = vst [vmem:[#allocation3 + $0xb28] sm:$0xff] %v4355
    %4444 = vst [vmem:[#allocation3 + $0xb30] sm:$0xff] %v4356
    %4445 = vst [vmem:[#allocation3 + $0xb38] sm:$0xff] %v4357
    %4446 = vst [vmem:[#allocation3 + $0xb40] sm:$0xff] %v4358
    %4447 = vst [vmem:[#allocation3 + $0xb48] sm:$0xff] %v4359
    %4448 = vst [vmem:[#allocation3 + $0xb50] sm:$0xff] %v4360
    %4449 = vst [vmem:[#allocation3 + $0xb58] sm:$0xff] %v4361
    %4450 = vst [vmem:[#allocation3 + $0xb60] sm:$0xff] %v4362
    %4451 = vst [vmem:[#allocation3 + $0xb68] sm:$0xff] %v4363
    %4452 = vst [vmem:[#allocation3 + $0xb70] sm:$0xff] %v4364
    %4453 = vst [vmem:[#allocation3 + $0xb78] sm:$0xff] %v4365
    %4454 = vst [vmem:[#allocation3 + $0xb80] sm:$0xff] %v4366
    %4455 = vst [vmem:[#allocation3 + $0xb88] sm:$0xff] %v4367
    %4456 = vst [vmem:[#allocation3 + $0xb90] sm:$0xff] %v4368
    %4457 = vst [vmem:[#allocation3 + $0xb98] sm:$0xff] %v4369
    %4458 = vst [vmem:[#allocation3 + $0xba0] sm:$0xff] %v4370
    %4459 = vst [vmem:[#allocation3 + $0xba8] sm:$0xff] %v4371
    %4460 = vst [vmem:[#allocation3 + $0xbb0] sm:$0xff] %v4372
    %4461 = vst [vmem:[#allocation3 + $0xbb8] sm:$0xff] %v4373
    %4462 = vst [vmem:[#allocation3 + $0xbc0] sm:$0xff] %v4374
    %4463 = vst [vmem:[#allocation3 + $0xbc8] sm:$0xff] %v4375
    %4464 = vst [vmem:[#allocation3 + $0xbd0] sm:$0xff] %v4376
    %4465 = vst [vmem:[#allocation3 + $0xbd8] sm:$0xff] %v4377
    %4466 = vst [vmem:[#allocation3 + $0xbe0] sm:$0xff] %v4378
    %4467 = vst [vmem:[#allocation3 + $0xbe8] sm:$0xff] %v4379
    %4468 = vst [vmem:[#allocation3 + $0xbf0] sm:$0xff] %v4380
    %4469 = vst [vmem:[#allocation3 + $0xbf8] sm:$0xff] %v4381
    %4470 = vst [vmem:[#allocation3 + $0xc00] sm:$0xff] %v4382
    %4471 = vst [vmem:[#allocation3 + $0xc08] sm:$0xff] %v4383
    %4472 = vst [vmem:[#allocation3 + $0xc10] sm:$0xff] %v4384
    %4473 = vst [vmem:[#allocation3 + $0xc18] sm:$0xff] %v4385
    %4474 = vst [vmem:[#allocation3 + $0xc20] sm:$0xff] %v4386
    %4475 = vst [vmem:[#allocation3 + $0xc28] sm:$0xff] %v4387
    %4476 = vst [vmem:[#allocation3 + $0xc30] sm:$0xff] %v4388
    %4477 = vst [vmem:[#allocation3 + $0xc38] sm:$0xff] %v4389
    %4478 = vst [vmem:[#allocation3 + $0xc40] sm:$0xff] %v4390
    %4479 = vst [vmem:[#allocation3 + $0xc48] sm:$0xff] %v4391
    %4480 = vst [vmem:[#allocation3 + $0xc50] sm:$0xff] %v4392
    %4481 = vst [vmem:[#allocation3 + $0xc58] sm:$0xff] %v4393
    %v4482 = vld [vmem:[%s5] sm:$0xff]
    %v4483 = vld [vmem:[%s5 + $0x8] sm:$0xff]
    %v4484 = vld [vmem:[%s5 + $0x10] sm:$0xff]
    %v4485 = vld [vmem:[%s5 + $0x18] sm:$0xff]
    %v4486 = vld [vmem:[%s5 + $0x20] sm:$0xff]
    %v4487 = vld [vmem:[%s5 + $0x28] sm:$0xff]
    %v4488 = vld [vmem:[%s5 + $0x30] sm:$0xff]
    %v4489 = vld [vmem:[%s5 + $0x38] sm:$0xff]
    %v4490 = vld [vmem:[%s5 + $0x40] sm:$0xff]
    %v4491 = vld [vmem:[%s5 + $0x48] sm:$0xff]
    %v4492 = vld [vmem:[%s5 + $0x50] sm:$0xff]
    %v4493 = vld [vmem:[%s5 + $0x58] sm:$0xff]
    %v4494 = vld [vmem:[#allocation3] sm:$0xff]
    %v4495 = vld [vmem:[#allocation3 + $0x8] sm:$0xff]
    %v4496 = vld [vmem:[#allocation3 + $0x10] sm:$0xff]
    %v4497 = vld [vmem:[#allocation3 + $0x18] sm:$0xff]
    %v4498 = vld [vmem:[#allocation3 + $0x20] sm:$0xff]
    %v4499 = vld [vmem:[#allocation3 + $0x28] sm:$0xff]
    %v4500 = vld [vmem:[#allocation3 + $0x30] sm:$0xff]
    %v4501 = vld [vmem:[#allocation3 + $0x38] sm:$0xff]
    %v4502 = vld [vmem:[#allocation3 + $0x40] sm:$0xff]
    %v4503 = vld [vmem:[#allocation3 + $0x48] sm:$0xff]
    %v4504 = vld [vmem:[#allocation3 + $0x50] sm:$0xff]
    %v4505 = vld [vmem:[#allocation3 + $0x58] sm:$0xff]
    %v4506 = vld [vmem:[#allocation3 + $0x60] sm:$0xff]
    %v4507 = vld [vmem:[#allocation3 + $0x68] sm:$0xff]
    %v4508 = vld [vmem:[#allocation3 + $0x70] sm:$0xff]
    %v4509 = vld [vmem:[#allocation3 + $0x78] sm:$0xff]
    %v4510 = vld [vmem:[#allocation3 + $0x80] sm:$0xff]
    %v4511 = vld [vmem:[#allocation3 + $0x88] sm:$0xff]
    %v4512 = vld [vmem:[#allocation3 + $0x90] sm:$0xff]
    %v4513 = vld [vmem:[#allocation3 + $0x98] sm:$0xff]
    %v4514 = vld [vmem:[#allocation3 + $0xa0] sm:$0xff]
    %v4515 = vld [vmem:[#allocation3 + $0xa8] sm:$0xff]
    %v4516 = vld [vmem:[#allocation3 + $0xb0] sm:$0xff]
    %v4517 = vld [vmem:[#allocation3 + $0xb8] sm:$0xff]
    %v4518 = vld [vmem:[#allocation3 + $0xc0] sm:$0xff]
    %v4519 = vld [vmem:[#allocation3 + $0xc8] sm:$0xff]
    %v4520 = vld [vmem:[#allocation3 + $0xd0] sm:$0xff]
    %v4521 = vld [vmem:[#allocation3 + $0xd8] sm:$0xff]
    %v4522 = vld [vmem:[#allocation3 + $0xe0] sm:$0xff]
    %v4523 = vld [vmem:[#allocation3 + $0xe8] sm:$0xff]
    %v4524 = vld [vmem:[#allocation3 + $0xf0] sm:$0xff]
    %v4525 = vld [vmem:[#allocation3 + $0xf8] sm:$0xff]
    %v4526 = vld [vmem:[#allocation3 + $0x100] sm:$0xff]
    %v4527 = vld [vmem:[#allocation3 + $0x108] sm:$0xff]
    %v4528 = vld [vmem:[#allocation3 + $0x110] sm:$0xff]
    %v4529 = vld [vmem:[#allocation3 + $0x118] sm:$0xff]
    %v4530 = vld [vmem:[#allocation3 + $0x120] sm:$0xff]
    %v4531 = vld [vmem:[#allocation3 + $0x128] sm:$0xff]
    %v4532 = vld [vmem:[#allocation3 + $0x130] sm:$0xff]
    %v4533 = vld [vmem:[#allocation3 + $0x138] sm:$0xff]
    %v4534 = vld [vmem:[#allocation3 + $0x140] sm:$0xff]
    %v4535 = vld [vmem:[#allocation3 + $0x148] sm:$0xff]
    %v4536 = vld [vmem:[#allocation3 + $0x150] sm:$0xff]
    %v4537 = vld [vmem:[#allocation3 + $0x158] sm:$0xff]
    %v4538 = vld [vmem:[#allocation3 + $0x160] sm:$0xff]
    %v4539 = vld [vmem:[#allocation3 + $0x168] sm:$0xff]
    %v4540 = vld [vmem:[#allocation3 + $0x170] sm:$0xff]
    %v4541 = vld [vmem:[#allocation3 + $0x178] sm:$0xff]
    %v4542 = vld [vmem:[#allocation3 + $0x180] sm:$0xff]
    %v4543 = vld [vmem:[#allocation3 + $0x188] sm:$0xff]
    %v4544 = vld [vmem:[#allocation3 + $0x190] sm:$0xff]
    %v4545 = vld [vmem:[#allocation3 + $0x198] sm:$0xff]
    %v4546 = vld [vmem:[#allocation3 + $0x1a0] sm:$0xff]
    %v4547 = vld [vmem:[#allocation3 + $0x1a8] sm:$0xff]
    %v4548 = vld [vmem:[#allocation3 + $0x1b0] sm:$0xff]
    %v4549 = vld [vmem:[#allocation3 + $0x1b8] sm:$0xff]
    %v4550 = vld [vmem:[#allocation3 + $0x1c0] sm:$0xff]
    %v4551 = vld [vmem:[#allocation3 + $0x1c8] sm:$0xff]
    %v4552 = vld [vmem:[#allocation3 + $0x1d0] sm:$0xff]
    %v4553 = vld [vmem:[#allocation3 + $0x1d8] sm:$0xff]
    %v4554 = vld [vmem:[#allocation3 + $0x1e0] sm:$0xff]
    %v4555 = vld [vmem:[#allocation3 + $0x1e8] sm:$0xff]
    %v4556 = vld [vmem:[#allocation3 + $0x1f0] sm:$0xff]
    %v4557 = vld [vmem:[#allocation3 + $0x1f8] sm:$0xff]
    %v4558 = vld [vmem:[#allocation3 + $0x200] sm:$0xff]
    %v4559 = vld [vmem:[#allocation3 + $0x208] sm:$0xff]
    %v4560 = vld [vmem:[#allocation3 + $0x210] sm:$0xff]
    %v4561 = vld [vmem:[#allocation3 + $0x218] sm:$0xff]
    %v4562 = vld [vmem:[#allocation3 + $0x220] sm:$0xff]
    %v4563 = vld [vmem:[#allocation3 + $0x228] sm:$0xff]
    %v4564 = vld [vmem:[#allocation3 + $0x230] sm:$0xff]
    %v4565 = vld [vmem:[#allocation3 + $0x238] sm:$0xff]
    %v4566 = vld [vmem:[#allocation3 + $0x240] sm:$0xff]
    %v4567 = vld [vmem:[#allocation3 + $0x248] sm:$0xff]
    %v4568 = vld [vmem:[#allocation3 + $0x250] sm:$0xff]
    %v4569 = vld [vmem:[#allocation3 + $0x258] sm:$0xff]
    %v4570 = vld [vmem:[#allocation3 + $0x260] sm:$0xff]
    %v4571 = vld [vmem:[#allocation3 + $0x268] sm:$0xff]
    %v4572 = vld [vmem:[#allocation3 + $0x270] sm:$0xff]
    %v4573 = vld [vmem:[#allocation3 + $0x278] sm:$0xff]
    %v4574 = vld [vmem:[#allocation3 + $0x280] sm:$0xff]
    %v4575 = vld [vmem:[#allocation3 + $0x288] sm:$0xff]
    %v4576 = vld [vmem:[#allocation3 + $0x290] sm:$0xff]
    %v4577 = vld [vmem:[#allocation3 + $0x298] sm:$0xff]
    %v4578 = vld [vmem:[#allocation3 + $0x2a0] sm:$0xff]
    %v4579 = vld [vmem:[#allocation3 + $0x2a8] sm:$0xff]
    %v4580 = vld [vmem:[#allocation3 + $0x2b0] sm:$0xff]
    %v4581 = vld [vmem:[#allocation3 + $0x2b8] sm:$0xff]
    %v4582 = vld [vmem:[#allocation3 + $0x2c0] sm:$0xff]
    %v4583 = vld [vmem:[#allocation3 + $0x2c8] sm:$0xff]
    %v4584 = vld [vmem:[#allocation3 + $0x2d0] sm:$0xff]
    %v4585 = vld [vmem:[#allocation3 + $0x2d8] sm:$0xff]
    %v4586 = vld [vmem:[#allocation3 + $0x2e0] sm:$0xff]
    %v4587 = vld [vmem:[#allocation3 + $0x2e8] sm:$0xff]
    %v4588 = vld [vmem:[#allocation3 + $0x2f0] sm:$0xff]
    %v4589 = vld [vmem:[#allocation3 + $0x2f8] sm:$0xff]
    %v4590 = vld [vmem:[#allocation3 + $0x300] sm:$0xff]
    %v4591 = vld [vmem:[#allocation3 + $0x308] sm:$0xff]
    %v4592 = vld [vmem:[#allocation3 + $0x310] sm:$0xff]
    %v4593 = vld [vmem:[#allocation3 + $0x318] sm:$0xff]
    %v4594 = vld [vmem:[#allocation3 + $0x320] sm:$0xff]
    %v4595 = vld [vmem:[#allocation3 + $0x328] sm:$0xff]
    %v4596 = vld [vmem:[#allocation3 + $0x330] sm:$0xff]
    %v4597 = vld [vmem:[#allocation3 + $0x338] sm:$0xff]
    %v4598 = vld [vmem:[#allocation3 + $0x340] sm:$0xff]
    %v4599 = vld [vmem:[#allocation3 + $0x348] sm:$0xff]
    %v4600 = vld [vmem:[#allocation3 + $0x350] sm:$0xff]
    %v4601 = vld [vmem:[#allocation3 + $0x358] sm:$0xff]
    %v4602 = vld [vmem:[#allocation3 + $0x360] sm:$0xff]
    %v4603 = vld [vmem:[#allocation3 + $0x368] sm:$0xff]
    %v4604 = vld [vmem:[#allocation3 + $0x370] sm:$0xff]
    %v4605 = vld [vmem:[#allocation3 + $0x378] sm:$0xff]
    %v4606 = vld [vmem:[#allocation3 + $0x380] sm:$0xff]
    %v4607 = vld [vmem:[#allocation3 + $0x388] sm:$0xff]
    %v4608 = vld [vmem:[#allocation3 + $0x390] sm:$0xff]
    %v4609 = vld [vmem:[#allocation3 + $0x398] sm:$0xff]
    %v4610 = vld [vmem:[#allocation3 + $0x3a0] sm:$0xff]
    %v4611 = vld [vmem:[#allocation3 + $0x3a8] sm:$0xff]
    %v4612 = vld [vmem:[#allocation3 + $0x3b0] sm:$0xff]
    %v4613 = vld [vmem:[#allocation3 + $0x3b8] sm:$0xff]
    %v4614 = vld [vmem:[#allocation3 + $0x3c0] sm:$0xff]
    %v4615 = vld [vmem:[#allocation3 + $0x3c8] sm:$0xff]
    %v4616 = vld [vmem:[#allocation3 + $0x3d0] sm:$0xff]
    %v4617 = vld [vmem:[#allocation3 + $0x3d8] sm:$0xff]
    %v4618 = vld [vmem:[#allocation3 + $0x3e0] sm:$0xff]
    %v4619 = vld [vmem:[#allocation3 + $0x3e8] sm:$0xff]
    %v4620 = vld [vmem:[#allocation3 + $0x3f0] sm:$0xff]
    %v4621 = vld [vmem:[#allocation3 + $0x3f8] sm:$0xff]
    %v4622 = vld [vmem:[#allocation3 + $0x400] sm:$0xff]
    %v4623 = vld [vmem:[#allocation3 + $0x408] sm:$0xff]
    %v4624 = vld [vmem:[#allocation3 + $0x410] sm:$0xff]
    %v4625 = vld [vmem:[#allocation3 + $0x418] sm:$0xff]
    %v4626 = vld [vmem:[#allocation3 + $0x420] sm:$0xff]
    %v4627 = vld [vmem:[#allocation3 + $0x428] sm:$0xff]
    %v4628 = vld [vmem:[#allocation3 + $0x430] sm:$0xff]
    %v4629 = vld [vmem:[#allocation3 + $0x438] sm:$0xff]
    %v4630 = vld [vmem:[#allocation3 + $0x440] sm:$0xff]
    %v4631 = vld [vmem:[#allocation3 + $0x448] sm:$0xff]
    %v4632 = vld [vmem:[#allocation3 + $0x450] sm:$0xff]
    %v4633 = vld [vmem:[#allocation3 + $0x458] sm:$0xff]
    %v4634 = vld [vmem:[#allocation3 + $0x460] sm:$0xff]
    %v4635 = vld [vmem:[#allocation3 + $0x468] sm:$0xff]
    %v4636 = vld [vmem:[#allocation3 + $0x470] sm:$0xff]
    %v4637 = vld [vmem:[#allocation3 + $0x478] sm:$0xff]
    %v4638 = vld [vmem:[#allocation3 + $0x480] sm:$0xff]
    %v4639 = vld [vmem:[#allocation3 + $0x488] sm:$0xff]
    %v4640 = vld [vmem:[#allocation3 + $0x490] sm:$0xff]
    %v4641 = vld [vmem:[#allocation3 + $0x498] sm:$0xff]
    %v4642 = vld [vmem:[#allocation3 + $0x4a0] sm:$0xff]
    %v4643 = vld [vmem:[#allocation3 + $0x4a8] sm:$0xff]
    %v4644 = vld [vmem:[#allocation3 + $0x4b0] sm:$0xff]
    %v4645 = vld [vmem:[#allocation3 + $0x4b8] sm:$0xff]
    %v4646 = vld [vmem:[#allocation3 + $0x4c0] sm:$0xff]
    %v4647 = vld [vmem:[#allocation3 + $0x4c8] sm:$0xff]
    %v4648 = vld [vmem:[#allocation3 + $0x4d0] sm:$0xff]
    %v4649 = vld [vmem:[#allocation3 + $0x4d8] sm:$0xff]
    %v4650 = vld [vmem:[#allocation3 + $0x4e0] sm:$0xff]
    %v4651 = vld [vmem:[#allocation3 + $0x4e8] sm:$0xff]
    %v4652 = vld [vmem:[#allocation3 + $0x4f0] sm:$0xff]
    %v4653 = vld [vmem:[#allocation3 + $0x4f8] sm:$0xff]
    %v4654 = vld [vmem:[#allocation3 + $0x500] sm:$0xff]
    %v4655 = vld [vmem:[#allocation3 + $0x508] sm:$0xff]
    %v4656 = vld [vmem:[#allocation3 + $0x510] sm:$0xff]
    %v4657 = vld [vmem:[#allocation3 + $0x518] sm:$0xff]
    %v4658 = vld [vmem:[#allocation3 + $0x520] sm:$0xff]
    %v4659 = vld [vmem:[#allocation3 + $0x528] sm:$0xff]
    %v4660 = vld [vmem:[#allocation3 + $0x530] sm:$0xff]
    %v4661 = vld [vmem:[#allocation3 + $0x538] sm:$0xff]
    %v4662 = vld [vmem:[#allocation3 + $0x540] sm:$0xff]
    %v4663 = vld [vmem:[#allocation3 + $0x548] sm:$0xff]
    %v4664 = vld [vmem:[#allocation3 + $0x550] sm:$0xff]
    %v4665 = vld [vmem:[#allocation3 + $0x558] sm:$0xff]
    %v4666 = vld [vmem:[#allocation3 + $0x560] sm:$0xff]
    %v4667 = vld [vmem:[#allocation3 + $0x568] sm:$0xff]
    %v4668 = vld [vmem:[#allocation3 + $0x570] sm:$0xff]
    %v4669 = vld [vmem:[#allocation3 + $0x578] sm:$0xff]
    %v4670 = vld [vmem:[#allocation3 + $0x580] sm:$0xff]
    %v4671 = vld [vmem:[#allocation3 + $0x588] sm:$0xff]
    %v4672 = vld [vmem:[#allocation3 + $0x590] sm:$0xff]
    %v4673 = vld [vmem:[#allocation3 + $0x598] sm:$0xff]
    %v4674 = vld [vmem:[#allocation3 + $0x5a0] sm:$0xff]
    %v4675 = vld [vmem:[#allocation3 + $0x5a8] sm:$0xff]
    %v4676 = vld [vmem:[#allocation3 + $0x5b0] sm:$0xff]
    %v4677 = vld [vmem:[#allocation3 + $0x5b8] sm:$0xff]
    %v4678 = vld [vmem:[#allocation3 + $0x5c0] sm:$0xff]
    %v4679 = vld [vmem:[#allocation3 + $0x5c8] sm:$0xff]
    %v4680 = vld [vmem:[#allocation3 + $0x5d0] sm:$0xff]
    %v4681 = vld [vmem:[#allocation3 + $0x5d8] sm:$0xff]
    %v4682 = vld [vmem:[#allocation3 + $0x5e0] sm:$0xff]
    %v4683 = vld [vmem:[#allocation3 + $0x5e8] sm:$0xff]
    %v4684 = vld [vmem:[#allocation3 + $0x5f0] sm:$0xff]
    %v4685 = vld [vmem:[#allocation3 + $0x5f8] sm:$0xff]
    %v4686 = vld [vmem:[#allocation3 + $0x600] sm:$0xff]
    %v4687 = vld [vmem:[#allocation3 + $0x608] sm:$0xff]
    %v4688 = vld [vmem:[#allocation3 + $0x610] sm:$0xff]
    %v4689 = vld [vmem:[#allocation3 + $0x618] sm:$0xff]
    %v4690 = vld [vmem:[#allocation3 + $0x620] sm:$0xff]
    %v4691 = vld [vmem:[#allocation3 + $0x628] sm:$0xff]
    %v4692 = vld [vmem:[#allocation3 + $0x630] sm:$0xff]
    %v4693 = vld [vmem:[#allocation3 + $0x638] sm:$0xff]
    %v4694 = vld [vmem:[#allocation3 + $0x640] sm:$0xff]
    %v4695 = vld [vmem:[#allocation3 + $0x648] sm:$0xff]
    %v4696 = vld [vmem:[#allocation3 + $0x650] sm:$0xff]
    %v4697 = vld [vmem:[#allocation3 + $0x658] sm:$0xff]
    %v4698 = vld [vmem:[#allocation3 + $0x660] sm:$0xff]
    %v4699 = vld [vmem:[#allocation3 + $0x668] sm:$0xff]
    %v4700 = vld [vmem:[#allocation3 + $0x670] sm:$0xff]
    %v4701 = vld [vmem:[#allocation3 + $0x678] sm:$0xff]
    %v4702 = vld [vmem:[#allocation3 + $0x680] sm:$0xff]
    %v4703 = vld [vmem:[#allocation3 + $0x688] sm:$0xff]
    %v4704 = vld [vmem:[#allocation3 + $0x690] sm:$0xff]
    %v4705 = vld [vmem:[#allocation3 + $0x698] sm:$0xff]
    %v4706 = vld [vmem:[#allocation3 + $0x6a0] sm:$0xff]
    %v4707 = vld [vmem:[#allocation3 + $0x6a8] sm:$0xff]
    %v4708 = vld [vmem:[#allocation3 + $0x6b0] sm:$0xff]
    %v4709 = vld [vmem:[#allocation3 + $0x6b8] sm:$0xff]
    %v4710 = vld [vmem:[#allocation3 + $0x6c0] sm:$0xff]
    %v4711 = vld [vmem:[#allocation3 + $0x6c8] sm:$0xff]
    %v4712 = vld [vmem:[#allocation3 + $0x6d0] sm:$0xff]
    %v4713 = vld [vmem:[#allocation3 + $0x6d8] sm:$0xff]
    %v4714 = vld [vmem:[#allocation3 + $0x6e0] sm:$0xff]
    %v4715 = vld [vmem:[#allocation3 + $0x6e8] sm:$0xff]
    %v4716 = vld [vmem:[#allocation3 + $0x6f0] sm:$0xff]
    %v4717 = vld [vmem:[#allocation3 + $0x6f8] sm:$0xff]
    %v4718 = vld [vmem:[#allocation3 + $0x700] sm:$0xff]
    %v4719 = vld [vmem:[#allocation3 + $0x708] sm:$0xff]
    %v4720 = vld [vmem:[#allocation3 + $0x710] sm:$0xff]
    %v4721 = vld [vmem:[#allocation3 + $0x718] sm:$0xff]
    %v4722 = vld [vmem:[#allocation3 + $0x720] sm:$0xff]
    %v4723 = vld [vmem:[#allocation3 + $0x728] sm:$0xff]
    %v4724 = vld [vmem:[#allocation3 + $0x730] sm:$0xff]
    %v4725 = vld [vmem:[#allocation3 + $0x738] sm:$0xff]
    %v4726 = vld [vmem:[#allocation3 + $0x740] sm:$0xff]
    %v4727 = vld [vmem:[#allocation3 + $0x748] sm:$0xff]
    %v4728 = vld [vmem:[#allocation3 + $0x750] sm:$0xff]
    %v4729 = vld [vmem:[#allocation3 + $0x758] sm:$0xff]
    %v4730 = vld [vmem:[#allocation3 + $0x760] sm:$0xff]
    %v4731 = vld [vmem:[#allocation3 + $0x768] sm:$0xff]
    %v4732 = vld [vmem:[#allocation3 + $0x770] sm:$0xff]
    %v4733 = vld [vmem:[#allocation3 + $0x778] sm:$0xff]
    %v4734 = vld [vmem:[#allocation3 + $0x780] sm:$0xff]
    %v4735 = vld [vmem:[#allocation3 + $0x788] sm:$0xff]
    %v4736 = vld [vmem:[#allocation3 + $0x790] sm:$0xff]
    %v4737 = vld [vmem:[#allocation3 + $0x798] sm:$0xff]
    %v4738 = vld [vmem:[#allocation3 + $0x7a0] sm:$0xff]
    %v4739 = vld [vmem:[#allocation3 + $0x7a8] sm:$0xff]
    %v4740 = vld [vmem:[#allocation3 + $0x7b0] sm:$0xff]
    %v4741 = vld [vmem:[#allocation3 + $0x7b8] sm:$0xff]
    %v4742 = vld [vmem:[#allocation3 + $0x7c0] sm:$0xff]
    %v4743 = vld [vmem:[#allocation3 + $0x7c8] sm:$0xff]
    %v4744 = vld [vmem:[#allocation3 + $0x7d0] sm:$0xff]
    %v4745 = vld [vmem:[#allocation3 + $0x7d8] sm:$0xff]
    %v4746 = vld [vmem:[#allocation3 + $0x7e0] sm:$0xff]
    %v4747 = vld [vmem:[#allocation3 + $0x7e8] sm:$0xff]
    %v4748 = vld [vmem:[#allocation3 + $0x7f0] sm:$0xff]
    %v4749 = vld [vmem:[#allocation3 + $0x7f8] sm:$0xff]
    %v4750 = vld [vmem:[#allocation3 + $0x800] sm:$0xff]
    %v4751 = vld [vmem:[#allocation3 + $0x808] sm:$0xff]
    %v4752 = vld [vmem:[#allocation3 + $0x810] sm:$0xff]
    %v4753 = vld [vmem:[#allocation3 + $0x818] sm:$0xff]
    %v4754 = vld [vmem:[#allocation3 + $0x820] sm:$0xff]
    %v4755 = vld [vmem:[#allocation3 + $0x828] sm:$0xff]
    %v4756 = vld [vmem:[#allocation3 + $0x830] sm:$0xff]
    %v4757 = vld [vmem:[#allocation3 + $0x838] sm:$0xff]
    %v4758 = vld [vmem:[#allocation3 + $0x840] sm:$0xff]
    %v4759 = vld [vmem:[#allocation3 + $0x848] sm:$0xff]
    %v4760 = vld [vmem:[#allocation3 + $0x850] sm:$0xff]
    %v4761 = vld [vmem:[#allocation3 + $0x858] sm:$0xff]
    %v4762 = vld [vmem:[#allocation3 + $0x860] sm:$0xff]
    %v4763 = vld [vmem:[#allocation3 + $0x868] sm:$0xff]
    %v4764 = vld [vmem:[#allocation3 + $0x870] sm:$0xff]
    %v4765 = vld [vmem:[#allocation3 + $0x878] sm:$0xff]
    %v4766 = vld [vmem:[#allocation3 + $0x880] sm:$0xff]
    %v4767 = vld [vmem:[#allocation3 + $0x888] sm:$0xff]
    %v4768 = vld [vmem:[#allocation3 + $0x890] sm:$0xff]
    %v4769 = vld [vmem:[#allocation3 + $0x898] sm:$0xff]
    %v4770 = vld [vmem:[#allocation3 + $0x8a0] sm:$0xff]
    %v4771 = vld [vmem:[#allocation3 + $0x8a8] sm:$0xff]
    %v4772 = vld [vmem:[#allocation3 + $0x8b0] sm:$0xff]
    %v4773 = vld [vmem:[#allocation3 + $0x8b8] sm:$0xff]
    %v4774 = vld [vmem:[#allocation3 + $0x8c0] sm:$0xff]
    %v4775 = vld [vmem:[#allocation3 + $0x8c8] sm:$0xff]
    %v4776 = vld [vmem:[#allocation3 + $0x8d0] sm:$0xff]
    %v4777 = vld [vmem:[#allocation3 + $0x8d8] sm:$0xff]
    %v4778 = vld [vmem:[#allocation3 + $0x8e0] sm:$0xff]
    %v4779 = vld [vmem:[#allocation3 + $0x8e8] sm:$0xff]
    %v4780 = vld [vmem:[#allocation3 + $0x8f0] sm:$0xff]
    %v4781 = vld [vmem:[#allocation3 + $0x8f8] sm:$0xff]
    %v4782 = vld [vmem:[#allocation3 + $0x900] sm:$0xff]
    %v4783 = vld [vmem:[#allocation3 + $0x908] sm:$0xff]
    %v4784 = vld [vmem:[#allocation3 + $0x910] sm:$0xff]
    %v4785 = vld [vmem:[#allocation3 + $0x918] sm:$0xff]
    %v4786 = vld [vmem:[#allocation3 + $0x920] sm:$0xff]
    %v4787 = vld [vmem:[#allocation3 + $0x928] sm:$0xff]
    %v4788 = vld [vmem:[#allocation3 + $0x930] sm:$0xff]
    %v4789 = vld [vmem:[#allocation3 + $0x938] sm:$0xff]
    %v4790 = vld [vmem:[#allocation3 + $0x940] sm:$0xff]
    %v4791 = vld [vmem:[#allocation3 + $0x948] sm:$0xff]
    %v4792 = vld [vmem:[#allocation3 + $0x950] sm:$0xff]
    %v4793 = vld [vmem:[#allocation3 + $0x958] sm:$0xff]
    %v4794 = vld [vmem:[#allocation3 + $0x960] sm:$0xff]
    %v4795 = vld [vmem:[#allocation3 + $0x968] sm:$0xff]
    %v4796 = vld [vmem:[#allocation3 + $0x970] sm:$0xff]
    %v4797 = vld [vmem:[#allocation3 + $0x978] sm:$0xff]
    %v4798 = vld [vmem:[#allocation3 + $0x980] sm:$0xff]
    %v4799 = vld [vmem:[#allocation3 + $0x988] sm:$0xff]
    %v4800 = vld [vmem:[#allocation3 + $0x990] sm:$0xff]
    %v4801 = vld [vmem:[#allocation3 + $0x998] sm:$0xff]
    %v4802 = vld [vmem:[#allocation3 + $0x9a0] sm:$0xff]
    %v4803 = vld [vmem:[#allocation3 + $0x9a8] sm:$0xff]
    %v4804 = vld [vmem:[#allocation3 + $0x9b0] sm:$0xff]
    %v4805 = vld [vmem:[#allocation3 + $0x9b8] sm:$0xff]
    %v4806 = vld [vmem:[#allocation3 + $0x9c0] sm:$0xff]
    %v4807 = vld [vmem:[#allocation3 + $0x9c8] sm:$0xff]
    %v4808 = vld [vmem:[#allocation3 + $0x9d0] sm:$0xff]
    %v4809 = vld [vmem:[#allocation3 + $0x9d8] sm:$0xff]
    %v4810 = vld [vmem:[#allocation3 + $0x9e0] sm:$0xff]
    %v4811 = vld [vmem:[#allocation3 + $0x9e8] sm:$0xff]
    %v4812 = vld [vmem:[#allocation3 + $0x9f0] sm:$0xff]
    %v4813 = vld [vmem:[#allocation3 + $0x9f8] sm:$0xff]
    %v4814 = vld [vmem:[#allocation3 + $0xa00] sm:$0xff]
    %v4815 = vld [vmem:[#allocation3 + $0xa08] sm:$0xff]
    %v4816 = vld [vmem:[#allocation3 + $0xa10] sm:$0xff]
    %v4817 = vld [vmem:[#allocation3 + $0xa18] sm:$0xff]
    %v4818 = vld [vmem:[#allocation3 + $0xa20] sm:$0xff]
    %v4819 = vld [vmem:[#allocation3 + $0xa28] sm:$0xff]
    %v4820 = vld [vmem:[#allocation3 + $0xa30] sm:$0xff]
    %v4821 = vld [vmem:[#allocation3 + $0xa38] sm:$0xff]
    %v4822 = vld [vmem:[#allocation3 + $0xa40] sm:$0xff]
    %v4823 = vld [vmem:[#allocation3 + $0xa48] sm:$0xff]
    %v4824 = vld [vmem:[#allocation3 + $0xa50] sm:$0xff]
    %v4825 = vld [vmem:[#allocation3 + $0xa58] sm:$0xff]
    %v4826 = vld [vmem:[#allocation3 + $0xa60] sm:$0xff]
    %v4827 = vld [vmem:[#allocation3 + $0xa68] sm:$0xff]
    %v4828 = vld [vmem:[#allocation3 + $0xa70] sm:$0xff]
    %v4829 = vld [vmem:[#allocation3 + $0xa78] sm:$0xff]
    %v4830 = vld [vmem:[#allocation3 + $0xa80] sm:$0xff]
    %v4831 = vld [vmem:[#allocation3 + $0xa88] sm:$0xff]
    %v4832 = vld [vmem:[#allocation3 + $0xa90] sm:$0xff]
    %v4833 = vld [vmem:[#allocation3 + $0xa98] sm:$0xff]
    %v4834 = vld [vmem:[#allocation3 + $0xaa0] sm:$0xff]
    %v4835 = vld [vmem:[#allocation3 + $0xaa8] sm:$0xff]
    %v4836 = vld [vmem:[#allocation3 + $0xab0] sm:$0xff]
    %v4837 = vld [vmem:[#allocation3 + $0xab8] sm:$0xff]
    %v4838 = vld [vmem:[#allocation3 + $0xac0] sm:$0xff]
    %v4839 = vld [vmem:[#allocation3 + $0xac8] sm:$0xff]
    %v4840 = vld [vmem:[#allocation3 + $0xad0] sm:$0xff]
    %v4841 = vld [vmem:[#allocation3 + $0xad8] sm:$0xff]
    %v4842 = vld [vmem:[#allocation3 + $0xae0] sm:$0xff]
    %v4843 = vld [vmem:[#allocation3 + $0xae8] sm:$0xff]
    %v4844 = vld [vmem:[#allocation3 + $0xaf0] sm:$0xff]
    %v4845 = vld [vmem:[#allocation3 + $0xaf8] sm:$0xff]
    %v4846 = vld [vmem:[#allocation3 + $0xb00] sm:$0xff]
    %v4847 = vld [vmem:[#allocation3 + $0xb08] sm:$0xff]
    %v4848 = vld [vmem:[#allocation3 + $0xb10] sm:$0xff]
    %v4849 = vld [vmem:[#allocation3 + $0xb18] sm:$0xff]
    %v4850 = vld [vmem:[#allocation3 + $0xb20] sm:$0xff]
    %v4851 = vld [vmem:[#allocation3 + $0xb28] sm:$0xff]
    %v4852 = vld [vmem:[#allocation3 + $0xb30] sm:$0xff]
    %v4853 = vld [vmem:[#allocation3 + $0xb38] sm:$0xff]
    %v4854 = vld [vmem:[#allocation3 + $0xb40] sm:$0xff]
    %v4855 = vld [vmem:[#allocation3 + $0xb48] sm:$0xff]
    %v4856 = vld [vmem:[#allocation3 + $0xb50] sm:$0xff]
    %v4857 = vld [vmem:[#allocation3 + $0xb58] sm:$0xff]
    %v4858 = vld [vmem:[#allocation3 + $0xb60] sm:$0xff]
    %v4859 = vld [vmem:[#allocation3 + $0xb68] sm:$0xff]
    %v4860 = vld [vmem:[#allocation3 + $0xb70] sm:$0xff]
    %v4861 = vld [vmem:[#allocation3 + $0xb78] sm:$0xff]
    %v4862 = vld [vmem:[#allocation3 + $0xb80] sm:$0xff]
    %v4863 = vld [vmem:[#allocation3 + $0xb88] sm:$0xff]
    %v4864 = vld [vmem:[#allocation3 + $0xb90] sm:$0xff]
    %v4865 = vld [vmem:[#allocation3 + $0xb98] sm:$0xff]
    %v4866 = vld [vmem:[#allocation3 + $0xba0] sm:$0xff]
    %v4867 = vld [vmem:[#allocation3 + $0xba8] sm:$0xff]
    %v4868 = vld [vmem:[#allocation3 + $0xbb0] sm:$0xff]
    %v4869 = vld [vmem:[#allocation3 + $0xbb8] sm:$0xff]
    %v4870 = vld [vmem:[#allocation3 + $0xbc0] sm:$0xff]
    %v4871 = vld [vmem:[#allocation3 + $0xbc8] sm:$0xff]
    %v4872 = vld [vmem:[#allocation3 + $0xbd0] sm:$0xff]
    %v4873 = vld [vmem:[#allocation3 + $0xbd8] sm:$0xff]
    %v4874 = vld [vmem:[#allocation3 + $0xbe0] sm:$0xff]
    %v4875 = vld [vmem:[#allocation3 + $0xbe8] sm:$0xff]
    %v4876 = vld [vmem:[#allocation3 + $0xbf0] sm:$0xff]
    %v4877 = vld [vmem:[#allocation3 + $0xbf8] sm:$0xff]
    %v4878 = vld [vmem:[#allocation3 + $0xc00] sm:$0xff]
    %v4879 = vld [vmem:[#allocation3 + $0xc08] sm:$0xff]
    %v4880 = vld [vmem:[#allocation3 + $0xc10] sm:$0xff]
    %v4881 = vld [vmem:[#allocation3 + $0xc18] sm:$0xff]
    %v4882 = vld [vmem:[#allocation3 + $0xc20] sm:$0xff]
    %v4883 = vld [vmem:[#allocation3 + $0xc28] sm:$0xff]
    %v4884 = vld [vmem:[#allocation3 + $0xc30] sm:$0xff]
    %v4885 = vld [vmem:[#allocation3 + $0xc38] sm:$0xff]
    %v4886 = vld [vmem:[#allocation3 + $0xc40] sm:$0xff]
    %v4887 = vld [vmem:[#allocation3 + $0xc48] sm:$0xff]
    %v4888 = vld [vmem:[#allocation3 + $0xc50] sm:$0xff]
    %v4889 = vld [vmem:[#allocation3 + $0xc58] sm:$0xff]
    %v4890 = vld [vmem:[%s8] sm:$0xff]
    %v4891 = vld [vmem:[%s8 + $0x8] sm:$0xff]
    %v4892 = vld [vmem:[%s8 + $0x10] sm:$0xff]
    %v4893 = vld [vmem:[%s8 + $0x18] sm:$0xff]
    %4895 = vset.pattern.permute.xlu0 0
    %4896 = vperm.xlu0 %4895, %v4890
    %v4897 = vpop.permute.xlu0 %4896
    %4900 = vset.pattern.permute.xlu0 0
    %4901 = vperm.xlu0 %4900, %v4891
    %v4902 = vpop.permute.xlu0 %4901
    %4905 = vset.pattern.permute.xlu0 0
    %4906 = vperm.xlu0 %4905, %v4892
    %v4907 = vpop.permute.xlu0 %4906
    %4910 = vset.pattern.permute.xlu0 0
    %4911 = vperm.xlu0 %4910, %v4893
    %v4912 = vpop.permute.xlu0 %4911
    %vm4914 = vcmask 261120
    %v4916 = vsel %vm4914, %v4484, 0
    %v4919 = vsel %vm4914, %v4487, 0
    %v4922 = vsel %vm4914, %v4490, 0
    %v4925 = vsel %vm4914, %v4493, 0
    %4927 = vmatprep.subr.mxu0 %v4495
    %4928 = vmatpush1.msra.mxu0 %v4494
    %4929 = vmatprep.subr.mxu0 %v4506
    %4930 = vmatpush1.msra.mxu0 %v4505
    %4931 = vmatprep.subr.mxu0 %v4517
    %4932 = vmatpush1.msra.mxu0 %v4516
    %4933 = vmatprep.subr.mxu0 %v4528
    %4934 = vmatpush1.msra.mxu0 %v4527
    %4935 = vmatprep.subr.mxu0 %v4539
    %4936 = vmatpush1.msra.mxu0 %v4538
    %4937 = vmatprep.subr.mxu0 %v4550
    %4938 = vmatpush1.msra.mxu0 %v4549
    %4939 = vmatprep.subr.mxu0 %v4561
    %4940 = vmatpush1.msra.mxu0 %v4560
    %4941 = vmatprep.subr.mxu0 %v4572
    %4942 = vmatpush1.msra.mxu0 %v4571
    %4943 = vmatprep.subr.mxu0 %v4583
    %4944 = vmatpush1.msra.mxu0 %v4582
    %4945 = vmatprep.subr.mxu0 %v4594
    %4946 = vmatpush1.msra.mxu0 %v4593
    %4947 = vmatprep.subr.mxu0 %v4605
    %4948 = vmatpush1.msra.mxu0 %v4604
    %4949 = vmatprep.subr.mxu0 %v4616
    %4950 = vmatpush1.msra.mxu0 %v4615
    %4951 = vmatprep.subr.mxu0 %v4627
    %4952 = vmatpush1.msra.mxu0 %v4626
    %4953 = vmatprep.subr.mxu0 %v4638
    %4954 = vmatpush1.msra.mxu0 %v4637
    %4955 = vmatprep.subr.mxu0 %v4649
    %4956 = vmatpush1.msra.mxu0 %v4648
    %4957 = vmatprep.subr.mxu0 %v4660
    %4958 = vmatpush1.msra.mxu0 %v4659
    %4959 = vmatprep.subr.mxu0 %v4671
    %4960 = vmatpush1.msra.mxu0 %v4670
    %4961 = vmatprep.subr.mxu0 %v4682
    %4962 = vmatpush1.msra.mxu0 %v4681
    %4963 = vmatprep.subr.mxu0 %v4693
    %4964 = vmatpush1.msra.mxu0 %v4692
    %4965 = vmatprep.subr.mxu0 %v4704
    %4966 = vmatpush1.msra.mxu0 %v4703
    %4967 = vmatprep.subr.mxu0 %v4715
    %4968 = vmatpush1.msra.mxu0 %v4714
    %4969 = vmatprep.subr.mxu0 %v4726
    %4970 = vmatpush1.msra.mxu0 %v4725
    %4971 = vmatprep.subr.mxu0 %v4737
    %4972 = vmatpush1.msra.mxu0 %v4736
    %4973 = vmatprep.subr.mxu0 %v4748
    %4974 = vmatpush1.msra.mxu0 %v4747
    %4975 = vmatprep.subr.mxu0 %v4759
    %4976 = vmatpush1.msra.mxu0 %v4758
    %4977 = vmatprep.subr.mxu0 %v4770
    %4978 = vmatpush1.msra.mxu0 %v4769
    %4979 = vmatprep.subr.mxu0 %v4781
    %4980 = vmatpush1.msra.mxu0 %v4780
    %4981 = vmatprep.subr.mxu0 %v4792
    %4982 = vmatpush1.msra.mxu0 %v4791
    %4983 = vmatprep.subr.mxu0 %v4803
    %4984 = vmatpush1.msra.mxu0 %v4802
    %4985 = vmatprep.subr.mxu0 %v4814
    %4986 = vmatpush1.msra.mxu0 %v4813
    %4987 = vmatprep.subr.mxu0 %v4825
    %4988 = vmatpush1.msra.mxu0 %v4824
    %4989 = vmatprep.subr.mxu0 %v4836
    %4990 = vmatpush1.msra.mxu0 %v4835
    %4991 = vmatprep.mubr.f32.mxu0 %v4483
    %4992 = vmatmul.mubr.f32.gmra.mrb[0].mxu0 %v4482
    %v4993 = vpop.f32.mrb[0].mxu0
    %v4994 = vadd.f32 %v4897, %v4993
    %v4995 = vpop.f32.mrb[0].mxu0
    %v4996 = vadd.f32 %v4897, %v4995
    %4997 = vmatprep.mubr.f32.mxu0 %v4486
    %4998 = vmatmul.mubr.f32.gmra.mrb[0].mxu0 %v4485
    %v4999 = vpop.f32.mrb[0].mxu0
    %v5000 = vadd.f32 %v4902, %v4999
    %v5001 = vpop.f32.mrb[0].mxu0
    %v5002 = vadd.f32 %v4902, %v5001
    %5003 = vmatprep.mubr.f32.mxu0 %v4489
    %5004 = vmatmul.mubr.f32.gmra.mrb[0].mxu0 %v4488
    %v5005 = vpop.f32.mrb[0].mxu0
    %v5006 = vadd.f32 %v4907, %v5005
    %v5007 = vpop.f32.mrb[0].mxu0
    %v5008 = vadd.f32 %v4907, %v5007
    %5009 = vmatprep.mubr.f32.mxu0 %v4492
    %5010 = vmatmul.mubr.f32.gmra.mrb[0].mxu0 %v4491
    %v5011 = vpop.f32.mrb[0].mxu0
    %v5012 = vadd.f32 %v4912, %v5011
    %v5013 = vpop.f32.mrb[0].mxu0
    %v5014 = vadd.f32 %v4912, %v5013
    %5015 = vdwg.mxu0
    %5016 = vmatprep.subr.mxu0 %v4847
    %5017 = vmatpush1.msra.mxu0 %v4846
    %5018 = vmatprep.subr.mxu0 %v4858
    %5019 = vmatpush1.msra.mxu0 %v4857
    %5020 = vmatprep.subr.mxu0 %v4869
    %5021 = vmatpush1.msra.mxu0 %v4868
    %5022 = vmatprep.subr.mxu0 %v4880
    %5023 = vmatpush1.msra.mxu0 %v4879
    %5024 = vmatprep.subr.mxu0 0.0
    %5025 = vmatpush1.msra.mxu0 0.0
    %5026 = vmatprep.subr.mxu0 0.0
    %5027 = vmatpush1.msra.mxu0 0.0
    %5028 = vmatprep.subr.mxu0 0.0
    %5029 = vmatpush1.msra.mxu0 0.0
    %5030 = vmatprep.subr.mxu0 0.0
    %5031 = vmatpush1.msra.mxu0 0.0
    %5032 = vmatprep.subr.mxu0 0.0
    %5033 = vmatpush1.msra.mxu0 0.0
    %5034 = vmatprep.subr.mxu0 0.0
    %5035 = vmatpush1.msra.mxu0 0.0
    %5036 = vmatprep.subr.mxu0 0.0
    %5037 = vmatpush1.msra.mxu0 0.0
    %5038 = vmatprep.subr.mxu0 0.0
    %5039 = vmatpush1.msra.mxu0 0.0
    %5040 = vmatprep.subr.mxu0 0.0
    %5041 = vmatpush1.msra.mxu0 0.0
    %5042 = vmatprep.subr.mxu0 0.0
    %5043 = vmatpush1.msra.mxu0 0.0
    %5044 = vmatprep.subr.mxu0 0.0
    %5045 = vmatpush1.msra.mxu0 0.0
    %5046 = vmatprep.subr.mxu0 0.0
    %5047 = vmatpush1.msra.mxu0 0.0
    %5048 = vmatprep.subr.mxu0 0.0
    %5049 = vmatpush1.msra.mxu0 0.0
    %5050 = vmatprep.subr.mxu0 0.0
    %5051 = vmatpush1.msra.mxu0 0.0
    %5052 = vmatprep.subr.mxu0 0.0
    %5053 = vmatpush1.msra.mxu0 0.0
    %5054 = vmatprep.subr.mxu0 0.0
    %5055 = vmatpush1.msra.mxu0 0.0
    %5056 = vmatprep.subr.mxu0 0.0
    %5057 = vmatpush1.msra.mxu0 0.0
    %5058 = vmatprep.subr.mxu0 0.0
    %5059 = vmatpush1.msra.mxu0 0.0
    %5060 = vmatprep.subr.mxu0 0.0
    %5061 = vmatpush1.msra.mxu0 0.0
    %5062 = vmatprep.subr.mxu0 0.0
    %5063 = vmatpush1.msra.mxu0 0.0
    %5064 = vmatprep.subr.mxu0 0.0
    %5065 = vmatpush1.msra.mxu0 0.0
    %5066 = vmatprep.subr.mxu0 0.0
    %5067 = vmatpush1.msra.mxu0 0.0
    %5068 = vmatprep.subr.mxu0 0.0
    %5069 = vmatpush1.msra.mxu0 0.0
    %5070 = vmatprep.subr.mxu0 0.0
    %5071 = vmatpush1.msra.mxu0 0.0
    %5072 = vmatprep.subr.mxu0 0.0
    %5073 = vmatpush1.msra.mxu0 0.0
    %5074 = vmatprep.subr.mxu0 0.0
    %5075 = vmatpush1.msra.mxu0 0.0
    %5076 = vmatprep.subr.mxu0 0.0
    %5077 = vmatpush1.msra.mxu0 0.0
    %5078 = vmatprep.subr.mxu0 0.0
    %5079 = vmatpush1.msra.mxu0 0.0
    %5080 = vmatprep.mubr.f32.mxu0 0.0
    %5081 = vmatmul.mubr.f32.gmra.mrb[0].mxu0 %v4916
    %v5082 = vpop.f32.mrb[0].mxu0
    %v5083 = vadd.f32 %v4994, %v5082
    %v5084 = vpop.f32.mrb[0].mxu0
    %v5085 = vadd.f32 %v4996, %v5084
    %5086 = vmatprep.mubr.f32.mxu0 0.0
    %5087 = vmatmul.mubr.f32.gmra.mrb[0].mxu0 %v4919
    %v5088 = vpop.f32.mrb[0].mxu0
    %v5089 = vadd.f32 %v5000, %v5088
    %v5090 = vpop.f32.mrb[0].mxu0
    %v5091 = vadd.f32 %v5002, %v5090
    %5092 = vmatprep.mubr.f32.mxu0 0.0
    %5093 = vmatmul.mubr.f32.gmra.mrb[0].mxu0 %v4922
    %v5094 = vpop.f32.mrb[0].mxu0
    %v5095 = vadd.f32 %v5006, %v5094
    %v5096 = vpop.f32.mrb[0].mxu0
    %v5097 = vadd.f32 %v5008, %v5096
    %5098 = vmatprep.mubr.f32.mxu0 0.0
    %5099 = vmatmul.mubr.f32.gmra.mrb[0].mxu0 %v4925
    %v5100 = vpop.f32.mrb[0].mxu0
    %v5101 = vadd.f32 %v5012, %v5100
    %v5102 = vpop.f32.mrb[0].mxu0
    %v5103 = vadd.f32 %v5014, %v5102
    %5104 = vdwg.mxu0
    %5105 = vmatprep.subr.mxu0 %v4497
    %5106 = vmatpush1.msra.mxu0 %v4496
    %5107 = vmatprep.subr.mxu0 %v4508
    %5108 = vmatpush1.msra.mxu0 %v4507
    %5109 = vmatprep.subr.mxu0 %v4519
    %5110 = vmatpush1.msra.mxu0 %v4518
    %5111 = vmatprep.subr.mxu0 %v4530
    %5112 = vmatpush1.msra.mxu0 %v4529
    %5113 = vmatprep.subr.mxu0 %v4541
    %5114 = vmatpush1.msra.mxu0 %v4540
    %5115 = vmatprep.subr.mxu0 %v4552
    %5116 = vmatpush1.msra.mxu0 %v4551
    %5117 = vmatprep.subr.mxu0 %v4563
    %5118 = vmatpush1.msra.mxu0 %v4562
    %5119 = vmatprep.subr.mxu0 %v4574
    %5120 = vmatpush1.msra.mxu0 %v4573
    %5121 = vmatprep.subr.mxu0 %v4585
    %5122 = vmatpush1.msra.mxu0 %v4584
    %5123 = vmatprep.subr.mxu0 %v4596
    %5124 = vmatpush1.msra.mxu0 %v4595
    %5125 = vmatprep.subr.mxu0 %v4607
    %5126 = vmatpush1.msra.mxu0 %v4606
    %5127 = vmatprep.subr.mxu0 %v4618
    %5128 = vmatpush1.msra.mxu0 %v4617
    %5129 = vmatprep.subr.mxu0 %v4629
    %5130 = vmatpush1.msra.mxu0 %v4628
    %5131 = vmatprep.subr.mxu0 %v4640
    %5132 = vmatpush1.msra.mxu0 %v4639
    %5133 = vmatprep.subr.mxu0 %v4651
    %5134 = vmatpush1.msra.mxu0 %v4650
    %5135 = vmatprep.subr.mxu0 %v4662
    %5136 = vmatpush1.msra.mxu0 %v4661
    %5137 = vmatprep.subr.mxu0 %v4673
    %5138 = vmatpush1.msra.mxu0 %v4672
    %5139 = vmatprep.subr.mxu0 %v4684
    %5140 = vmatpush1.msra.mxu0 %v4683
    %5141 = vmatprep.subr.mxu0 %v4695
    %5142 = vmatpush1.msra.mxu0 %v4694
    %5143 = vmatprep.subr.mxu0 %v4706
    %5144 = vmatpush1.msra.mxu0 %v4705
    %5145 = vmatprep.subr.mxu0 %v4717
    %5146 = vmatpush1.msra.mxu0 %v4716
    %5147 = vmatprep.subr.mxu0 %v4728
    %5148 = vmatpush1.msra.mxu0 %v4727
    %5149 = vmatprep.subr.mxu0 %v4739
    %5150 = vmatpush1.msra.mxu0 %v4738
    %5151 = vmatprep.subr.mxu0 %v4750
    %5152 = vmatpush1.msra.mxu0 %v4749
    %5153 = vmatprep.subr.mxu0 %v4761
    %5154 = vmatpush1.msra.mxu0 %v4760
    %5155 = vmatprep.subr.mxu0 %v4772
    %5156 = vmatpush1.msra.mxu0 %v4771
    %5157 = vmatprep.subr.mxu0 %v4783
    %5158 = vmatpush1.msra.mxu0 %v4782
    %5159 = vmatprep.subr.mxu0 %v4794
    %5160 = vmatpush1.msra.mxu0 %v4793
    %5161 = vmatprep.subr.mxu0 %v4805
    %5162 = vmatpush1.msra.mxu0 %v4804
    %5163 = vmatprep.subr.mxu0 %v4816
    %5164 = vmatpush1.msra.mxu0 %v4815
    %5165 = vmatprep.subr.mxu0 %v4827
    %5166 = vmatpush1.msra.mxu0 %v4826
    %5167 = vmatprep.subr.mxu0 %v4838
    %5168 = vmatpush1.msra.mxu0 %v4837
    %5169 = vmatprep.mubr.f32.mxu0 %v4483
    %5170 = vmatmul.mubr.f32.gmra.mrb[0].mxu0 %v4482
    %v5171 = vpop.f32.mrb[0].mxu0
    %v5172 = vadd.f32 %v4897, %v5171
    %v5173 = vpop.f32.mrb[0].mxu0
    %v5174 = vadd.f32 %v4897, %v5173
    %5175 = vmatprep.mubr.f32.mxu0 %v4486
    %5176 = vmatmul.mubr.f32.gmra.mrb[0].mxu0 %v4485
    %v5177 = vpop.f32.mrb[0].mxu0
    %v5178 = vadd.f32 %v4902, %v5177
    %v5179 = vpop.f32.mrb[0].mxu0
    %v5180 = vadd.f32 %v4902, %v5179
    %5181 = vmatprep.mubr.f32.mxu0 %v4489
    %5182 = vmatmul.mubr.f32.gmra.mrb[0].mxu0 %v4488
    %v5183 = vpop.f32.mrb[0].mxu0
    %v5184 = vadd.f32 %v4907, %v5183
    %v5185 = vpop.f32.mrb[0].mxu0
    %v5186 = vadd.f32 %v4907, %v5185
    %5187 = vmatprep.mubr.f32.mxu0 %v4492
    %5188 = vmatmul.mubr.f32.gmra.mrb[0].mxu0 %v4491
    %v5189 = vpop.f32.mrb[0].mxu0
    %v5190 = vadd.f32 %v4912, %v5189
    %v5191 = vpop.f32.mrb[0].mxu0
    %v5192 = vadd.f32 %v4912, %v5191
    %5193 = vdwg.mxu0
    %5194 = vmatprep.subr.mxu0 %v4849
    %5195 = vmatpush1.msra.mxu0 %v4848
    %5196 = vmatprep.subr.mxu0 %v4860
    %5197 = vmatpush1.msra.mxu0 %v4859
    %5198 = vmatprep.subr.mxu0 %v4871
    %5199 = vmatpush1.msra.mxu0 %v4870
    %5200 = vmatprep.subr.mxu0 %v4882
    %5201 = vmatpush1.msra.mxu0 %v4881
    %5202 = vmatprep.subr.mxu0 0.0
    %5203 = vmatpush1.msra.mxu0 0.0
    %5204 = vmatprep.subr.mxu0 0.0
    %5205 = vmatpush1.msra.mxu0 0.0
    %5206 = vmatprep.subr.mxu0 0.0
    %5207 = vmatpush1.msra.mxu0 0.0
    %5208 = vmatprep.subr.mxu0 0.0
    %5209 = vmatpush1.msra.mxu0 0.0
    %5210 = vmatprep.subr.mxu0 0.0
    %5211 = vmatpush1.msra.mxu0 0.0
    %5212 = vmatprep.subr.mxu0 0.0
    %5213 = vmatpush1.msra.mxu0 0.0
    %5214 = vmatprep.subr.mxu0 0.0
    %5215 = vmatpush1.msra.mxu0 0.0
    %5216 = vmatprep.subr.mxu0 0.0
    %5217 = vmatpush1.msra.mxu0 0.0
    %5218 = vmatprep.subr.mxu0 0.0
    %5219 = vmatpush1.msra.mxu0 0.0
    %5220 = vmatprep.subr.mxu0 0.0
    %5221 = vmatpush1.msra.mxu0 0.0
    %5222 = vmatprep.subr.mxu0 0.0
    %5223 = vmatpush1.msra.mxu0 0.0
    %5224 = vmatprep.subr.mxu0 0.0
    %5225 = vmatpush1.msra.mxu0 0.0
    %5226 = vmatprep.subr.mxu0 0.0
    %5227 = vmatpush1.msra.mxu0 0.0
    %5228 = vmatprep.subr.mxu0 0.0
    %5229 = vmatpush1.msra.mxu0 0.0
    %5230 = vmatprep.subr.mxu0 0.0
    %5231 = vmatpush1.msra.mxu0 0.0
    %5232 = vmatprep.subr.mxu0 0.0
    %5233 = vmatpush1.msra.mxu0 0.0
    %5234 = vmatprep.subr.mxu0 0.0
    %5235 = vmatpush1.msra.mxu0 0.0
    %5236 = vmatprep.subr.mxu0 0.0
    %5237 = vmatpush1.msra.mxu0 0.0
    %5238 = vmatprep.subr.mxu0 0.0
    %5239 = vmatpush1.msra.mxu0 0.0
    %5240 = vmatprep.subr.mxu0 0.0
    %5241 = vmatpush1.msra.mxu0 0.0
    %5242 = vmatprep.subr.mxu0 0.0
    %5243 = vmatpush1.msra.mxu0 0.0
    %5244 = vmatprep.subr.mxu0 0.0
    %5245 = vmatpush1.msra.mxu0 0.0
    %5246 = vmatprep.subr.mxu0 0.0
    %5247 = vmatpush1.msra.mxu0 0.0
    %5248 = vmatprep.subr.mxu0 0.0
    %5249 = vmatpush1.msra.mxu0 0.0
    %5250 = vmatprep.subr.mxu0 0.0
    %5251 = vmatpush1.msra.mxu0 0.0
    %5252 = vmatprep.subr.mxu0 0.0
    %5253 = vmatpush1.msra.mxu0 0.0
    %5254 = vmatprep.subr.mxu0 0.0
    %5255 = vmatpush1.msra.mxu0 0.0
    %5256 = vmatprep.subr.mxu0 0.0
    %5257 = vmatpush1.msra.mxu0 0.0
    %5258 = vmatprep.mubr.f32.mxu0 0.0
    %5259 = vmatmul.mubr.f32.gmra.mrb[0].mxu0 %v4916
    %v5260 = vpop.f32.mrb[0].mxu0
    %v5261 = vadd.f32 %v5172, %v5260
    %v5262 = vpop.f32.mrb[0].mxu0
    %v5263 = vadd.f32 %v5174, %v5262
    %5264 = vmatprep.mubr.f32.mxu0 0.0
    %5265 = vmatmul.mubr.f32.gmra.mrb[0].mxu0 %v4919
    %v5266 = vpop.f32.mrb[0].mxu0
    %v5267 = vadd.f32 %v5178, %v5266
    %v5268 = vpop.f32.mrb[0].mxu0
    %v5269 = vadd.f32 %v5180, %v5268
    %5270 = vmatprep.mubr.f32.mxu0 0.0
    %5271 = vmatmul.mubr.f32.gmra.mrb[0].mxu0 %v4922
    %v5272 = vpop.f32.mrb[0].mxu0
    %v5273 = vadd.f32 %v5184, %v5272
    %v5274 = vpop.f32.mrb[0].mxu0
    %v5275 = vadd.f32 %v5186, %v5274
    %5276 = vmatprep.mubr.f32.mxu0 0.0
    %5277 = vmatmul.mubr.f32.gmra.mrb[0].mxu0 %v4925
    %v5278 = vpop.f32.mrb[0].mxu0
    %v5279 = vadd.f32 %v5190, %v5278
    %v5280 = vpop.f32.mrb[0].mxu0
    %v5281 = vadd.f32 %v5192, %v5280
    %5282 = vdwg.mxu0
    %5283 = vmatprep.subr.mxu0 %v4499
    %5284 = vmatpush1.msra.mxu0 %v4498
    %5285 = vmatprep.subr.mxu0 %v4510
    %5286 = vmatpush1.msra.mxu0 %v4509
    %5287 = vmatprep.subr.mxu0 %v4521
    %5288 = vmatpush1.msra.mxu0 %v4520
    %5289 = vmatprep.subr.mxu0 %v4532
    %5290 = vmatpush1.msra.mxu0 %v4531
    %5291 = vmatprep.subr.mxu0 %v4543
    %5292 = vmatpush1.msra.mxu0 %v4542
    %5293 = vmatprep.subr.mxu0 %v4554
    %5294 = vmatpush1.msra.mxu0 %v4553
    %5295 = vmatprep.subr.mxu0 %v4565
    %5296 = vmatpush1.msra.mxu0 %v4564
    %5297 = vmatprep.subr.mxu0 %v4576
    %5298 = vmatpush1.msra.mxu0 %v4575
    %5299 = vmatprep.subr.mxu0 %v4587
    %5300 = vmatpush1.msra.mxu0 %v4586
    %5301 = vmatprep.subr.mxu0 %v4598
    %5302 = vmatpush1.msra.mxu0 %v4597
    %5303 = vmatprep.subr.mxu0 %v4609
    %5304 = vmatpush1.msra.mxu0 %v4608
    %5305 = vmatprep.subr.mxu0 %v4620
    %5306 = vmatpush1.msra.mxu0 %v4619
    %5307 = vmatprep.subr.mxu0 %v4631
    %5308 = vmatpush1.msra.mxu0 %v4630
    %5309 = vmatprep.subr.mxu0 %v4642
    %5310 = vmatpush1.msra.mxu0 %v4641
    %5311 = vmatprep.subr.mxu0 %v4653
    %5312 = vmatpush1.msra.mxu0 %v4652
    %5313 = vmatprep.subr.mxu0 %v4664
    %5314 = vmatpush1.msra.mxu0 %v4663
    %5315 = vmatprep.subr.mxu0 %v4675
    %5316 = vmatpush1.msra.mxu0 %v4674
    %5317 = vmatprep.subr.mxu0 %v4686
    %5318 = vmatpush1.msra.mxu0 %v4685
    %5319 = vmatprep.subr.mxu0 %v4697
    %5320 = vmatpush1.msra.mxu0 %v4696
    %5321 = vmatprep.subr.mxu0 %v4708
    %5322 = vmatpush1.msra.mxu0 %v4707
    %5323 = vmatprep.subr.mxu0 %v4719
    %5324 = vmatpush1.msra.mxu0 %v4718
    %5325 = vmatprep.subr.mxu0 %v4730
    %5326 = vmatpush1.msra.mxu0 %v4729
    %5327 = vmatprep.subr.mxu0 %v4741
    %5328 = vmatpush1.msra.mxu0 %v4740
    %5329 = vmatprep.subr.mxu0 %v4752
    %5330 = vmatpush1.msra.mxu0 %v4751
    %5331 = vmatprep.subr.mxu0 %v4763
    %5332 = vmatpush1.msra.mxu0 %v4762
    %5333 = vmatprep.subr.mxu0 %v4774
    %5334 = vmatpush1.msra.mxu0 %v4773
    %5335 = vmatprep.subr.mxu0 %v4785
    %5336 = vmatpush1.msra.mxu0 %v4784
    %5337 = vmatprep.subr.mxu0 %v4796
    %5338 = vmatpush1.msra.mxu0 %v4795
    %5339 = vmatprep.subr.mxu0 %v4807
    %5340 = vmatpush1.msra.mxu0 %v4806
    %5341 = vmatprep.subr.mxu0 %v4818
    %5342 = vmatpush1.msra.mxu0 %v4817
    %5343 = vmatprep.subr.mxu0 %v4829
    %5344 = vmatpush1.msra.mxu0 %v4828
    %5345 = vmatprep.subr.mxu0 %v4840
    %5346 = vmatpush1.msra.mxu0 %v4839
    %5347 = vmatprep.mubr.f32.mxu0 %v4483
    %5348 = vmatmul.mubr.f32.gmra.mrb[0].mxu0 %v4482
    %v5349 = vpop.f32.mrb[0].mxu0
    %v5350 = vadd.f32 %v4897, %v5349
    %v5351 = vpop.f32.mrb[0].mxu0
    %v5352 = vadd.f32 %v4897, %v5351
    %5353 = vmatprep.mubr.f32.mxu0 %v4486
    %5354 = vmatmul.mubr.f32.gmra.mrb[0].mxu0 %v4485
    %v5355 = vpop.f32.mrb[0].mxu0
    %v5356 = vadd.f32 %v4902, %v5355
    %v5357 = vpop.f32.mrb[0].mxu0
    %v5358 = vadd.f32 %v4902, %v5357
    %5359 = vmatprep.mubr.f32.mxu0 %v4489
    %5360 = vmatmul.mubr.f32.gmra.mrb[0].mxu0 %v4488
    %v5361 = vpop.f32.mrb[0].mxu0
    %v5362 = vadd.f32 %v4907, %v5361
    %v5363 = vpop.f32.mrb[0].mxu0
    %v5364 = vadd.f32 %v4907, %v5363
    %5365 = vmatprep.mubr.f32.mxu0 %v4492
    %5366 = vmatmul.mubr.f32.gmra.mrb[0].mxu0 %v4491
    %v5367 = vpop.f32.mrb[0].mxu0
    %v5368 = vadd.f32 %v4912, %v5367
    %v5369 = vpop.f32.mrb[0].mxu0
    %v5370 = vadd.f32 %v4912, %v5369
    %5371 = vdwg.mxu0
    %5372 = vmatprep.subr.mxu0 %v4851
    %5373 = vmatpush1.msra.mxu0 %v4850
    %5374 = vmatprep.subr.mxu0 %v4862
    %5375 = vmatpush1.msra.mxu0 %v4861
    %5376 = vmatprep.subr.mxu0 %v4873
    %5377 = vmatpush1.msra.mxu0 %v4872
    %5378 = vmatprep.subr.mxu0 %v4884
    %5379 = vmatpush1.msra.mxu0 %v4883
    %5380 = vmatprep.subr.mxu0 0.0
    %5381 = vmatpush1.msra.mxu0 0.0
    %5382 = vmatprep.subr.mxu0 0.0
    %5383 = vmatpush1.msra.mxu0 0.0
    %5384 = vmatprep.subr.mxu0 0.0
    %5385 = vmatpush1.msra.mxu0 0.0
    %5386 = vmatprep.subr.mxu0 0.0
    %5387 = vmatpush1.msra.mxu0 0.0
    %5388 = vmatprep.subr.mxu0 0.0
    %5389 = vmatpush1.msra.mxu0 0.0
    %5390 = vmatprep.subr.mxu0 0.0
    %5391 = vmatpush1.msra.mxu0 0.0
    %5392 = vmatprep.subr.mxu0 0.0
    %5393 = vmatpush1.msra.mxu0 0.0
    %5394 = vmatprep.subr.mxu0 0.0
    %5395 = vmatpush1.msra.mxu0 0.0
    %5396 = vmatprep.subr.mxu0 0.0
    %5397 = vmatpush1.msra.mxu0 0.0
    %5398 = vmatprep.subr.mxu0 0.0
    %5399 = vmatpush1.msra.mxu0 0.0
    %5400 = vmatprep.subr.mxu0 0.0
    %5401 = vmatpush1.msra.mxu0 0.0
    %5402 = vmatprep.subr.mxu0 0.0
    %5403 = vmatpush1.msra.mxu0 0.0
    %5404 = vmatprep.subr.mxu0 0.0
    %5405 = vmatpush1.msra.mxu0 0.0
    %5406 = vmatprep.subr.mxu0 0.0
    %5407 = vmatpush1.msra.mxu0 0.0
    %5408 = vmatprep.subr.mxu0 0.0
    %5409 = vmatpush1.msra.mxu0 0.0
    %5410 = vmatprep.subr.mxu0 0.0
    %5411 = vmatpush1.msra.mxu0 0.0
    %5412 = vmatprep.subr.mxu0 0.0
    %5413 = vmatpush1.msra.mxu0 0.0
    %5414 = vmatprep.subr.mxu0 0.0
    %5415 = vmatpush1.msra.mxu0 0.0
    %5416 = vmatprep.subr.mxu0 0.0
    %5417 = vmatpush1.msra.mxu0 0.0
    %5418 = vmatprep.subr.mxu0 0.0
    %5419 = vmatpush1.msra.mxu0 0.0
    %5420 = vmatprep.subr.mxu0 0.0
    %5421 = vmatpush1.msra.mxu0 0.0
    %5422 = vmatprep.subr.mxu0 0.0
    %5423 = vmatpush1.msra.mxu0 0.0
    %5424 = vmatprep.subr.mxu0 0.0
    %5425 = vmatpush1.msra.mxu0 0.0
    %5426 = vmatprep.subr.mxu0 0.0
    %5427 = vmatpush1.msra.mxu0 0.0
    %5428 = vmatprep.subr.mxu0 0.0
    %5429 = vmatpush1.msra.mxu0 0.0
    %5430 = vmatprep.subr.mxu0 0.0
    %5431 = vmatpush1.msra.mxu0 0.0
    %5432 = vmatprep.subr.mxu0 0.0
    %5433 = vmatpush1.msra.mxu0 0.0
    %5434 = vmatprep.subr.mxu0 0.0
    %5435 = vmatpush1.msra.mxu0 0.0
    %5436 = vmatprep.mubr.f32.mxu0 0.0
    %5437 = vmatmul.mubr.f32.gmra.mrb[0].mxu0 %v4916
    %v5438 = vpop.f32.mrb[0].mxu0
    %v5439 = vadd.f32 %v5350, %v5438
    %v5440 = vpop.f32.mrb[0].mxu0
    %v5441 = vadd.f32 %v5352, %v5440
    %5442 = vmatprep.mubr.f32.mxu0 0.0
    %5443 = vmatmul.mubr.f32.gmra.mrb[0].mxu0 %v4919
    %v5444 = vpop.f32.mrb[0].mxu0
    %v5445 = vadd.f32 %v5356, %v5444
    %v5446 = vpop.f32.mrb[0].mxu0
    %v5447 = vadd.f32 %v5358, %v5446
    %5448 = vmatprep.mubr.f32.mxu0 0.0
    %5449 = vmatmul.mubr.f32.gmra.mrb[0].mxu0 %v4922
    %v5450 = vpop.f32.mrb[0].mxu0
    %v5451 = vadd.f32 %v5362, %v5450
    %v5452 = vpop.f32.mrb[0].mxu0
    %v5453 = vadd.f32 %v5364, %v5452
    %5454 = vmatprep.mubr.f32.mxu0 0.0
    %5455 = vmatmul.mubr.f32.gmra.mrb[0].mxu0 %v4925
    %v5456 = vpop.f32.mrb[0].mxu0
    %v5457 = vadd.f32 %v5368, %v5456
    %v5458 = vpop.f32.mrb[0].mxu0
    %v5459 = vadd.f32 %v5370, %v5458
    %5460 = vdwg.mxu0
    %5461 = vmatprep.subr.mxu0 %v4501
    %5462 = vmatpush1.msra.mxu0 %v4500
    %5463 = vmatprep.subr.mxu0 %v4512
    %5464 = vmatpush1.msra.mxu0 %v4511
    %5465 = vmatprep.subr.mxu0 %v4523
    %5466 = vmatpush1.msra.mxu0 %v4522
    %5467 = vmatprep.subr.mxu0 %v4534
    %5468 = vmatpush1.msra.mxu0 %v4533
    %5469 = vmatprep.subr.mxu0 %v4545
    %5470 = vmatpush1.msra.mxu0 %v4544
    %5471 = vmatprep.subr.mxu0 %v4556
    %5472 = vmatpush1.msra.mxu0 %v4555
    %5473 = vmatprep.subr.mxu0 %v4567
    %5474 = vmatpush1.msra.mxu0 %v4566
    %5475 = vmatprep.subr.mxu0 %v4578
    %5476 = vmatpush1.msra.mxu0 %v4577
    %5477 = vmatprep.subr.mxu0 %v4589
    %5478 = vmatpush1.msra.mxu0 %v4588
    %5479 = vmatprep.subr.mxu0 %v4600
    %5480 = vmatpush1.msra.mxu0 %v4599
    %5481 = vmatprep.subr.mxu0 %v4611
    %5482 = vmatpush1.msra.mxu0 %v4610
    %5483 = vmatprep.subr.mxu0 %v4622
    %5484 = vmatpush1.msra.mxu0 %v4621
    %5485 = vmatprep.subr.mxu0 %v4633
    %5486 = vmatpush1.msra.mxu0 %v4632
    %5487 = vmatprep.subr.mxu0 %v4644
    %5488 = vmatpush1.msra.mxu0 %v4643
    %5489 = vmatprep.subr.mxu0 %v4655
    %5490 = vmatpush1.msra.mxu0 %v4654
    %5491 = vmatprep.subr.mxu0 %v4666
    %5492 = vmatpush1.msra.mxu0 %v4665
    %5493 = vmatprep.subr.mxu0 %v4677
    %5494 = vmatpush1.msra.mxu0 %v4676
    %5495 = vmatprep.subr.mxu0 %v4688
    %5496 = vmatpush1.msra.mxu0 %v4687
    %5497 = vmatprep.subr.mxu0 %v4699
    %5498 = vmatpush1.msra.mxu0 %v4698
    %5499 = vmatprep.subr.mxu0 %v4710
    %5500 = vmatpush1.msra.mxu0 %v4709
    %5501 = vmatprep.subr.mxu0 %v4721
    %5502 = vmatpush1.msra.mxu0 %v4720
    %5503 = vmatprep.subr.mxu0 %v4732
    %5504 = vmatpush1.msra.mxu0 %v4731
    %5505 = vmatprep.subr.mxu0 %v4743
    %5506 = vmatpush1.msra.mxu0 %v4742
    %5507 = vmatprep.subr.mxu0 %v4754
    %5508 = vmatpush1.msra.mxu0 %v4753
    %5509 = vmatprep.subr.mxu0 %v4765
    %5510 = vmatpush1.msra.mxu0 %v4764
    %5511 = vmatprep.subr.mxu0 %v4776
    %5512 = vmatpush1.msra.mxu0 %v4775
    %5513 = vmatprep.subr.mxu0 %v4787
    %5514 = vmatpush1.msra.mxu0 %v4786
    %5515 = vmatprep.subr.mxu0 %v4798
    %5516 = vmatpush1.msra.mxu0 %v4797
    %5517 = vmatprep.subr.mxu0 %v4809
    %5518 = vmatpush1.msra.mxu0 %v4808
    %5519 = vmatprep.subr.mxu0 %v4820
    %5520 = vmatpush1.msra.mxu0 %v4819
    %5521 = vmatprep.subr.mxu0 %v4831
    %5522 = vmatpush1.msra.mxu0 %v4830
    %5523 = vmatprep.subr.mxu0 %v4842
    %5524 = vmatpush1.msra.mxu0 %v4841
    %5525 = vmatprep.mubr.f32.mxu0 %v4483
    %5526 = vmatmul.mubr.f32.gmra.mrb[0].mxu0 %v4482
    %v5527 = vpop.f32.mrb[0].mxu0
    %v5528 = vadd.f32 %v4897, %v5527
    %v5529 = vpop.f32.mrb[0].mxu0
    %v5530 = vadd.f32 %v4897, %v5529
    %5531 = vmatprep.mubr.f32.mxu0 %v4486
    %5532 = vmatmul.mubr.f32.gmra.mrb[0].mxu0 %v4485
    %v5533 = vpop.f32.mrb[0].mxu0
    %v5534 = vadd.f32 %v4902, %v5533
    %v5535 = vpop.f32.mrb[0].mxu0
    %v5536 = vadd.f32 %v4902, %v5535
    %5537 = vmatprep.mubr.f32.mxu0 %v4489
    %5538 = vmatmul.mubr.f32.gmra.mrb[0].mxu0 %v4488
    %v5539 = vpop.f32.mrb[0].mxu0
    %v5540 = vadd.f32 %v4907, %v5539
    %v5541 = vpop.f32.mrb[0].mxu0
    %v5542 = vadd.f32 %v4907, %v5541
    %5543 = vmatprep.mubr.f32.mxu0 %v4492
    %5544 = vmatmul.mubr.f32.gmra.mrb[0].mxu0 %v4491
    %v5545 = vpop.f32.mrb[0].mxu0
    %v5546 = vadd.f32 %v4912, %v5545
    %v5547 = vpop.f32.mrb[0].mxu0
    %v5548 = vadd.f32 %v4912, %v5547
    %5549 = vdwg.mxu0
    %5550 = vmatprep.subr.mxu0 %v4853
    %5551 = vmatpush1.msra.mxu0 %v4852
    %5552 = vmatprep.subr.mxu0 %v4864
    %5553 = vmatpush1.msra.mxu0 %v4863
    %5554 = vmatprep.subr.mxu0 %v4875
    %5555 = vmatpush1.msra.mxu0 %v4874
    %5556 = vmatprep.subr.mxu0 %v4886
    %5557 = vmatpush1.msra.mxu0 %v4885
    %5558 = vmatprep.subr.mxu0 0.0
    %5559 = vmatpush1.msra.mxu0 0.0
    %5560 = vmatprep.subr.mxu0 0.0
    %5561 = vmatpush1.msra.mxu0 0.0
    %5562 = vmatprep.subr.mxu0 0.0
    %5563 = vmatpush1.msra.mxu0 0.0
    %5564 = vmatprep.subr.mxu0 0.0
    %5565 = vmatpush1.msra.mxu0 0.0
    %5566 = vmatprep.subr.mxu0 0.0
    %5567 = vmatpush1.msra.mxu0 0.0
    %5568 = vmatprep.subr.mxu0 0.0
    %5569 = vmatpush1.msra.mxu0 0.0
    %5570 = vmatprep.subr.mxu0 0.0
    %5571 = vmatpush1.msra.mxu0 0.0
    %5572 = vmatprep.subr.mxu0 0.0
    %5573 = vmatpush1.msra.mxu0 0.0
    %5574 = vmatprep.subr.mxu0 0.0
    %5575 = vmatpush1.msra.mxu0 0.0
    %5576 = vmatprep.subr.mxu0 0.0
    %5577 = vmatpush1.msra.mxu0 0.0
    %5578 = vmatprep.subr.mxu0 0.0
    %5579 = vmatpush1.msra.mxu0 0.0
    %5580 = vmatprep.subr.mxu0 0.0
    %5581 = vmatpush1.msra.mxu0 0.0
    %5582 = vmatprep.subr.mxu0 0.0
    %5583 = vmatpush1.msra.mxu0 0.0
    %5584 = vmatprep.subr.mxu0 0.0
    %5585 = vmatpush1.msra.mxu0 0.0
    %5586 = vmatprep.subr.mxu0 0.0
    %5587 = vmatpush1.msra.mxu0 0.0
    %5588 = vmatprep.subr.mxu0 0.0
    %5589 = vmatpush1.msra.mxu0 0.0
    %5590 = vmatprep.subr.mxu0 0.0
    %5591 = vmatpush1.msra.mxu0 0.0
    %5592 = vmatprep.subr.mxu0 0.0
    %5593 = vmatpush1.msra.mxu0 0.0
    %5594 = vmatprep.subr.mxu0 0.0
    %5595 = vmatpush1.msra.mxu0 0.0
    %5596 = vmatprep.subr.mxu0 0.0
    %5597 = vmatpush1.msra.mxu0 0.0
    %5598 = vmatprep.subr.mxu0 0.0
    %5599 = vmatpush1.msra.mxu0 0.0
    %5600 = vmatprep.subr.mxu0 0.0
    %5601 = vmatpush1.msra.mxu0 0.0
    %5602 = vmatprep.subr.mxu0 0.0
    %5603 = vmatpush1.msra.mxu0 0.0
    %5604 = vmatprep.subr.mxu0 0.0
    %5605 = vmatpush1.msra.mxu0 0.0
    %5606 = vmatprep.subr.mxu0 0.0
    %5607 = vmatpush1.msra.mxu0 0.0
    %5608 = vmatprep.subr.mxu0 0.0
    %5609 = vmatpush1.msra.mxu0 0.0
    %5610 = vmatprep.subr.mxu0 0.0
    %5611 = vmatpush1.msra.mxu0 0.0
    %5612 = vmatprep.subr.mxu0 0.0
    %5613 = vmatpush1.msra.mxu0 0.0
    %5614 = vmatprep.mubr.f32.mxu0 0.0
    %5615 = vmatmul.mubr.f32.gmra.mrb[0].mxu0 %v4916
    %v5616 = vpop.f32.mrb[0].mxu0
    %v5617 = vadd.f32 %v5528, %v5616
    %v5618 = vpop.f32.mrb[0].mxu0
    %v5619 = vadd.f32 %v5530, %v5618
    %5620 = vmatprep.mubr.f32.mxu0 0.0
    %5621 = vmatmul.mubr.f32.gmra.mrb[0].mxu0 %v4919
    %v5622 = vpop.f32.mrb[0].mxu0
    %v5623 = vadd.f32 %v5534, %v5622
    %v5624 = vpop.f32.mrb[0].mxu0
    %v5625 = vadd.f32 %v5536, %v5624
    %5626 = vmatprep.mubr.f32.mxu0 0.0
    %5627 = vmatmul.mubr.f32.gmra.mrb[0].mxu0 %v4922
    %v5628 = vpop.f32.mrb[0].mxu0
    %v5629 = vadd.f32 %v5540, %v5628
    %v5630 = vpop.f32.mrb[0].mxu0
    %v5631 = vadd.f32 %v5542, %v5630
    %5632 = vmatprep.mubr.f32.mxu0 0.0
    %5633 = vmatmul.mubr.f32.gmra.mrb[0].mxu0 %v4925
    %v5634 = vpop.f32.mrb[0].mxu0
    %v5635 = vadd.f32 %v5546, %v5634
    %v5636 = vpop.f32.mrb[0].mxu0
    %v5637 = vadd.f32 %v5548, %v5636
    %5638 = vdwg.mxu0
    %5639 = vmatprep.subr.mxu0 %v4503
    %5640 = vmatpush1.msra.mxu0 %v4502
    %5641 = vmatprep.subr.mxu0 %v4514
    %5642 = vmatpush1.msra.mxu0 %v4513
    %5643 = vmatprep.subr.mxu0 %v4525
    %5644 = vmatpush1.msra.mxu0 %v4524
    %5645 = vmatprep.subr.mxu0 %v4536
    %5646 = vmatpush1.msra.mxu0 %v4535
    %5647 = vmatprep.subr.mxu0 %v4547
    %5648 = vmatpush1.msra.mxu0 %v4546
    %5649 = vmatprep.subr.mxu0 %v4558
    %5650 = vmatpush1.msra.mxu0 %v4557
    %5651 = vmatprep.subr.mxu0 %v4569
    %5652 = vmatpush1.msra.mxu0 %v4568
    %5653 = vmatprep.subr.mxu0 %v4580
    %5654 = vmatpush1.msra.mxu0 %v4579
    %5655 = vmatprep.subr.mxu0 %v4591
    %5656 = vmatpush1.msra.mxu0 %v4590
    %5657 = vmatprep.subr.mxu0 %v4602
    %5658 = vmatpush1.msra.mxu0 %v4601
    %5659 = vmatprep.subr.mxu0 %v4613
    %5660 = vmatpush1.msra.mxu0 %v4612
    %5661 = vmatprep.subr.mxu0 %v4624
    %5662 = vmatpush1.msra.mxu0 %v4623
    %5663 = vmatprep.subr.mxu0 %v4635
    %5664 = vmatpush1.msra.mxu0 %v4634
    %5665 = vmatprep.subr.mxu0 %v4646
    %5666 = vmatpush1.msra.mxu0 %v4645
    %5667 = vmatprep.subr.mxu0 %v4657
    %5668 = vmatpush1.msra.mxu0 %v4656
    %5669 = vmatprep.subr.mxu0 %v4668
    %5670 = vmatpush1.msra.mxu0 %v4667
    %5671 = vmatprep.subr.mxu0 %v4679
    %5672 = vmatpush1.msra.mxu0 %v4678
    %5673 = vmatprep.subr.mxu0 %v4690
    %5674 = vmatpush1.msra.mxu0 %v4689
    %5675 = vmatprep.subr.mxu0 %v4701
    %5676 = vmatpush1.msra.mxu0 %v4700
    %5677 = vmatprep.subr.mxu0 %v4712
    %5678 = vmatpush1.msra.mxu0 %v4711
    %5679 = vmatprep.subr.mxu0 %v4723
    %5680 = vmatpush1.msra.mxu0 %v4722
    %5681 = vmatprep.subr.mxu0 %v4734
    %5682 = vmatpush1.msra.mxu0 %v4733
    %5683 = vmatprep.subr.mxu0 %v4745
    %5684 = vmatpush1.msra.mxu0 %v4744
    %5685 = vmatprep.subr.mxu0 %v4756
    %5686 = vmatpush1.msra.mxu0 %v4755
    %5687 = vmatprep.subr.mxu0 %v4767
    %5688 = vmatpush1.msra.mxu0 %v4766
    %5689 = vmatprep.subr.mxu0 %v4778
    %5690 = vmatpush1.msra.mxu0 %v4777
    %5691 = vmatprep.subr.mxu0 %v4789
    %5692 = vmatpush1.msra.mxu0 %v4788
    %5693 = vmatprep.subr.mxu0 %v4800
    %5694 = vmatpush1.msra.mxu0 %v4799
    %5695 = vmatprep.subr.mxu0 %v4811
    %5696 = vmatpush1.msra.mxu0 %v4810
    %5697 = vmatprep.subr.mxu0 %v4822
    %5698 = vmatpush1.msra.mxu0 %v4821
    %5699 = vmatprep.subr.mxu0 %v4833
    %5700 = vmatpush1.msra.mxu0 %v4832
    %5701 = vmatprep.subr.mxu0 %v4844
    %5702 = vmatpush1.msra.mxu0 %v4843
    %5703 = vmatprep.mubr.f32.mxu0 %v4483
    %5704 = vmatmul.mubr.f32.gmra.mrb[0].mxu0 %v4482
    %v5705 = vpop.f32.mrb[0].mxu0
    %v5706 = vadd.f32 %v4897, %v5705
    %v5707 = vpop.f32.mrb[0].mxu0
    %v5708 = vadd.f32 %v4897, %v5707
    %5709 = vmatprep.mubr.f32.mxu0 %v4486
    %5710 = vmatmul.mubr.f32.gmra.mrb[0].mxu0 %v4485
    %v5711 = vpop.f32.mrb[0].mxu0
    %v5712 = vadd.f32 %v4902, %v5711
    %v5713 = vpop.f32.mrb[0].mxu0
    %v5714 = vadd.f32 %v4902, %v5713
    %5715 = vmatprep.mubr.f32.mxu0 %v4489
    %5716 = vmatmul.mubr.f32.gmra.mrb[0].mxu0 %v4488
    %v5717 = vpop.f32.mrb[0].mxu0
    %v5718 = vadd.f32 %v4907, %v5717
    %v5719 = vpop.f32.mrb[0].mxu0
    %v5720 = vadd.f32 %v4907, %v5719
    %5721 = vmatprep.mubr.f32.mxu0 %v4492
    %5722 = vmatmul.mubr.f32.gmra.mrb[0].mxu0 %v4491
    %v5723 = vpop.f32.mrb[0].mxu0
    %v5724 = vadd.f32 %v4912, %v5723
    %v5725 = vpop.f32.mrb[0].mxu0
    %v5726 = vadd.f32 %v4912, %v5725
    %5727 = vdwg.mxu0
    %5728 = vmatprep.subr.mxu0 %v4855
    %5729 = vmatpush1.msra.mxu0 %v4854
    %5730 = vmatprep.subr.mxu0 %v4866
    %5731 = vmatpush1.msra.mxu0 %v4865
    %5732 = vmatprep.subr.mxu0 %v4877
    %5733 = vmatpush1.msra.mxu0 %v4876
    %5734 = vmatprep.subr.mxu0 %v4888
    %5735 = vmatpush1.msra.mxu0 %v4887
    %5736 = vmatprep.subr.mxu0 0.0
    %5737 = vmatpush1.msra.mxu0 0.0
    %5738 = vmatprep.subr.mxu0 0.0
    %5739 = vmatpush1.msra.mxu0 0.0
    %5740 = vmatprep.subr.mxu0 0.0
    %5741 = vmatpush1.msra.mxu0 0.0
    %5742 = vmatprep.subr.mxu0 0.0
    %5743 = vmatpush1.msra.mxu0 0.0
    %5744 = vmatprep.subr.mxu0 0.0
    %5745 = vmatpush1.msra.mxu0 0.0
    %5746 = vmatprep.subr.mxu0 0.0
    %5747 = vmatpush1.msra.mxu0 0.0
    %5748 = vmatprep.subr.mxu0 0.0
    %5749 = vmatpush1.msra.mxu0 0.0
    %5750 = vmatprep.subr.mxu0 0.0
    %5751 = vmatpush1.msra.mxu0 0.0
    %5752 = vmatprep.subr.mxu0 0.0
    %5753 = vmatpush1.msra.mxu0 0.0
    %5754 = vmatprep.subr.mxu0 0.0
    %5755 = vmatpush1.msra.mxu0 0.0
    %5756 = vmatprep.subr.mxu0 0.0
    %5757 = vmatpush1.msra.mxu0 0.0
    %5758 = vmatprep.subr.mxu0 0.0
    %5759 = vmatpush1.msra.mxu0 0.0
    %5760 = vmatprep.subr.mxu0 0.0
    %5761 = vmatpush1.msra.mxu0 0.0
    %5762 = vmatprep.subr.mxu0 0.0
    %5763 = vmatpush1.msra.mxu0 0.0
    %5764 = vmatprep.subr.mxu0 0.0
    %5765 = vmatpush1.msra.mxu0 0.0
    %5766 = vmatprep.subr.mxu0 0.0
    %5767 = vmatpush1.msra.mxu0 0.0
    %5768 = vmatprep.subr.mxu0 0.0
    %5769 = vmatpush1.msra.mxu0 0.0
    %5770 = vmatprep.subr.mxu0 0.0
    %5771 = vmatpush1.msra.mxu0 0.0
    %5772 = vmatprep.subr.mxu0 0.0
    %5773 = vmatpush1.msra.mxu0 0.0
    %5774 = vmatprep.subr.mxu0 0.0
    %5775 = vmatpush1.msra.mxu0 0.0
    %5776 = vmatprep.subr.mxu0 0.0
    %5777 = vmatpush1.msra.mxu0 0.0
    %5778 = vmatprep.subr.mxu0 0.0
    %5779 = vmatpush1.msra.mxu0 0.0
    %5780 = vmatprep.subr.mxu0 0.0
    %5781 = vmatpush1.msra.mxu0 0.0
    %5782 = vmatprep.subr.mxu0 0.0
    %5783 = vmatpush1.msra.mxu0 0.0
    %5784 = vmatprep.subr.mxu0 0.0
    %5785 = vmatpush1.msra.mxu0 0.0
    %5786 = vmatprep.subr.mxu0 0.0
    %5787 = vmatpush1.msra.mxu0 0.0
    %5788 = vmatprep.subr.mxu0 0.0
    %5789 = vmatpush1.msra.mxu0 0.0
    %5790 = vmatprep.subr.mxu0 0.0
    %5791 = vmatpush1.msra.mxu0 0.0
    %5792 = vmatprep.mubr.f32.mxu0 0.0
    %5793 = vmatmul.mubr.f32.gmra.mrb[0].mxu0 %v4916
    %v5794 = vpop.f32.mrb[0].mxu0
    %v5795 = vadd.f32 %v5706, %v5794
    %v5796 = vpop.f32.mrb[0].mxu0
    %v5797 = vadd.f32 %v5708, %v5796
    %5798 = vmatprep.mubr.f32.mxu0 0.0
    %5799 = vmatmul.mubr.f32.gmra.mrb[0].mxu0 %v4919
    %v5800 = vpop.f32.mrb[0].mxu0
    %v5801 = vadd.f32 %v5712, %v5800
    %v5802 = vpop.f32.mrb[0].mxu0
    %v5803 = vadd.f32 %v5714, %v5802
    %5804 = vmatprep.mubr.f32.mxu0 0.0
    %5805 = vmatmul.mubr.f32.gmra.mrb[0].mxu0 %v4922
    %v5806 = vpop.f32.mrb[0].mxu0
    %v5807 = vadd.f32 %v5718, %v5806
    %v5808 = vpop.f32.mrb[0].mxu0
    %v5809 = vadd.f32 %v5720, %v5808
    %5810 = vmatprep.mubr.f32.mxu0 0.0
    %5811 = vmatmul.mubr.f32.gmra.mrb[0].mxu0 %v4925
    %v5812 = vpop.f32.mrb[0].mxu0
    %v5813 = vadd.f32 %v5724, %v5812
    %v5814 = vpop.f32.mrb[0].mxu0
    %v5815 = vadd.f32 %v5726, %v5814
    %5816 = vdwg.mxu0
    %5817 = vmatprep.subr.mxu0 0.0
    %5818 = vmatpush1.msra.mxu0 %v4504
    %5819 = vmatprep.subr.mxu0 0.0
    %5820 = vmatpush1.msra.mxu0 %v4515
    %5821 = vmatprep.subr.mxu0 0.0
    %5822 = vmatpush1.msra.mxu0 %v4526
    %5823 = vmatprep.subr.mxu0 0.0
    %5824 = vmatpush1.msra.mxu0 %v4537
    %5825 = vmatprep.subr.mxu0 0.0
    %5826 = vmatpush1.msra.mxu0 %v4548
    %5827 = vmatprep.subr.mxu0 0.0
    %5828 = vmatpush1.msra.mxu0 %v4559
    %5829 = vmatprep.subr.mxu0 0.0
    %5830 = vmatpush1.msra.mxu0 %v4570
    %5831 = vmatprep.subr.mxu0 0.0
    %5832 = vmatpush1.msra.mxu0 %v4581
    %5833 = vmatprep.subr.mxu0 0.0
    %5834 = vmatpush1.msra.mxu0 %v4592
    %5835 = vmatprep.subr.mxu0 0.0
    %5836 = vmatpush1.msra.mxu0 %v4603
    %5837 = vmatprep.subr.mxu0 0.0
    %5838 = vmatpush1.msra.mxu0 %v4614
    %5839 = vmatprep.subr.mxu0 0.0
    %5840 = vmatpush1.msra.mxu0 %v4625
    %5841 = vmatprep.subr.mxu0 0.0
    %5842 = vmatpush1.msra.mxu0 %v4636
    %5843 = vmatprep.subr.mxu0 0.0
    %5844 = vmatpush1.msra.mxu0 %v4647
    %5845 = vmatprep.subr.mxu0 0.0
    %5846 = vmatpush1.msra.mxu0 %v4658
    %5847 = vmatprep.subr.mxu0 0.0
    %5848 = vmatpush1.msra.mxu0 %v4669
    %5849 = vmatprep.subr.mxu0 0.0
    %5850 = vmatpush1.msra.mxu0 %v4680
    %5851 = vmatprep.subr.mxu0 0.0
    %5852 = vmatpush1.msra.mxu0 %v4691
    %5853 = vmatprep.subr.mxu0 0.0
    %5854 = vmatpush1.msra.mxu0 %v4702
    %5855 = vmatprep.subr.mxu0 0.0
    %5856 = vmatpush1.msra.mxu0 %v4713
    %5857 = vmatprep.subr.mxu0 0.0
    %5858 = vmatpush1.msra.mxu0 %v4724
    %5859 = vmatprep.subr.mxu0 0.0
    %5860 = vmatpush1.msra.mxu0 %v4735
    %5861 = vmatprep.subr.mxu0 0.0
    %5862 = vmatpush1.msra.mxu0 %v4746
    %5863 = vmatprep.subr.mxu0 0.0
    %5864 = vmatpush1.msra.mxu0 %v4757
    %5865 = vmatprep.subr.mxu0 0.0
    %5866 = vmatpush1.msra.mxu0 %v4768
    %5867 = vmatprep.subr.mxu0 0.0
    %5868 = vmatpush1.msra.mxu0 %v4779
    %5869 = vmatprep.subr.mxu0 0.0
    %5870 = vmatpush1.msra.mxu0 %v4790
    %5871 = vmatprep.subr.mxu0 0.0
    %5872 = vmatpush1.msra.mxu0 %v4801
    %5873 = vmatprep.subr.mxu0 0.0
    %5874 = vmatpush1.msra.mxu0 %v4812
    %5875 = vmatprep.subr.mxu0 0.0
    %5876 = vmatpush1.msra.mxu0 %v4823
    %5877 = vmatprep.subr.mxu0 0.0
    %5878 = vmatpush1.msra.mxu0 %v4834
    %5879 = vmatprep.subr.mxu0 0.0
    %5880 = vmatpush1.msra.mxu0 %v4845
    %5881 = vmatprep.mubr.f32.mxu0 %v4483
    %5882 = vmatmul.mubr.f32.gmra.mrb[0].mxu0 %v4482
    %v5883 = vpop.f32.mrb[0].mxu0
    %v5884 = vadd.f32 %v4897, %v5883
    %v5885 = vpop.f32.mrb[0].mxu0
    %5886 = vmatprep.mubr.f32.mxu0 %v4486
    %5887 = vmatmul.mubr.f32.gmra.mrb[0].mxu0 %v4485
    %v5888 = vpop.f32.mrb[0].mxu0
    %v5889 = vadd.f32 %v4902, %v5888
    %v5890 = vpop.f32.mrb[0].mxu0
    %5891 = vmatprep.mubr.f32.mxu0 %v4489
    %5892 = vmatmul.mubr.f32.gmra.mrb[0].mxu0 %v4488
    %v5893 = vpop.f32.mrb[0].mxu0
    %v5894 = vadd.f32 %v4907, %v5893
    %v5895 = vpop.f32.mrb[0].mxu0
    %5896 = vmatprep.mubr.f32.mxu0 %v4492
    %5897 = vmatmul.mubr.f32.gmra.mrb[0].mxu0 %v4491
    %v5898 = vpop.f32.mrb[0].mxu0
    %v5899 = vadd.f32 %v4912, %v5898
    %v5900 = vpop.f32.mrb[0].mxu0
    %5901 = vdwg.mxu0
    %5902 = vmatprep.subr.mxu0 0.0
    %5903 = vmatpush1.msra.mxu0 %v4856
    %5904 = vmatprep.subr.mxu0 0.0
    %5905 = vmatpush1.msra.mxu0 %v4867
    %5906 = vmatprep.subr.mxu0 0.0
    %5907 = vmatpush1.msra.mxu0 %v4878
    %5908 = vmatprep.subr.mxu0 0.0
    %5909 = vmatpush1.msra.mxu0 %v4889
    %5910 = vmatprep.subr.mxu0 0.0
    %5911 = vmatpush1.msra.mxu0 0.0
    %5912 = vmatprep.subr.mxu0 0.0
    %5913 = vmatpush1.msra.mxu0 0.0
    %5914 = vmatprep.subr.mxu0 0.0
    %5915 = vmatpush1.msra.mxu0 0.0
    %5916 = vmatprep.subr.mxu0 0.0
    %5917 = vmatpush1.msra.mxu0 0.0
    %5918 = vmatprep.subr.mxu0 0.0
    %5919 = vmatpush1.msra.mxu0 0.0
    %5920 = vmatprep.subr.mxu0 0.0
    %5921 = vmatpush1.msra.mxu0 0.0
    %5922 = vmatprep.subr.mxu0 0.0
    %5923 = vmatpush1.msra.mxu0 0.0
    %5924 = vmatprep.subr.mxu0 0.0
    %5925 = vmatpush1.msra.mxu0 0.0
    %5926 = vmatprep.subr.mxu0 0.0
    %5927 = vmatpush1.msra.mxu0 0.0
    %5928 = vmatprep.subr.mxu0 0.0
    %5929 = vmatpush1.msra.mxu0 0.0
    %5930 = vmatprep.subr.mxu0 0.0
    %5931 = vmatpush1.msra.mxu0 0.0
    %5932 = vmatprep.subr.mxu0 0.0
    %5933 = vmatpush1.msra.mxu0 0.0
    %5934 = vmatprep.subr.mxu0 0.0
    %5935 = vmatpush1.msra.mxu0 0.0
    %5936 = vmatprep.subr.mxu0 0.0
    %5937 = vmatpush1.msra.mxu0 0.0
    %5938 = vmatprep.subr.mxu0 0.0
    %5939 = vmatpush1.msra.mxu0 0.0
    %5940 = vmatprep.subr.mxu0 0.0
    %5941 = vmatpush1.msra.mxu0 0.0
    %5942 = vmatprep.subr.mxu0 0.0
    %5943 = vmatpush1.msra.mxu0 0.0
    %5944 = vmatprep.subr.mxu0 0.0
    %5945 = vmatpush1.msra.mxu0 0.0
    %5946 = vmatprep.subr.mxu0 0.0
    %5947 = vmatpush1.msra.mxu0 0.0
    %5948 = vmatprep.subr.mxu0 0.0
    %5949 = vmatpush1.msra.mxu0 0.0
    %5950 = vmatprep.subr.mxu0 0.0
    %5951 = vmatpush1.msra.mxu0 0.0
    %5952 = vmatprep.subr.mxu0 0.0
    %5953 = vmatpush1.msra.mxu0 0.0
    %5954 = vmatprep.subr.mxu0 0.0
    %5955 = vmatpush1.msra.mxu0 0.0
    %5956 = vmatprep.subr.mxu0 0.0
    %5957 = vmatpush1.msra.mxu0 0.0
    %5958 = vmatprep.subr.mxu0 0.0
    %5959 = vmatpush1.msra.mxu0 0.0
    %5960 = vmatprep.subr.mxu0 0.0
    %5961 = vmatpush1.msra.mxu0 0.0
    %5962 = vmatprep.subr.mxu0 0.0
    %5963 = vmatpush1.msra.mxu0 0.0
    %5964 = vmatprep.subr.mxu0 0.0
    %5965 = vmatpush1.msra.mxu0 0.0
    %5966 = vmatprep.mubr.f32.mxu0 0.0
    %5967 = vmatmul.mubr.f32.gmra.mrb[0].mxu0 %v4916
    %v5968 = vpop.f32.mrb[0].mxu0
    %v5969 = vadd.f32 %v5884, %v5968
    %v5970 = vpop.f32.mrb[0].mxu0
    %5971 = vmatprep.mubr.f32.mxu0 0.0
    %5972 = vmatmul.mubr.f32.gmra.mrb[0].mxu0 %v4919
    %v5973 = vpop.f32.mrb[0].mxu0
    %v5974 = vadd.f32 %v5889, %v5973
    %v5975 = vpop.f32.mrb[0].mxu0
    %5976 = vmatprep.mubr.f32.mxu0 0.0
    %5977 = vmatmul.mubr.f32.gmra.mrb[0].mxu0 %v4922
    %v5978 = vpop.f32.mrb[0].mxu0
    %v5979 = vadd.f32 %v5894, %v5978
    %v5980 = vpop.f32.mrb[0].mxu0
    %5981 = vmatprep.mubr.f32.mxu0 0.0
    %5982 = vmatmul.mubr.f32.gmra.mrb[0].mxu0 %v4925
    %v5983 = vpop.f32.mrb[0].mxu0
    %v5984 = vadd.f32 %v5899, %v5983
    %v5985 = vpop.f32.mrb[0].mxu0
    %5986 = vdwg.mxu0
    %v5987 = vmul.f32 %v5083, %v1528
    %v5988 = vmul.f32 %v5085, %v1532
    %v5989 = vmul.f32 %v5261, %v1536
    %v5990 = vmul.f32 %v5263, %v1540
    %v5991 = vmul.f32 %v5439, %v1544
    %v5992 = vmul.f32 %v5441, %v1548
    %v5993 = vmul.f32 %v5617, %v1552
    %v5994 = vmul.f32 %v5619, %v1556
    %v5995 = vmul.f32 %v5795, %v1560
    %v5996 = vmul.f32 %v5797, %v1564
    %v5997 = vmul.f32 %v5969, %v1568
    %v5998 = vmul.f32 %v5089, %v1528
    %v5999 = vmul.f32 %v5091, %v1532
    %v6000 = vmul.f32 %v5267, %v1536
    %v6001 = vmul.f32 %v5269, %v1540
    %v6002 = vmul.f32 %v5445, %v1544
    %v6003 = vmul.f32 %v5447, %v1548
    %v6004 = vmul.f32 %v5623, %v1552
    %v6005 = vmul.f32 %v5625, %v1556
    %v6006 = vmul.f32 %v5801, %v1560
    %v6007 = vmul.f32 %v5803, %v1564
    %v6008 = vmul.f32 %v5974, %v1568
    %v6009 = vmul.f32 %v5095, %v1528
    %v6010 = vmul.f32 %v5097, %v1532
    %v6011 = vmul.f32 %v5273, %v1536
    %v6012 = vmul.f32 %v5275, %v1540
    %v6013 = vmul.f32 %v5451, %v1544
    %v6014 = vmul.f32 %v5453, %v1548
    %v6015 = vmul.f32 %v5629, %v1552
    %v6016 = vmul.f32 %v5631, %v1556
    %v6017 = vmul.f32 %v5807, %v1560
    %v6018 = vmul.f32 %v5809, %v1564
    %v6019 = vmul.f32 %v5979, %v1568
    %v6020 = vmul.f32 %v5101, %v1528
    %v6021 = vmul.f32 %v5103, %v1532
    %v6022 = vmul.f32 %v5279, %v1536
    %v6023 = vmul.f32 %v5281, %v1540
    %v6024 = vmul.f32 %v5457, %v1544
    %v6025 = vmul.f32 %v5459, %v1548
    %v6026 = vmul.f32 %v5635, %v1552
    %v6027 = vmul.f32 %v5637, %v1556
    %v6028 = vmul.f32 %v5813, %v1560
    %v6029 = vmul.f32 %v5815, %v1564
    %v6030 = vmul.f32 %v5984, %v1568
    %s6031 = sld [smem:[#allocation4 + $0x1]]
    %vm6032 = vcmp.ge.f32.partialorder %v5987, 0.0
    %vm6033 = vcmp.ge.f32.partialorder %v5988, 0.0
    %vm6034 = vcmp.ge.f32.partialorder %v5989, 0.0
    %vm6035 = vcmp.ge.f32.partialorder %v5990, 0.0
    %vm6036 = vcmp.ge.f32.partialorder %v5991, 0.0
    %vm6037 = vcmp.ge.f32.partialorder %v5992, 0.0
    %vm6038 = vcmp.ge.f32.partialorder %v5993, 0.0
    %vm6039 = vcmp.ge.f32.partialorder %v5994, 0.0
    %vm6040 = vcmp.ge.f32.partialorder %v5995, 0.0
    %vm6041 = vcmp.ge.f32.partialorder %v5996, 0.0
    %vm6042 = vcmp.ge.f32.partialorder %v5997, 0.0
    %vm6043 = vcmp.ge.f32.partialorder %v5998, 0.0
    %vm6044 = vcmp.ge.f32.partialorder %v5999, 0.0
    %vm6045 = vcmp.ge.f32.partialorder %v6000, 0.0
    %vm6046 = vcmp.ge.f32.partialorder %v6001, 0.0
    %vm6047 = vcmp.ge.f32.partialorder %v6002, 0.0
    %vm6048 = vcmp.ge.f32.partialorder %v6003, 0.0
    %vm6049 = vcmp.ge.f32.partialorder %v6004, 0.0
    %vm6050 = vcmp.ge.f32.partialorder %v6005, 0.0
    %vm6051 = vcmp.ge.f32.partialorder %v6006, 0.0
    %vm6052 = vcmp.ge.f32.partialorder %v6007, 0.0
    %vm6053 = vcmp.ge.f32.partialorder %v6008, 0.0
    %vm6054 = vcmp.ge.f32.partialorder %v6009, 0.0
    %vm6055 = vcmp.ge.f32.partialorder %v6010, 0.0
    %vm6056 = vcmp.ge.f32.partialorder %v6011, 0.0
    %vm6057 = vcmp.ge.f32.partialorder %v6012, 0.0
    %vm6058 = vcmp.ge.f32.partialorder %v6013, 0.0
    %vm6059 = vcmp.ge.f32.partialorder %v6014, 0.0
    %vm6060 = vcmp.ge.f32.partialorder %v6015, 0.0
    %vm6061 = vcmp.ge.f32.partialorder %v6016, 0.0
    %vm6062 = vcmp.ge.f32.partialorder %v6017, 0.0
    %vm6063 = vcmp.ge.f32.partialorder %v6018, 0.0
    %vm6064 = vcmp.ge.f32.partialorder %v6019, 0.0
    %vm6065 = vcmp.ge.f32.partialorder %v6020, 0.0
    %vm6066 = vcmp.ge.f32.partialorder %v6021, 0.0
    %vm6067 = vcmp.ge.f32.partialorder %v6022, 0.0
    %vm6068 = vcmp.ge.f32.partialorder %v6023, 0.0
    %vm6069 = vcmp.ge.f32.partialorder %v6024, 0.0
    %vm6070 = vcmp.ge.f32.partialorder %v6025, 0.0
    %vm6071 = vcmp.ge.f32.partialorder %v6026, 0.0
    %vm6072 = vcmp.ge.f32.partialorder %v6027, 0.0
    %vm6073 = vcmp.ge.f32.partialorder %v6028, 0.0
    %vm6074 = vcmp.ge.f32.partialorder %v6029, 0.0
    %vm6075 = vcmp.ge.f32.partialorder %v6030, 0.0
    %v6076 = vstv %s6031
    %v6077 = vmul.f32 %v6076, %v5987
    %v6078 = vmul.f32 %v6076, %v5988
    %v6079 = vmul.f32 %v6076, %v5989
    %v6080 = vmul.f32 %v6076, %v5990
    %v6081 = vmul.f32 %v6076, %v5991
    %v6082 = vmul.f32 %v6076, %v5992
    %v6083 = vmul.f32 %v6076, %v5993
    %v6084 = vmul.f32 %v6076, %v5994
    %v6085 = vmul.f32 %v6076, %v5995
    %v6086 = vmul.f32 %v6076, %v5996
    %v6087 = vmul.f32 %v6076, %v5997
    %v6088 = vmul.f32 %v6076, %v5998
    %v6089 = vmul.f32 %v6076, %v5999
    %v6090 = vmul.f32 %v6076, %v6000
    %v6091 = vmul.f32 %v6076, %v6001
    %v6092 = vmul.f32 %v6076, %v6002
    %v6093 = vmul.f32 %v6076, %v6003
    %v6094 = vmul.f32 %v6076, %v6004
    %v6095 = vmul.f32 %v6076, %v6005
    %v6096 = vmul.f32 %v6076, %v6006
    %v6097 = vmul.f32 %v6076, %v6007
    %v6098 = vmul.f32 %v6076, %v6008
    %v6099 = vmul.f32 %v6076, %v6009
    %v6100 = vmul.f32 %v6076, %v6010
    %v6101 = vmul.f32 %v6076, %v6011
    %v6102 = vmul.f32 %v6076, %v6012
    %v6103 = vmul.f32 %v6076, %v6013
    %v6104 = vmul.f32 %v6076, %v6014
    %v6105 = vmul.f32 %v6076, %v6015
    %v6106 = vmul.f32 %v6076, %v6016
    %v6107 = vmul.f32 %v6076, %v6017
    %v6108 = vmul.f32 %v6076, %v6018
    %v6109 = vmul.f32 %v6076, %v6019
    %v6110 = vmul.f32 %v6076, %v6020
    %v6111 = vmul.f32 %v6076, %v6021
    %v6112 = vmul.f32 %v6076, %v6022
    %v6113 = vmul.f32 %v6076, %v6023
    %v6114 = vmul.f32 %v6076, %v6024
    %v6115 = vmul.f32 %v6076, %v6025
    %v6116 = vmul.f32 %v6076, %v6026
    %v6117 = vmul.f32 %v6076, %v6027
    %v6118 = vmul.f32 %v6076, %v6028
    %v6119 = vmul.f32 %v6076, %v6029
    %v6120 = vmul.f32 %v6076, %v6030
    %v6121 = vsel %vm6032, %v5987, %v6077
    %v6122 = vsel %vm6033, %v5988, %v6078
    %v6123 = vsel %vm6034, %v5989, %v6079
    %v6124 = vsel %vm6035, %v5990, %v6080
    %v6125 = vsel %vm6036, %v5991, %v6081
    %v6126 = vsel %vm6037, %v5992, %v6082
    %v6127 = vsel %vm6038, %v5993, %v6083
    %v6128 = vsel %vm6039, %v5994, %v6084
    %v6129 = vsel %vm6040, %v5995, %v6085
    %v6130 = vsel %vm6041, %v5996, %v6086
    %v6131 = vsel %vm6042, %v5997, %v6087
    %v6132 = vsel %vm6043, %v5998, %v6088
    %v6133 = vsel %vm6044, %v5999, %v6089
    %v6134 = vsel %vm6045, %v6000, %v6090
    %v6135 = vsel %vm6046, %v6001, %v6091
    %v6136 = vsel %vm6047, %v6002, %v6092
    %v6137 = vsel %vm6048, %v6003, %v6093
    %v6138 = vsel %vm6049, %v6004, %v6094
    %v6139 = vsel %vm6050, %v6005, %v6095
    %v6140 = vsel %vm6051, %v6006, %v6096
    %v6141 = vsel %vm6052, %v6007, %v6097
    %v6142 = vsel %vm6053, %v6008, %v6098
    %v6143 = vsel %vm6054, %v6009, %v6099
    %v6144 = vsel %vm6055, %v6010, %v6100
    %v6145 = vsel %vm6056, %v6011, %v6101
    %v6146 = vsel %vm6057, %v6012, %v6102
    %v6147 = vsel %vm6058, %v6013, %v6103
    %v6148 = vsel %vm6059, %v6014, %v6104
    %v6149 = vsel %vm6060, %v6015, %v6105
    %v6150 = vsel %vm6061, %v6016, %v6106
    %v6151 = vsel %vm6062, %v6017, %v6107
    %v6152 = vsel %vm6063, %v6018, %v6108
    %v6153 = vsel %vm6064, %v6019, %v6109
    %v6154 = vsel %vm6065, %v6020, %v6110
    %v6155 = vsel %vm6066, %v6021, %v6111
    %v6156 = vsel %vm6067, %v6022, %v6112
    %v6157 = vsel %vm6068, %v6023, %v6113
    %v6158 = vsel %vm6069, %v6024, %v6114
    %v6159 = vsel %vm6070, %v6025, %v6115
    %v6160 = vsel %vm6071, %v6026, %v6116
    %v6161 = vsel %vm6072, %v6027, %v6117
    %v6162 = vsel %vm6073, %v6028, %v6118
    %v6163 = vsel %vm6074, %v6029, %v6119
    %v6164 = vsel %vm6075, %v6030, %v6120
    %6165 = vst [vmem:[#allocation2 + $0x8] sm:$0xff] %v6121
    %6166 = vst [vmem:[#allocation2 + $0x10] sm:$0xff] %v6122
    %6167 = vst [vmem:[#allocation2 + $0x18] sm:$0xff] %v6123
    %6168 = vst [vmem:[#allocation2 + $0x20] sm:$0xff] %v6124
    %6169 = vst [vmem:[#allocation2 + $0x28] sm:$0xff] %v6125
    %6170 = vst [vmem:[#allocation2 + $0x30] sm:$0xff] %v6126
    %6171 = vst [vmem:[#allocation2 + $0x38] sm:$0xff] %v6127
    %6172 = vst [vmem:[#allocation2 + $0x40] sm:$0xff] %v6128
    %6173 = vst [vmem:[#allocation2 + $0x48] sm:$0xff] %v6129
    %6174 = vst [vmem:[#allocation2 + $0x50] sm:$0xff] %v6130
    %6175 = vst [vmem:[#allocation2 + $0x58] sm:$0xff] %v6131
    %6176 = vst [vmem:[#allocation2 + $0x70] sm:$0xff] %v6132
    %6177 = vst [vmem:[#allocation2 + $0x78] sm:$0xff] %v6133
    %6178 = vst [vmem:[#allocation2 + $0x80] sm:$0xff] %v6134
    %6179 = vst [vmem:[#allocation2 + $0x88] sm:$0xff] %v6135
    %6180 = vst [vmem:[#allocation2 + $0x90] sm:$0xff] %v6136
    %6181 = vst [vmem:[#allocation2 + $0x98] sm:$0xff] %v6137
    %6182 = vst [vmem:[#allocation2 + $0xa0] sm:$0xff] %v6138
    %6183 = vst [vmem:[#allocation2 + $0xa8] sm:$0xff] %v6139
    %6184 = vst [vmem:[#allocation2 + $0xb0] sm:$0xff] %v6140
    %6185 = vst [vmem:[#allocation2 + $0xb8] sm:$0xff] %v6141
    %6186 = vst [vmem:[#allocation2 + $0xc0] sm:$0xff] %v6142
    %6187 = vst [vmem:[#allocation2 + $0xd8] sm:$0xff] %v6143
    %6188 = vst [vmem:[#allocation2 + $0xe0] sm:$0xff] %v6144
    %6189 = vst [vmem:[#allocation2 + $0xe8] sm:$0xff] %v6145
    %6190 = vst [vmem:[#allocation2 + $0xf0] sm:$0xff] %v6146
    %6191 = vst [vmem:[#allocation2 + $0xf8] sm:$0xff] %v6147
    %6192 = vst [vmem:[#allocation2 + $0x100] sm:$0xff] %v6148
    %6193 = vst [vmem:[#allocation2 + $0x108] sm:$0xff] %v6149
    %6194 = vst [vmem:[#allocation2 + $0x110] sm:$0xff] %v6150
    %6195 = vst [vmem:[#allocation2 + $0x118] sm:$0xff] %v6151
    %6196 = vst [vmem:[#allocation2 + $0x120] sm:$0xff] %v6152
    %6197 = vst [vmem:[#allocation2 + $0x128] sm:$0xff] %v6153
    %6198 = vst [vmem:[#allocation2 + $0x140] sm:$0xff] %v6154
    %6199 = vst [vmem:[#allocation2 + $0x148] sm:$0xff] %v6155
    %6200 = vst [vmem:[#allocation2 + $0x150] sm:$0xff] %v6156
    %6201 = vst [vmem:[#allocation2 + $0x158] sm:$0xff] %v6157
    %6202 = vst [vmem:[#allocation2 + $0x160] sm:$0xff] %v6158
    %6203 = vst [vmem:[#allocation2 + $0x168] sm:$0xff] %v6159
    %6204 = vst [vmem:[#allocation2 + $0x170] sm:$0xff] %v6160
    %6205 = vst [vmem:[#allocation2 + $0x178] sm:$0xff] %v6161
    %6206 = vst [vmem:[#allocation2 + $0x180] sm:$0xff] %v6162
    %6207 = vst [vmem:[#allocation2 + $0x188] sm:$0xff] %v6163
    %6208 = vst [vmem:[#allocation2 + $0x190] sm:$0xff] %v6164
    %v6209 = vld [vmem:[#allocation2] sm:$0xff]
    %v6210 = vld [vmem:[#allocation2 + $0x8] sm:$0xff]
    %v6211 = vld [vmem:[#allocation2 + $0x10] sm:$0xff]
    %v6212 = vld [vmem:[#allocation2 + $0x18] sm:$0xff]
    %v6213 = vld [vmem:[#allocation2 + $0x20] sm:$0xff]
    %v6214 = vld [vmem:[#allocation2 + $0x28] sm:$0xff]
    %v6215 = vld [vmem:[#allocation2 + $0x30] sm:$0xff]
    %v6216 = vld [vmem:[#allocation2 + $0x38] sm:$0xff]
    %v6217 = vld [vmem:[#allocation2 + $0x40] sm:$0xff]
    %v6218 = vld [vmem:[#allocation2 + $0x48] sm:$0xff]
    %v6219 = vld [vmem:[#allocation2 + $0x50] sm:$0xff]
    %v6220 = vld [vmem:[#allocation2 + $0x58] sm:$0xff]
    %v6221 = vld [vmem:[#allocation2 + $0x68] sm:$0xff]
    %v6222 = vld [vmem:[#allocation2 + $0x70] sm:$0xff]
    %v6223 = vld [vmem:[#allocation2 + $0x78] sm:$0xff]
    %v6224 = vld [vmem:[#allocation2 + $0x80] sm:$0xff]
    %v6225 = vld [vmem:[#allocation2 + $0x88] sm:$0xff]
    %v6226 = vld [vmem:[#allocation2 + $0x90] sm:$0xff]
    %v6227 = vld [vmem:[#allocation2 + $0x98] sm:$0xff]
    %v6228 = vld [vmem:[#allocation2 + $0xa0] sm:$0xff]
    %v6229 = vld [vmem:[#allocation2 + $0xa8] sm:$0xff]
    %v6230 = vld [vmem:[#allocation2 + $0xb0] sm:$0xff]
    %v6231 = vld [vmem:[#allocation2 + $0xb8] sm:$0xff]
    %v6232 = vld [vmem:[#allocation2 + $0xc0] sm:$0xff]
    %v6233 = vld [vmem:[#allocation2 + $0xd0] sm:$0xff]
    %v6234 = vld [vmem:[#allocation2 + $0xd8] sm:$0xff]
    %v6235 = vld [vmem:[#allocation2 + $0xe0] sm:$0xff]
    %v6236 = vld [vmem:[#allocation2 + $0xe8] sm:$0xff]
    %v6237 = vld [vmem:[#allocation2 + $0xf0] sm:$0xff]
    %v6238 = vld [vmem:[#allocation2 + $0xf8] sm:$0xff]
    %v6239 = vld [vmem:[#allocation2 + $0x100] sm:$0xff]
    %v6240 = vld [vmem:[#allocation2 + $0x108] sm:$0xff]
    %v6241 = vld [vmem:[#allocation2 + $0x110] sm:$0xff]
    %v6242 = vld [vmem:[#allocation2 + $0x118] sm:$0xff]
    %v6243 = vld [vmem:[#allocation2 + $0x120] sm:$0xff]
    %v6244 = vld [vmem:[#allocation2 + $0x128] sm:$0xff]
    %v6245 = vld [vmem:[#allocation2 + $0x138] sm:$0xff]
    %v6246 = vld [vmem:[#allocation2 + $0x140] sm:$0xff]
    %v6247 = vld [vmem:[#allocation2 + $0x148] sm:$0xff]
    %v6248 = vld [vmem:[#allocation2 + $0x150] sm:$0xff]
    %v6249 = vld [vmem:[#allocation2 + $0x158] sm:$0xff]
    %v6250 = vld [vmem:[#allocation2 + $0x160] sm:$0xff]
    %v6251 = vld [vmem:[#allocation2 + $0x168] sm:$0xff]
    %v6252 = vld [vmem:[#allocation2 + $0x170] sm:$0xff]
    %v6253 = vld [vmem:[#allocation2 + $0x178] sm:$0xff]
    %v6254 = vld [vmem:[#allocation2 + $0x180] sm:$0xff]
    %v6255 = vld [vmem:[#allocation2 + $0x188] sm:$0xff]
    %v6256 = vld [vmem:[#allocation2 + $0x190] sm:$0xff]
    %6305 = vrot.lane.b32.xlu0 %v6209, 19
    %v6306 = vpop.permute.xlu0 %6305
    %6307 = vrot.lane.b32.xlu0 %v6210, 19
    %v6308 = vpop.permute.xlu0 %6307
    %6309 = vrot.lane.b32.xlu0 %v6211, 19
    %v6310 = vpop.permute.xlu0 %6309
    %6311 = vrot.lane.b32.xlu0 %v6212, 19
    %v6312 = vpop.permute.xlu0 %6311
    %6313 = vrot.lane.b32.xlu0 %v6213, 19
    %v6314 = vpop.permute.xlu0 %6313
    %6315 = vrot.lane.b32.xlu0 %v6214, 19
    %v6316 = vpop.permute.xlu0 %6315
    %6317 = vrot.lane.b32.xlu0 %v6215, 19
    %v6318 = vpop.permute.xlu0 %6317
    %6319 = vrot.lane.b32.xlu0 %v6216, 19
    %v6320 = vpop.permute.xlu0 %6319
    %6321 = vrot.lane.b32.xlu0 %v6217, 19
    %v6322 = vpop.permute.xlu0 %6321
    %6323 = vrot.lane.b32.xlu0 %v6218, 19
    %v6324 = vpop.permute.xlu0 %6323
    %6325 = vrot.lane.b32.xlu0 %v6219, 19
    %v6326 = vpop.permute.xlu0 %6325
    %6327 = vrot.lane.b32.xlu0 %v6220, 19
    %v6328 = vpop.permute.xlu0 %6327
    %6329 = vrot.lane.b32.xlu0 %v6221, 19
    %v6330 = vpop.permute.xlu0 %6329
    %6331 = vrot.lane.b32.xlu0 %v6222, 19
    %v6332 = vpop.permute.xlu0 %6331
    %6333 = vrot.lane.b32.xlu0 %v6223, 19
    %v6334 = vpop.permute.xlu0 %6333
    %6335 = vrot.lane.b32.xlu0 %v6224, 19
    %v6336 = vpop.permute.xlu0 %6335
    %6337 = vrot.lane.b32.xlu0 %v6225, 19
    %v6338 = vpop.permute.xlu0 %6337
    %6339 = vrot.lane.b32.xlu0 %v6226, 19
    %v6340 = vpop.permute.xlu0 %6339
    %6341 = vrot.lane.b32.xlu0 %v6227, 19
    %v6342 = vpop.permute.xlu0 %6341
    %6343 = vrot.lane.b32.xlu0 %v6228, 19
    %v6344 = vpop.permute.xlu0 %6343
    %6345 = vrot.lane.b32.xlu0 %v6229, 19
    %v6346 = vpop.permute.xlu0 %6345
    %6347 = vrot.lane.b32.xlu0 %v6230, 19
    %v6348 = vpop.permute.xlu0 %6347
    %6349 = vrot.lane.b32.xlu0 %v6231, 19
    %v6350 = vpop.permute.xlu0 %6349
    %6351 = vrot.lane.b32.xlu0 %v6232, 19
    %v6352 = vpop.permute.xlu0 %6351
    %6353 = vrot.lane.b32.xlu0 %v6233, 19
    %v6354 = vpop.permute.xlu0 %6353
    %6355 = vrot.lane.b32.xlu0 %v6234, 19
    %v6356 = vpop.permute.xlu0 %6355
    %6357 = vrot.lane.b32.xlu0 %v6235, 19
    %v6358 = vpop.permute.xlu0 %6357
    %6359 = vrot.lane.b32.xlu0 %v6236, 19
    %v6360 = vpop.permute.xlu0 %6359
    %6361 = vrot.lane.b32.xlu0 %v6237, 19
    %v6362 = vpop.permute.xlu0 %6361
    %6363 = vrot.lane.b32.xlu0 %v6238, 19
    %v6364 = vpop.permute.xlu0 %6363
    %6365 = vrot.lane.b32.xlu0 %v6239, 19
    %v6366 = vpop.permute.xlu0 %6365
    %6367 = vrot.lane.b32.xlu0 %v6240, 19
    %v6368 = vpop.permute.xlu0 %6367
    %6369 = vrot.lane.b32.xlu0 %v6241, 19
    %v6370 = vpop.permute.xlu0 %6369
    %6371 = vrot.lane.b32.xlu0 %v6242, 19
    %v6372 = vpop.permute.xlu0 %6371
    %6373 = vrot.lane.b32.xlu0 %v6243, 19
    %v6374 = vpop.permute.xlu0 %6373
    %6375 = vrot.lane.b32.xlu0 %v6244, 19
    %v6376 = vpop.permute.xlu0 %6375
    %6377 = vrot.lane.b32.xlu0 %v6245, 19
    %v6378 = vpop.permute.xlu0 %6377
    %6379 = vrot.lane.b32.xlu0 %v6246, 19
    %v6380 = vpop.permute.xlu0 %6379
    %6381 = vrot.lane.b32.xlu0 %v6247, 19
    %v6382 = vpop.permute.xlu0 %6381
    %6383 = vrot.lane.b32.xlu0 %v6248, 19
    %v6384 = vpop.permute.xlu0 %6383
    %6385 = vrot.lane.b32.xlu0 %v6249, 19
    %v6386 = vpop.permute.xlu0 %6385
    %6387 = vrot.lane.b32.xlu0 %v6250, 19
    %v6388 = vpop.permute.xlu0 %6387
    %6389 = vrot.lane.b32.xlu0 %v6251, 19
    %v6390 = vpop.permute.xlu0 %6389
    %6391 = vrot.lane.b32.xlu0 %v6252, 19
    %v6392 = vpop.permute.xlu0 %6391
    %6393 = vrot.lane.b32.xlu0 %v6253, 19
    %v6394 = vpop.permute.xlu0 %6393
    %6395 = vrot.lane.b32.xlu0 %v6254, 19
    %v6396 = vpop.permute.xlu0 %6395
    %6397 = vrot.lane.b32.xlu0 %v6255, 19
    %v6398 = vpop.permute.xlu0 %6397
    %6399 = vrot.lane.b32.xlu0 %v6256, 19
    %v6400 = vpop.permute.xlu0 %6399
    %v6401 = vsel %vm184, %v6306, %v6308
    %v6402 = vsel %vm184, %v6308, %v6310
    %v6403 = vsel %vm184, %v6310, %v6312
    %v6404 = vsel %vm184, %v6312, %v6314
    %v6405 = vsel %vm184, %v6314, %v6316
    %v6406 = vsel %vm184, %v6316, %v6318
    %v6407 = vsel %vm184, %v6318, %v6320
    %v6408 = vsel %vm184, %v6320, %v6322
    %v6409 = vsel %vm184, %v6322, %v6324
    %v6410 = vsel %vm184, %v6324, %v6326
    %v6411 = vsel %vm184, %v6326, %v6328
    %v6412 = vsel %vm184, %v6330, %v6332
    %v6413 = vsel %vm184, %v6332, %v6334
    %v6414 = vsel %vm184, %v6334, %v6336
    %v6415 = vsel %vm184, %v6336, %v6338
    %v6416 = vsel %vm184, %v6338, %v6340
    %v6417 = vsel %vm184, %v6340, %v6342
    %v6418 = vsel %vm184, %v6342, %v6344
    %v6419 = vsel %vm184, %v6344, %v6346
    %v6420 = vsel %vm184, %v6346, %v6348
    %v6421 = vsel %vm184, %v6348, %v6350
    %v6422 = vsel %vm184, %v6350, %v6352
    %v6423 = vsel %vm184, %v6354, %v6356
    %v6424 = vsel %vm184, %v6356, %v6358
    %v6425 = vsel %vm184, %v6358, %v6360
    %v6426 = vsel %vm184, %v6360, %v6362
    %v6427 = vsel %vm184, %v6362, %v6364
    %v6428 = vsel %vm184, %v6364, %v6366
    %v6429 = vsel %vm184, %v6366, %v6368
    %v6430 = vsel %vm184, %v6368, %v6370
    %v6431 = vsel %vm184, %v6370, %v6372
    %v6432 = vsel %vm184, %v6372, %v6374
    %v6433 = vsel %vm184, %v6374, %v6376
    %v6434 = vsel %vm184, %v6378, %v6380
    %v6435 = vsel %vm184, %v6380, %v6382
    %v6436 = vsel %vm184, %v6382, %v6384
    %v6437 = vsel %vm184, %v6384, %v6386
    %v6438 = vsel %vm184, %v6386, %v6388
    %v6439 = vsel %vm184, %v6388, %v6390
    %v6440 = vsel %vm184, %v6390, %v6392
    %v6441 = vsel %vm184, %v6392, %v6394
    %v6442 = vsel %vm184, %v6394, %v6396
    %v6443 = vsel %vm184, %v6396, %v6398
    %v6444 = vsel %vm184, %v6398, %v6400
    %6489 = vst [vmem:[#allocation3] sm:$0xff] %v6401
    %6490 = vst [vmem:[#allocation3 + $0x8] sm:$0xff] %v6402
    %6491 = vst [vmem:[#allocation3 + $0x10] sm:$0xff] %v6403
    %6492 = vst [vmem:[#allocation3 + $0x18] sm:$0xff] %v6404
    %6493 = vst [vmem:[#allocation3 + $0x20] sm:$0xff] %v6405
    %6494 = vst [vmem:[#allocation3 + $0x28] sm:$0xff] %v6406
    %6495 = vst [vmem:[#allocation3 + $0x30] sm:$0xff] %v6407
    %6496 = vst [vmem:[#allocation3 + $0x38] sm:$0xff] %v6408
    %6497 = vst [vmem:[#allocation3 + $0x40] sm:$0xff] %v6409
    %6498 = vst [vmem:[#allocation3 + $0x48] sm:$0xff] %v6410
    %6499 = vst [vmem:[#allocation3 + $0x50] sm:$0xff] %v6411
    %6500 = vst [vmem:[#allocation3 + $0x58] sm:$0xff] %v6412
    %6501 = vst [vmem:[#allocation3 + $0x60] sm:$0xff] %v6413
    %6502 = vst [vmem:[#allocation3 + $0x68] sm:$0xff] %v6414
    %6503 = vst [vmem:[#allocation3 + $0x70] sm:$0xff] %v6415
    %6504 = vst [vmem:[#allocation3 + $0x78] sm:$0xff] %v6416
    %6505 = vst [vmem:[#allocation3 + $0x80] sm:$0xff] %v6417
    %6506 = vst [vmem:[#allocation3 + $0x88] sm:$0xff] %v6418
    %6507 = vst [vmem:[#allocation3 + $0x90] sm:$0xff] %v6419
    %6508 = vst [vmem:[#allocation3 + $0x98] sm:$0xff] %v6420
    %6509 = vst [vmem:[#allocation3 + $0xa0] sm:$0xff] %v6421
    %6510 = vst [vmem:[#allocation3 + $0xa8] sm:$0xff] %v6422
    %6511 = vst [vmem:[#allocation3 + $0xb0] sm:$0xff] %v6423
    %6512 = vst [vmem:[#allocation3 + $0xb8] sm:$0xff] %v6424
    %6513 = vst [vmem:[#allocation3 + $0xc0] sm:$0xff] %v6425
    %6514 = vst [vmem:[#allocation3 + $0xc8] sm:$0xff] %v6426
    %6515 = vst [vmem:[#allocation3 + $0xd0] sm:$0xff] %v6427
    %6516 = vst [vmem:[#allocation3 + $0xd8] sm:$0xff] %v6428
    %6517 = vst [vmem:[#allocation3 + $0xe0] sm:$0xff] %v6429
    %6518 = vst [vmem:[#allocation3 + $0xe8] sm:$0xff] %v6430
    %6519 = vst [vmem:[#allocation3 + $0xf0] sm:$0xff] %v6431
    %6520 = vst [vmem:[#allocation3 + $0xf8] sm:$0xff] %v6432
    %6521 = vst [vmem:[#allocation3 + $0x100] sm:$0xff] %v6433
    %6522 = vst [vmem:[#allocation3 + $0x108] sm:$0xff] %v6434
    %6523 = vst [vmem:[#allocation3 + $0x110] sm:$0xff] %v6435
    %6524 = vst [vmem:[#allocation3 + $0x118] sm:$0xff] %v6436
    %6525 = vst [vmem:[#allocation3 + $0x120] sm:$0xff] %v6437
    %6526 = vst [vmem:[#allocation3 + $0x128] sm:$0xff] %v6438
    %6527 = vst [vmem:[#allocation3 + $0x130] sm:$0xff] %v6439
    %6528 = vst [vmem:[#allocation3 + $0x138] sm:$0xff] %v6440
    %6529 = vst [vmem:[#allocation3 + $0x140] sm:$0xff] %v6441
    %6530 = vst [vmem:[#allocation3 + $0x148] sm:$0xff] %v6442
    %6531 = vst [vmem:[#allocation3 + $0x150] sm:$0xff] %v6443
    %6532 = vst [vmem:[#allocation3 + $0x158] sm:$0xff] %v6444
    %v6533 = vld [vmem:[#allocation2] sm:$0xff]
    %v6534 = vld [vmem:[#allocation2 + $0x8] sm:$0xff]
    %v6535 = vld [vmem:[#allocation2 + $0x10] sm:$0xff]
    %v6536 = vld [vmem:[#allocation2 + $0x18] sm:$0xff]
    %v6537 = vld [vmem:[#allocation2 + $0x20] sm:$0xff]
    %v6538 = vld [vmem:[#allocation2 + $0x28] sm:$0xff]
    %v6539 = vld [vmem:[#allocation2 + $0x30] sm:$0xff]
    %v6540 = vld [vmem:[#allocation2 + $0x38] sm:$0xff]
    %v6541 = vld [vmem:[#allocation2 + $0x40] sm:$0xff]
    %v6542 = vld [vmem:[#allocation2 + $0x48] sm:$0xff]
    %v6543 = vld [vmem:[#allocation2 + $0x50] sm:$0xff]
    %v6544 = vld [vmem:[#allocation2 + $0x58] sm:$0xff]
    %v6545 = vld [vmem:[#allocation2 + $0x68] sm:$0xff]
    %v6546 = vld [vmem:[#allocation2 + $0x70] sm:$0xff]
    %v6547 = vld [vmem:[#allocation2 + $0x78] sm:$0xff]
    %v6548 = vld [vmem:[#allocation2 + $0x80] sm:$0xff]
    %v6549 = vld [vmem:[#allocation2 + $0x88] sm:$0xff]
    %v6550 = vld [vmem:[#allocation2 + $0x90] sm:$0xff]
    %v6551 = vld [vmem:[#allocation2 + $0x98] sm:$0xff]
    %v6552 = vld [vmem:[#allocation2 + $0xa0] sm:$0xff]
    %v6553 = vld [vmem:[#allocation2 + $0xa8] sm:$0xff]
    %v6554 = vld [vmem:[#allocation2 + $0xb0] sm:$0xff]
    %v6555 = vld [vmem:[#allocation2 + $0xb8] sm:$0xff]
    %v6556 = vld [vmem:[#allocation2 + $0xc0] sm:$0xff]
    %v6557 = vld [vmem:[#allocation2 + $0xd0] sm:$0xff]
    %v6558 = vld [vmem:[#allocation2 + $0xd8] sm:$0xff]
    %v6559 = vld [vmem:[#allocation2 + $0xe0] sm:$0xff]
    %v6560 = vld [vmem:[#allocation2 + $0xe8] sm:$0xff]
    %v6561 = vld [vmem:[#allocation2 + $0xf0] sm:$0xff]
    %v6562 = vld [vmem:[#allocation2 + $0xf8] sm:$0xff]
    %v6563 = vld [vmem:[#allocation2 + $0x100] sm:$0xff]
    %v6564 = vld [vmem:[#allocation2 + $0x108] sm:$0xff]
    %v6565 = vld [vmem:[#allocation2 + $0x110] sm:$0xff]
    %v6566 = vld [vmem:[#allocation2 + $0x118] sm:$0xff]
    %v6567 = vld [vmem:[#allocation2 + $0x120] sm:$0xff]
    %v6568 = vld [vmem:[#allocation2 + $0x128] sm:$0xff]
    %v6569 = vld [vmem:[#allocation2 + $0x138] sm:$0xff]
    %v6570 = vld [vmem:[#allocation2 + $0x140] sm:$0xff]
    %v6571 = vld [vmem:[#allocation2 + $0x148] sm:$0xff]
    %v6572 = vld [vmem:[#allocation2 + $0x150] sm:$0xff]
    %v6573 = vld [vmem:[#allocation2 + $0x158] sm:$0xff]
    %v6574 = vld [vmem:[#allocation2 + $0x160] sm:$0xff]
    %v6575 = vld [vmem:[#allocation2 + $0x168] sm:$0xff]
    %v6576 = vld [vmem:[#allocation2 + $0x170] sm:$0xff]
    %v6577 = vld [vmem:[#allocation2 + $0x178] sm:$0xff]
    %v6578 = vld [vmem:[#allocation2 + $0x180] sm:$0xff]
    %v6579 = vld [vmem:[#allocation2 + $0x188] sm:$0xff]
    %v6580 = vld [vmem:[#allocation2 + $0x190] sm:$0xff]
    %6629 = vrot.lane.b32.xlu0 %v6533, 18
    %v6630 = vpop.permute.xlu0 %6629
    %6631 = vrot.lane.b32.xlu0 %v6534, 18
    %v6632 = vpop.permute.xlu0 %6631
    %6633 = vrot.lane.b32.xlu0 %v6535, 18
    %v6634 = vpop.permute.xlu0 %6633
    %6635 = vrot.lane.b32.xlu0 %v6536, 18
    %v6636 = vpop.permute.xlu0 %6635
    %6637 = vrot.lane.b32.xlu0 %v6537, 18
    %v6638 = vpop.permute.xlu0 %6637
    %6639 = vrot.lane.b32.xlu0 %v6538, 18
    %v6640 = vpop.permute.xlu0 %6639
    %6641 = vrot.lane.b32.xlu0 %v6539, 18
    %v6642 = vpop.permute.xlu0 %6641
    %6643 = vrot.lane.b32.xlu0 %v6540, 18
    %v6644 = vpop.permute.xlu0 %6643
    %6645 = vrot.lane.b32.xlu0 %v6541, 18
    %v6646 = vpop.permute.xlu0 %6645
    %6647 = vrot.lane.b32.xlu0 %v6542, 18
    %v6648 = vpop.permute.xlu0 %6647
    %6649 = vrot.lane.b32.xlu0 %v6543, 18
    %v6650 = vpop.permute.xlu0 %6649
    %6651 = vrot.lane.b32.xlu0 %v6544, 18
    %v6652 = vpop.permute.xlu0 %6651
    %6653 = vrot.lane.b32.xlu0 %v6545, 18
    %v6654 = vpop.permute.xlu0 %6653
    %6655 = vrot.lane.b32.xlu0 %v6546, 18
    %v6656 = vpop.permute.xlu0 %6655
    %6657 = vrot.lane.b32.xlu0 %v6547, 18
    %v6658 = vpop.permute.xlu0 %6657
    %6659 = vrot.lane.b32.xlu0 %v6548, 18
    %v6660 = vpop.permute.xlu0 %6659
    %6661 = vrot.lane.b32.xlu0 %v6549, 18
    %v6662 = vpop.permute.xlu0 %6661
    %6663 = vrot.lane.b32.xlu0 %v6550, 18
    %v6664 = vpop.permute.xlu0 %6663
    %6665 = vrot.lane.b32.xlu0 %v6551, 18
    %v6666 = vpop.permute.xlu0 %6665
    %6667 = vrot.lane.b32.xlu0 %v6552, 18
    %v6668 = vpop.permute.xlu0 %6667
    %6669 = vrot.lane.b32.xlu0 %v6553, 18
    %v6670 = vpop.permute.xlu0 %6669
    %6671 = vrot.lane.b32.xlu0 %v6554, 18
    %v6672 = vpop.permute.xlu0 %6671
    %6673 = vrot.lane.b32.xlu0 %v6555, 18
    %v6674 = vpop.permute.xlu0 %6673
    %6675 = vrot.lane.b32.xlu0 %v6556, 18
    %v6676 = vpop.permute.xlu0 %6675
    %6677 = vrot.lane.b32.xlu0 %v6557, 18
    %v6678 = vpop.permute.xlu0 %6677
    %6679 = vrot.lane.b32.xlu0 %v6558, 18
    %v6680 = vpop.permute.xlu0 %6679
    %6681 = vrot.lane.b32.xlu0 %v6559, 18
    %v6682 = vpop.permute.xlu0 %6681
    %6683 = vrot.lane.b32.xlu0 %v6560, 18
    %v6684 = vpop.permute.xlu0 %6683
    %6685 = vrot.lane.b32.xlu0 %v6561, 18
    %v6686 = vpop.permute.xlu0 %6685
    %6687 = vrot.lane.b32.xlu0 %v6562, 18
    %v6688 = vpop.permute.xlu0 %6687
    %6689 = vrot.lane.b32.xlu0 %v6563, 18
    %v6690 = vpop.permute.xlu0 %6689
    %6691 = vrot.lane.b32.xlu0 %v6564, 18
    %v6692 = vpop.permute.xlu0 %6691
    %6693 = vrot.lane.b32.xlu0 %v6565, 18
    %v6694 = vpop.permute.xlu0 %6693
    %6695 = vrot.lane.b32.xlu0 %v6566, 18
    %v6696 = vpop.permute.xlu0 %6695
    %6697 = vrot.lane.b32.xlu0 %v6567, 18
    %v6698 = vpop.permute.xlu0 %6697
    %6699 = vrot.lane.b32.xlu0 %v6568, 18
    %v6700 = vpop.permute.xlu0 %6699
    %6701 = vrot.lane.b32.xlu0 %v6569, 18
    %v6702 = vpop.permute.xlu0 %6701
    %6703 = vrot.lane.b32.xlu0 %v6570, 18
    %v6704 = vpop.permute.xlu0 %6703
    %6705 = vrot.lane.b32.xlu0 %v6571, 18
    %v6706 = vpop.permute.xlu0 %6705
    %6707 = vrot.lane.b32.xlu0 %v6572, 18
    %v6708 = vpop.permute.xlu0 %6707
    %6709 = vrot.lane.b32.xlu0 %v6573, 18
    %v6710 = vpop.permute.xlu0 %6709
    %6711 = vrot.lane.b32.xlu0 %v6574, 18
    %v6712 = vpop.permute.xlu0 %6711
    %6713 = vrot.lane.b32.xlu0 %v6575, 18
    %v6714 = vpop.permute.xlu0 %6713
    %6715 = vrot.lane.b32.xlu0 %v6576, 18
    %v6716 = vpop.permute.xlu0 %6715
    %6717 = vrot.lane.b32.xlu0 %v6577, 18
    %v6718 = vpop.permute.xlu0 %6717
    %6719 = vrot.lane.b32.xlu0 %v6578, 18
    %v6720 = vpop.permute.xlu0 %6719
    %6721 = vrot.lane.b32.xlu0 %v6579, 18
    %v6722 = vpop.permute.xlu0 %6721
    %6723 = vrot.lane.b32.xlu0 %v6580, 18
    %v6724 = vpop.permute.xlu0 %6723
    %v6725 = vsel %vm278, %v6630, %v6632
    %v6726 = vsel %vm278, %v6632, %v6634
    %v6727 = vsel %vm278, %v6634, %v6636
    %v6728 = vsel %vm278, %v6636, %v6638
    %v6729 = vsel %vm278, %v6638, %v6640
    %v6730 = vsel %vm278, %v6640, %v6642
    %v6731 = vsel %vm278, %v6642, %v6644
    %v6732 = vsel %vm278, %v6644, %v6646
    %v6733 = vsel %vm278, %v6646, %v6648
    %v6734 = vsel %vm278, %v6648, %v6650
    %v6735 = vsel %vm278, %v6650, %v6652
    %v6736 = vsel %vm278, %v6654, %v6656
    %v6737 = vsel %vm278, %v6656, %v6658
    %v6738 = vsel %vm278, %v6658, %v6660
    %v6739 = vsel %vm278, %v6660, %v6662
    %v6740 = vsel %vm278, %v6662, %v6664
    %v6741 = vsel %vm278, %v6664, %v6666
    %v6742 = vsel %vm278, %v6666, %v6668
    %v6743 = vsel %vm278, %v6668, %v6670
    %v6744 = vsel %vm278, %v6670, %v6672
    %v6745 = vsel %vm278, %v6672, %v6674
    %v6746 = vsel %vm278, %v6674, %v6676
    %v6747 = vsel %vm278, %v6678, %v6680
    %v6748 = vsel %vm278, %v6680, %v6682
    %v6749 = vsel %vm278, %v6682, %v6684
    %v6750 = vsel %vm278, %v6684, %v6686
    %v6751 = vsel %vm278, %v6686, %v6688
    %v6752 = vsel %vm278, %v6688, %v6690
    %v6753 = vsel %vm278, %v6690, %v6692
    %v6754 = vsel %vm278, %v6692, %v6694
    %v6755 = vsel %vm278, %v6694, %v6696
    %v6756 = vsel %vm278, %v6696, %v6698
    %v6757 = vsel %vm278, %v6698, %v6700
    %v6758 = vsel %vm278, %v6702, %v6704
    %v6759 = vsel %vm278, %v6704, %v6706
    %v6760 = vsel %vm278, %v6706, %v6708
    %v6761 = vsel %vm278, %v6708, %v6710
    %v6762 = vsel %vm278, %v6710, %v6712
    %v6763 = vsel %vm278, %v6712, %v6714
    %v6764 = vsel %vm278, %v6714, %v6716
    %v6765 = vsel %vm278, %v6716, %v6718
    %v6766 = vsel %vm278, %v6718, %v6720
    %v6767 = vsel %vm278, %v6720, %v6722
    %v6768 = vsel %vm278, %v6722, %v6724
    %6813 = vst [vmem:[#allocation3 + $0x160] sm:$0xff] %v6725
    %6814 = vst [vmem:[#allocation3 + $0x168] sm:$0xff] %v6726
    %6815 = vst [vmem:[#allocation3 + $0x170] sm:$0xff] %v6727
    %6816 = vst [vmem:[#allocation3 + $0x178] sm:$0xff] %v6728
    %6817 = vst [vmem:[#allocation3 + $0x180] sm:$0xff] %v6729
    %6818 = vst [vmem:[#allocation3 + $0x188] sm:$0xff] %v6730
    %6819 = vst [vmem:[#allocation3 + $0x190] sm:$0xff] %v6731
    %6820 = vst [vmem:[#allocation3 + $0x198] sm:$0xff] %v6732
    %6821 = vst [vmem:[#allocation3 + $0x1a0] sm:$0xff] %v6733
    %6822 = vst [vmem:[#allocation3 + $0x1a8] sm:$0xff] %v6734
    %6823 = vst [vmem:[#allocation3 + $0x1b0] sm:$0xff] %v6735
    %6824 = vst [vmem:[#allocation3 + $0x1b8] sm:$0xff] %v6736
    %6825 = vst [vmem:[#allocation3 + $0x1c0] sm:$0xff] %v6737
    %6826 = vst [vmem:[#allocation3 + $0x1c8] sm:$0xff] %v6738
    %6827 = vst [vmem:[#allocation3 + $0x1d0] sm:$0xff] %v6739
    %6828 = vst [vmem:[#allocation3 + $0x1d8] sm:$0xff] %v6740
    %6829 = vst [vmem:[#allocation3 + $0x1e0] sm:$0xff] %v6741
    %6830 = vst [vmem:[#allocation3 + $0x1e8] sm:$0xff] %v6742
    %6831 = vst [vmem:[#allocation3 + $0x1f0] sm:$0xff] %v6743
    %6832 = vst [vmem:[#allocation3 + $0x1f8] sm:$0xff] %v6744
    %6833 = vst [vmem:[#allocation3 + $0x200] sm:$0xff] %v6745
    %6834 = vst [vmem:[#allocation3 + $0x208] sm:$0xff] %v6746
    %6835 = vst [vmem:[#allocation3 + $0x210] sm:$0xff] %v6747
    %6836 = vst [vmem:[#allocation3 + $0x218] sm:$0xff] %v6748
    %6837 = vst [vmem:[#allocation3 + $0x220] sm:$0xff] %v6749
    %6838 = vst [vmem:[#allocation3 + $0x228] sm:$0xff] %v6750
    %6839 = vst [vmem:[#allocation3 + $0x230] sm:$0xff] %v6751
    %6840 = vst [vmem:[#allocation3 + $0x238] sm:$0xff] %v6752
    %6841 = vst [vmem:[#allocation3 + $0x240] sm:$0xff] %v6753
    %6842 = vst [vmem:[#allocation3 + $0x248] sm:$0xff] %v6754
    %6843 = vst [vmem:[#allocation3 + $0x250] sm:$0xff] %v6755
    %6844 = vst [vmem:[#allocation3 + $0x258] sm:$0xff] %v6756
    %6845 = vst [vmem:[#allocation3 + $0x260] sm:$0xff] %v6757
    %6846 = vst [vmem:[#allocation3 + $0x268] sm:$0xff] %v6758
    %6847 = vst [vmem:[#allocation3 + $0x270] sm:$0xff] %v6759
    %6848 = vst [vmem:[#allocation3 + $0x278] sm:$0xff] %v6760
    %6849 = vst [vmem:[#allocation3 + $0x280] sm:$0xff] %v6761
    %6850 = vst [vmem:[#allocation3 + $0x288] sm:$0xff] %v6762
    %6851 = vst [vmem:[#allocation3 + $0x290] sm:$0xff] %v6763
    %6852 = vst [vmem:[#allocation3 + $0x298] sm:$0xff] %v6764
    %6853 = vst [vmem:[#allocation3 + $0x2a0] sm:$0xff] %v6765
    %6854 = vst [vmem:[#allocation3 + $0x2a8] sm:$0xff] %v6766
    %6855 = vst [vmem:[#allocation3 + $0x2b0] sm:$0xff] %v6767
    %6856 = vst [vmem:[#allocation3 + $0x2b8] sm:$0xff] %v6768
    %v6857 = vld [vmem:[#allocation2] sm:$0xff]
    %v6858 = vld [vmem:[#allocation2 + $0x8] sm:$0xff]
    %v6859 = vld [vmem:[#allocation2 + $0x10] sm:$0xff]
    %v6860 = vld [vmem:[#allocation2 + $0x18] sm:$0xff]
    %v6861 = vld [vmem:[#allocation2 + $0x20] sm:$0xff]
    %v6862 = vld [vmem:[#allocation2 + $0x28] sm:$0xff]
    %v6863 = vld [vmem:[#allocation2 + $0x30] sm:$0xff]
    %v6864 = vld [vmem:[#allocation2 + $0x38] sm:$0xff]
    %v6865 = vld [vmem:[#allocation2 + $0x40] sm:$0xff]
    %v6866 = vld [vmem:[#allocation2 + $0x48] sm:$0xff]
    %v6867 = vld [vmem:[#allocation2 + $0x50] sm:$0xff]
    %v6868 = vld [vmem:[#allocation2 + $0x58] sm:$0xff]
    %v6869 = vld [vmem:[#allocation2 + $0x68] sm:$0xff]
    %v6870 = vld [vmem:[#allocation2 + $0x70] sm:$0xff]
    %v6871 = vld [vmem:[#allocation2 + $0x78] sm:$0xff]
    %v6872 = vld [vmem:[#allocation2 + $0x80] sm:$0xff]
    %v6873 = vld [vmem:[#allocation2 + $0x88] sm:$0xff]
    %v6874 = vld [vmem:[#allocation2 + $0x90] sm:$0xff]
    %v6875 = vld [vmem:[#allocation2 + $0x98] sm:$0xff]
    %v6876 = vld [vmem:[#allocation2 + $0xa0] sm:$0xff]
    %v6877 = vld [vmem:[#allocation2 + $0xa8] sm:$0xff]
    %v6878 = vld [vmem:[#allocation2 + $0xb0] sm:$0xff]
    %v6879 = vld [vmem:[#allocation2 + $0xb8] sm:$0xff]
    %v6880 = vld [vmem:[#allocation2 + $0xc0] sm:$0xff]
    %v6881 = vld [vmem:[#allocation2 + $0xd0] sm:$0xff]
    %v6882 = vld [vmem:[#allocation2 + $0xd8] sm:$0xff]
    %v6883 = vld [vmem:[#allocation2 + $0xe0] sm:$0xff]
    %v6884 = vld [vmem:[#allocation2 + $0xe8] sm:$0xff]
    %v6885 = vld [vmem:[#allocation2 + $0xf0] sm:$0xff]
    %v6886 = vld [vmem:[#allocation2 + $0xf8] sm:$0xff]
    %v6887 = vld [vmem:[#allocation2 + $0x100] sm:$0xff]
    %v6888 = vld [vmem:[#allocation2 + $0x108] sm:$0xff]
    %v6889 = vld [vmem:[#allocation2 + $0x110] sm:$0xff]
    %v6890 = vld [vmem:[#allocation2 + $0x118] sm:$0xff]
    %v6891 = vld [vmem:[#allocation2 + $0x120] sm:$0xff]
    %v6892 = vld [vmem:[#allocation2 + $0x128] sm:$0xff]
    %v6893 = vld [vmem:[#allocation2 + $0x138] sm:$0xff]
    %v6894 = vld [vmem:[#allocation2 + $0x140] sm:$0xff]
    %v6895 = vld [vmem:[#allocation2 + $0x148] sm:$0xff]
    %v6896 = vld [vmem:[#allocation2 + $0x150] sm:$0xff]
    %v6897 = vld [vmem:[#allocation2 + $0x158] sm:$0xff]
    %v6898 = vld [vmem:[#allocation2 + $0x160] sm:$0xff]
    %v6899 = vld [vmem:[#allocation2 + $0x168] sm:$0xff]
    %v6900 = vld [vmem:[#allocation2 + $0x170] sm:$0xff]
    %v6901 = vld [vmem:[#allocation2 + $0x178] sm:$0xff]
    %v6902 = vld [vmem:[#allocation2 + $0x180] sm:$0xff]
    %v6903 = vld [vmem:[#allocation2 + $0x188] sm:$0xff]
    %v6904 = vld [vmem:[#allocation2 + $0x190] sm:$0xff]
    %6953 = vrot.lane.b32.xlu0 %v6857, 17
    %v6954 = vpop.permute.xlu0 %6953
    %6955 = vrot.lane.b32.xlu0 %v6858, 17
    %v6956 = vpop.permute.xlu0 %6955
    %6957 = vrot.lane.b32.xlu0 %v6859, 17
    %v6958 = vpop.permute.xlu0 %6957
    %6959 = vrot.lane.b32.xlu0 %v6860, 17
    %v6960 = vpop.permute.xlu0 %6959
    %6961 = vrot.lane.b32.xlu0 %v6861, 17
    %v6962 = vpop.permute.xlu0 %6961
    %6963 = vrot.lane.b32.xlu0 %v6862, 17
    %v6964 = vpop.permute.xlu0 %6963
    %6965 = vrot.lane.b32.xlu0 %v6863, 17
    %v6966 = vpop.permute.xlu0 %6965
    %6967 = vrot.lane.b32.xlu0 %v6864, 17
    %v6968 = vpop.permute.xlu0 %6967
    %6969 = vrot.lane.b32.xlu0 %v6865, 17
    %v6970 = vpop.permute.xlu0 %6969
    %6971 = vrot.lane.b32.xlu0 %v6866, 17
    %v6972 = vpop.permute.xlu0 %6971
    %6973 = vrot.lane.b32.xlu0 %v6867, 17
    %v6974 = vpop.permute.xlu0 %6973
    %6975 = vrot.lane.b32.xlu0 %v6868, 17
    %v6976 = vpop.permute.xlu0 %6975
    %6977 = vrot.lane.b32.xlu0 %v6869, 17
    %v6978 = vpop.permute.xlu0 %6977
    %6979 = vrot.lane.b32.xlu0 %v6870, 17
    %v6980 = vpop.permute.xlu0 %6979
    %6981 = vrot.lane.b32.xlu0 %v6871, 17
    %v6982 = vpop.permute.xlu0 %6981
    %6983 = vrot.lane.b32.xlu0 %v6872, 17
    %v6984 = vpop.permute.xlu0 %6983
    %6985 = vrot.lane.b32.xlu0 %v6873, 17
    %v6986 = vpop.permute.xlu0 %6985
    %6987 = vrot.lane.b32.xlu0 %v6874, 17
    %v6988 = vpop.permute.xlu0 %6987
    %6989 = vrot.lane.b32.xlu0 %v6875, 17
    %v6990 = vpop.permute.xlu0 %6989
    %6991 = vrot.lane.b32.xlu0 %v6876, 17
    %v6992 = vpop.permute.xlu0 %6991
    %6993 = vrot.lane.b32.xlu0 %v6877, 17
    %v6994 = vpop.permute.xlu0 %6993
    %6995 = vrot.lane.b32.xlu0 %v6878, 17
    %v6996 = vpop.permute.xlu0 %6995
    %6997 = vrot.lane.b32.xlu0 %v6879, 17
    %v6998 = vpop.permute.xlu0 %6997
    %6999 = vrot.lane.b32.xlu0 %v6880, 17
    %v7000 = vpop.permute.xlu0 %6999
    %7001 = vrot.lane.b32.xlu0 %v6881, 17
    %v7002 = vpop.permute.xlu0 %7001
    %7003 = vrot.lane.b32.xlu0 %v6882, 17
    %v7004 = vpop.permute.xlu0 %7003
    %7005 = vrot.lane.b32.xlu0 %v6883, 17
    %v7006 = vpop.permute.xlu0 %7005
    %7007 = vrot.lane.b32.xlu0 %v6884, 17
    %v7008 = vpop.permute.xlu0 %7007
    %7009 = vrot.lane.b32.xlu0 %v6885, 17
    %v7010 = vpop.permute.xlu0 %7009
    %7011 = vrot.lane.b32.xlu0 %v6886, 17
    %v7012 = vpop.permute.xlu0 %7011
    %7013 = vrot.lane.b32.xlu0 %v6887, 17
    %v7014 = vpop.permute.xlu0 %7013
    %7015 = vrot.lane.b32.xlu0 %v6888, 17
    %v7016 = vpop.permute.xlu0 %7015
    %7017 = vrot.lane.b32.xlu0 %v6889, 17
    %v7018 = vpop.permute.xlu0 %7017
    %7019 = vrot.lane.b32.xlu0 %v6890, 17
    %v7020 = vpop.permute.xlu0 %7019
    %7021 = vrot.lane.b32.xlu0 %v6891, 17
    %v7022 = vpop.permute.xlu0 %7021
    %7023 = vrot.lane.b32.xlu0 %v6892, 17
    %v7024 = vpop.permute.xlu0 %7023
    %7025 = vrot.lane.b32.xlu0 %v6893, 17
    %v7026 = vpop.permute.xlu0 %7025
    %7027 = vrot.lane.b32.xlu0 %v6894, 17
    %v7028 = vpop.permute.xlu0 %7027
    %7029 = vrot.lane.b32.xlu0 %v6895, 17
    %v7030 = vpop.permute.xlu0 %7029
    %7031 = vrot.lane.b32.xlu0 %v6896, 17
    %v7032 = vpop.permute.xlu0 %7031
    %7033 = vrot.lane.b32.xlu0 %v6897, 17
    %v7034 = vpop.permute.xlu0 %7033
    %7035 = vrot.lane.b32.xlu0 %v6898, 17
    %v7036 = vpop.permute.xlu0 %7035
    %7037 = vrot.lane.b32.xlu0 %v6899, 17
    %v7038 = vpop.permute.xlu0 %7037
    %7039 = vrot.lane.b32.xlu0 %v6900, 17
    %v7040 = vpop.permute.xlu0 %7039
    %7041 = vrot.lane.b32.xlu0 %v6901, 17
    %v7042 = vpop.permute.xlu0 %7041
    %7043 = vrot.lane.b32.xlu0 %v6902, 17
    %v7044 = vpop.permute.xlu0 %7043
    %7045 = vrot.lane.b32.xlu0 %v6903, 17
    %v7046 = vpop.permute.xlu0 %7045
    %7047 = vrot.lane.b32.xlu0 %v6904, 17
    %v7048 = vpop.permute.xlu0 %7047
    %v7049 = vsel %vm372, %v6954, %v6956
    %v7050 = vsel %vm372, %v6956, %v6958
    %v7051 = vsel %vm372, %v6958, %v6960
    %v7052 = vsel %vm372, %v6960, %v6962
    %v7053 = vsel %vm372, %v6962, %v6964
    %v7054 = vsel %vm372, %v6964, %v6966
    %v7055 = vsel %vm372, %v6966, %v6968
    %v7056 = vsel %vm372, %v6968, %v6970
    %v7057 = vsel %vm372, %v6970, %v6972
    %v7058 = vsel %vm372, %v6972, %v6974
    %v7059 = vsel %vm372, %v6974, %v6976
    %v7060 = vsel %vm372, %v6978, %v6980
    %v7061 = vsel %vm372, %v6980, %v6982
    %v7062 = vsel %vm372, %v6982, %v6984
    %v7063 = vsel %vm372, %v6984, %v6986
    %v7064 = vsel %vm372, %v6986, %v6988
    %v7065 = vsel %vm372, %v6988, %v6990
    %v7066 = vsel %vm372, %v6990, %v6992
    %v7067 = vsel %vm372, %v6992, %v6994
    %v7068 = vsel %vm372, %v6994, %v6996
    %v7069 = vsel %vm372, %v6996, %v6998
    %v7070 = vsel %vm372, %v6998, %v7000
    %v7071 = vsel %vm372, %v7002, %v7004
    %v7072 = vsel %vm372, %v7004, %v7006
    %v7073 = vsel %vm372, %v7006, %v7008
    %v7074 = vsel %vm372, %v7008, %v7010
    %v7075 = vsel %vm372, %v7010, %v7012
    %v7076 = vsel %vm372, %v7012, %v7014
    %v7077 = vsel %vm372, %v7014, %v7016
    %v7078 = vsel %vm372, %v7016, %v7018
    %v7079 = vsel %vm372, %v7018, %v7020
    %v7080 = vsel %vm372, %v7020, %v7022
    %v7081 = vsel %vm372, %v7022, %v7024
    %v7082 = vsel %vm372, %v7026, %v7028
    %v7083 = vsel %vm372, %v7028, %v7030
    %v7084 = vsel %vm372, %v7030, %v7032
    %v7085 = vsel %vm372, %v7032, %v7034
    %v7086 = vsel %vm372, %v7034, %v7036
    %v7087 = vsel %vm372, %v7036, %v7038
    %v7088 = vsel %vm372, %v7038, %v7040
    %v7089 = vsel %vm372, %v7040, %v7042
    %v7090 = vsel %vm372, %v7042, %v7044
    %v7091 = vsel %vm372, %v7044, %v7046
    %v7092 = vsel %vm372, %v7046, %v7048
    %7137 = vst [vmem:[#allocation3 + $0x2c0] sm:$0xff] %v7049
    %7138 = vst [vmem:[#allocation3 + $0x2c8] sm:$0xff] %v7050
    %7139 = vst [vmem:[#allocation3 + $0x2d0] sm:$0xff] %v7051
    %7140 = vst [vmem:[#allocation3 + $0x2d8] sm:$0xff] %v7052
    %7141 = vst [vmem:[#allocation3 + $0x2e0] sm:$0xff] %v7053
    %7142 = vst [vmem:[#allocation3 + $0x2e8] sm:$0xff] %v7054
    %7143 = vst [vmem:[#allocation3 + $0x2f0] sm:$0xff] %v7055
    %7144 = vst [vmem:[#allocation3 + $0x2f8] sm:$0xff] %v7056
    %7145 = vst [vmem:[#allocation3 + $0x300] sm:$0xff] %v7057
    %7146 = vst [vmem:[#allocation3 + $0x308] sm:$0xff] %v7058
    %7147 = vst [vmem:[#allocation3 + $0x310] sm:$0xff] %v7059
    %7148 = vst [vmem:[#allocation3 + $0x318] sm:$0xff] %v7060
    %7149 = vst [vmem:[#allocation3 + $0x320] sm:$0xff] %v7061
    %7150 = vst [vmem:[#allocation3 + $0x328] sm:$0xff] %v7062
    %7151 = vst [vmem:[#allocation3 + $0x330] sm:$0xff] %v7063
    %7152 = vst [vmem:[#allocation3 + $0x338] sm:$0xff] %v7064
    %7153 = vst [vmem:[#allocation3 + $0x340] sm:$0xff] %v7065
    %7154 = vst [vmem:[#allocation3 + $0x348] sm:$0xff] %v7066
    %7155 = vst [vmem:[#allocation3 + $0x350] sm:$0xff] %v7067
    %7156 = vst [vmem:[#allocation3 + $0x358] sm:$0xff] %v7068
    %7157 = vst [vmem:[#allocation3 + $0x360] sm:$0xff] %v7069
    %7158 = vst [vmem:[#allocation3 + $0x368] sm:$0xff] %v7070
    %7159 = vst [vmem:[#allocation3 + $0x370] sm:$0xff] %v7071
    %7160 = vst [vmem:[#allocation3 + $0x378] sm:$0xff] %v7072
    %7161 = vst [vmem:[#allocation3 + $0x380] sm:$0xff] %v7073
    %7162 = vst [vmem:[#allocation3 + $0x388] sm:$0xff] %v7074
    %7163 = vst [vmem:[#allocation3 + $0x390] sm:$0xff] %v7075
    %7164 = vst [vmem:[#allocation3 + $0x398] sm:$0xff] %v7076
    %7165 = vst [vmem:[#allocation3 + $0x3a0] sm:$0xff] %v7077
    %7166 = vst [vmem:[#allocation3 + $0x3a8] sm:$0xff] %v7078
    %7167 = vst [vmem:[#allocation3 + $0x3b0] sm:$0xff] %v7079
    %7168 = vst [vmem:[#allocation3 + $0x3b8] sm:$0xff] %v7080
    %7169 = vst [vmem:[#allocation3 + $0x3c0] sm:$0xff] %v7081
    %7170 = vst [vmem:[#allocation3 + $0x3c8] sm:$0xff] %v7082
    %7171 = vst [vmem:[#allocation3 + $0x3d0] sm:$0xff] %v7083
    %7172 = vst [vmem:[#allocation3 + $0x3d8] sm:$0xff] %v7084
    %7173 = vst [vmem:[#allocation3 + $0x3e0] sm:$0xff] %v7085
    %7174 = vst [vmem:[#allocation3 + $0x3e8] sm:$0xff] %v7086
    %7175 = vst [vmem:[#allocation3 + $0x3f0] sm:$0xff] %v7087
    %7176 = vst [vmem:[#allocation3 + $0x3f8] sm:$0xff] %v7088
    %7177 = vst [vmem:[#allocation3 + $0x400] sm:$0xff] %v7089
    %7178 = vst [vmem:[#allocation3 + $0x408] sm:$0xff] %v7090
    %7179 = vst [vmem:[#allocation3 + $0x410] sm:$0xff] %v7091
    %7180 = vst [vmem:[#allocation3 + $0x418] sm:$0xff] %v7092
    %v7181 = vld [vmem:[#allocation2] sm:$0xff]
    %v7182 = vld [vmem:[#allocation2 + $0x8] sm:$0xff]
    %v7183 = vld [vmem:[#allocation2 + $0x10] sm:$0xff]
    %v7184 = vld [vmem:[#allocation2 + $0x18] sm:$0xff]
    %v7185 = vld [vmem:[#allocation2 + $0x20] sm:$0xff]
    %v7186 = vld [vmem:[#allocation2 + $0x28] sm:$0xff]
    %v7187 = vld [vmem:[#allocation2 + $0x30] sm:$0xff]
    %v7188 = vld [vmem:[#allocation2 + $0x38] sm:$0xff]
    %v7189 = vld [vmem:[#allocation2 + $0x40] sm:$0xff]
    %v7190 = vld [vmem:[#allocation2 + $0x48] sm:$0xff]
    %v7191 = vld [vmem:[#allocation2 + $0x50] sm:$0xff]
    %v7192 = vld [vmem:[#allocation2 + $0x58] sm:$0xff]
    %v7193 = vld [vmem:[#allocation2 + $0x68] sm:$0xff]
    %v7194 = vld [vmem:[#allocation2 + $0x70] sm:$0xff]
    %v7195 = vld [vmem:[#allocation2 + $0x78] sm:$0xff]
    %v7196 = vld [vmem:[#allocation2 + $0x80] sm:$0xff]
    %v7197 = vld [vmem:[#allocation2 + $0x88] sm:$0xff]
    %v7198 = vld [vmem:[#allocation2 + $0x90] sm:$0xff]
    %v7199 = vld [vmem:[#allocation2 + $0x98] sm:$0xff]
    %v7200 = vld [vmem:[#allocation2 + $0xa0] sm:$0xff]
    %v7201 = vld [vmem:[#allocation2 + $0xa8] sm:$0xff]
    %v7202 = vld [vmem:[#allocation2 + $0xb0] sm:$0xff]
    %v7203 = vld [vmem:[#allocation2 + $0xb8] sm:$0xff]
    %v7204 = vld [vmem:[#allocation2 + $0xc0] sm:$0xff]
    %v7205 = vld [vmem:[#allocation2 + $0xd0] sm:$0xff]
    %v7206 = vld [vmem:[#allocation2 + $0xd8] sm:$0xff]
    %v7207 = vld [vmem:[#allocation2 + $0xe0] sm:$0xff]
    %v7208 = vld [vmem:[#allocation2 + $0xe8] sm:$0xff]
    %v7209 = vld [vmem:[#allocation2 + $0xf0] sm:$0xff]
    %v7210 = vld [vmem:[#allocation2 + $0xf8] sm:$0xff]
    %v7211 = vld [vmem:[#allocation2 + $0x100] sm:$0xff]
    %v7212 = vld [vmem:[#allocation2 + $0x108] sm:$0xff]
    %v7213 = vld [vmem:[#allocation2 + $0x110] sm:$0xff]
    %v7214 = vld [vmem:[#allocation2 + $0x118] sm:$0xff]
    %v7215 = vld [vmem:[#allocation2 + $0x120] sm:$0xff]
    %v7216 = vld [vmem:[#allocation2 + $0x128] sm:$0xff]
    %v7217 = vld [vmem:[#allocation2 + $0x138] sm:$0xff]
    %v7218 = vld [vmem:[#allocation2 + $0x140] sm:$0xff]
    %v7219 = vld [vmem:[#allocation2 + $0x148] sm:$0xff]
    %v7220 = vld [vmem:[#allocation2 + $0x150] sm:$0xff]
    %v7221 = vld [vmem:[#allocation2 + $0x158] sm:$0xff]
    %v7222 = vld [vmem:[#allocation2 + $0x160] sm:$0xff]
    %v7223 = vld [vmem:[#allocation2 + $0x168] sm:$0xff]
    %v7224 = vld [vmem:[#allocation2 + $0x170] sm:$0xff]
    %v7225 = vld [vmem:[#allocation2 + $0x178] sm:$0xff]
    %v7226 = vld [vmem:[#allocation2 + $0x180] sm:$0xff]
    %v7227 = vld [vmem:[#allocation2 + $0x188] sm:$0xff]
    %v7228 = vld [vmem:[#allocation2 + $0x190] sm:$0xff]
    %7277 = vrot.lane.b32.xlu0 %v7181, 1
    %v7278 = vpop.permute.xlu0 %7277
    %7279 = vrot.lane.b32.xlu0 %v7182, 1
    %v7280 = vpop.permute.xlu0 %7279
    %7281 = vrot.lane.b32.xlu0 %v7183, 1
    %v7282 = vpop.permute.xlu0 %7281
    %7283 = vrot.lane.b32.xlu0 %v7184, 1
    %v7284 = vpop.permute.xlu0 %7283
    %7285 = vrot.lane.b32.xlu0 %v7185, 1
    %v7286 = vpop.permute.xlu0 %7285
    %7287 = vrot.lane.b32.xlu0 %v7186, 1
    %v7288 = vpop.permute.xlu0 %7287
    %7289 = vrot.lane.b32.xlu0 %v7187, 1
    %v7290 = vpop.permute.xlu0 %7289
    %7291 = vrot.lane.b32.xlu0 %v7188, 1
    %v7292 = vpop.permute.xlu0 %7291
    %7293 = vrot.lane.b32.xlu0 %v7189, 1
    %v7294 = vpop.permute.xlu0 %7293
    %7295 = vrot.lane.b32.xlu0 %v7190, 1
    %v7296 = vpop.permute.xlu0 %7295
    %7297 = vrot.lane.b32.xlu0 %v7191, 1
    %v7298 = vpop.permute.xlu0 %7297
    %7299 = vrot.lane.b32.xlu0 %v7192, 1
    %v7300 = vpop.permute.xlu0 %7299
    %7301 = vrot.lane.b32.xlu0 %v7193, 1
    %v7302 = vpop.permute.xlu0 %7301
    %7303 = vrot.lane.b32.xlu0 %v7194, 1
    %v7304 = vpop.permute.xlu0 %7303
    %7305 = vrot.lane.b32.xlu0 %v7195, 1
    %v7306 = vpop.permute.xlu0 %7305
    %7307 = vrot.lane.b32.xlu0 %v7196, 1
    %v7308 = vpop.permute.xlu0 %7307
    %7309 = vrot.lane.b32.xlu0 %v7197, 1
    %v7310 = vpop.permute.xlu0 %7309
    %7311 = vrot.lane.b32.xlu0 %v7198, 1
    %v7312 = vpop.permute.xlu0 %7311
    %7313 = vrot.lane.b32.xlu0 %v7199, 1
    %v7314 = vpop.permute.xlu0 %7313
    %7315 = vrot.lane.b32.xlu0 %v7200, 1
    %v7316 = vpop.permute.xlu0 %7315
    %7317 = vrot.lane.b32.xlu0 %v7201, 1
    %v7318 = vpop.permute.xlu0 %7317
    %7319 = vrot.lane.b32.xlu0 %v7202, 1
    %v7320 = vpop.permute.xlu0 %7319
    %7321 = vrot.lane.b32.xlu0 %v7203, 1
    %v7322 = vpop.permute.xlu0 %7321
    %7323 = vrot.lane.b32.xlu0 %v7204, 1
    %v7324 = vpop.permute.xlu0 %7323
    %7325 = vrot.lane.b32.xlu0 %v7205, 1
    %v7326 = vpop.permute.xlu0 %7325
    %7327 = vrot.lane.b32.xlu0 %v7206, 1
    %v7328 = vpop.permute.xlu0 %7327
    %7329 = vrot.lane.b32.xlu0 %v7207, 1
    %v7330 = vpop.permute.xlu0 %7329
    %7331 = vrot.lane.b32.xlu0 %v7208, 1
    %v7332 = vpop.permute.xlu0 %7331
    %7333 = vrot.lane.b32.xlu0 %v7209, 1
    %v7334 = vpop.permute.xlu0 %7333
    %7335 = vrot.lane.b32.xlu0 %v7210, 1
    %v7336 = vpop.permute.xlu0 %7335
    %7337 = vrot.lane.b32.xlu0 %v7211, 1
    %v7338 = vpop.permute.xlu0 %7337
    %7339 = vrot.lane.b32.xlu0 %v7212, 1
    %v7340 = vpop.permute.xlu0 %7339
    %7341 = vrot.lane.b32.xlu0 %v7213, 1
    %v7342 = vpop.permute.xlu0 %7341
    %7343 = vrot.lane.b32.xlu0 %v7214, 1
    %v7344 = vpop.permute.xlu0 %7343
    %7345 = vrot.lane.b32.xlu0 %v7215, 1
    %v7346 = vpop.permute.xlu0 %7345
    %7347 = vrot.lane.b32.xlu0 %v7216, 1
    %v7348 = vpop.permute.xlu0 %7347
    %7349 = vrot.lane.b32.xlu0 %v7217, 1
    %v7350 = vpop.permute.xlu0 %7349
    %7351 = vrot.lane.b32.xlu0 %v7218, 1
    %v7352 = vpop.permute.xlu0 %7351
    %7353 = vrot.lane.b32.xlu0 %v7219, 1
    %v7354 = vpop.permute.xlu0 %7353
    %7355 = vrot.lane.b32.xlu0 %v7220, 1
    %v7356 = vpop.permute.xlu0 %7355
    %7357 = vrot.lane.b32.xlu0 %v7221, 1
    %v7358 = vpop.permute.xlu0 %7357
    %7359 = vrot.lane.b32.xlu0 %v7222, 1
    %v7360 = vpop.permute.xlu0 %7359
    %7361 = vrot.lane.b32.xlu0 %v7223, 1
    %v7362 = vpop.permute.xlu0 %7361
    %7363 = vrot.lane.b32.xlu0 %v7224, 1
    %v7364 = vpop.permute.xlu0 %7363
    %7365 = vrot.lane.b32.xlu0 %v7225, 1
    %v7366 = vpop.permute.xlu0 %7365
    %7367 = vrot.lane.b32.xlu0 %v7226, 1
    %v7368 = vpop.permute.xlu0 %7367
    %7369 = vrot.lane.b32.xlu0 %v7227, 1
    %v7370 = vpop.permute.xlu0 %7369
    %7371 = vrot.lane.b32.xlu0 %v7228, 1
    %v7372 = vpop.permute.xlu0 %7371
    %v7373 = vsel %vm466, %v7278, %v7280
    %v7374 = vsel %vm466, %v7280, %v7282
    %v7375 = vsel %vm466, %v7282, %v7284
    %v7376 = vsel %vm466, %v7284, %v7286
    %v7377 = vsel %vm466, %v7286, %v7288
    %v7378 = vsel %vm466, %v7288, %v7290
    %v7379 = vsel %vm466, %v7290, %v7292
    %v7380 = vsel %vm466, %v7292, %v7294
    %v7381 = vsel %vm466, %v7294, %v7296
    %v7382 = vsel %vm466, %v7296, %v7298
    %v7383 = vsel %vm466, %v7298, %v7300
    %v7384 = vsel %vm466, %v7302, %v7304
    %v7385 = vsel %vm466, %v7304, %v7306
    %v7386 = vsel %vm466, %v7306, %v7308
    %v7387 = vsel %vm466, %v7308, %v7310
    %v7388 = vsel %vm466, %v7310, %v7312
    %v7389 = vsel %vm466, %v7312, %v7314
    %v7390 = vsel %vm466, %v7314, %v7316
    %v7391 = vsel %vm466, %v7316, %v7318
    %v7392 = vsel %vm466, %v7318, %v7320
    %v7393 = vsel %vm466, %v7320, %v7322
    %v7394 = vsel %vm466, %v7322, %v7324
    %v7395 = vsel %vm466, %v7326, %v7328
    %v7396 = vsel %vm466, %v7328, %v7330
    %v7397 = vsel %vm466, %v7330, %v7332
    %v7398 = vsel %vm466, %v7332, %v7334
    %v7399 = vsel %vm466, %v7334, %v7336
    %v7400 = vsel %vm466, %v7336, %v7338
    %v7401 = vsel %vm466, %v7338, %v7340
    %v7402 = vsel %vm466, %v7340, %v7342
    %v7403 = vsel %vm466, %v7342, %v7344
    %v7404 = vsel %vm466, %v7344, %v7346
    %v7405 = vsel %vm466, %v7346, %v7348
    %v7406 = vsel %vm466, %v7350, %v7352
    %v7407 = vsel %vm466, %v7352, %v7354
    %v7408 = vsel %vm466, %v7354, %v7356
    %v7409 = vsel %vm466, %v7356, %v7358
    %v7410 = vsel %vm466, %v7358, %v7360
    %v7411 = vsel %vm466, %v7360, %v7362
    %v7412 = vsel %vm466, %v7362, %v7364
    %v7413 = vsel %vm466, %v7364, %v7366
    %v7414 = vsel %vm466, %v7366, %v7368
    %v7415 = vsel %vm466, %v7368, %v7370
    %v7416 = vsel %vm466, %v7370, %v7372
    %7461 = vst [vmem:[#allocation3 + $0x420] sm:$0xff] %v7373
    %7462 = vst [vmem:[#allocation3 + $0x428] sm:$0xff] %v7374
    %7463 = vst [vmem:[#allocation3 + $0x430] sm:$0xff] %v7375
    %7464 = vst [vmem:[#allocation3 + $0x438] sm:$0xff] %v7376
    %7465 = vst [vmem:[#allocation3 + $0x440] sm:$0xff] %v7377
    %7466 = vst [vmem:[#allocation3 + $0x448] sm:$0xff] %v7378
    %7467 = vst [vmem:[#allocation3 + $0x450] sm:$0xff] %v7379
    %7468 = vst [vmem:[#allocation3 + $0x458] sm:$0xff] %v7380
    %7469 = vst [vmem:[#allocation3 + $0x460] sm:$0xff] %v7381
    %7470 = vst [vmem:[#allocation3 + $0x468] sm:$0xff] %v7382
    %7471 = vst [vmem:[#allocation3 + $0x470] sm:$0xff] %v7383
    %7472 = vst [vmem:[#allocation3 + $0x478] sm:$0xff] %v7384
    %7473 = vst [vmem:[#allocation3 + $0x480] sm:$0xff] %v7385
    %7474 = vst [vmem:[#allocation3 + $0x488] sm:$0xff] %v7386
    %7475 = vst [vmem:[#allocation3 + $0x490] sm:$0xff] %v7387
    %7476 = vst [vmem:[#allocation3 + $0x498] sm:$0xff] %v7388
    %7477 = vst [vmem:[#allocation3 + $0x4a0] sm:$0xff] %v7389
    %7478 = vst [vmem:[#allocation3 + $0x4a8] sm:$0xff] %v7390
    %7479 = vst [vmem:[#allocation3 + $0x4b0] sm:$0xff] %v7391
    %7480 = vst [vmem:[#allocation3 + $0x4b8] sm:$0xff] %v7392
    %7481 = vst [vmem:[#allocation3 + $0x4c0] sm:$0xff] %v7393
    %7482 = vst [vmem:[#allocation3 + $0x4c8] sm:$0xff] %v7394
    %7483 = vst [vmem:[#allocation3 + $0x4d0] sm:$0xff] %v7395
    %7484 = vst [vmem:[#allocation3 + $0x4d8] sm:$0xff] %v7396
    %7485 = vst [vmem:[#allocation3 + $0x4e0] sm:$0xff] %v7397
    %7486 = vst [vmem:[#allocation3 + $0x4e8] sm:$0xff] %v7398
    %7487 = vst [vmem:[#allocation3 + $0x4f0] sm:$0xff] %v7399
    %7488 = vst [vmem:[#allocation3 + $0x4f8] sm:$0xff] %v7400
    %7489 = vst [vmem:[#allocation3 + $0x500] sm:$0xff] %v7401
    %7490 = vst [vmem:[#allocation3 + $0x508] sm:$0xff] %v7402
    %7491 = vst [vmem:[#allocation3 + $0x510] sm:$0xff] %v7403
    %7492 = vst [vmem:[#allocation3 + $0x518] sm:$0xff] %v7404
    %7493 = vst [vmem:[#allocation3 + $0x520] sm:$0xff] %v7405
    %7494 = vst [vmem:[#allocation3 + $0x528] sm:$0xff] %v7406
    %7495 = vst [vmem:[#allocation3 + $0x530] sm:$0xff] %v7407
    %7496 = vst [vmem:[#allocation3 + $0x538] sm:$0xff] %v7408
    %7497 = vst [vmem:[#allocation3 + $0x540] sm:$0xff] %v7409
    %7498 = vst [vmem:[#allocation3 + $0x548] sm:$0xff] %v7410
    %7499 = vst [vmem:[#allocation3 + $0x550] sm:$0xff] %v7411
    %7500 = vst [vmem:[#allocation3 + $0x558] sm:$0xff] %v7412
    %7501 = vst [vmem:[#allocation3 + $0x560] sm:$0xff] %v7413
    %7502 = vst [vmem:[#allocation3 + $0x568] sm:$0xff] %v7414
    %7503 = vst [vmem:[#allocation3 + $0x570] sm:$0xff] %v7415
    %7504 = vst [vmem:[#allocation3 + $0x578] sm:$0xff] %v7416
    %v7505 = vld [vmem:[#allocation2 + $0x8] sm:$0xff]
    %v7506 = vld [vmem:[#allocation2 + $0x10] sm:$0xff]
    %v7507 = vld [vmem:[#allocation2 + $0x18] sm:$0xff]
    %v7508 = vld [vmem:[#allocation2 + $0x20] sm:$0xff]
    %v7509 = vld [vmem:[#allocation2 + $0x28] sm:$0xff]
    %v7510 = vld [vmem:[#allocation2 + $0x30] sm:$0xff]
    %v7511 = vld [vmem:[#allocation2 + $0x38] sm:$0xff]
    %v7512 = vld [vmem:[#allocation2 + $0x40] sm:$0xff]
    %v7513 = vld [vmem:[#allocation2 + $0x48] sm:$0xff]
    %v7514 = vld [vmem:[#allocation2 + $0x50] sm:$0xff]
    %v7515 = vld [vmem:[#allocation2 + $0x58] sm:$0xff]
    %v7516 = vld [vmem:[#allocation2 + $0x70] sm:$0xff]
    %v7517 = vld [vmem:[#allocation2 + $0x78] sm:$0xff]
    %v7518 = vld [vmem:[#allocation2 + $0x80] sm:$0xff]
    %v7519 = vld [vmem:[#allocation2 + $0x88] sm:$0xff]
    %v7520 = vld [vmem:[#allocation2 + $0x90] sm:$0xff]
    %v7521 = vld [vmem:[#allocation2 + $0x98] sm:$0xff]
    %v7522 = vld [vmem:[#allocation2 + $0xa0] sm:$0xff]
    %v7523 = vld [vmem:[#allocation2 + $0xa8] sm:$0xff]
    %v7524 = vld [vmem:[#allocation2 + $0xb0] sm:$0xff]
    %v7525 = vld [vmem:[#allocation2 + $0xb8] sm:$0xff]
    %v7526 = vld [vmem:[#allocation2 + $0xc0] sm:$0xff]
    %v7527 = vld [vmem:[#allocation2 + $0xd8] sm:$0xff]
    %v7528 = vld [vmem:[#allocation2 + $0xe0] sm:$0xff]
    %v7529 = vld [vmem:[#allocation2 + $0xe8] sm:$0xff]
    %v7530 = vld [vmem:[#allocation2 + $0xf0] sm:$0xff]
    %v7531 = vld [vmem:[#allocation2 + $0xf8] sm:$0xff]
    %v7532 = vld [vmem:[#allocation2 + $0x100] sm:$0xff]
    %v7533 = vld [vmem:[#allocation2 + $0x108] sm:$0xff]
    %v7534 = vld [vmem:[#allocation2 + $0x110] sm:$0xff]
    %v7535 = vld [vmem:[#allocation2 + $0x118] sm:$0xff]
    %v7536 = vld [vmem:[#allocation2 + $0x120] sm:$0xff]
    %v7537 = vld [vmem:[#allocation2 + $0x128] sm:$0xff]
    %v7538 = vld [vmem:[#allocation2 + $0x140] sm:$0xff]
    %v7539 = vld [vmem:[#allocation2 + $0x148] sm:$0xff]
    %v7540 = vld [vmem:[#allocation2 + $0x150] sm:$0xff]
    %v7541 = vld [vmem:[#allocation2 + $0x158] sm:$0xff]
    %v7542 = vld [vmem:[#allocation2 + $0x160] sm:$0xff]
    %v7543 = vld [vmem:[#allocation2 + $0x168] sm:$0xff]
    %v7544 = vld [vmem:[#allocation2 + $0x170] sm:$0xff]
    %v7545 = vld [vmem:[#allocation2 + $0x178] sm:$0xff]
    %v7546 = vld [vmem:[#allocation2 + $0x180] sm:$0xff]
    %v7547 = vld [vmem:[#allocation2 + $0x188] sm:$0xff]
    %v7548 = vld [vmem:[#allocation2 + $0x190] sm:$0xff]
    %7549 = vst [vmem:[#allocation3 + $0x580] sm:$0xff] %v7505
    %7550 = vst [vmem:[#allocation3 + $0x588] sm:$0xff] %v7506
    %7551 = vst [vmem:[#allocation3 + $0x590] sm:$0xff] %v7507
    %7552 = vst [vmem:[#allocation3 + $0x598] sm:$0xff] %v7508
    %7553 = vst [vmem:[#allocation3 + $0x5a0] sm:$0xff] %v7509
    %7554 = vst [vmem:[#allocation3 + $0x5a8] sm:$0xff] %v7510
    %7555 = vst [vmem:[#allocation3 + $0x5b0] sm:$0xff] %v7511
    %7556 = vst [vmem:[#allocation3 + $0x5b8] sm:$0xff] %v7512
    %7557 = vst [vmem:[#allocation3 + $0x5c0] sm:$0xff] %v7513
    %7558 = vst [vmem:[#allocation3 + $0x5c8] sm:$0xff] %v7514
    %7559 = vst [vmem:[#allocation3 + $0x5d0] sm:$0xff] %v7515
    %7560 = vst [vmem:[#allocation3 + $0x5d8] sm:$0xff] %v7516
    %7561 = vst [vmem:[#allocation3 + $0x5e0] sm:$0xff] %v7517
    %7562 = vst [vmem:[#allocation3 + $0x5e8] sm:$0xff] %v7518
    %7563 = vst [vmem:[#allocation3 + $0x5f0] sm:$0xff] %v7519
    %7564 = vst [vmem:[#allocation3 + $0x5f8] sm:$0xff] %v7520
    %7565 = vst [vmem:[#allocation3 + $0x600] sm:$0xff] %v7521
    %7566 = vst [vmem:[#allocation3 + $0x608] sm:$0xff] %v7522
    %7567 = vst [vmem:[#allocation3 + $0x610] sm:$0xff] %v7523
    %7568 = vst [vmem:[#allocation3 + $0x618] sm:$0xff] %v7524
    %7569 = vst [vmem:[#allocation3 + $0x620] sm:$0xff] %v7525
    %7570 = vst [vmem:[#allocation3 + $0x628] sm:$0xff] %v7526
    %7571 = vst [vmem:[#allocation3 + $0x630] sm:$0xff] %v7527
    %7572 = vst [vmem:[#allocation3 + $0x638] sm:$0xff] %v7528
    %7573 = vst [vmem:[#allocation3 + $0x640] sm:$0xff] %v7529
    %7574 = vst [vmem:[#allocation3 + $0x648] sm:$0xff] %v7530
    %7575 = vst [vmem:[#allocation3 + $0x650] sm:$0xff] %v7531
    %7576 = vst [vmem:[#allocation3 + $0x658] sm:$0xff] %v7532
    %7577 = vst [vmem:[#allocation3 + $0x660] sm:$0xff] %v7533
    %7578 = vst [vmem:[#allocation3 + $0x668] sm:$0xff] %v7534
    %7579 = vst [vmem:[#allocation3 + $0x670] sm:$0xff] %v7535
    %7580 = vst [vmem:[#allocation3 + $0x678] sm:$0xff] %v7536
    %7581 = vst [vmem:[#allocation3 + $0x680] sm:$0xff] %v7537
    %7582 = vst [vmem:[#allocation3 + $0x688] sm:$0xff] %v7538
    %7583 = vst [vmem:[#allocation3 + $0x690] sm:$0xff] %v7539
    %7584 = vst [vmem:[#allocation3 + $0x698] sm:$0xff] %v7540
    %7585 = vst [vmem:[#allocation3 + $0x6a0] sm:$0xff] %v7541
    %7586 = vst [vmem:[#allocation3 + $0x6a8] sm:$0xff] %v7542
    %7587 = vst [vmem:[#allocation3 + $0x6b0] sm:$0xff] %v7543
    %7588 = vst [vmem:[#allocation3 + $0x6b8] sm:$0xff] %v7544
    %7589 = vst [vmem:[#allocation3 + $0x6c0] sm:$0xff] %v7545
    %7590 = vst [vmem:[#allocation3 + $0x6c8] sm:$0xff] %v7546
    %7591 = vst [vmem:[#allocation3 + $0x6d0] sm:$0xff] %v7547
    %7592 = vst [vmem:[#allocation3 + $0x6d8] sm:$0xff] %v7548
    %v7593 = vld [vmem:[#allocation2 + $0x8] sm:$0xff]
    %v7594 = vld [vmem:[#allocation2 + $0x10] sm:$0xff]
    %v7595 = vld [vmem:[#allocation2 + $0x18] sm:$0xff]
    %v7596 = vld [vmem:[#allocation2 + $0x20] sm:$0xff]
    %v7597 = vld [vmem:[#allocation2 + $0x28] sm:$0xff]
    %v7598 = vld [vmem:[#allocation2 + $0x30] sm:$0xff]
    %v7599 = vld [vmem:[#allocation2 + $0x38] sm:$0xff]
    %v7600 = vld [vmem:[#allocation2 + $0x40] sm:$0xff]
    %v7601 = vld [vmem:[#allocation2 + $0x48] sm:$0xff]
    %v7602 = vld [vmem:[#allocation2 + $0x50] sm:$0xff]
    %v7603 = vld [vmem:[#allocation2 + $0x58] sm:$0xff]
    %v7604 = vld [vmem:[#allocation2 + $0x60] sm:$0xff]
    %v7605 = vld [vmem:[#allocation2 + $0x70] sm:$0xff]
    %v7606 = vld [vmem:[#allocation2 + $0x78] sm:$0xff]
    %v7607 = vld [vmem:[#allocation2 + $0x80] sm:$0xff]
    %v7608 = vld [vmem:[#allocation2 + $0x88] sm:$0xff]
    %v7609 = vld [vmem:[#allocation2 + $0x90] sm:$0xff]
    %v7610 = vld [vmem:[#allocation2 + $0x98] sm:$0xff]
    %v7611 = vld [vmem:[#allocation2 + $0xa0] sm:$0xff]
    %v7612 = vld [vmem:[#allocation2 + $0xa8] sm:$0xff]
    %v7613 = vld [vmem:[#allocation2 + $0xb0] sm:$0xff]
    %v7614 = vld [vmem:[#allocation2 + $0xb8] sm:$0xff]
    %v7615 = vld [vmem:[#allocation2 + $0xc0] sm:$0xff]
    %v7616 = vld [vmem:[#allocation2 + $0xc8] sm:$0xff]
    %v7617 = vld [vmem:[#allocation2 + $0xd8] sm:$0xff]
    %v7618 = vld [vmem:[#allocation2 + $0xe0] sm:$0xff]
    %v7619 = vld [vmem:[#allocation2 + $0xe8] sm:$0xff]
    %v7620 = vld [vmem:[#allocation2 + $0xf0] sm:$0xff]
    %v7621 = vld [vmem:[#allocation2 + $0xf8] sm:$0xff]
    %v7622 = vld [vmem:[#allocation2 + $0x100] sm:$0xff]
    %v7623 = vld [vmem:[#allocation2 + $0x108] sm:$0xff]
    %v7624 = vld [vmem:[#allocation2 + $0x110] sm:$0xff]
    %v7625 = vld [vmem:[#allocation2 + $0x118] sm:$0xff]
    %v7626 = vld [vmem:[#allocation2 + $0x120] sm:$0xff]
    %v7627 = vld [vmem:[#allocation2 + $0x128] sm:$0xff]
    %v7628 = vld [vmem:[#allocation2 + $0x130] sm:$0xff]
    %v7629 = vld [vmem:[#allocation2 + $0x140] sm:$0xff]
    %v7630 = vld [vmem:[#allocation2 + $0x148] sm:$0xff]
    %v7631 = vld [vmem:[#allocation2 + $0x150] sm:$0xff]
    %v7632 = vld [vmem:[#allocation2 + $0x158] sm:$0xff]
    %v7633 = vld [vmem:[#allocation2 + $0x160] sm:$0xff]
    %v7634 = vld [vmem:[#allocation2 + $0x168] sm:$0xff]
    %v7635 = vld [vmem:[#allocation2 + $0x170] sm:$0xff]
    %v7636 = vld [vmem:[#allocation2 + $0x178] sm:$0xff]
    %v7637 = vld [vmem:[#allocation2 + $0x180] sm:$0xff]
    %v7638 = vld [vmem:[#allocation2 + $0x188] sm:$0xff]
    %v7639 = vld [vmem:[#allocation2 + $0x190] sm:$0xff]
    %v7640 = vld [vmem:[#allocation2 + $0x198] sm:$0xff]
    %7689 = vrot.lane.b32.xlu0 %v7593, 127
    %v7690 = vpop.permute.xlu0 %7689
    %7691 = vrot.lane.b32.xlu0 %v7594, 127
    %v7692 = vpop.permute.xlu0 %7691
    %7693 = vrot.lane.b32.xlu0 %v7595, 127
    %v7694 = vpop.permute.xlu0 %7693
    %7695 = vrot.lane.b32.xlu0 %v7596, 127
    %v7696 = vpop.permute.xlu0 %7695
    %7697 = vrot.lane.b32.xlu0 %v7597, 127
    %v7698 = vpop.permute.xlu0 %7697
    %7699 = vrot.lane.b32.xlu0 %v7598, 127
    %v7700 = vpop.permute.xlu0 %7699
    %7701 = vrot.lane.b32.xlu0 %v7599, 127
    %v7702 = vpop.permute.xlu0 %7701
    %7703 = vrot.lane.b32.xlu0 %v7600, 127
    %v7704 = vpop.permute.xlu0 %7703
    %7705 = vrot.lane.b32.xlu0 %v7601, 127
    %v7706 = vpop.permute.xlu0 %7705
    %7707 = vrot.lane.b32.xlu0 %v7602, 127
    %v7708 = vpop.permute.xlu0 %7707
    %7709 = vrot.lane.b32.xlu0 %v7603, 127
    %v7710 = vpop.permute.xlu0 %7709
    %7711 = vrot.lane.b32.xlu0 %v7604, 127
    %v7712 = vpop.permute.xlu0 %7711
    %7713 = vrot.lane.b32.xlu0 %v7605, 127
    %v7714 = vpop.permute.xlu0 %7713
    %7715 = vrot.lane.b32.xlu0 %v7606, 127
    %v7716 = vpop.permute.xlu0 %7715
    %7717 = vrot.lane.b32.xlu0 %v7607, 127
    %v7718 = vpop.permute.xlu0 %7717
    %7719 = vrot.lane.b32.xlu0 %v7608, 127
    %v7720 = vpop.permute.xlu0 %7719
    %7721 = vrot.lane.b32.xlu0 %v7609, 127
    %v7722 = vpop.permute.xlu0 %7721
    %7723 = vrot.lane.b32.xlu0 %v7610, 127
    %v7724 = vpop.permute.xlu0 %7723
    %7725 = vrot.lane.b32.xlu0 %v7611, 127
    %v7726 = vpop.permute.xlu0 %7725
    %7727 = vrot.lane.b32.xlu0 %v7612, 127
    %v7728 = vpop.permute.xlu0 %7727
    %7729 = vrot.lane.b32.xlu0 %v7613, 127
    %v7730 = vpop.permute.xlu0 %7729
    %7731 = vrot.lane.b32.xlu0 %v7614, 127
    %v7732 = vpop.permute.xlu0 %7731
    %7733 = vrot.lane.b32.xlu0 %v7615, 127
    %v7734 = vpop.permute.xlu0 %7733
    %7735 = vrot.lane.b32.xlu0 %v7616, 127
    %v7736 = vpop.permute.xlu0 %7735
    %7737 = vrot.lane.b32.xlu0 %v7617, 127
    %v7738 = vpop.permute.xlu0 %7737
    %7739 = vrot.lane.b32.xlu0 %v7618, 127
    %v7740 = vpop.permute.xlu0 %7739
    %7741 = vrot.lane.b32.xlu0 %v7619, 127
    %v7742 = vpop.permute.xlu0 %7741
    %7743 = vrot.lane.b32.xlu0 %v7620, 127
    %v7744 = vpop.permute.xlu0 %7743
    %7745 = vrot.lane.b32.xlu0 %v7621, 127
    %v7746 = vpop.permute.xlu0 %7745
    %7747 = vrot.lane.b32.xlu0 %v7622, 127
    %v7748 = vpop.permute.xlu0 %7747
    %7749 = vrot.lane.b32.xlu0 %v7623, 127
    %v7750 = vpop.permute.xlu0 %7749
    %7751 = vrot.lane.b32.xlu0 %v7624, 127
    %v7752 = vpop.permute.xlu0 %7751
    %7753 = vrot.lane.b32.xlu0 %v7625, 127
    %v7754 = vpop.permute.xlu0 %7753
    %7755 = vrot.lane.b32.xlu0 %v7626, 127
    %v7756 = vpop.permute.xlu0 %7755
    %7757 = vrot.lane.b32.xlu0 %v7627, 127
    %v7758 = vpop.permute.xlu0 %7757
    %7759 = vrot.lane.b32.xlu0 %v7628, 127
    %v7760 = vpop.permute.xlu0 %7759
    %7761 = vrot.lane.b32.xlu0 %v7629, 127
    %v7762 = vpop.permute.xlu0 %7761
    %7763 = vrot.lane.b32.xlu0 %v7630, 127
    %v7764 = vpop.permute.xlu0 %7763
    %7765 = vrot.lane.b32.xlu0 %v7631, 127
    %v7766 = vpop.permute.xlu0 %7765
    %7767 = vrot.lane.b32.xlu0 %v7632, 127
    %v7768 = vpop.permute.xlu0 %7767
    %7769 = vrot.lane.b32.xlu0 %v7633, 127
    %v7770 = vpop.permute.xlu0 %7769
    %7771 = vrot.lane.b32.xlu0 %v7634, 127
    %v7772 = vpop.permute.xlu0 %7771
    %7773 = vrot.lane.b32.xlu0 %v7635, 127
    %v7774 = vpop.permute.xlu0 %7773
    %7775 = vrot.lane.b32.xlu0 %v7636, 127
    %v7776 = vpop.permute.xlu0 %7775
    %7777 = vrot.lane.b32.xlu0 %v7637, 127
    %v7778 = vpop.permute.xlu0 %7777
    %7779 = vrot.lane.b32.xlu0 %v7638, 127
    %v7780 = vpop.permute.xlu0 %7779
    %7781 = vrot.lane.b32.xlu0 %v7639, 127
    %v7782 = vpop.permute.xlu0 %7781
    %7783 = vrot.lane.b32.xlu0 %v7640, 127
    %v7784 = vpop.permute.xlu0 %7783
    %v7785 = vsel %vm582, %v7690, %v7692
    %v7786 = vsel %vm582, %v7692, %v7694
    %v7787 = vsel %vm582, %v7694, %v7696
    %v7788 = vsel %vm582, %v7696, %v7698
    %v7789 = vsel %vm582, %v7698, %v7700
    %v7790 = vsel %vm582, %v7700, %v7702
    %v7791 = vsel %vm582, %v7702, %v7704
    %v7792 = vsel %vm582, %v7704, %v7706
    %v7793 = vsel %vm582, %v7706, %v7708
    %v7794 = vsel %vm582, %v7708, %v7710
    %v7795 = vsel %vm582, %v7710, %v7712
    %v7796 = vsel %vm582, %v7714, %v7716
    %v7797 = vsel %vm582, %v7716, %v7718
    %v7798 = vsel %vm582, %v7718, %v7720
    %v7799 = vsel %vm582, %v7720, %v7722
    %v7800 = vsel %vm582, %v7722, %v7724
    %v7801 = vsel %vm582, %v7724, %v7726
    %v7802 = vsel %vm582, %v7726, %v7728
    %v7803 = vsel %vm582, %v7728, %v7730
    %v7804 = vsel %vm582, %v7730, %v7732
    %v7805 = vsel %vm582, %v7732, %v7734
    %v7806 = vsel %vm582, %v7734, %v7736
    %v7807 = vsel %vm582, %v7738, %v7740
    %v7808 = vsel %vm582, %v7740, %v7742
    %v7809 = vsel %vm582, %v7742, %v7744
    %v7810 = vsel %vm582, %v7744, %v7746
    %v7811 = vsel %vm582, %v7746, %v7748
    %v7812 = vsel %vm582, %v7748, %v7750
    %v7813 = vsel %vm582, %v7750, %v7752
    %v7814 = vsel %vm582, %v7752, %v7754
    %v7815 = vsel %vm582, %v7754, %v7756
    %v7816 = vsel %vm582, %v7756, %v7758
    %v7817 = vsel %vm582, %v7758, %v7760
    %v7818 = vsel %vm582, %v7762, %v7764
    %v7819 = vsel %vm582, %v7764, %v7766
    %v7820 = vsel %vm582, %v7766, %v7768
    %v7821 = vsel %vm582, %v7768, %v7770
    %v7822 = vsel %vm582, %v7770, %v7772
    %v7823 = vsel %vm582, %v7772, %v7774
    %v7824 = vsel %vm582, %v7774, %v7776
    %v7825 = vsel %vm582, %v7776, %v7778
    %v7826 = vsel %vm582, %v7778, %v7780
    %v7827 = vsel %vm582, %v7780, %v7782
    %v7828 = vsel %vm582, %v7782, %v7784
    %7873 = vst [vmem:[#allocation3 + $0x6e0] sm:$0xff] %v7785
    %7874 = vst [vmem:[#allocation3 + $0x6e8] sm:$0xff] %v7786
    %7875 = vst [vmem:[#allocation3 + $0x6f0] sm:$0xff] %v7787
    %7876 = vst [vmem:[#allocation3 + $0x6f8] sm:$0xff] %v7788
    %7877 = vst [vmem:[#allocation3 + $0x700] sm:$0xff] %v7789
    %7878 = vst [vmem:[#allocation3 + $0x708] sm:$0xff] %v7790
    %7879 = vst [vmem:[#allocation3 + $0x710] sm:$0xff] %v7791
    %7880 = vst [vmem:[#allocation3 + $0x718] sm:$0xff] %v7792
    %7881 = vst [vmem:[#allocation3 + $0x720] sm:$0xff] %v7793
    %7882 = vst [vmem:[#allocation3 + $0x728] sm:$0xff] %v7794
    %7883 = vst [vmem:[#allocation3 + $0x730] sm:$0xff] %v7795
    %7884 = vst [vmem:[#allocation3 + $0x738] sm:$0xff] %v7796
    %7885 = vst [vmem:[#allocation3 + $0x740] sm:$0xff] %v7797
    %7886 = vst [vmem:[#allocation3 + $0x748] sm:$0xff] %v7798
    %7887 = vst [vmem:[#allocation3 + $0x750] sm:$0xff] %v7799
    %7888 = vst [vmem:[#allocation3 + $0x758] sm:$0xff] %v7800
    %7889 = vst [vmem:[#allocation3 + $0x760] sm:$0xff] %v7801
    %7890 = vst [vmem:[#allocation3 + $0x768] sm:$0xff] %v7802
    %7891 = vst [vmem:[#allocation3 + $0x770] sm:$0xff] %v7803
    %7892 = vst [vmem:[#allocation3 + $0x778] sm:$0xff] %v7804
    %7893 = vst [vmem:[#allocation3 + $0x780] sm:$0xff] %v7805
    %7894 = vst [vmem:[#allocation3 + $0x788] sm:$0xff] %v7806
    %7895 = vst [vmem:[#allocation3 + $0x790] sm:$0xff] %v7807
    %7896 = vst [vmem:[#allocation3 + $0x798] sm:$0xff] %v7808
    %7897 = vst [vmem:[#allocation3 + $0x7a0] sm:$0xff] %v7809
    %7898 = vst [vmem:[#allocation3 + $0x7a8] sm:$0xff] %v7810
    %7899 = vst [vmem:[#allocation3 + $0x7b0] sm:$0xff] %v7811
    %7900 = vst [vmem:[#allocation3 + $0x7b8] sm:$0xff] %v7812
    %7901 = vst [vmem:[#allocation3 + $0x7c0] sm:$0xff] %v7813
    %7902 = vst [vmem:[#allocation3 + $0x7c8] sm:$0xff] %v7814
    %7903 = vst [vmem:[#allocation3 + $0x7d0] sm:$0xff] %v7815
    %7904 = vst [vmem:[#allocation3 + $0x7d8] sm:$0xff] %v7816
    %7905 = vst [vmem:[#allocation3 + $0x7e0] sm:$0xff] %v7817
    %7906 = vst [vmem:[#allocation3 + $0x7e8] sm:$0xff] %v7818
    %7907 = vst [vmem:[#allocation3 + $0x7f0] sm:$0xff] %v7819
    %7908 = vst [vmem:[#allocation3 + $0x7f8] sm:$0xff] %v7820
    %7909 = vst [vmem:[#allocation3 + $0x800] sm:$0xff] %v7821
    %7910 = vst [vmem:[#allocation3 + $0x808] sm:$0xff] %v7822
    %7911 = vst [vmem:[#allocation3 + $0x810] sm:$0xff] %v7823
    %7912 = vst [vmem:[#allocation3 + $0x818] sm:$0xff] %v7824
    %7913 = vst [vmem:[#allocation3 + $0x820] sm:$0xff] %v7825
    %7914 = vst [vmem:[#allocation3 + $0x828] sm:$0xff] %v7826
    %7915 = vst [vmem:[#allocation3 + $0x830] sm:$0xff] %v7827
    %7916 = vst [vmem:[#allocation3 + $0x838] sm:$0xff] %v7828
    %v7917 = vld [vmem:[#allocation2 + $0x8] sm:$0xff]
    %v7918 = vld [vmem:[#allocation2 + $0x10] sm:$0xff]
    %v7919 = vld [vmem:[#allocation2 + $0x18] sm:$0xff]
    %v7920 = vld [vmem:[#allocation2 + $0x20] sm:$0xff]
    %v7921 = vld [vmem:[#allocation2 + $0x28] sm:$0xff]
    %v7922 = vld [vmem:[#allocation2 + $0x30] sm:$0xff]
    %v7923 = vld [vmem:[#allocation2 + $0x38] sm:$0xff]
    %v7924 = vld [vmem:[#allocation2 + $0x40] sm:$0xff]
    %v7925 = vld [vmem:[#allocation2 + $0x48] sm:$0xff]
    %v7926 = vld [vmem:[#allocation2 + $0x50] sm:$0xff]
    %v7927 = vld [vmem:[#allocation2 + $0x58] sm:$0xff]
    %v7928 = vld [vmem:[#allocation2 + $0x60] sm:$0xff]
    %v7929 = vld [vmem:[#allocation2 + $0x70] sm:$0xff]
    %v7930 = vld [vmem:[#allocation2 + $0x78] sm:$0xff]
    %v7931 = vld [vmem:[#allocation2 + $0x80] sm:$0xff]
    %v7932 = vld [vmem:[#allocation2 + $0x88] sm:$0xff]
    %v7933 = vld [vmem:[#allocation2 + $0x90] sm:$0xff]
    %v7934 = vld [vmem:[#allocation2 + $0x98] sm:$0xff]
    %v7935 = vld [vmem:[#allocation2 + $0xa0] sm:$0xff]
    %v7936 = vld [vmem:[#allocation2 + $0xa8] sm:$0xff]
    %v7937 = vld [vmem:[#allocation2 + $0xb0] sm:$0xff]
    %v7938 = vld [vmem:[#allocation2 + $0xb8] sm:$0xff]
    %v7939 = vld [vmem:[#allocation2 + $0xc0] sm:$0xff]
    %v7940 = vld [vmem:[#allocation2 + $0xc8] sm:$0xff]
    %v7941 = vld [vmem:[#allocation2 + $0xd8] sm:$0xff]
    %v7942 = vld [vmem:[#allocation2 + $0xe0] sm:$0xff]
    %v7943 = vld [vmem:[#allocation2 + $0xe8] sm:$0xff]
    %v7944 = vld [vmem:[#allocation2 + $0xf0] sm:$0xff]
    %v7945 = vld [vmem:[#allocation2 + $0xf8] sm:$0xff]
    %v7946 = vld [vmem:[#allocation2 + $0x100] sm:$0xff]
    %v7947 = vld [vmem:[#allocation2 + $0x108] sm:$0xff]
    %v7948 = vld [vmem:[#allocation2 + $0x110] sm:$0xff]
    %v7949 = vld [vmem:[#allocation2 + $0x118] sm:$0xff]
    %v7950 = vld [vmem:[#allocation2 + $0x120] sm:$0xff]
    %v7951 = vld [vmem:[#allocation2 + $0x128] sm:$0xff]
    %v7952 = vld [vmem:[#allocation2 + $0x130] sm:$0xff]
    %v7953 = vld [vmem:[#allocation2 + $0x140] sm:$0xff]
    %v7954 = vld [vmem:[#allocation2 + $0x148] sm:$0xff]
    %v7955 = vld [vmem:[#allocation2 + $0x150] sm:$0xff]
    %v7956 = vld [vmem:[#allocation2 + $0x158] sm:$0xff]
    %v7957 = vld [vmem:[#allocation2 + $0x160] sm:$0xff]
    %v7958 = vld [vmem:[#allocation2 + $0x168] sm:$0xff]
    %v7959 = vld [vmem:[#allocation2 + $0x170] sm:$0xff]
    %v7960 = vld [vmem:[#allocation2 + $0x178] sm:$0xff]
    %v7961 = vld [vmem:[#allocation2 + $0x180] sm:$0xff]
    %v7962 = vld [vmem:[#allocation2 + $0x188] sm:$0xff]
    %v7963 = vld [vmem:[#allocation2 + $0x190] sm:$0xff]
    %v7964 = vld [vmem:[#allocation2 + $0x198] sm:$0xff]
    %8013 = vrot.lane.b32.xlu0 %v7917, 111
    %v8014 = vpop.permute.xlu0 %8013
    %8015 = vrot.lane.b32.xlu0 %v7918, 111
    %v8016 = vpop.permute.xlu0 %8015
    %8017 = vrot.lane.b32.xlu0 %v7919, 111
    %v8018 = vpop.permute.xlu0 %8017
    %8019 = vrot.lane.b32.xlu0 %v7920, 111
    %v8020 = vpop.permute.xlu0 %8019
    %8021 = vrot.lane.b32.xlu0 %v7921, 111
    %v8022 = vpop.permute.xlu0 %8021
    %8023 = vrot.lane.b32.xlu0 %v7922, 111
    %v8024 = vpop.permute.xlu0 %8023
    %8025 = vrot.lane.b32.xlu0 %v7923, 111
    %v8026 = vpop.permute.xlu0 %8025
    %8027 = vrot.lane.b32.xlu0 %v7924, 111
    %v8028 = vpop.permute.xlu0 %8027
    %8029 = vrot.lane.b32.xlu0 %v7925, 111
    %v8030 = vpop.permute.xlu0 %8029
    %8031 = vrot.lane.b32.xlu0 %v7926, 111
    %v8032 = vpop.permute.xlu0 %8031
    %8033 = vrot.lane.b32.xlu0 %v7927, 111
    %v8034 = vpop.permute.xlu0 %8033
    %8035 = vrot.lane.b32.xlu0 %v7928, 111
    %v8036 = vpop.permute.xlu0 %8035
    %8037 = vrot.lane.b32.xlu0 %v7929, 111
    %v8038 = vpop.permute.xlu0 %8037
    %8039 = vrot.lane.b32.xlu0 %v7930, 111
    %v8040 = vpop.permute.xlu0 %8039
    %8041 = vrot.lane.b32.xlu0 %v7931, 111
    %v8042 = vpop.permute.xlu0 %8041
    %8043 = vrot.lane.b32.xlu0 %v7932, 111
    %v8044 = vpop.permute.xlu0 %8043
    %8045 = vrot.lane.b32.xlu0 %v7933, 111
    %v8046 = vpop.permute.xlu0 %8045
    %8047 = vrot.lane.b32.xlu0 %v7934, 111
    %v8048 = vpop.permute.xlu0 %8047
    %8049 = vrot.lane.b32.xlu0 %v7935, 111
    %v8050 = vpop.permute.xlu0 %8049
    %8051 = vrot.lane.b32.xlu0 %v7936, 111
    %v8052 = vpop.permute.xlu0 %8051
    %8053 = vrot.lane.b32.xlu0 %v7937, 111
    %v8054 = vpop.permute.xlu0 %8053
    %8055 = vrot.lane.b32.xlu0 %v7938, 111
    %v8056 = vpop.permute.xlu0 %8055
    %8057 = vrot.lane.b32.xlu0 %v7939, 111
    %v8058 = vpop.permute.xlu0 %8057
    %8059 = vrot.lane.b32.xlu0 %v7940, 111
    %v8060 = vpop.permute.xlu0 %8059
    %8061 = vrot.lane.b32.xlu0 %v7941, 111
    %v8062 = vpop.permute.xlu0 %8061
    %8063 = vrot.lane.b32.xlu0 %v7942, 111
    %v8064 = vpop.permute.xlu0 %8063
    %8065 = vrot.lane.b32.xlu0 %v7943, 111
    %v8066 = vpop.permute.xlu0 %8065
    %8067 = vrot.lane.b32.xlu0 %v7944, 111
    %v8068 = vpop.permute.xlu0 %8067
    %8069 = vrot.lane.b32.xlu0 %v7945, 111
    %v8070 = vpop.permute.xlu0 %8069
    %8071 = vrot.lane.b32.xlu0 %v7946, 111
    %v8072 = vpop.permute.xlu0 %8071
    %8073 = vrot.lane.b32.xlu0 %v7947, 111
    %v8074 = vpop.permute.xlu0 %8073
    %8075 = vrot.lane.b32.xlu0 %v7948, 111
    %v8076 = vpop.permute.xlu0 %8075
    %8077 = vrot.lane.b32.xlu0 %v7949, 111
    %v8078 = vpop.permute.xlu0 %8077
    %8079 = vrot.lane.b32.xlu0 %v7950, 111
    %v8080 = vpop.permute.xlu0 %8079
    %8081 = vrot.lane.b32.xlu0 %v7951, 111
    %v8082 = vpop.permute.xlu0 %8081
    %8083 = vrot.lane.b32.xlu0 %v7952, 111
    %v8084 = vpop.permute.xlu0 %8083
    %8085 = vrot.lane.b32.xlu0 %v7953, 111
    %v8086 = vpop.permute.xlu0 %8085
    %8087 = vrot.lane.b32.xlu0 %v7954, 111
    %v8088 = vpop.permute.xlu0 %8087
    %8089 = vrot.lane.b32.xlu0 %v7955, 111
    %v8090 = vpop.permute.xlu0 %8089
    %8091 = vrot.lane.b32.xlu0 %v7956, 111
    %v8092 = vpop.permute.xlu0 %8091
    %8093 = vrot.lane.b32.xlu0 %v7957, 111
    %v8094 = vpop.permute.xlu0 %8093
    %8095 = vrot.lane.b32.xlu0 %v7958, 111
    %v8096 = vpop.permute.xlu0 %8095
    %8097 = vrot.lane.b32.xlu0 %v7959, 111
    %v8098 = vpop.permute.xlu0 %8097
    %8099 = vrot.lane.b32.xlu0 %v7960, 111
    %v8100 = vpop.permute.xlu0 %8099
    %8101 = vrot.lane.b32.xlu0 %v7961, 111
    %v8102 = vpop.permute.xlu0 %8101
    %8103 = vrot.lane.b32.xlu0 %v7962, 111
    %v8104 = vpop.permute.xlu0 %8103
    %8105 = vrot.lane.b32.xlu0 %v7963, 111
    %v8106 = vpop.permute.xlu0 %8105
    %8107 = vrot.lane.b32.xlu0 %v7964, 111
    %v8108 = vpop.permute.xlu0 %8107
    %v8109 = vsel %vm676, %v8014, %v8016
    %v8110 = vsel %vm676, %v8016, %v8018
    %v8111 = vsel %vm676, %v8018, %v8020
    %v8112 = vsel %vm676, %v8020, %v8022
    %v8113 = vsel %vm676, %v8022, %v8024
    %v8114 = vsel %vm676, %v8024, %v8026
    %v8115 = vsel %vm676, %v8026, %v8028
    %v8116 = vsel %vm676, %v8028, %v8030
    %v8117 = vsel %vm676, %v8030, %v8032
    %v8118 = vsel %vm676, %v8032, %v8034
    %v8119 = vsel %vm676, %v8034, %v8036
    %v8120 = vsel %vm676, %v8038, %v8040
    %v8121 = vsel %vm676, %v8040, %v8042
    %v8122 = vsel %vm676, %v8042, %v8044
    %v8123 = vsel %vm676, %v8044, %v8046
    %v8124 = vsel %vm676, %v8046, %v8048
    %v8125 = vsel %vm676, %v8048, %v8050
    %v8126 = vsel %vm676, %v8050, %v8052
    %v8127 = vsel %vm676, %v8052, %v8054
    %v8128 = vsel %vm676, %v8054, %v8056
    %v8129 = vsel %vm676, %v8056, %v8058
    %v8130 = vsel %vm676, %v8058, %v8060
    %v8131 = vsel %vm676, %v8062, %v8064
    %v8132 = vsel %vm676, %v8064, %v8066
    %v8133 = vsel %vm676, %v8066, %v8068
    %v8134 = vsel %vm676, %v8068, %v8070
    %v8135 = vsel %vm676, %v8070, %v8072
    %v8136 = vsel %vm676, %v8072, %v8074
    %v8137 = vsel %vm676, %v8074, %v8076
    %v8138 = vsel %vm676, %v8076, %v8078
    %v8139 = vsel %vm676, %v8078, %v8080
    %v8140 = vsel %vm676, %v8080, %v8082
    %v8141 = vsel %vm676, %v8082, %v8084
    %v8142 = vsel %vm676, %v8086, %v8088
    %v8143 = vsel %vm676, %v8088, %v8090
    %v8144 = vsel %vm676, %v8090, %v8092
    %v8145 = vsel %vm676, %v8092, %v8094
    %v8146 = vsel %vm676, %v8094, %v8096
    %v8147 = vsel %vm676, %v8096, %v8098
    %v8148 = vsel %vm676, %v8098, %v8100
    %v8149 = vsel %vm676, %v8100, %v8102
    %v8150 = vsel %vm676, %v8102, %v8104
    %v8151 = vsel %vm676, %v8104, %v8106
    %v8152 = vsel %vm676, %v8106, %v8108
    %8197 = vst [vmem:[#allocation3 + $0x840] sm:$0xff] %v8109
    %8198 = vst [vmem:[#allocation3 + $0x848] sm:$0xff] %v8110
    %8199 = vst [vmem:[#allocation3 + $0x850] sm:$0xff] %v8111
    %8200 = vst [vmem:[#allocation3 + $0x858] sm:$0xff] %v8112
    %8201 = vst [vmem:[#allocation3 + $0x860] sm:$0xff] %v8113
    %8202 = vst [vmem:[#allocation3 + $0x868] sm:$0xff] %v8114
    %8203 = vst [vmem:[#allocation3 + $0x870] sm:$0xff] %v8115
    %8204 = vst [vmem:[#allocation3 + $0x878] sm:$0xff] %v8116
    %8205 = vst [vmem:[#allocation3 + $0x880] sm:$0xff] %v8117
    %8206 = vst [vmem:[#allocation3 + $0x888] sm:$0xff] %v8118
    %8207 = vst [vmem:[#allocation3 + $0x890] sm:$0xff] %v8119
    %8208 = vst [vmem:[#allocation3 + $0x898] sm:$0xff] %v8120
    %8209 = vst [vmem:[#allocation3 + $0x8a0] sm:$0xff] %v8121
    %8210 = vst [vmem:[#allocation3 + $0x8a8] sm:$0xff] %v8122
    %8211 = vst [vmem:[#allocation3 + $0x8b0] sm:$0xff] %v8123
    %8212 = vst [vmem:[#allocation3 + $0x8b8] sm:$0xff] %v8124
    %8213 = vst [vmem:[#allocation3 + $0x8c0] sm:$0xff] %v8125
    %8214 = vst [vmem:[#allocation3 + $0x8c8] sm:$0xff] %v8126
    %8215 = vst [vmem:[#allocation3 + $0x8d0] sm:$0xff] %v8127
    %8216 = vst [vmem:[#allocation3 + $0x8d8] sm:$0xff] %v8128
    %8217 = vst [vmem:[#allocation3 + $0x8e0] sm:$0xff] %v8129
    %8218 = vst [vmem:[#allocation3 + $0x8e8] sm:$0xff] %v8130
    %8219 = vst [vmem:[#allocation3 + $0x8f0] sm:$0xff] %v8131
    %8220 = vst [vmem:[#allocation3 + $0x8f8] sm:$0xff] %v8132
    %8221 = vst [vmem:[#allocation3 + $0x900] sm:$0xff] %v8133
    %8222 = vst [vmem:[#allocation3 + $0x908] sm:$0xff] %v8134
    %8223 = vst [vmem:[#allocation3 + $0x910] sm:$0xff] %v8135
    %8224 = vst [vmem:[#allocation3 + $0x918] sm:$0xff] %v8136
    %8225 = vst [vmem:[#allocation3 + $0x920] sm:$0xff] %v8137
    %8226 = vst [vmem:[#allocation3 + $0x928] sm:$0xff] %v8138
    %8227 = vst [vmem:[#allocation3 + $0x930] sm:$0xff] %v8139
    %8228 = vst [vmem:[#allocation3 + $0x938] sm:$0xff] %v8140
    %8229 = vst [vmem:[#allocation3 + $0x940] sm:$0xff] %v8141
    %8230 = vst [vmem:[#allocation3 + $0x948] sm:$0xff] %v8142
    %8231 = vst [vmem:[#allocation3 + $0x950] sm:$0xff] %v8143
    %8232 = vst [vmem:[#allocation3 + $0x958] sm:$0xff] %v8144
    %8233 = vst [vmem:[#allocation3 + $0x960] sm:$0xff] %v8145
    %8234 = vst [vmem:[#allocation3 + $0x968] sm:$0xff] %v8146
    %8235 = vst [vmem:[#allocation3 + $0x970] sm:$0xff] %v8147
    %8236 = vst [vmem:[#allocation3 + $0x978] sm:$0xff] %v8148
    %8237 = vst [vmem:[#allocation3 + $0x980] sm:$0xff] %v8149
    %8238 = vst [vmem:[#allocation3 + $0x988] sm:$0xff] %v8150
    %8239 = vst [vmem:[#allocation3 + $0x990] sm:$0xff] %v8151
    %8240 = vst [vmem:[#allocation3 + $0x998] sm:$0xff] %v8152
    %v8241 = vld [vmem:[#allocation2 + $0x8] sm:$0xff]
    %v8242 = vld [vmem:[#allocation2 + $0x10] sm:$0xff]
    %v8243 = vld [vmem:[#allocation2 + $0x18] sm:$0xff]
    %v8244 = vld [vmem:[#allocation2 + $0x20] sm:$0xff]
    %v8245 = vld [vmem:[#allocation2 + $0x28] sm:$0xff]
    %v8246 = vld [vmem:[#allocation2 + $0x30] sm:$0xff]
    %v8247 = vld [vmem:[#allocation2 + $0x38] sm:$0xff]
    %v8248 = vld [vmem:[#allocation2 + $0x40] sm:$0xff]
    %v8249 = vld [vmem:[#allocation2 + $0x48] sm:$0xff]
    %v8250 = vld [vmem:[#allocation2 + $0x50] sm:$0xff]
    %v8251 = vld [vmem:[#allocation2 + $0x58] sm:$0xff]
    %v8252 = vld [vmem:[#allocation2 + $0x60] sm:$0xff]
    %v8253 = vld [vmem:[#allocation2 + $0x70] sm:$0xff]
    %v8254 = vld [vmem:[#allocation2 + $0x78] sm:$0xff]
    %v8255 = vld [vmem:[#allocation2 + $0x80] sm:$0xff]
    %v8256 = vld [vmem:[#allocation2 + $0x88] sm:$0xff]
    %v8257 = vld [vmem:[#allocation2 + $0x90] sm:$0xff]
    %v8258 = vld [vmem:[#allocation2 + $0x98] sm:$0xff]
    %v8259 = vld [vmem:[#allocation2 + $0xa0] sm:$0xff]
    %v8260 = vld [vmem:[#allocation2 + $0xa8] sm:$0xff]
    %v8261 = vld [vmem:[#allocation2 + $0xb0] sm:$0xff]
    %v8262 = vld [vmem:[#allocation2 + $0xb8] sm:$0xff]
    %v8263 = vld [vmem:[#allocation2 + $0xc0] sm:$0xff]
    %v8264 = vld [vmem:[#allocation2 + $0xc8] sm:$0xff]
    %v8265 = vld [vmem:[#allocation2 + $0xd8] sm:$0xff]
    %v8266 = vld [vmem:[#allocation2 + $0xe0] sm:$0xff]
    %v8267 = vld [vmem:[#allocation2 + $0xe8] sm:$0xff]
    %v8268 = vld [vmem:[#allocation2 + $0xf0] sm:$0xff]
    %v8269 = vld [vmem:[#allocation2 + $0xf8] sm:$0xff]
    %v8270 = vld [vmem:[#allocation2 + $0x100] sm:$0xff]
    %v8271 = vld [vmem:[#allocation2 + $0x108] sm:$0xff]
    %v8272 = vld [vmem:[#allocation2 + $0x110] sm:$0xff]
    %v8273 = vld [vmem:[#allocation2 + $0x118] sm:$0xff]
    %v8274 = vld [vmem:[#allocation2 + $0x120] sm:$0xff]
    %v8275 = vld [vmem:[#allocation2 + $0x128] sm:$0xff]
    %v8276 = vld [vmem:[#allocation2 + $0x130] sm:$0xff]
    %v8277 = vld [vmem:[#allocation2 + $0x140] sm:$0xff]
    %v8278 = vld [vmem:[#allocation2 + $0x148] sm:$0xff]
    %v8279 = vld [vmem:[#allocation2 + $0x150] sm:$0xff]
    %v8280 = vld [vmem:[#allocation2 + $0x158] sm:$0xff]
    %v8281 = vld [vmem:[#allocation2 + $0x160] sm:$0xff]
    %v8282 = vld [vmem:[#allocation2 + $0x168] sm:$0xff]
    %v8283 = vld [vmem:[#allocation2 + $0x170] sm:$0xff]
    %v8284 = vld [vmem:[#allocation2 + $0x178] sm:$0xff]
    %v8285 = vld [vmem:[#allocation2 + $0x180] sm:$0xff]
    %v8286 = vld [vmem:[#allocation2 + $0x188] sm:$0xff]
    %v8287 = vld [vmem:[#allocation2 + $0x190] sm:$0xff]
    %v8288 = vld [vmem:[#allocation2 + $0x198] sm:$0xff]
    %8337 = vrot.lane.b32.xlu0 %v8241, 110
    %v8338 = vpop.permute.xlu0 %8337
    %8339 = vrot.lane.b32.xlu0 %v8242, 110
    %v8340 = vpop.permute.xlu0 %8339
    %8341 = vrot.lane.b32.xlu0 %v8243, 110
    %v8342 = vpop.permute.xlu0 %8341
    %8343 = vrot.lane.b32.xlu0 %v8244, 110
    %v8344 = vpop.permute.xlu0 %8343
    %8345 = vrot.lane.b32.xlu0 %v8245, 110
    %v8346 = vpop.permute.xlu0 %8345
    %8347 = vrot.lane.b32.xlu0 %v8246, 110
    %v8348 = vpop.permute.xlu0 %8347
    %8349 = vrot.lane.b32.xlu0 %v8247, 110
    %v8350 = vpop.permute.xlu0 %8349
    %8351 = vrot.lane.b32.xlu0 %v8248, 110
    %v8352 = vpop.permute.xlu0 %8351
    %8353 = vrot.lane.b32.xlu0 %v8249, 110
    %v8354 = vpop.permute.xlu0 %8353
    %8355 = vrot.lane.b32.xlu0 %v8250, 110
    %v8356 = vpop.permute.xlu0 %8355
    %8357 = vrot.lane.b32.xlu0 %v8251, 110
    %v8358 = vpop.permute.xlu0 %8357
    %8359 = vrot.lane.b32.xlu0 %v8252, 110
    %v8360 = vpop.permute.xlu0 %8359
    %8361 = vrot.lane.b32.xlu0 %v8253, 110
    %v8362 = vpop.permute.xlu0 %8361
    %8363 = vrot.lane.b32.xlu0 %v8254, 110
    %v8364 = vpop.permute.xlu0 %8363
    %8365 = vrot.lane.b32.xlu0 %v8255, 110
    %v8366 = vpop.permute.xlu0 %8365
    %8367 = vrot.lane.b32.xlu0 %v8256, 110
    %v8368 = vpop.permute.xlu0 %8367
    %8369 = vrot.lane.b32.xlu0 %v8257, 110
    %v8370 = vpop.permute.xlu0 %8369
    %8371 = vrot.lane.b32.xlu0 %v8258, 110
    %v8372 = vpop.permute.xlu0 %8371
    %8373 = vrot.lane.b32.xlu0 %v8259, 110
    %v8374 = vpop.permute.xlu0 %8373
    %8375 = vrot.lane.b32.xlu0 %v8260, 110
    %v8376 = vpop.permute.xlu0 %8375
    %8377 = vrot.lane.b32.xlu0 %v8261, 110
    %v8378 = vpop.permute.xlu0 %8377
    %8379 = vrot.lane.b32.xlu0 %v8262, 110
    %v8380 = vpop.permute.xlu0 %8379
    %8381 = vrot.lane.b32.xlu0 %v8263, 110
    %v8382 = vpop.permute.xlu0 %8381
    %8383 = vrot.lane.b32.xlu0 %v8264, 110
    %v8384 = vpop.permute.xlu0 %8383
    %8385 = vrot.lane.b32.xlu0 %v8265, 110
    %v8386 = vpop.permute.xlu0 %8385
    %8387 = vrot.lane.b32.xlu0 %v8266, 110
    %v8388 = vpop.permute.xlu0 %8387
    %8389 = vrot.lane.b32.xlu0 %v8267, 110
    %v8390 = vpop.permute.xlu0 %8389
    %8391 = vrot.lane.b32.xlu0 %v8268, 110
    %v8392 = vpop.permute.xlu0 %8391
    %8393 = vrot.lane.b32.xlu0 %v8269, 110
    %v8394 = vpop.permute.xlu0 %8393
    %8395 = vrot.lane.b32.xlu0 %v8270, 110
    %v8396 = vpop.permute.xlu0 %8395
    %8397 = vrot.lane.b32.xlu0 %v8271, 110
    %v8398 = vpop.permute.xlu0 %8397
    %8399 = vrot.lane.b32.xlu0 %v8272, 110
    %v8400 = vpop.permute.xlu0 %8399
    %8401 = vrot.lane.b32.xlu0 %v8273, 110
    %v8402 = vpop.permute.xlu0 %8401
    %8403 = vrot.lane.b32.xlu0 %v8274, 110
    %v8404 = vpop.permute.xlu0 %8403
    %8405 = vrot.lane.b32.xlu0 %v8275, 110
    %v8406 = vpop.permute.xlu0 %8405
    %8407 = vrot.lane.b32.xlu0 %v8276, 110
    %v8408 = vpop.permute.xlu0 %8407
    %8409 = vrot.lane.b32.xlu0 %v8277, 110
    %v8410 = vpop.permute.xlu0 %8409
    %8411 = vrot.lane.b32.xlu0 %v8278, 110
    %v8412 = vpop.permute.xlu0 %8411
    %8413 = vrot.lane.b32.xlu0 %v8279, 110
    %v8414 = vpop.permute.xlu0 %8413
    %8415 = vrot.lane.b32.xlu0 %v8280, 110
    %v8416 = vpop.permute.xlu0 %8415
    %8417 = vrot.lane.b32.xlu0 %v8281, 110
    %v8418 = vpop.permute.xlu0 %8417
    %8419 = vrot.lane.b32.xlu0 %v8282, 110
    %v8420 = vpop.permute.xlu0 %8419
    %8421 = vrot.lane.b32.xlu0 %v8283, 110
    %v8422 = vpop.permute.xlu0 %8421
    %8423 = vrot.lane.b32.xlu0 %v8284, 110
    %v8424 = vpop.permute.xlu0 %8423
    %8425 = vrot.lane.b32.xlu0 %v8285, 110
    %v8426 = vpop.permute.xlu0 %8425
    %8427 = vrot.lane.b32.xlu0 %v8286, 110
    %v8428 = vpop.permute.xlu0 %8427
    %8429 = vrot.lane.b32.xlu0 %v8287, 110
    %v8430 = vpop.permute.xlu0 %8429
    %8431 = vrot.lane.b32.xlu0 %v8288, 110
    %v8432 = vpop.permute.xlu0 %8431
    %v8433 = vsel %vm770, %v8338, %v8340
    %v8434 = vsel %vm770, %v8340, %v8342
    %v8435 = vsel %vm770, %v8342, %v8344
    %v8436 = vsel %vm770, %v8344, %v8346
    %v8437 = vsel %vm770, %v8346, %v8348
    %v8438 = vsel %vm770, %v8348, %v8350
    %v8439 = vsel %vm770, %v8350, %v8352
    %v8440 = vsel %vm770, %v8352, %v8354
    %v8441 = vsel %vm770, %v8354, %v8356
    %v8442 = vsel %vm770, %v8356, %v8358
    %v8443 = vsel %vm770, %v8358, %v8360
    %v8444 = vsel %vm770, %v8362, %v8364
    %v8445 = vsel %vm770, %v8364, %v8366
    %v8446 = vsel %vm770, %v8366, %v8368
    %v8447 = vsel %vm770, %v8368, %v8370
    %v8448 = vsel %vm770, %v8370, %v8372
    %v8449 = vsel %vm770, %v8372, %v8374
    %v8450 = vsel %vm770, %v8374, %v8376
    %v8451 = vsel %vm770, %v8376, %v8378
    %v8452 = vsel %vm770, %v8378, %v8380
    %v8453 = vsel %vm770, %v8380, %v8382
    %v8454 = vsel %vm770, %v8382, %v8384
    %v8455 = vsel %vm770, %v8386, %v8388
    %v8456 = vsel %vm770, %v8388, %v8390
    %v8457 = vsel %vm770, %v8390, %v8392
    %v8458 = vsel %vm770, %v8392, %v8394
    %v8459 = vsel %vm770, %v8394, %v8396
    %v8460 = vsel %vm770, %v8396, %v8398
    %v8461 = vsel %vm770, %v8398, %v8400
    %v8462 = vsel %vm770, %v8400, %v8402
    %v8463 = vsel %vm770, %v8402, %v8404
    %v8464 = vsel %vm770, %v8404, %v8406
    %v8465 = vsel %vm770, %v8406, %v8408
    %v8466 = vsel %vm770, %v8410, %v8412
    %v8467 = vsel %vm770, %v8412, %v8414
    %v8468 = vsel %vm770, %v8414, %v8416
    %v8469 = vsel %vm770, %v8416, %v8418
    %v8470 = vsel %vm770, %v8418, %v8420
    %v8471 = vsel %vm770, %v8420, %v8422
    %v8472 = vsel %vm770, %v8422, %v8424
    %v8473 = vsel %vm770, %v8424, %v8426
    %v8474 = vsel %vm770, %v8426, %v8428
    %v8475 = vsel %vm770, %v8428, %v8430
    %v8476 = vsel %vm770, %v8430, %v8432
    %8521 = vst [vmem:[#allocation3 + $0x9a0] sm:$0xff] %v8433
    %8522 = vst [vmem:[#allocation3 + $0x9a8] sm:$0xff] %v8434
    %8523 = vst [vmem:[#allocation3 + $0x9b0] sm:$0xff] %v8435
    %8524 = vst [vmem:[#allocation3 + $0x9b8] sm:$0xff] %v8436
    %8525 = vst [vmem:[#allocation3 + $0x9c0] sm:$0xff] %v8437
    %8526 = vst [vmem:[#allocation3 + $0x9c8] sm:$0xff] %v8438
    %8527 = vst [vmem:[#allocation3 + $0x9d0] sm:$0xff] %v8439
    %8528 = vst [vmem:[#allocation3 + $0x9d8] sm:$0xff] %v8440
    %8529 = vst [vmem:[#allocation3 + $0x9e0] sm:$0xff] %v8441
    %8530 = vst [vmem:[#allocation3 + $0x9e8] sm:$0xff] %v8442
    %8531 = vst [vmem:[#allocation3 + $0x9f0] sm:$0xff] %v8443
    %8532 = vst [vmem:[#allocation3 + $0x9f8] sm:$0xff] %v8444
    %8533 = vst [vmem:[#allocation3 + $0xa00] sm:$0xff] %v8445
    %8534 = vst [vmem:[#allocation3 + $0xa08] sm:$0xff] %v8446
    %8535 = vst [vmem:[#allocation3 + $0xa10] sm:$0xff] %v8447
    %8536 = vst [vmem:[#allocation3 + $0xa18] sm:$0xff] %v8448
    %8537 = vst [vmem:[#allocation3 + $0xa20] sm:$0xff] %v8449
    %8538 = vst [vmem:[#allocation3 + $0xa28] sm:$0xff] %v8450
    %8539 = vst [vmem:[#allocation3 + $0xa30] sm:$0xff] %v8451
    %8540 = vst [vmem:[#allocation3 + $0xa38] sm:$0xff] %v8452
    %8541 = vst [vmem:[#allocation3 + $0xa40] sm:$0xff] %v8453
    %8542 = vst [vmem:[#allocation3 + $0xa48] sm:$0xff] %v8454
    %8543 = vst [vmem:[#allocation3 + $0xa50] sm:$0xff] %v8455
    %8544 = vst [vmem:[#allocation3 + $0xa58] sm:$0xff] %v8456
    %8545 = vst [vmem:[#allocation3 + $0xa60] sm:$0xff] %v8457
    %8546 = vst [vmem:[#allocation3 + $0xa68] sm:$0xff] %v8458
    %8547 = vst [vmem:[#allocation3 + $0xa70] sm:$0xff] %v8459
    %8548 = vst [vmem:[#allocation3 + $0xa78] sm:$0xff] %v8460
    %8549 = vst [vmem:[#allocation3 + $0xa80] sm:$0xff] %v8461
    %8550 = vst [vmem:[#allocation3 + $0xa88] sm:$0xff] %v8462
    %8551 = vst [vmem:[#allocation3 + $0xa90] sm:$0xff] %v8463
    %8552 = vst [vmem:[#allocation3 + $0xa98] sm:$0xff] %v8464
    %8553 = vst [vmem:[#allocation3 + $0xaa0] sm:$0xff] %v8465
    %8554 = vst [vmem:[#allocation3 + $0xaa8] sm:$0xff] %v8466
    %8555 = vst [vmem:[#allocation3 + $0xab0] sm:$0xff] %v8467
    %8556 = vst [vmem:[#allocation3 + $0xab8] sm:$0xff] %v8468
    %8557 = vst [vmem:[#allocation3 + $0xac0] sm:$0xff] %v8469
    %8558 = vst [vmem:[#allocation3 + $0xac8] sm:$0xff] %v8470
    %8559 = vst [vmem:[#allocation3 + $0xad0] sm:$0xff] %v8471
    %8560 = vst [vmem:[#allocation3 + $0xad8] sm:$0xff] %v8472
    %8561 = vst [vmem:[#allocation3 + $0xae0] sm:$0xff] %v8473
    %8562 = vst [vmem:[#allocation3 + $0xae8] sm:$0xff] %v8474
    %8563 = vst [vmem:[#allocation3 + $0xaf0] sm:$0xff] %v8475
    %8564 = vst [vmem:[#allocation3 + $0xaf8] sm:$0xff] %v8476
    %v8565 = vld [vmem:[#allocation2 + $0x8] sm:$0xff]
    %v8566 = vld [vmem:[#allocation2 + $0x10] sm:$0xff]
    %v8567 = vld [vmem:[#allocation2 + $0x18] sm:$0xff]
    %v8568 = vld [vmem:[#allocation2 + $0x20] sm:$0xff]
    %v8569 = vld [vmem:[#allocation2 + $0x28] sm:$0xff]
    %v8570 = vld [vmem:[#allocation2 + $0x30] sm:$0xff]
    %v8571 = vld [vmem:[#allocation2 + $0x38] sm:$0xff]
    %v8572 = vld [vmem:[#allocation2 + $0x40] sm:$0xff]
    %v8573 = vld [vmem:[#allocation2 + $0x48] sm:$0xff]
    %v8574 = vld [vmem:[#allocation2 + $0x50] sm:$0xff]
    %v8575 = vld [vmem:[#allocation2 + $0x58] sm:$0xff]
    %v8576 = vld [vmem:[#allocation2 + $0x60] sm:$0xff]
    %v8577 = vld [vmem:[#allocation2 + $0x70] sm:$0xff]
    %v8578 = vld [vmem:[#allocation2 + $0x78] sm:$0xff]
    %v8579 = vld [vmem:[#allocation2 + $0x80] sm:$0xff]
    %v8580 = vld [vmem:[#allocation2 + $0x88] sm:$0xff]
    %v8581 = vld [vmem:[#allocation2 + $0x90] sm:$0xff]
    %v8582 = vld [vmem:[#allocation2 + $0x98] sm:$0xff]
    %v8583 = vld [vmem:[#allocation2 + $0xa0] sm:$0xff]
    %v8584 = vld [vmem:[#allocation2 + $0xa8] sm:$0xff]
    %v8585 = vld [vmem:[#allocation2 + $0xb0] sm:$0xff]
    %v8586 = vld [vmem:[#allocation2 + $0xb8] sm:$0xff]
    %v8587 = vld [vmem:[#allocation2 + $0xc0] sm:$0xff]
    %v8588 = vld [vmem:[#allocation2 + $0xc8] sm:$0xff]
    %v8589 = vld [vmem:[#allocation2 + $0xd8] sm:$0xff]
    %v8590 = vld [vmem:[#allocation2 + $0xe0] sm:$0xff]
    %v8591 = vld [vmem:[#allocation2 + $0xe8] sm:$0xff]
    %v8592 = vld [vmem:[#allocation2 + $0xf0] sm:$0xff]
    %v8593 = vld [vmem:[#allocation2 + $0xf8] sm:$0xff]
    %v8594 = vld [vmem:[#allocation2 + $0x100] sm:$0xff]
    %v8595 = vld [vmem:[#allocation2 + $0x108] sm:$0xff]
    %v8596 = vld [vmem:[#allocation2 + $0x110] sm:$0xff]
    %v8597 = vld [vmem:[#allocation2 + $0x118] sm:$0xff]
    %v8598 = vld [vmem:[#allocation2 + $0x120] sm:$0xff]
    %v8599 = vld [vmem:[#allocation2 + $0x128] sm:$0xff]
    %v8600 = vld [vmem:[#allocation2 + $0x130] sm:$0xff]
    %v8601 = vld [vmem:[#allocation2 + $0x140] sm:$0xff]
    %v8602 = vld [vmem:[#allocation2 + $0x148] sm:$0xff]
    %v8603 = vld [vmem:[#allocation2 + $0x150] sm:$0xff]
    %v8604 = vld [vmem:[#allocation2 + $0x158] sm:$0xff]
    %v8605 = vld [vmem:[#allocation2 + $0x160] sm:$0xff]
    %v8606 = vld [vmem:[#allocation2 + $0x168] sm:$0xff]
    %v8607 = vld [vmem:[#allocation2 + $0x170] sm:$0xff]
    %v8608 = vld [vmem:[#allocation2 + $0x178] sm:$0xff]
    %v8609 = vld [vmem:[#allocation2 + $0x180] sm:$0xff]
    %v8610 = vld [vmem:[#allocation2 + $0x188] sm:$0xff]
    %v8611 = vld [vmem:[#allocation2 + $0x190] sm:$0xff]
    %v8612 = vld [vmem:[#allocation2 + $0x198] sm:$0xff]
    %8661 = vrot.lane.b32.xlu0 %v8565, 109
    %v8662 = vpop.permute.xlu0 %8661
    %8663 = vrot.lane.b32.xlu0 %v8566, 109
    %v8664 = vpop.permute.xlu0 %8663
    %8665 = vrot.lane.b32.xlu0 %v8567, 109
    %v8666 = vpop.permute.xlu0 %8665
    %8667 = vrot.lane.b32.xlu0 %v8568, 109
    %v8668 = vpop.permute.xlu0 %8667
    %8669 = vrot.lane.b32.xlu0 %v8569, 109
    %v8670 = vpop.permute.xlu0 %8669
    %8671 = vrot.lane.b32.xlu0 %v8570, 109
    %v8672 = vpop.permute.xlu0 %8671
    %8673 = vrot.lane.b32.xlu0 %v8571, 109
    %v8674 = vpop.permute.xlu0 %8673
    %8675 = vrot.lane.b32.xlu0 %v8572, 109
    %v8676 = vpop.permute.xlu0 %8675
    %8677 = vrot.lane.b32.xlu0 %v8573, 109
    %v8678 = vpop.permute.xlu0 %8677
    %8679 = vrot.lane.b32.xlu0 %v8574, 109
    %v8680 = vpop.permute.xlu0 %8679
    %8681 = vrot.lane.b32.xlu0 %v8575, 109
    %v8682 = vpop.permute.xlu0 %8681
    %8683 = vrot.lane.b32.xlu0 %v8576, 109
    %v8684 = vpop.permute.xlu0 %8683
    %8685 = vrot.lane.b32.xlu0 %v8577, 109
    %v8686 = vpop.permute.xlu0 %8685
    %8687 = vrot.lane.b32.xlu0 %v8578, 109
    %v8688 = vpop.permute.xlu0 %8687
    %8689 = vrot.lane.b32.xlu0 %v8579, 109
    %v8690 = vpop.permute.xlu0 %8689
    %8691 = vrot.lane.b32.xlu0 %v8580, 109
    %v8692 = vpop.permute.xlu0 %8691
    %8693 = vrot.lane.b32.xlu0 %v8581, 109
    %v8694 = vpop.permute.xlu0 %8693
    %8695 = vrot.lane.b32.xlu0 %v8582, 109
    %v8696 = vpop.permute.xlu0 %8695
    %8697 = vrot.lane.b32.xlu0 %v8583, 109
    %v8698 = vpop.permute.xlu0 %8697
    %8699 = vrot.lane.b32.xlu0 %v8584, 109
    %v8700 = vpop.permute.xlu0 %8699
    %8701 = vrot.lane.b32.xlu0 %v8585, 109
    %v8702 = vpop.permute.xlu0 %8701
    %8703 = vrot.lane.b32.xlu0 %v8586, 109
    %v8704 = vpop.permute.xlu0 %8703
    %8705 = vrot.lane.b32.xlu0 %v8587, 109
    %v8706 = vpop.permute.xlu0 %8705
    %8707 = vrot.lane.b32.xlu0 %v8588, 109
    %v8708 = vpop.permute.xlu0 %8707
    %8709 = vrot.lane.b32.xlu0 %v8589, 109
    %v8710 = vpop.permute.xlu0 %8709
    %8711 = vrot.lane.b32.xlu0 %v8590, 109
    %v8712 = vpop.permute.xlu0 %8711
    %8713 = vrot.lane.b32.xlu0 %v8591, 109
    %v8714 = vpop.permute.xlu0 %8713
    %8715 = vrot.lane.b32.xlu0 %v8592, 109
    %v8716 = vpop.permute.xlu0 %8715
    %8717 = vrot.lane.b32.xlu0 %v8593, 109
    %v8718 = vpop.permute.xlu0 %8717
    %8719 = vrot.lane.b32.xlu0 %v8594, 109
    %v8720 = vpop.permute.xlu0 %8719
    %8721 = vrot.lane.b32.xlu0 %v8595, 109
    %v8722 = vpop.permute.xlu0 %8721
    %8723 = vrot.lane.b32.xlu0 %v8596, 109
    %v8724 = vpop.permute.xlu0 %8723
    %8725 = vrot.lane.b32.xlu0 %v8597, 109
    %v8726 = vpop.permute.xlu0 %8725
    %8727 = vrot.lane.b32.xlu0 %v8598, 109
    %v8728 = vpop.permute.xlu0 %8727
    %8729 = vrot.lane.b32.xlu0 %v8599, 109
    %v8730 = vpop.permute.xlu0 %8729
    %8731 = vrot.lane.b32.xlu0 %v8600, 109
    %v8732 = vpop.permute.xlu0 %8731
    %8733 = vrot.lane.b32.xlu0 %v8601, 109
    %v8734 = vpop.permute.xlu0 %8733
    %8735 = vrot.lane.b32.xlu0 %v8602, 109
    %v8736 = vpop.permute.xlu0 %8735
    %8737 = vrot.lane.b32.xlu0 %v8603, 109
    %v8738 = vpop.permute.xlu0 %8737
    %8739 = vrot.lane.b32.xlu0 %v8604, 109
    %v8740 = vpop.permute.xlu0 %8739
    %8741 = vrot.lane.b32.xlu0 %v8605, 109
    %v8742 = vpop.permute.xlu0 %8741
    %8743 = vrot.lane.b32.xlu0 %v8606, 109
    %v8744 = vpop.permute.xlu0 %8743
    %8745 = vrot.lane.b32.xlu0 %v8607, 109
    %v8746 = vpop.permute.xlu0 %8745
    %8747 = vrot.lane.b32.xlu0 %v8608, 109
    %v8748 = vpop.permute.xlu0 %8747
    %8749 = vrot.lane.b32.xlu0 %v8609, 109
    %v8750 = vpop.permute.xlu0 %8749
    %8751 = vrot.lane.b32.xlu0 %v8610, 109
    %v8752 = vpop.permute.xlu0 %8751
    %8753 = vrot.lane.b32.xlu0 %v8611, 109
    %v8754 = vpop.permute.xlu0 %8753
    %8755 = vrot.lane.b32.xlu0 %v8612, 109
    %v8756 = vpop.permute.xlu0 %8755
    %v8757 = vsel %vm852, %v8662, %v8664
    %v8758 = vsel %vm852, %v8664, %v8666
    %v8759 = vsel %vm852, %v8666, %v8668
    %v8760 = vsel %vm852, %v8668, %v8670
    %v8761 = vsel %vm852, %v8670, %v8672
    %v8762 = vsel %vm852, %v8672, %v8674
    %v8763 = vsel %vm852, %v8674, %v8676
    %v8764 = vsel %vm852, %v8676, %v8678
    %v8765 = vsel %vm852, %v8678, %v8680
    %v8766 = vsel %vm852, %v8680, %v8682
    %v8767 = vsel %vm852, %v8682, %v8684
    %v8768 = vsel %vm852, %v8686, %v8688
    %v8769 = vsel %vm852, %v8688, %v8690
    %v8770 = vsel %vm852, %v8690, %v8692
    %v8771 = vsel %vm852, %v8692, %v8694
    %v8772 = vsel %vm852, %v8694, %v8696
    %v8773 = vsel %vm852, %v8696, %v8698
    %v8774 = vsel %vm852, %v8698, %v8700
    %v8775 = vsel %vm852, %v8700, %v8702
    %v8776 = vsel %vm852, %v8702, %v8704
    %v8777 = vsel %vm852, %v8704, %v8706
    %v8778 = vsel %vm852, %v8706, %v8708
    %v8779 = vsel %vm852, %v8710, %v8712
    %v8780 = vsel %vm852, %v8712, %v8714
    %v8781 = vsel %vm852, %v8714, %v8716
    %v8782 = vsel %vm852, %v8716, %v8718
    %v8783 = vsel %vm852, %v8718, %v8720
    %v8784 = vsel %vm852, %v8720, %v8722
    %v8785 = vsel %vm852, %v8722, %v8724
    %v8786 = vsel %vm852, %v8724, %v8726
    %v8787 = vsel %vm852, %v8726, %v8728
    %v8788 = vsel %vm852, %v8728, %v8730
    %v8789 = vsel %vm852, %v8730, %v8732
    %v8790 = vsel %vm852, %v8734, %v8736
    %v8791 = vsel %vm852, %v8736, %v8738
    %v8792 = vsel %vm852, %v8738, %v8740
    %v8793 = vsel %vm852, %v8740, %v8742
    %v8794 = vsel %vm852, %v8742, %v8744
    %v8795 = vsel %vm852, %v8744, %v8746
    %v8796 = vsel %vm852, %v8746, %v8748
    %v8797 = vsel %vm852, %v8748, %v8750
    %v8798 = vsel %vm852, %v8750, %v8752
    %v8799 = vsel %vm852, %v8752, %v8754
    %v8800 = vsel %vm852, %v8754, %v8756
    %8845 = vst [vmem:[#allocation3 + $0xb00] sm:$0xff] %v8757
    %8846 = vst [vmem:[#allocation3 + $0xb08] sm:$0xff] %v8758
    %8847 = vst [vmem:[#allocation3 + $0xb10] sm:$0xff] %v8759
    %8848 = vst [vmem:[#allocation3 + $0xb18] sm:$0xff] %v8760
    %8849 = vst [vmem:[#allocation3 + $0xb20] sm:$0xff] %v8761
    %8850 = vst [vmem:[#allocation3 + $0xb28] sm:$0xff] %v8762
    %8851 = vst [vmem:[#allocation3 + $0xb30] sm:$0xff] %v8763
    %8852 = vst [vmem:[#allocation3 + $0xb38] sm:$0xff] %v8764
    %8853 = vst [vmem:[#allocation3 + $0xb40] sm:$0xff] %v8765
    %8854 = vst [vmem:[#allocation3 + $0xb48] sm:$0xff] %v8766
    %8855 = vst [vmem:[#allocation3 + $0xb50] sm:$0xff] %v8767
    %8856 = vst [vmem:[#allocation3 + $0xb58] sm:$0xff] %v8768
    %8857 = vst [vmem:[#allocation3 + $0xb60] sm:$0xff] %v8769
    %8858 = vst [vmem:[#allocation3 + $0xb68] sm:$0xff] %v8770
    %8859 = vst [vmem:[#allocation3 + $0xb70] sm:$0xff] %v8771
    %8860 = vst [vmem:[#allocation3 + $0xb78] sm:$0xff] %v8772
    %8861 = vst [vmem:[#allocation3 + $0xb80] sm:$0xff] %v8773
    %8862 = vst [vmem:[#allocation3 + $0xb88] sm:$0xff] %v8774
    %8863 = vst [vmem:[#allocation3 + $0xb90] sm:$0xff] %v8775
    %8864 = vst [vmem:[#allocation3 + $0xb98] sm:$0xff] %v8776
    %8865 = vst [vmem:[#allocation3 + $0xba0] sm:$0xff] %v8777
    %8866 = vst [vmem:[#allocation3 + $0xba8] sm:$0xff] %v8778
    %8867 = vst [vmem:[#allocation3 + $0xbb0] sm:$0xff] %v8779
    %8868 = vst [vmem:[#allocation3 + $0xbb8] sm:$0xff] %v8780
    %8869 = vst [vmem:[#allocation3 + $0xbc0] sm:$0xff] %v8781
    %8870 = vst [vmem:[#allocation3 + $0xbc8] sm:$0xff] %v8782
    %8871 = vst [vmem:[#allocation3 + $0xbd0] sm:$0xff] %v8783
    %8872 = vst [vmem:[#allocation3 + $0xbd8] sm:$0xff] %v8784
    %8873 = vst [vmem:[#allocation3 + $0xbe0] sm:$0xff] %v8785
    %8874 = vst [vmem:[#allocation3 + $0xbe8] sm:$0xff] %v8786
    %8875 = vst [vmem:[#allocation3 + $0xbf0] sm:$0xff] %v8787
    %8876 = vst [vmem:[#allocation3 + $0xbf8] sm:$0xff] %v8788
    %8877 = vst [vmem:[#allocation3 + $0xc00] sm:$0xff] %v8789
    %8878 = vst [vmem:[#allocation3 + $0xc08] sm:$0xff] %v8790
    %8879 = vst [vmem:[#allocation3 + $0xc10] sm:$0xff] %v8791
    %8880 = vst [vmem:[#allocation3 + $0xc18] sm:$0xff] %v8792
    %8881 = vst [vmem:[#allocation3 + $0xc20] sm:$0xff] %v8793
    %8882 = vst [vmem:[#allocation3 + $0xc28] sm:$0xff] %v8794
    %8883 = vst [vmem:[#allocation3 + $0xc30] sm:$0xff] %v8795
    %8884 = vst [vmem:[#allocation3 + $0xc38] sm:$0xff] %v8796
    %8885 = vst [vmem:[#allocation3 + $0xc40] sm:$0xff] %v8797
    %8886 = vst [vmem:[#allocation3 + $0xc48] sm:$0xff] %v8798
    %8887 = vst [vmem:[#allocation3 + $0xc50] sm:$0xff] %v8799
    %8888 = vst [vmem:[#allocation3 + $0xc58] sm:$0xff] %v8800
    %v8889 = vld [vmem:[%s6] sm:$0x3f]
    %v8890 = vld [vmem:[#allocation3] sm:$0xff]
    %v8891 = vld [vmem:[#allocation3 + $0x8] sm:$0xff]
    %v8892 = vld [vmem:[#allocation3 + $0x10] sm:$0xff]
    %v8893 = vld [vmem:[#allocation3 + $0x18] sm:$0xff]
    %v8894 = vld [vmem:[#allocation3 + $0x20] sm:$0xff]
    %v8895 = vld [vmem:[#allocation3 + $0x28] sm:$0xff]
    %v8896 = vld [vmem:[#allocation3 + $0x30] sm:$0xff]
    %v8897 = vld [vmem:[#allocation3 + $0x38] sm:$0xff]
    %v8898 = vld [vmem:[#allocation3 + $0x40] sm:$0xff]
    %v8899 = vld [vmem:[#allocation3 + $0x48] sm:$0xff]
    %v8900 = vld [vmem:[#allocation3 + $0x50] sm:$0xff]
    %v8901 = vld [vmem:[#allocation3 + $0x58] sm:$0xff]
    %v8902 = vld [vmem:[#allocation3 + $0x60] sm:$0xff]
    %v8903 = vld [vmem:[#allocation3 + $0x68] sm:$0xff]
    %v8904 = vld [vmem:[#allocation3 + $0x70] sm:$0xff]
    %v8905 = vld [vmem:[#allocation3 + $0x78] sm:$0xff]
    %v8906 = vld [vmem:[#allocation3 + $0x80] sm:$0xff]
    %v8907 = vld [vmem:[#allocation3 + $0x88] sm:$0xff]
    %v8908 = vld [vmem:[#allocation3 + $0x90] sm:$0xff]
    %v8909 = vld [vmem:[#allocation3 + $0x98] sm:$0xff]
    %v8910 = vld [vmem:[#allocation3 + $0xa0] sm:$0xff]
    %v8911 = vld [vmem:[#allocation3 + $0xa8] sm:$0xff]
    %v8912 = vld [vmem:[#allocation3 + $0xb0] sm:$0xff]
    %v8913 = vld [vmem:[#allocation3 + $0xb8] sm:$0xff]
    %v8914 = vld [vmem:[#allocation3 + $0xc0] sm:$0xff]
    %v8915 = vld [vmem:[#allocation3 + $0xc8] sm:$0xff]
    %v8916 = vld [vmem:[#allocation3 + $0xd0] sm:$0xff]
    %v8917 = vld [vmem:[#allocation3 + $0xd8] sm:$0xff]
    %v8918 = vld [vmem:[#allocation3 + $0xe0] sm:$0xff]
    %v8919 = vld [vmem:[#allocation3 + $0xe8] sm:$0xff]
    %v8920 = vld [vmem:[#allocation3 + $0xf0] sm:$0xff]
    %v8921 = vld [vmem:[#allocation3 + $0xf8] sm:$0xff]
    %v8922 = vld [vmem:[#allocation3 + $0x100] sm:$0xff]
    %v8923 = vld [vmem:[#allocation3 + $0x108] sm:$0xff]
    %v8924 = vld [vmem:[#allocation3 + $0x110] sm:$0xff]
    %v8925 = vld [vmem:[#allocation3 + $0x118] sm:$0xff]
    %v8926 = vld [vmem:[#allocation3 + $0x120] sm:$0xff]
    %v8927 = vld [vmem:[#allocation3 + $0x128] sm:$0xff]
    %v8928 = vld [vmem:[#allocation3 + $0x130] sm:$0xff]
    %v8929 = vld [vmem:[#allocation3 + $0x138] sm:$0xff]
    %v8930 = vld [vmem:[#allocation3 + $0x140] sm:$0xff]
    %v8931 = vld [vmem:[#allocation3 + $0x148] sm:$0xff]
    %v8932 = vld [vmem:[#allocation3 + $0x150] sm:$0xff]
    %v8933 = vld [vmem:[#allocation3 + $0x158] sm:$0xff]
    %v8934 = vld [vmem:[#allocation3 + $0x160] sm:$0xff]
    %v8935 = vld [vmem:[#allocation3 + $0x168] sm:$0xff]
    %v8936 = vld [vmem:[#allocation3 + $0x170] sm:$0xff]
    %v8937 = vld [vmem:[#allocation3 + $0x178] sm:$0xff]
    %v8938 = vld [vmem:[#allocation3 + $0x180] sm:$0xff]
    %v8939 = vld [vmem:[#allocation3 + $0x188] sm:$0xff]
    %v8940 = vld [vmem:[#allocation3 + $0x190] sm:$0xff]
    %v8941 = vld [vmem:[#allocation3 + $0x198] sm:$0xff]
    %v8942 = vld [vmem:[#allocation3 + $0x1a0] sm:$0xff]
    %v8943 = vld [vmem:[#allocation3 + $0x1a8] sm:$0xff]
    %v8944 = vld [vmem:[#allocation3 + $0x1b0] sm:$0xff]
    %v8945 = vld [vmem:[#allocation3 + $0x1b8] sm:$0xff]
    %v8946 = vld [vmem:[#allocation3 + $0x1c0] sm:$0xff]
    %v8947 = vld [vmem:[#allocation3 + $0x1c8] sm:$0xff]
    %v8948 = vld [vmem:[#allocation3 + $0x1d0] sm:$0xff]
    %v8949 = vld [vmem:[#allocation3 + $0x1d8] sm:$0xff]
    %v8950 = vld [vmem:[#allocation3 + $0x1e0] sm:$0xff]
    %v8951 = vld [vmem:[#allocation3 + $0x1e8] sm:$0xff]
    %v8952 = vld [vmem:[#allocation3 + $0x1f0] sm:$0xff]
    %v8953 = vld [vmem:[#allocation3 + $0x1f8] sm:$0xff]
    %v8954 = vld [vmem:[#allocation3 + $0x200] sm:$0xff]
    %v8955 = vld [vmem:[#allocation3 + $0x208] sm:$0xff]
    %v8956 = vld [vmem:[#allocation3 + $0x210] sm:$0xff]
    %v8957 = vld [vmem:[#allocation3 + $0x218] sm:$0xff]
    %v8958 = vld [vmem:[#allocation3 + $0x220] sm:$0xff]
    %v8959 = vld [vmem:[#allocation3 + $0x228] sm:$0xff]
    %v8960 = vld [vmem:[#allocation3 + $0x230] sm:$0xff]
    %v8961 = vld [vmem:[#allocation3 + $0x238] sm:$0xff]
    %v8962 = vld [vmem:[#allocation3 + $0x240] sm:$0xff]
    %v8963 = vld [vmem:[#allocation3 + $0x248] sm:$0xff]
    %v8964 = vld [vmem:[#allocation3 + $0x250] sm:$0xff]
    %v8965 = vld [vmem:[#allocation3 + $0x258] sm:$0xff]
    %v8966 = vld [vmem:[#allocation3 + $0x260] sm:$0xff]
    %v8967 = vld [vmem:[#allocation3 + $0x268] sm:$0xff]
    %v8968 = vld [vmem:[#allocation3 + $0x270] sm:$0xff]
    %v8969 = vld [vmem:[#allocation3 + $0x278] sm:$0xff]
    %v8970 = vld [vmem:[#allocation3 + $0x280] sm:$0xff]
    %v8971 = vld [vmem:[#allocation3 + $0x288] sm:$0xff]
    %v8972 = vld [vmem:[#allocation3 + $0x290] sm:$0xff]
    %v8973 = vld [vmem:[#allocation3 + $0x298] sm:$0xff]
    %v8974 = vld [vmem:[#allocation3 + $0x2a0] sm:$0xff]
    %v8975 = vld [vmem:[#allocation3 + $0x2a8] sm:$0xff]
    %v8976 = vld [vmem:[#allocation3 + $0x2b0] sm:$0xff]
    %v8977 = vld [vmem:[#allocation3 + $0x2b8] sm:$0xff]
    %v8978 = vld [vmem:[#allocation3 + $0x2c0] sm:$0xff]
    %v8979 = vld [vmem:[#allocation3 + $0x2c8] sm:$0xff]
    %v8980 = vld [vmem:[#allocation3 + $0x2d0] sm:$0xff]
    %v8981 = vld [vmem:[#allocation3 + $0x2d8] sm:$0xff]
    %v8982 = vld [vmem:[#allocation3 + $0x2e0] sm:$0xff]
    %v8983 = vld [vmem:[#allocation3 + $0x2e8] sm:$0xff]
    %v8984 = vld [vmem:[#allocation3 + $0x2f0] sm:$0xff]
    %v8985 = vld [vmem:[#allocation3 + $0x2f8] sm:$0xff]
    %v8986 = vld [vmem:[#allocation3 + $0x300] sm:$0xff]
    %v8987 = vld [vmem:[#allocation3 + $0x308] sm:$0xff]
    %v8988 = vld [vmem:[#allocation3 + $0x310] sm:$0xff]
    %v8989 = vld [vmem:[#allocation3 + $0x318] sm:$0xff]
    %v8990 = vld [vmem:[#allocation3 + $0x320] sm:$0xff]
    %v8991 = vld [vmem:[#allocation3 + $0x328] sm:$0xff]
    %v8992 = vld [vmem:[#allocation3 + $0x330] sm:$0xff]
    %v8993 = vld [vmem:[#allocation3 + $0x338] sm:$0xff]
    %v8994 = vld [vmem:[#allocation3 + $0x340] sm:$0xff]
    %v8995 = vld [vmem:[#allocation3 + $0x348] sm:$0xff]
    %v8996 = vld [vmem:[#allocation3 + $0x350] sm:$0xff]
    %v8997 = vld [vmem:[#allocation3 + $0x358] sm:$0xff]
    %v8998 = vld [vmem:[#allocation3 + $0x360] sm:$0xff]
    %v8999 = vld [vmem:[#allocation3 + $0x368] sm:$0xff]
    %v9000 = vld [vmem:[#allocation3 + $0x370] sm:$0xff]
    %v9001 = vld [vmem:[#allocation3 + $0x378] sm:$0xff]
    %v9002 = vld [vmem:[#allocation3 + $0x380] sm:$0xff]
    %v9003 = vld [vmem:[#allocation3 + $0x388] sm:$0xff]
    %v9004 = vld [vmem:[#allocation3 + $0x390] sm:$0xff]
    %v9005 = vld [vmem:[#allocation3 + $0x398] sm:$0xff]
    %v9006 = vld [vmem:[#allocation3 + $0x3a0] sm:$0xff]
    %v9007 = vld [vmem:[#allocation3 + $0x3a8] sm:$0xff]
    %v9008 = vld [vmem:[#allocation3 + $0x3b0] sm:$0xff]
    %v9009 = vld [vmem:[#allocation3 + $0x3b8] sm:$0xff]
    %v9010 = vld [vmem:[#allocation3 + $0x3c0] sm:$0xff]
    %v9011 = vld [vmem:[#allocation3 + $0x3c8] sm:$0xff]
    %v9012 = vld [vmem:[#allocation3 + $0x3d0] sm:$0xff]
    %v9013 = vld [vmem:[#allocation3 + $0x3d8] sm:$0xff]
    %v9014 = vld [vmem:[#allocation3 + $0x3e0] sm:$0xff]
    %v9015 = vld [vmem:[#allocation3 + $0x3e8] sm:$0xff]
    %v9016 = vld [vmem:[#allocation3 + $0x3f0] sm:$0xff]
    %v9017 = vld [vmem:[#allocation3 + $0x3f8] sm:$0xff]
    %v9018 = vld [vmem:[#allocation3 + $0x400] sm:$0xff]
    %v9019 = vld [vmem:[#allocation3 + $0x408] sm:$0xff]
    %v9020 = vld [vmem:[#allocation3 + $0x410] sm:$0xff]
    %v9021 = vld [vmem:[#allocation3 + $0x418] sm:$0xff]
    %v9022 = vld [vmem:[#allocation3 + $0x420] sm:$0xff]
    %v9023 = vld [vmem:[#allocation3 + $0x428] sm:$0xff]
    %v9024 = vld [vmem:[#allocation3 + $0x430] sm:$0xff]
    %v9025 = vld [vmem:[#allocation3 + $0x438] sm:$0xff]
    %v9026 = vld [vmem:[#allocation3 + $0x440] sm:$0xff]
    %v9027 = vld [vmem:[#allocation3 + $0x448] sm:$0xff]
    %v9028 = vld [vmem:[#allocation3 + $0x450] sm:$0xff]
    %v9029 = vld [vmem:[#allocation3 + $0x458] sm:$0xff]
    %v9030 = vld [vmem:[#allocation3 + $0x460] sm:$0xff]
    %v9031 = vld [vmem:[#allocation3 + $0x468] sm:$0xff]
    %v9032 = vld [vmem:[#allocation3 + $0x470] sm:$0xff]
    %v9033 = vld [vmem:[#allocation3 + $0x478] sm:$0xff]
    %v9034 = vld [vmem:[#allocation3 + $0x480] sm:$0xff]
    %v9035 = vld [vmem:[#allocation3 + $0x488] sm:$0xff]
    %v9036 = vld [vmem:[#allocation3 + $0x490] sm:$0xff]
    %v9037 = vld [vmem:[#allocation3 + $0x498] sm:$0xff]
    %v9038 = vld [vmem:[#allocation3 + $0x4a0] sm:$0xff]
    %v9039 = vld [vmem:[#allocation3 + $0x4a8] sm:$0xff]
    %v9040 = vld [vmem:[#allocation3 + $0x4b0] sm:$0xff]
    %v9041 = vld [vmem:[#allocation3 + $0x4b8] sm:$0xff]
    %v9042 = vld [vmem:[#allocation3 + $0x4c0] sm:$0xff]
    %v9043 = vld [vmem:[#allocation3 + $0x4c8] sm:$0xff]
    %v9044 = vld [vmem:[#allocation3 + $0x4d0] sm:$0xff]
    %v9045 = vld [vmem:[#allocation3 + $0x4d8] sm:$0xff]
    %v9046 = vld [vmem:[#allocation3 + $0x4e0] sm:$0xff]
    %v9047 = vld [vmem:[#allocation3 + $0x4e8] sm:$0xff]
    %v9048 = vld [vmem:[#allocation3 + $0x4f0] sm:$0xff]
    %v9049 = vld [vmem:[#allocation3 + $0x4f8] sm:$0xff]
    %v9050 = vld [vmem:[#allocation3 + $0x500] sm:$0xff]
    %v9051 = vld [vmem:[#allocation3 + $0x508] sm:$0xff]
    %v9052 = vld [vmem:[#allocation3 + $0x510] sm:$0xff]
    %v9053 = vld [vmem:[#allocation3 + $0x518] sm:$0xff]
    %v9054 = vld [vmem:[#allocation3 + $0x520] sm:$0xff]
    %v9055 = vld [vmem:[#allocation3 + $0x528] sm:$0xff]
    %v9056 = vld [vmem:[#allocation3 + $0x530] sm:$0xff]
    %v9057 = vld [vmem:[#allocation3 + $0x538] sm:$0xff]
    %v9058 = vld [vmem:[#allocation3 + $0x540] sm:$0xff]
    %v9059 = vld [vmem:[#allocation3 + $0x548] sm:$0xff]
    %v9060 = vld [vmem:[#allocation3 + $0x550] sm:$0xff]
    %v9061 = vld [vmem:[#allocation3 + $0x558] sm:$0xff]
    %v9062 = vld [vmem:[#allocation3 + $0x560] sm:$0xff]
    %v9063 = vld [vmem:[#allocation3 + $0x568] sm:$0xff]
    %v9064 = vld [vmem:[#allocation3 + $0x570] sm:$0xff]
    %v9065 = vld [vmem:[#allocation3 + $0x578] sm:$0xff]
    %v9066 = vld [vmem:[#allocation3 + $0x580] sm:$0xff]
    %v9067 = vld [vmem:[#allocation3 + $0x588] sm:$0xff]
    %v9068 = vld [vmem:[#allocation3 + $0x590] sm:$0xff]
    %v9069 = vld [vmem:[#allocation3 + $0x598] sm:$0xff]
    %v9070 = vld [vmem:[#allocation3 + $0x5a0] sm:$0xff]
    %v9071 = vld [vmem:[#allocation3 + $0x5a8] sm:$0xff]
    %v9072 = vld [vmem:[#allocation3 + $0x5b0] sm:$0xff]
    %v9073 = vld [vmem:[#allocation3 + $0x5b8] sm:$0xff]
    %v9074 = vld [vmem:[#allocation3 + $0x5c0] sm:$0xff]
    %v9075 = vld [vmem:[#allocation3 + $0x5c8] sm:$0xff]
    %v9076 = vld [vmem:[#allocation3 + $0x5d0] sm:$0xff]
    %v9077 = vld [vmem:[#allocation3 + $0x5d8] sm:$0xff]
    %v9078 = vld [vmem:[#allocation3 + $0x5e0] sm:$0xff]
    %v9079 = vld [vmem:[#allocation3 + $0x5e8] sm:$0xff]
    %v9080 = vld [vmem:[#allocation3 + $0x5f0] sm:$0xff]
    %v9081 = vld [vmem:[#allocation3 + $0x5f8] sm:$0xff]
    %v9082 = vld [vmem:[#allocation3 + $0x600] sm:$0xff]
    %v9083 = vld [vmem:[#allocation3 + $0x608] sm:$0xff]
    %v9084 = vld [vmem:[#allocation3 + $0x610] sm:$0xff]
    %v9085 = vld [vmem:[#allocation3 + $0x618] sm:$0xff]
    %v9086 = vld [vmem:[#allocation3 + $0x620] sm:$0xff]
    %v9087 = vld [vmem:[#allocation3 + $0x628] sm:$0xff]
    %v9088 = vld [vmem:[#allocation3 + $0x630] sm:$0xff]
    %v9089 = vld [vmem:[#allocation3 + $0x638] sm:$0xff]
    %v9090 = vld [vmem:[#allocation3 + $0x640] sm:$0xff]
    %v9091 = vld [vmem:[#allocation3 + $0x648] sm:$0xff]
    %v9092 = vld [vmem:[#allocation3 + $0x650] sm:$0xff]
    %v9093 = vld [vmem:[#allocation3 + $0x658] sm:$0xff]
    %v9094 = vld [vmem:[#allocation3 + $0x660] sm:$0xff]
    %v9095 = vld [vmem:[#allocation3 + $0x668] sm:$0xff]
    %v9096 = vld [vmem:[#allocation3 + $0x670] sm:$0xff]
    %v9097 = vld [vmem:[#allocation3 + $0x678] sm:$0xff]
    %v9098 = vld [vmem:[#allocation3 + $0x680] sm:$0xff]
    %v9099 = vld [vmem:[#allocation3 + $0x688] sm:$0xff]
    %v9100 = vld [vmem:[#allocation3 + $0x690] sm:$0xff]
    %v9101 = vld [vmem:[#allocation3 + $0x698] sm:$0xff]
    %v9102 = vld [vmem:[#allocation3 + $0x6a0] sm:$0xff]
    %v9103 = vld [vmem:[#allocation3 + $0x6a8] sm:$0xff]
    %v9104 = vld [vmem:[#allocation3 + $0x6b0] sm:$0xff]
    %v9105 = vld [vmem:[#allocation3 + $0x6b8] sm:$0xff]
    %v9106 = vld [vmem:[#allocation3 + $0x6c0] sm:$0xff]
    %v9107 = vld [vmem:[#allocation3 + $0x6c8] sm:$0xff]
    %v9108 = vld [vmem:[#allocation3 + $0x6d0] sm:$0xff]
    %v9109 = vld [vmem:[#allocation3 + $0x6d8] sm:$0xff]
    %v9110 = vld [vmem:[#allocation3 + $0x6e0] sm:$0xff]
    %v9111 = vld [vmem:[#allocation3 + $0x6e8] sm:$0xff]
    %v9112 = vld [vmem:[#allocation3 + $0x6f0] sm:$0xff]
    %v9113 = vld [vmem:[#allocation3 + $0x6f8] sm:$0xff]
    %v9114 = vld [vmem:[#allocation3 + $0x700] sm:$0xff]
    %v9115 = vld [vmem:[#allocation3 + $0x708] sm:$0xff]
    %v9116 = vld [vmem:[#allocation3 + $0x710] sm:$0xff]
    %v9117 = vld [vmem:[#allocation3 + $0x718] sm:$0xff]
    %v9118 = vld [vmem:[#allocation3 + $0x720] sm:$0xff]
    %v9119 = vld [vmem:[#allocation3 + $0x728] sm:$0xff]
    %v9120 = vld [vmem:[#allocation3 + $0x730] sm:$0xff]
    %v9121 = vld [vmem:[#allocation3 + $0x738] sm:$0xff]
    %v9122 = vld [vmem:[#allocation3 + $0x740] sm:$0xff]
    %v9123 = vld [vmem:[#allocation3 + $0x748] sm:$0xff]
    %v9124 = vld [vmem:[#allocation3 + $0x750] sm:$0xff]
    %v9125 = vld [vmem:[#allocation3 + $0x758] sm:$0xff]
    %v9126 = vld [vmem:[#allocation3 + $0x760] sm:$0xff]
    %v9127 = vld [vmem:[#allocation3 + $0x768] sm:$0xff]
    %v9128 = vld [vmem:[#allocation3 + $0x770] sm:$0xff]
    %v9129 = vld [vmem:[#allocation3 + $0x778] sm:$0xff]
    %v9130 = vld [vmem:[#allocation3 + $0x780] sm:$0xff]
    %v9131 = vld [vmem:[#allocation3 + $0x788] sm:$0xff]
    %v9132 = vld [vmem:[#allocation3 + $0x790] sm:$0xff]
    %v9133 = vld [vmem:[#allocation3 + $0x798] sm:$0xff]
    %v9134 = vld [vmem:[#allocation3 + $0x7a0] sm:$0xff]
    %v9135 = vld [vmem:[#allocation3 + $0x7a8] sm:$0xff]
    %v9136 = vld [vmem:[#allocation3 + $0x7b0] sm:$0xff]
    %v9137 = vld [vmem:[#allocation3 + $0x7b8] sm:$0xff]
    %v9138 = vld [vmem:[#allocation3 + $0x7c0] sm:$0xff]
    %v9139 = vld [vmem:[#allocation3 + $0x7c8] sm:$0xff]
    %v9140 = vld [vmem:[#allocation3 + $0x7d0] sm:$0xff]
    %v9141 = vld [vmem:[#allocation3 + $0x7d8] sm:$0xff]
    %v9142 = vld [vmem:[#allocation3 + $0x7e0] sm:$0xff]
    %v9143 = vld [vmem:[#allocation3 + $0x7e8] sm:$0xff]
    %v9144 = vld [vmem:[#allocation3 + $0x7f0] sm:$0xff]
    %v9145 = vld [vmem:[#allocation3 + $0x7f8] sm:$0xff]
    %v9146 = vld [vmem:[#allocation3 + $0x800] sm:$0xff]
    %v9147 = vld [vmem:[#allocation3 + $0x808] sm:$0xff]
    %v9148 = vld [vmem:[#allocation3 + $0x810] sm:$0xff]
    %v9149 = vld [vmem:[#allocation3 + $0x818] sm:$0xff]
    %v9150 = vld [vmem:[#allocation3 + $0x820] sm:$0xff]
    %v9151 = vld [vmem:[#allocation3 + $0x828] sm:$0xff]
    %v9152 = vld [vmem:[#allocation3 + $0x830] sm:$0xff]
    %v9153 = vld [vmem:[#allocation3 + $0x838] sm:$0xff]
    %v9154 = vld [vmem:[#allocation3 + $0x840] sm:$0xff]
    %v9155 = vld [vmem:[#allocation3 + $0x848] sm:$0xff]
    %v9156 = vld [vmem:[#allocation3 + $0x850] sm:$0xff]
    %v9157 = vld [vmem:[#allocation3 + $0x858] sm:$0xff]
    %v9158 = vld [vmem:[#allocation3 + $0x860] sm:$0xff]
    %v9159 = vld [vmem:[#allocation3 + $0x868] sm:$0xff]
    %v9160 = vld [vmem:[#allocation3 + $0x870] sm:$0xff]
    %v9161 = vld [vmem:[#allocation3 + $0x878] sm:$0xff]
    %v9162 = vld [vmem:[#allocation3 + $0x880] sm:$0xff]
    %v9163 = vld [vmem:[#allocation3 + $0x888] sm:$0xff]
    %v9164 = vld [vmem:[#allocation3 + $0x890] sm:$0xff]
    %v9165 = vld [vmem:[#allocation3 + $0x898] sm:$0xff]
    %v9166 = vld [vmem:[#allocation3 + $0x8a0] sm:$0xff]
    %v9167 = vld [vmem:[#allocation3 + $0x8a8] sm:$0xff]
    %v9168 = vld [vmem:[#allocation3 + $0x8b0] sm:$0xff]
    %v9169 = vld [vmem:[#allocation3 + $0x8b8] sm:$0xff]
    %v9170 = vld [vmem:[#allocation3 + $0x8c0] sm:$0xff]
    %v9171 = vld [vmem:[#allocation3 + $0x8c8] sm:$0xff]
    %v9172 = vld [vmem:[#allocation3 + $0x8d0] sm:$0xff]
    %v9173 = vld [vmem:[#allocation3 + $0x8d8] sm:$0xff]
    %v9174 = vld [vmem:[#allocation3 + $0x8e0] sm:$0xff]
    %v9175 = vld [vmem:[#allocation3 + $0x8e8] sm:$0xff]
    %v9176 = vld [vmem:[#allocation3 + $0x8f0] sm:$0xff]
    %v9177 = vld [vmem:[#allocation3 + $0x8f8] sm:$0xff]
    %v9178 = vld [vmem:[#allocation3 + $0x900] sm:$0xff]
    %v9179 = vld [vmem:[#allocation3 + $0x908] sm:$0xff]
    %v9180 = vld [vmem:[#allocation3 + $0x910] sm:$0xff]
    %v9181 = vld [vmem:[#allocation3 + $0x918] sm:$0xff]
    %v9182 = vld [vmem:[#allocation3 + $0x920] sm:$0xff]
    %v9183 = vld [vmem:[#allocation3 + $0x928] sm:$0xff]
    %v9184 = vld [vmem:[#allocation3 + $0x930] sm:$0xff]
    %v9185 = vld [vmem:[#allocation3 + $0x938] sm:$0xff]
    %v9186 = vld [vmem:[#allocation3 + $0x940] sm:$0xff]
    %v9187 = vld [vmem:[#allocation3 + $0x948] sm:$0xff]
    %v9188 = vld [vmem:[#allocation3 + $0x950] sm:$0xff]
    %v9189 = vld [vmem:[#allocation3 + $0x958] sm:$0xff]
    %v9190 = vld [vmem:[#allocation3 + $0x960] sm:$0xff]
    %v9191 = vld [vmem:[#allocation3 + $0x968] sm:$0xff]
    %v9192 = vld [vmem:[#allocation3 + $0x970] sm:$0xff]
    %v9193 = vld [vmem:[#allocation3 + $0x978] sm:$0xff]
    %v9194 = vld [vmem:[#allocation3 + $0x980] sm:$0xff]
    %v9195 = vld [vmem:[#allocation3 + $0x988] sm:$0xff]
    %v9196 = vld [vmem:[#allocation3 + $0x990] sm:$0xff]
    %v9197 = vld [vmem:[#allocation3 + $0x998] sm:$0xff]
    %v9198 = vld [vmem:[#allocation3 + $0x9a0] sm:$0xff]
    %v9199 = vld [vmem:[#allocation3 + $0x9a8] sm:$0xff]
    %v9200 = vld [vmem:[#allocation3 + $0x9b0] sm:$0xff]
    %v9201 = vld [vmem:[#allocation3 + $0x9b8] sm:$0xff]
    %v9202 = vld [vmem:[#allocation3 + $0x9c0] sm:$0xff]
    %v9203 = vld [vmem:[#allocation3 + $0x9c8] sm:$0xff]
    %v9204 = vld [vmem:[#allocation3 + $0x9d0] sm:$0xff]
    %v9205 = vld [vmem:[#allocation3 + $0x9d8] sm:$0xff]
    %v9206 = vld [vmem:[#allocation3 + $0x9e0] sm:$0xff]
    %v9207 = vld [vmem:[#allocation3 + $0x9e8] sm:$0xff]
    %v9208 = vld [vmem:[#allocation3 + $0x9f0] sm:$0xff]
    %v9209 = vld [vmem:[#allocation3 + $0x9f8] sm:$0xff]
    %v9210 = vld [vmem:[#allocation3 + $0xa00] sm:$0xff]
    %v9211 = vld [vmem:[#allocation3 + $0xa08] sm:$0xff]
    %v9212 = vld [vmem:[#allocation3 + $0xa10] sm:$0xff]
    %v9213 = vld [vmem:[#allocation3 + $0xa18] sm:$0xff]
    %v9214 = vld [vmem:[#allocation3 + $0xa20] sm:$0xff]
    %v9215 = vld [vmem:[#allocation3 + $0xa28] sm:$0xff]
    %v9216 = vld [vmem:[#allocation3 + $0xa30] sm:$0xff]
    %v9217 = vld [vmem:[#allocation3 + $0xa38] sm:$0xff]
    %v9218 = vld [vmem:[#allocation3 + $0xa40] sm:$0xff]
    %v9219 = vld [vmem:[#allocation3 + $0xa48] sm:$0xff]
    %v9220 = vld [vmem:[#allocation3 + $0xa50] sm:$0xff]
    %v9221 = vld [vmem:[#allocation3 + $0xa58] sm:$0xff]
    %v9222 = vld [vmem:[#allocation3 + $0xa60] sm:$0xff]
    %v9223 = vld [vmem:[#allocation3 + $0xa68] sm:$0xff]
    %v9224 = vld [vmem:[#allocation3 + $0xa70] sm:$0xff]
    %v9225 = vld [vmem:[#allocation3 + $0xa78] sm:$0xff]
    %v9226 = vld [vmem:[#allocation3 + $0xa80] sm:$0xff]
    %v9227 = vld [vmem:[#allocation3 + $0xa88] sm:$0xff]
    %v9228 = vld [vmem:[#allocation3 + $0xa90] sm:$0xff]
    %v9229 = vld [vmem:[#allocation3 + $0xa98] sm:$0xff]
    %v9230 = vld [vmem:[#allocation3 + $0xaa0] sm:$0xff]
    %v9231 = vld [vmem:[#allocation3 + $0xaa8] sm:$0xff]
    %v9232 = vld [vmem:[#allocation3 + $0xab0] sm:$0xff]
    %v9233 = vld [vmem:[#allocation3 + $0xab8] sm:$0xff]
    %v9234 = vld [vmem:[#allocation3 + $0xac0] sm:$0xff]
    %v9235 = vld [vmem:[#allocation3 + $0xac8] sm:$0xff]
    %v9236 = vld [vmem:[#allocation3 + $0xad0] sm:$0xff]
    %v9237 = vld [vmem:[#allocation3 + $0xad8] sm:$0xff]
    %v9238 = vld [vmem:[#allocation3 + $0xae0] sm:$0xff]
    %v9239 = vld [vmem:[#allocation3 + $0xae8] sm:$0xff]
    %v9240 = vld [vmem:[#allocation3 + $0xaf0] sm:$0xff]
    %v9241 = vld [vmem:[#allocation3 + $0xaf8] sm:$0xff]
    %v9242 = vld [vmem:[#allocation3 + $0xb00] sm:$0xff]
    %v9243 = vld [vmem:[#allocation3 + $0xb08] sm:$0xff]
    %v9244 = vld [vmem:[#allocation3 + $0xb10] sm:$0xff]
    %v9245 = vld [vmem:[#allocation3 + $0xb18] sm:$0xff]
    %v9246 = vld [vmem:[#allocation3 + $0xb20] sm:$0xff]
    %v9247 = vld [vmem:[#allocation3 + $0xb28] sm:$0xff]
    %v9248 = vld [vmem:[#allocation3 + $0xb30] sm:$0xff]
    %v9249 = vld [vmem:[#allocation3 + $0xb38] sm:$0xff]
    %v9250 = vld [vmem:[#allocation3 + $0xb40] sm:$0xff]
    %v9251 = vld [vmem:[#allocation3 + $0xb48] sm:$0xff]
    %v9252 = vld [vmem:[#allocation3 + $0xb50] sm:$0xff]
    %v9253 = vld [vmem:[#allocation3 + $0xb58] sm:$0xff]
    %v9254 = vld [vmem:[#allocation3 + $0xb60] sm:$0xff]
    %v9255 = vld [vmem:[#allocation3 + $0xb68] sm:$0xff]
    %v9256 = vld [vmem:[#allocation3 + $0xb70] sm:$0xff]
    %v9257 = vld [vmem:[#allocation3 + $0xb78] sm:$0xff]
    %v9258 = vld [vmem:[#allocation3 + $0xb80] sm:$0xff]
    %v9259 = vld [vmem:[#allocation3 + $0xb88] sm:$0xff]
    %v9260 = vld [vmem:[#allocation3 + $0xb90] sm:$0xff]
    %v9261 = vld [vmem:[#allocation3 + $0xb98] sm:$0xff]
    %v9262 = vld [vmem:[#allocation3 + $0xba0] sm:$0xff]
    %v9263 = vld [vmem:[#allocation3 + $0xba8] sm:$0xff]
    %v9264 = vld [vmem:[#allocation3 + $0xbb0] sm:$0xff]
    %v9265 = vld [vmem:[#allocation3 + $0xbb8] sm:$0xff]
    %v9266 = vld [vmem:[#allocation3 + $0xbc0] sm:$0xff]
    %v9267 = vld [vmem:[#allocation3 + $0xbc8] sm:$0xff]
    %v9268 = vld [vmem:[#allocation3 + $0xbd0] sm:$0xff]
    %v9269 = vld [vmem:[#allocation3 + $0xbd8] sm:$0xff]
    %v9270 = vld [vmem:[#allocation3 + $0xbe0] sm:$0xff]
    %v9271 = vld [vmem:[#allocation3 + $0xbe8] sm:$0xff]
    %v9272 = vld [vmem:[#allocation3 + $0xbf0] sm:$0xff]
    %v9273 = vld [vmem:[#allocation3 + $0xbf8] sm:$0xff]
    %v9274 = vld [vmem:[#allocation3 + $0xc00] sm:$0xff]
    %v9275 = vld [vmem:[#allocation3 + $0xc08] sm:$0xff]
    %v9276 = vld [vmem:[#allocation3 + $0xc10] sm:$0xff]
    %v9277 = vld [vmem:[#allocation3 + $0xc18] sm:$0xff]
    %v9278 = vld [vmem:[#allocation3 + $0xc20] sm:$0xff]
    %v9279 = vld [vmem:[#allocation3 + $0xc28] sm:$0xff]
    %v9280 = vld [vmem:[#allocation3 + $0xc30] sm:$0xff]
    %v9281 = vld [vmem:[#allocation3 + $0xc38] sm:$0xff]
    %v9282 = vld [vmem:[#allocation3 + $0xc40] sm:$0xff]
    %v9283 = vld [vmem:[#allocation3 + $0xc48] sm:$0xff]
    %v9284 = vld [vmem:[#allocation3 + $0xc50] sm:$0xff]
    %v9285 = vld [vmem:[#allocation3 + $0xc58] sm:$0xff]
    %v9286 = vld [vmem:[%s9] sm:$0x3]
    %9288 = vset.pattern.permute.xlu0 0
    %9289 = vperm.xlu0 %9288, %v9286
    %v9290 = vpop.permute.xlu0 %9289
    %v9293 = vcombine.high %v8889, %v8889
    %v9295 = vunpack.c.l.s4 1983009808
    %v9296 = vunpack.c.0.s8 %v9295
    %v9297 = vlaneseq
    %v9298 = vshrl.u32 %v9297, 7
    %v9299 = vsub.s32 %v9296, %v9298
    %v9300 = vrot.slane %v8889, %v9299
    %v9302 = vunpack.c.l.s4 1983009808
    %v9303 = vunpack.c.0.s8 %v9302
    %v9304 = vlaneseq
    %v9305 = vshrl.u32 %v9304, 7
    %v9306 = vsub.s32 %v9303, %v9305
    %v9307 = vrot.slane %v9293, %v9306
    %v9308 = vcombine.high %v9300, %v9300
    %v9311 = vsel %vm4914, %v9307, 0
    %9313 = vmatprep.subr.mxu0 %v8891
    %9314 = vmatpush1.msra.mxu0 %v8890
    %9315 = vmatprep.subr.mxu0 %v8902
    %9316 = vmatpush1.msra.mxu0 %v8901
    %9317 = vmatprep.subr.mxu0 %v8913
    %9318 = vmatpush1.msra.mxu0 %v8912
    %9319 = vmatprep.subr.mxu0 %v8924
    %9320 = vmatpush1.msra.mxu0 %v8923
    %9321 = vmatprep.subr.mxu0 %v8935
    %9322 = vmatpush1.msra.mxu0 %v8934
    %9323 = vmatprep.subr.mxu0 %v8946
    %9324 = vmatpush1.msra.mxu0 %v8945
    %9325 = vmatprep.subr.mxu0 %v8957
    %9326 = vmatpush1.msra.mxu0 %v8956
    %9327 = vmatprep.subr.mxu0 %v8968
    %9328 = vmatpush1.msra.mxu0 %v8967
    %9329 = vmatprep.subr.mxu0 %v8979
    %9330 = vmatpush1.msra.mxu0 %v8978
    %9331 = vmatprep.subr.mxu0 %v8990
    %9332 = vmatpush1.msra.mxu0 %v8989
    %9333 = vmatprep.subr.mxu0 %v9001
    %9334 = vmatpush1.msra.mxu0 %v9000
    %9335 = vmatprep.subr.mxu0 %v9012
    %9336 = vmatpush1.msra.mxu0 %v9011
    %9337 = vmatprep.subr.mxu0 %v9023
    %9338 = vmatpush1.msra.mxu0 %v9022
    %9339 = vmatprep.subr.mxu0 %v9034
    %9340 = vmatpush1.msra.mxu0 %v9033
    %9341 = vmatprep.subr.mxu0 %v9045
    %9342 = vmatpush1.msra.mxu0 %v9044
    %9343 = vmatprep.subr.mxu0 %v9056
    %9344 = vmatpush1.msra.mxu0 %v9055
    %9345 = vmatprep.subr.mxu0 %v9067
    %9346 = vmatpush1.msra.mxu0 %v9066
    %9347 = vmatprep.subr.mxu0 %v9078
    %9348 = vmatpush1.msra.mxu0 %v9077
    %9349 = vmatprep.subr.mxu0 %v9089
    %9350 = vmatpush1.msra.mxu0 %v9088
    %9351 = vmatprep.subr.mxu0 %v9100
    %9352 = vmatpush1.msra.mxu0 %v9099
    %9353 = vmatprep.subr.mxu0 %v9111
    %9354 = vmatpush1.msra.mxu0 %v9110
    %9355 = vmatprep.subr.mxu0 %v9122
    %9356 = vmatpush1.msra.mxu0 %v9121
    %9357 = vmatprep.subr.mxu0 %v9133
    %9358 = vmatpush1.msra.mxu0 %v9132
    %9359 = vmatprep.subr.mxu0 %v9144
    %9360 = vmatpush1.msra.mxu0 %v9143
    %9361 = vmatprep.subr.mxu0 %v9155
    %9362 = vmatpush1.msra.mxu0 %v9154
    %9363 = vmatprep.subr.mxu0 %v9166
    %9364 = vmatpush1.msra.mxu0 %v9165
    %9365 = vmatprep.subr.mxu0 %v9177
    %9366 = vmatpush1.msra.mxu0 %v9176
    %9367 = vmatprep.subr.mxu0 %v9188
    %9368 = vmatpush1.msra.mxu0 %v9187
    %9369 = vmatprep.subr.mxu0 %v9199
    %9370 = vmatpush1.msra.mxu0 %v9198
    %9371 = vmatprep.subr.mxu0 %v9210
    %9372 = vmatpush1.msra.mxu0 %v9209
    %9373 = vmatprep.subr.mxu0 %v9221
    %9374 = vmatpush1.msra.mxu0 %v9220
    %9375 = vmatprep.subr.mxu0 %v9232
    %9376 = vmatpush1.msra.mxu0 %v9231
    %9377 = vmatprep.mubr.f32.mxu0 %v9308
    %9378 = vmatmul.mubr.f32.gmra.mrb[0].mxu0 %v9300
    %v9379 = vpop.f32.mrb[0].mxu0
    %v9380 = vadd.f32 %v9290, %v9379
    %v9381 = vpop.f32.mrb[0].mxu0
    %v9382 = vadd.f32 %v9290, %v9381
    %9383 = vdwg.mxu0
    %9384 = vmatprep.subr.mxu0 %v9243
    %9385 = vmatpush1.msra.mxu0 %v9242
    %9386 = vmatprep.subr.mxu0 %v9254
    %9387 = vmatpush1.msra.mxu0 %v9253
    %9388 = vmatprep.subr.mxu0 %v9265
    %9389 = vmatpush1.msra.mxu0 %v9264
    %9390 = vmatprep.subr.mxu0 %v9276
    %9391 = vmatpush1.msra.mxu0 %v9275
    %9392 = vmatprep.subr.mxu0 0.0
    %9393 = vmatpush1.msra.mxu0 0.0
    %9394 = vmatprep.subr.mxu0 0.0
    %9395 = vmatpush1.msra.mxu0 0.0
    %9396 = vmatprep.subr.mxu0 0.0
    %9397 = vmatpush1.msra.mxu0 0.0
    %9398 = vmatprep.subr.mxu0 0.0
    %9399 = vmatpush1.msra.mxu0 0.0
    %9400 = vmatprep.subr.mxu0 0.0
    %9401 = vmatpush1.msra.mxu0 0.0
    %9402 = vmatprep.subr.mxu0 0.0
    %9403 = vmatpush1.msra.mxu0 0.0
    %9404 = vmatprep.subr.mxu0 0.0
    %9405 = vmatpush1.msra.mxu0 0.0
    %9406 = vmatprep.subr.mxu0 0.0
    %9407 = vmatpush1.msra.mxu0 0.0
    %9408 = vmatprep.subr.mxu0 0.0
    %9409 = vmatpush1.msra.mxu0 0.0
    %9410 = vmatprep.subr.mxu0 0.0
    %9411 = vmatpush1.msra.mxu0 0.0
    %9412 = vmatprep.subr.mxu0 0.0
    %9413 = vmatpush1.msra.mxu0 0.0
    %9414 = vmatprep.subr.mxu0 0.0
    %9415 = vmatpush1.msra.mxu0 0.0
    %9416 = vmatprep.subr.mxu0 0.0
    %9417 = vmatpush1.msra.mxu0 0.0
    %9418 = vmatprep.subr.mxu0 0.0
    %9419 = vmatpush1.msra.mxu0 0.0
    %9420 = vmatprep.subr.mxu0 0.0
    %9421 = vmatpush1.msra.mxu0 0.0
    %9422 = vmatprep.subr.mxu0 0.0
    %9423 = vmatpush1.msra.mxu0 0.0
    %9424 = vmatprep.subr.mxu0 0.0
    %9425 = vmatpush1.msra.mxu0 0.0
    %9426 = vmatprep.subr.mxu0 0.0
    %9427 = vmatpush1.msra.mxu0 0.0
    %9428 = vmatprep.subr.mxu0 0.0
    %9429 = vmatpush1.msra.mxu0 0.0
    %9430 = vmatprep.subr.mxu0 0.0
    %9431 = vmatpush1.msra.mxu0 0.0
    %9432 = vmatprep.subr.mxu0 0.0
    %9433 = vmatpush1.msra.mxu0 0.0
    %9434 = vmatprep.subr.mxu0 0.0
    %9435 = vmatpush1.msra.mxu0 0.0
    %9436 = vmatprep.subr.mxu0 0.0
    %9437 = vmatpush1.msra.mxu0 0.0
    %9438 = vmatprep.subr.mxu0 0.0
    %9439 = vmatpush1.msra.mxu0 0.0
    %9440 = vmatprep.subr.mxu0 0.0
    %9441 = vmatpush1.msra.mxu0 0.0
    %9442 = vmatprep.subr.mxu0 0.0
    %9443 = vmatpush1.msra.mxu0 0.0
    %9444 = vmatprep.subr.mxu0 0.0
    %9445 = vmatpush1.msra.mxu0 0.0
    %9446 = vmatprep.subr.mxu0 0.0
    %9447 = vmatpush1.msra.mxu0 0.0
    %9448 = vmatprep.mubr.f32.mxu0 0.0
    %9449 = vmatmul.mubr.f32.gmra.mrb[0].mxu0 %v9311
    %v9450 = vpop.f32.mrb[0].mxu0
    %v9451 = vadd.f32 %v9380, %v9450
    %v9452 = vpop.f32.mrb[0].mxu0
    %v9453 = vadd.f32 %v9382, %v9452
    %9454 = vdwg.mxu0
    %9455 = vmatprep.subr.mxu0 %v8893
    %9456 = vmatpush1.msra.mxu0 %v8892
    %9457 = vmatprep.subr.mxu0 %v8904
    %9458 = vmatpush1.msra.mxu0 %v8903
    %9459 = vmatprep.subr.mxu0 %v8915
    %9460 = vmatpush1.msra.mxu0 %v8914
    %9461 = vmatprep.subr.mxu0 %v8926
    %9462 = vmatpush1.msra.mxu0 %v8925
    %9463 = vmatprep.subr.mxu0 %v8937
    %9464 = vmatpush1.msra.mxu0 %v8936
    %9465 = vmatprep.subr.mxu0 %v8948
    %9466 = vmatpush1.msra.mxu0 %v8947
    %9467 = vmatprep.subr.mxu0 %v8959
    %9468 = vmatpush1.msra.mxu0 %v8958
    %9469 = vmatprep.subr.mxu0 %v8970
    %9470 = vmatpush1.msra.mxu0 %v8969
    %9471 = vmatprep.subr.mxu0 %v8981
    %9472 = vmatpush1.msra.mxu0 %v8980
    %9473 = vmatprep.subr.mxu0 %v8992
    %9474 = vmatpush1.msra.mxu0 %v8991
    %9475 = vmatprep.subr.mxu0 %v9003
    %9476 = vmatpush1.msra.mxu0 %v9002
    %9477 = vmatprep.subr.mxu0 %v9014
    %9478 = vmatpush1.msra.mxu0 %v9013
    %9479 = vmatprep.subr.mxu0 %v9025
    %9480 = vmatpush1.msra.mxu0 %v9024
    %9481 = vmatprep.subr.mxu0 %v9036
    %9482 = vmatpush1.msra.mxu0 %v9035
    %9483 = vmatprep.subr.mxu0 %v9047
    %9484 = vmatpush1.msra.mxu0 %v9046
    %9485 = vmatprep.subr.mxu0 %v9058
    %9486 = vmatpush1.msra.mxu0 %v9057
    %9487 = vmatprep.subr.mxu0 %v9069
    %9488 = vmatpush1.msra.mxu0 %v9068
    %9489 = vmatprep.subr.mxu0 %v9080
    %9490 = vmatpush1.msra.mxu0 %v9079
    %9491 = vmatprep.subr.mxu0 %v9091
    %9492 = vmatpush1.msra.mxu0 %v9090
    %9493 = vmatprep.subr.mxu0 %v9102
    %9494 = vmatpush1.msra.mxu0 %v9101
    %9495 = vmatprep.subr.mxu0 %v9113
    %9496 = vmatpush1.msra.mxu0 %v9112
    %9497 = vmatprep.subr.mxu0 %v9124
    %9498 = vmatpush1.msra.mxu0 %v9123
    %9499 = vmatprep.subr.mxu0 %v9135
    %9500 = vmatpush1.msra.mxu0 %v9134
    %9501 = vmatprep.subr.mxu0 %v9146
    %9502 = vmatpush1.msra.mxu0 %v9145
    %9503 = vmatprep.subr.mxu0 %v9157
    %9504 = vmatpush1.msra.mxu0 %v9156
    %9505 = vmatprep.subr.mxu0 %v9168
    %9506 = vmatpush1.msra.mxu0 %v9167
    %9507 = vmatprep.subr.mxu0 %v9179
    %9508 = vmatpush1.msra.mxu0 %v9178
    %9509 = vmatprep.subr.mxu0 %v9190
    %9510 = vmatpush1.msra.mxu0 %v9189
    %9511 = vmatprep.subr.mxu0 %v9201
    %9512 = vmatpush1.msra.mxu0 %v9200
    %9513 = vmatprep.subr.mxu0 %v9212
    %9514 = vmatpush1.msra.mxu0 %v9211
    %9515 = vmatprep.subr.mxu0 %v9223
    %9516 = vmatpush1.msra.mxu0 %v9222
    %9517 = vmatprep.subr.mxu0 %v9234
    %9518 = vmatpush1.msra.mxu0 %v9233
    %9519 = vmatprep.mubr.f32.mxu0 %v9308
    %9520 = vmatmul.mubr.f32.gmra.mrb[0].mxu0 %v9300
    %v9521 = vpop.f32.mrb[0].mxu0
    %v9522 = vadd.f32 %v9290, %v9521
    %v9523 = vpop.f32.mrb[0].mxu0
    %v9524 = vadd.f32 %v9290, %v9523
    %9525 = vdwg.mxu0
    %9526 = vmatprep.subr.mxu0 %v9245
    %9527 = vmatpush1.msra.mxu0 %v9244
    %9528 = vmatprep.subr.mxu0 %v9256
    %9529 = vmatpush1.msra.mxu0 %v9255
    %9530 = vmatprep.subr.mxu0 %v9267
    %9531 = vmatpush1.msra.mxu0 %v9266
    %9532 = vmatprep.subr.mxu0 %v9278
    %9533 = vmatpush1.msra.mxu0 %v9277
    %9534 = vmatprep.subr.mxu0 0.0
    %9535 = vmatpush1.msra.mxu0 0.0
    %9536 = vmatprep.subr.mxu0 0.0
    %9537 = vmatpush1.msra.mxu0 0.0
    %9538 = vmatprep.subr.mxu0 0.0
    %9539 = vmatpush1.msra.mxu0 0.0
    %9540 = vmatprep.subr.mxu0 0.0
    %9541 = vmatpush1.msra.mxu0 0.0
    %9542 = vmatprep.subr.mxu0 0.0
    %9543 = vmatpush1.msra.mxu0 0.0
    %9544 = vmatprep.subr.mxu0 0.0
    %9545 = vmatpush1.msra.mxu0 0.0
    %9546 = vmatprep.subr.mxu0 0.0
    %9547 = vmatpush1.msra.mxu0 0.0
    %9548 = vmatprep.subr.mxu0 0.0
    %9549 = vmatpush1.msra.mxu0 0.0
    %9550 = vmatprep.subr.mxu0 0.0
    %9551 = vmatpush1.msra.mxu0 0.0
    %9552 = vmatprep.subr.mxu0 0.0
    %9553 = vmatpush1.msra.mxu0 0.0
    %9554 = vmatprep.subr.mxu0 0.0
    %9555 = vmatpush1.msra.mxu0 0.0
    %9556 = vmatprep.subr.mxu0 0.0
    %9557 = vmatpush1.msra.mxu0 0.0
    %9558 = vmatprep.subr.mxu0 0.0
    %9559 = vmatpush1.msra.mxu0 0.0
    %9560 = vmatprep.subr.mxu0 0.0
    %9561 = vmatpush1.msra.mxu0 0.0
    %9562 = vmatprep.subr.mxu0 0.0
    %9563 = vmatpush1.msra.mxu0 0.0
    %9564 = vmatprep.subr.mxu0 0.0
    %9565 = vmatpush1.msra.mxu0 0.0
    %9566 = vmatprep.subr.mxu0 0.0
    %9567 = vmatpush1.msra.mxu0 0.0
    %9568 = vmatprep.subr.mxu0 0.0
    %9569 = vmatpush1.msra.mxu0 0.0
    %9570 = vmatprep.subr.mxu0 0.0
    %9571 = vmatpush1.msra.mxu0 0.0
    %9572 = vmatprep.subr.mxu0 0.0
    %9573 = vmatpush1.msra.mxu0 0.0
    %9574 = vmatprep.subr.mxu0 0.0
    %9575 = vmatpush1.msra.mxu0 0.0
    %9576 = vmatprep.subr.mxu0 0.0
    %9577 = vmatpush1.msra.mxu0 0.0
    %9578 = vmatprep.subr.mxu0 0.0
    %9579 = vmatpush1.msra.mxu0 0.0
    %9580 = vmatprep.subr.mxu0 0.0
    %9581 = vmatpush1.msra.mxu0 0.0
    %9582 = vmatprep.subr.mxu0 0.0
    %9583 = vmatpush1.msra.mxu0 0.0
    %9584 = vmatprep.subr.mxu0 0.0
    %9585 = vmatpush1.msra.mxu0 0.0
    %9586 = vmatprep.subr.mxu0 0.0
    %9587 = vmatpush1.msra.mxu0 0.0
    %9588 = vmatprep.subr.mxu0 0.0
    %9589 = vmatpush1.msra.mxu0 0.0
    %9590 = vmatprep.mubr.f32.mxu0 0.0
    %9591 = vmatmul.mubr.f32.gmra.mrb[0].mxu0 %v9311
    %v9592 = vpop.f32.mrb[0].mxu0
    %v9593 = vadd.f32 %v9522, %v9592
    %v9594 = vpop.f32.mrb[0].mxu0
    %v9595 = vadd.f32 %v9524, %v9594
    %9596 = vdwg.mxu0
    %9597 = vmatprep.subr.mxu0 %v8895
    %9598 = vmatpush1.msra.mxu0 %v8894
    %9599 = vmatprep.subr.mxu0 %v8906
    %9600 = vmatpush1.msra.mxu0 %v8905
    %9601 = vmatprep.subr.mxu0 %v8917
    %9602 = vmatpush1.msra.mxu0 %v8916
    %9603 = vmatprep.subr.mxu0 %v8928
    %9604 = vmatpush1.msra.mxu0 %v8927
    %9605 = vmatprep.subr.mxu0 %v8939
    %9606 = vmatpush1.msra.mxu0 %v8938
    %9607 = vmatprep.subr.mxu0 %v8950
    %9608 = vmatpush1.msra.mxu0 %v8949
    %9609 = vmatprep.subr.mxu0 %v8961
    %9610 = vmatpush1.msra.mxu0 %v8960
    %9611 = vmatprep.subr.mxu0 %v8972
    %9612 = vmatpush1.msra.mxu0 %v8971
    %9613 = vmatprep.subr.mxu0 %v8983
    %9614 = vmatpush1.msra.mxu0 %v8982
    %9615 = vmatprep.subr.mxu0 %v8994
    %9616 = vmatpush1.msra.mxu0 %v8993
    %9617 = vmatprep.subr.mxu0 %v9005
    %9618 = vmatpush1.msra.mxu0 %v9004
    %9619 = vmatprep.subr.mxu0 %v9016
    %9620 = vmatpush1.msra.mxu0 %v9015
    %9621 = vmatprep.subr.mxu0 %v9027
    %9622 = vmatpush1.msra.mxu0 %v9026
    %9623 = vmatprep.subr.mxu0 %v9038
    %9624 = vmatpush1.msra.mxu0 %v9037
    %9625 = vmatprep.subr.mxu0 %v9049
    %9626 = vmatpush1.msra.mxu0 %v9048
    %9627 = vmatprep.subr.mxu0 %v9060
    %9628 = vmatpush1.msra.mxu0 %v9059
    %9629 = vmatprep.subr.mxu0 %v9071
    %9630 = vmatpush1.msra.mxu0 %v9070
    %9631 = vmatprep.subr.mxu0 %v9082
    %9632 = vmatpush1.msra.mxu0 %v9081
    %9633 = vmatprep.subr.mxu0 %v9093
    %9634 = vmatpush1.msra.mxu0 %v9092
    %9635 = vmatprep.subr.mxu0 %v9104
    %9636 = vmatpush1.msra.mxu0 %v9103
    %9637 = vmatprep.subr.mxu0 %v9115
    %9638 = vmatpush1.msra.mxu0 %v9114
    %9639 = vmatprep.subr.mxu0 %v9126
    %9640 = vmatpush1.msra.mxu0 %v9125
    %9641 = vmatprep.subr.mxu0 %v9137
    %9642 = vmatpush1.msra.mxu0 %v9136
    %9643 = vmatprep.subr.mxu0 %v9148
    %9644 = vmatpush1.msra.mxu0 %v9147
    %9645 = vmatprep.subr.mxu0 %v9159
    %9646 = vmatpush1.msra.mxu0 %v9158
    %9647 = vmatprep.subr.mxu0 %v9170
    %9648 = vmatpush1.msra.mxu0 %v9169
    %9649 = vmatprep.subr.mxu0 %v9181
    %9650 = vmatpush1.msra.mxu0 %v9180
    %9651 = vmatprep.subr.mxu0 %v9192
    %9652 = vmatpush1.msra.mxu0 %v9191
    %9653 = vmatprep.subr.mxu0 %v9203
    %9654 = vmatpush1.msra.mxu0 %v9202
    %9655 = vmatprep.subr.mxu0 %v9214
    %9656 = vmatpush1.msra.mxu0 %v9213
    %9657 = vmatprep.subr.mxu0 %v9225
    %9658 = vmatpush1.msra.mxu0 %v9224
    %9659 = vmatprep.subr.mxu0 %v9236
    %9660 = vmatpush1.msra.mxu0 %v9235
    %9661 = vmatprep.mubr.f32.mxu0 %v9308
    %9662 = vmatmul.mubr.f32.gmra.mrb[0].mxu0 %v9300
    %v9663 = vpop.f32.mrb[0].mxu0
    %v9664 = vadd.f32 %v9290, %v9663
    %v9665 = vpop.f32.mrb[0].mxu0
    %v9666 = vadd.f32 %v9290, %v9665
    %9667 = vdwg.mxu0
    %9668 = vmatprep.subr.mxu0 %v9247
    %9669 = vmatpush1.msra.mxu0 %v9246
    %9670 = vmatprep.subr.mxu0 %v9258
    %9671 = vmatpush1.msra.mxu0 %v9257
    %9672 = vmatprep.subr.mxu0 %v9269
    %9673 = vmatpush1.msra.mxu0 %v9268
    %9674 = vmatprep.subr.mxu0 %v9280
    %9675 = vmatpush1.msra.mxu0 %v9279
    %9676 = vmatprep.subr.mxu0 0.0
    %9677 = vmatpush1.msra.mxu0 0.0
    %9678 = vmatprep.subr.mxu0 0.0
    %9679 = vmatpush1.msra.mxu0 0.0
    %9680 = vmatprep.subr.mxu0 0.0
    %9681 = vmatpush1.msra.mxu0 0.0
    %9682 = vmatprep.subr.mxu0 0.0
    %9683 = vmatpush1.msra.mxu0 0.0
    %9684 = vmatprep.subr.mxu0 0.0
    %9685 = vmatpush1.msra.mxu0 0.0
    %9686 = vmatprep.subr.mxu0 0.0
    %9687 = vmatpush1.msra.mxu0 0.0
    %9688 = vmatprep.subr.mxu0 0.0
    %9689 = vmatpush1.msra.mxu0 0.0
    %9690 = vmatprep.subr.mxu0 0.0
    %9691 = vmatpush1.msra.mxu0 0.0
    %9692 = vmatprep.subr.mxu0 0.0
    %9693 = vmatpush1.msra.mxu0 0.0
    %9694 = vmatprep.subr.mxu0 0.0
    %9695 = vmatpush1.msra.mxu0 0.0
    %9696 = vmatprep.subr.mxu0 0.0
    %9697 = vmatpush1.msra.mxu0 0.0
    %9698 = vmatprep.subr.mxu0 0.0
    %9699 = vmatpush1.msra.mxu0 0.0
    %9700 = vmatprep.subr.mxu0 0.0
    %9701 = vmatpush1.msra.mxu0 0.0
    %9702 = vmatprep.subr.mxu0 0.0
    %9703 = vmatpush1.msra.mxu0 0.0
    %9704 = vmatprep.subr.mxu0 0.0
    %9705 = vmatpush1.msra.mxu0 0.0
    %9706 = vmatprep.subr.mxu0 0.0
    %9707 = vmatpush1.msra.mxu0 0.0
    %9708 = vmatprep.subr.mxu0 0.0
    %9709 = vmatpush1.msra.mxu0 0.0
    %9710 = vmatprep.subr.mxu0 0.0
    %9711 = vmatpush1.msra.mxu0 0.0
    %9712 = vmatprep.subr.mxu0 0.0
    %9713 = vmatpush1.msra.mxu0 0.0
    %9714 = vmatprep.subr.mxu0 0.0
    %9715 = vmatpush1.msra.mxu0 0.0
    %9716 = vmatprep.subr.mxu0 0.0
    %9717 = vmatpush1.msra.mxu0 0.0
    %9718 = vmatprep.subr.mxu0 0.0
    %9719 = vmatpush1.msra.mxu0 0.0
    %9720 = vmatprep.subr.mxu0 0.0
    %9721 = vmatpush1.msra.mxu0 0.0
    %9722 = vmatprep.subr.mxu0 0.0
    %9723 = vmatpush1.msra.mxu0 0.0
    %9724 = vmatprep.subr.mxu0 0.0
    %9725 = vmatpush1.msra.mxu0 0.0
    %9726 = vmatprep.subr.mxu0 0.0
    %9727 = vmatpush1.msra.mxu0 0.0
    %9728 = vmatprep.subr.mxu0 0.0
    %9729 = vmatpush1.msra.mxu0 0.0
    %9730 = vmatprep.subr.mxu0 0.0
    %9731 = vmatpush1.msra.mxu0 0.0
    %9732 = vmatprep.mubr.f32.mxu0 0.0
    %9733 = vmatmul.mubr.f32.gmra.mrb[0].mxu0 %v9311
    %v9734 = vpop.f32.mrb[0].mxu0
    %v9735 = vadd.f32 %v9664, %v9734
    %v9736 = vpop.f32.mrb[0].mxu0
    %v9737 = vadd.f32 %v9666, %v9736
    %9738 = vdwg.mxu0
    %9739 = vmatprep.subr.mxu0 %v8897
    %9740 = vmatpush1.msra.mxu0 %v8896
    %9741 = vmatprep.subr.mxu0 %v8908
    %9742 = vmatpush1.msra.mxu0 %v8907
    %9743 = vmatprep.subr.mxu0 %v8919
    %9744 = vmatpush1.msra.mxu0 %v8918
    %9745 = vmatprep.subr.mxu0 %v8930
    %9746 = vmatpush1.msra.mxu0 %v8929
    %9747 = vmatprep.subr.mxu0 %v8941
    %9748 = vmatpush1.msra.mxu0 %v8940
    %9749 = vmatprep.subr.mxu0 %v8952
    %9750 = vmatpush1.msra.mxu0 %v8951
    %9751 = vmatprep.subr.mxu0 %v8963
    %9752 = vmatpush1.msra.mxu0 %v8962
    %9753 = vmatprep.subr.mxu0 %v8974
    %9754 = vmatpush1.msra.mxu0 %v8973
    %9755 = vmatprep.subr.mxu0 %v8985
    %9756 = vmatpush1.msra.mxu0 %v8984
    %9757 = vmatprep.subr.mxu0 %v8996
    %9758 = vmatpush1.msra.mxu0 %v8995
    %9759 = vmatprep.subr.mxu0 %v9007
    %9760 = vmatpush1.msra.mxu0 %v9006
    %9761 = vmatprep.subr.mxu0 %v9018
    %9762 = vmatpush1.msra.mxu0 %v9017
    %9763 = vmatprep.subr.mxu0 %v9029
    %9764 = vmatpush1.msra.mxu0 %v9028
    %9765 = vmatprep.subr.mxu0 %v9040
    %9766 = vmatpush1.msra.mxu0 %v9039
    %9767 = vmatprep.subr.mxu0 %v9051
    %9768 = vmatpush1.msra.mxu0 %v9050
    %9769 = vmatprep.subr.mxu0 %v9062
    %9770 = vmatpush1.msra.mxu0 %v9061
    %9771 = vmatprep.subr.mxu0 %v9073
    %9772 = vmatpush1.msra.mxu0 %v9072
    %9773 = vmatprep.subr.mxu0 %v9084
    %9774 = vmatpush1.msra.mxu0 %v9083
    %9775 = vmatprep.subr.mxu0 %v9095
    %9776 = vmatpush1.msra.mxu0 %v9094
    %9777 = vmatprep.subr.mxu0 %v9106
    %9778 = vmatpush1.msra.mxu0 %v9105
    %9779 = vmatprep.subr.mxu0 %v9117
    %9780 = vmatpush1.msra.mxu0 %v9116
    %9781 = vmatprep.subr.mxu0 %v9128
    %9782 = vmatpush1.msra.mxu0 %v9127
    %9783 = vmatprep.subr.mxu0 %v9139
    %9784 = vmatpush1.msra.mxu0 %v9138
    %9785 = vmatprep.subr.mxu0 %v9150
    %9786 = vmatpush1.msra.mxu0 %v9149
    %9787 = vmatprep.subr.mxu0 %v9161
    %9788 = vmatpush1.msra.mxu0 %v9160
    %9789 = vmatprep.subr.mxu0 %v9172
    %9790 = vmatpush1.msra.mxu0 %v9171
    %9791 = vmatprep.subr.mxu0 %v9183
    %9792 = vmatpush1.msra.mxu0 %v9182
    %9793 = vmatprep.subr.mxu0 %v9194
    %9794 = vmatpush1.msra.mxu0 %v9193
    %9795 = vmatprep.subr.mxu0 %v9205
    %9796 = vmatpush1.msra.mxu0 %v9204
    %9797 = vmatprep.subr.mxu0 %v9216
    %9798 = vmatpush1.msra.mxu0 %v9215
    %9799 = vmatprep.subr.mxu0 %v9227
    %9800 = vmatpush1.msra.mxu0 %v9226
    %9801 = vmatprep.subr.mxu0 %v9238
    %9802 = vmatpush1.msra.mxu0 %v9237
    %9803 = vmatprep.mubr.f32.mxu0 %v9308
    %9804 = vmatmul.mubr.f32.gmra.mrb[0].mxu0 %v9300
    %v9805 = vpop.f32.mrb[0].mxu0
    %v9806 = vadd.f32 %v9290, %v9805
    %v9807 = vpop.f32.mrb[0].mxu0
    %v9808 = vadd.f32 %v9290, %v9807
    %9809 = vdwg.mxu0
    %9810 = vmatprep.subr.mxu0 %v9249
    %9811 = vmatpush1.msra.mxu0 %v9248
    %9812 = vmatprep.subr.mxu0 %v9260
    %9813 = vmatpush1.msra.mxu0 %v9259
    %9814 = vmatprep.subr.mxu0 %v9271
    %9815 = vmatpush1.msra.mxu0 %v9270
    %9816 = vmatprep.subr.mxu0 %v9282
    %9817 = vmatpush1.msra.mxu0 %v9281
    %9818 = vmatprep.subr.mxu0 0.0
    %9819 = vmatpush1.msra.mxu0 0.0
    %9820 = vmatprep.subr.mxu0 0.0
    %9821 = vmatpush1.msra.mxu0 0.0
    %9822 = vmatprep.subr.mxu0 0.0
    %9823 = vmatpush1.msra.mxu0 0.0
    %9824 = vmatprep.subr.mxu0 0.0
    %9825 = vmatpush1.msra.mxu0 0.0
    %9826 = vmatprep.subr.mxu0 0.0
    %9827 = vmatpush1.msra.mxu0 0.0
    %9828 = vmatprep.subr.mxu0 0.0
    %9829 = vmatpush1.msra.mxu0 0.0
    %9830 = vmatprep.subr.mxu0 0.0
    %9831 = vmatpush1.msra.mxu0 0.0
    %9832 = vmatprep.subr.mxu0 0.0
    %9833 = vmatpush1.msra.mxu0 0.0
    %9834 = vmatprep.subr.mxu0 0.0
    %9835 = vmatpush1.msra.mxu0 0.0
    %9836 = vmatprep.subr.mxu0 0.0
    %9837 = vmatpush1.msra.mxu0 0.0
    %9838 = vmatprep.subr.mxu0 0.0
    %9839 = vmatpush1.msra.mxu0 0.0
    %9840 = vmatprep.subr.mxu0 0.0
    %9841 = vmatpush1.msra.mxu0 0.0
    %9842 = vmatprep.subr.mxu0 0.0
    %9843 = vmatpush1.msra.mxu0 0.0
    %9844 = vmatprep.subr.mxu0 0.0
    %9845 = vmatpush1.msra.mxu0 0.0
    %9846 = vmatprep.subr.mxu0 0.0
    %9847 = vmatpush1.msra.mxu0 0.0
    %9848 = vmatprep.subr.mxu0 0.0
    %9849 = vmatpush1.msra.mxu0 0.0
    %9850 = vmatprep.subr.mxu0 0.0
    %9851 = vmatpush1.msra.mxu0 0.0
    %9852 = vmatprep.subr.mxu0 0.0
    %9853 = vmatpush1.msra.mxu0 0.0
    %9854 = vmatprep.subr.mxu0 0.0
    %9855 = vmatpush1.msra.mxu0 0.0
    %9856 = vmatprep.subr.mxu0 0.0
    %9857 = vmatpush1.msra.mxu0 0.0
    %9858 = vmatprep.subr.mxu0 0.0
    %9859 = vmatpush1.msra.mxu0 0.0
    %9860 = vmatprep.subr.mxu0 0.0
    %9861 = vmatpush1.msra.mxu0 0.0
    %9862 = vmatprep.subr.mxu0 0.0
    %9863 = vmatpush1.msra.mxu0 0.0
    %9864 = vmatprep.subr.mxu0 0.0
    %9865 = vmatpush1.msra.mxu0 0.0
    %9866 = vmatprep.subr.mxu0 0.0
    %9867 = vmatpush1.msra.mxu0 0.0
    %9868 = vmatprep.subr.mxu0 0.0
    %9869 = vmatpush1.msra.mxu0 0.0
    %9870 = vmatprep.subr.mxu0 0.0
    %9871 = vmatpush1.msra.mxu0 0.0
    %9872 = vmatprep.subr.mxu0 0.0
    %9873 = vmatpush1.msra.mxu0 0.0
    %9874 = vmatprep.mubr.f32.mxu0 0.0
    %9875 = vmatmul.mubr.f32.gmra.mrb[0].mxu0 %v9311
    %v9876 = vpop.f32.mrb[0].mxu0
    %v9877 = vadd.f32 %v9806, %v9876
    %v9878 = vpop.f32.mrb[0].mxu0
    %v9879 = vadd.f32 %v9808, %v9878
    %9880 = vdwg.mxu0
    %9881 = vmatprep.subr.mxu0 %v8899
    %9882 = vmatpush1.msra.mxu0 %v8898
    %9883 = vmatprep.subr.mxu0 %v8910
    %9884 = vmatpush1.msra.mxu0 %v8909
    %9885 = vmatprep.subr.mxu0 %v8921
    %9886 = vmatpush1.msra.mxu0 %v8920
    %9887 = vmatprep.subr.mxu0 %v8932
    %9888 = vmatpush1.msra.mxu0 %v8931
    %9889 = vmatprep.subr.mxu0 %v8943
    %9890 = vmatpush1.msra.mxu0 %v8942
    %9891 = vmatprep.subr.mxu0 %v8954
    %9892 = vmatpush1.msra.mxu0 %v8953
    %9893 = vmatprep.subr.mxu0 %v8965
    %9894 = vmatpush1.msra.mxu0 %v8964
    %9895 = vmatprep.subr.mxu0 %v8976
    %9896 = vmatpush1.msra.mxu0 %v8975
    %9897 = vmatprep.subr.mxu0 %v8987
    %9898 = vmatpush1.msra.mxu0 %v8986
    %9899 = vmatprep.subr.mxu0 %v8998
    %9900 = vmatpush1.msra.mxu0 %v8997
    %9901 = vmatprep.subr.mxu0 %v9009
    %9902 = vmatpush1.msra.mxu0 %v9008
    %9903 = vmatprep.subr.mxu0 %v9020
    %9904 = vmatpush1.msra.mxu0 %v9019
    %9905 = vmatprep.subr.mxu0 %v9031
    %9906 = vmatpush1.msra.mxu0 %v9030
    %9907 = vmatprep.subr.mxu0 %v9042
    %9908 = vmatpush1.msra.mxu0 %v9041
    %9909 = vmatprep.subr.mxu0 %v9053
    %9910 = vmatpush1.msra.mxu0 %v9052
    %9911 = vmatprep.subr.mxu0 %v9064
    %9912 = vmatpush1.msra.mxu0 %v9063
    %9913 = vmatprep.subr.mxu0 %v9075
    %9914 = vmatpush1.msra.mxu0 %v9074
    %9915 = vmatprep.subr.mxu0 %v9086
    %9916 = vmatpush1.msra.mxu0 %v9085
    %9917 = vmatprep.subr.mxu0 %v9097
    %9918 = vmatpush1.msra.mxu0 %v9096
    %9919 = vmatprep.subr.mxu0 %v9108
    %9920 = vmatpush1.msra.mxu0 %v9107
    %9921 = vmatprep.subr.mxu0 %v9119
    %9922 = vmatpush1.msra.mxu0 %v9118
    %9923 = vmatprep.subr.mxu0 %v9130
    %9924 = vmatpush1.msra.mxu0 %v9129
    %9925 = vmatprep.subr.mxu0 %v9141
    %9926 = vmatpush1.msra.mxu0 %v9140
    %9927 = vmatprep.subr.mxu0 %v9152
    %9928 = vmatpush1.msra.mxu0 %v9151
    %9929 = vmatprep.subr.mxu0 %v9163
    %9930 = vmatpush1.msra.mxu0 %v9162
    %9931 = vmatprep.subr.mxu0 %v9174
    %9932 = vmatpush1.msra.mxu0 %v9173
    %9933 = vmatprep.subr.mxu0 %v9185
    %9934 = vmatpush1.msra.mxu0 %v9184
    %9935 = vmatprep.subr.mxu0 %v9196
    %9936 = vmatpush1.msra.mxu0 %v9195
    %9937 = vmatprep.subr.mxu0 %v9207
    %9938 = vmatpush1.msra.mxu0 %v9206
    %9939 = vmatprep.subr.mxu0 %v9218
    %9940 = vmatpush1.msra.mxu0 %v9217
    %9941 = vmatprep.subr.mxu0 %v9229
    %9942 = vmatpush1.msra.mxu0 %v9228
    %9943 = vmatprep.subr.mxu0 %v9240
    %9944 = vmatpush1.msra.mxu0 %v9239
    %9945 = vmatprep.mubr.f32.mxu0 %v9308
    %9946 = vmatmul.mubr.f32.gmra.mrb[0].mxu0 %v9300
    %v9947 = vpop.f32.mrb[0].mxu0
    %v9948 = vadd.f32 %v9290, %v9947
    %v9949 = vpop.f32.mrb[0].mxu0
    %v9950 = vadd.f32 %v9290, %v9949
    %9951 = vdwg.mxu0
    %9952 = vmatprep.subr.mxu0 %v9251
    %9953 = vmatpush1.msra.mxu0 %v9250
    %9954 = vmatprep.subr.mxu0 %v9262
    %9955 = vmatpush1.msra.mxu0 %v9261
    %9956 = vmatprep.subr.mxu0 %v9273
    %9957 = vmatpush1.msra.mxu0 %v9272
    %9958 = vmatprep.subr.mxu0 %v9284
    %9959 = vmatpush1.msra.mxu0 %v9283
    %9960 = vmatprep.subr.mxu0 0.0
    %9961 = vmatpush1.msra.mxu0 0.0
    %9962 = vmatprep.subr.mxu0 0.0
    %9963 = vmatpush1.msra.mxu0 0.0
    %9964 = vmatprep.subr.mxu0 0.0
    %9965 = vmatpush1.msra.mxu0 0.0
    %9966 = vmatprep.subr.mxu0 0.0
    %9967 = vmatpush1.msra.mxu0 0.0
    %9968 = vmatprep.subr.mxu0 0.0
    %9969 = vmatpush1.msra.mxu0 0.0
    %9970 = vmatprep.subr.mxu0 0.0
    %9971 = vmatpush1.msra.mxu0 0.0
    %9972 = vmatprep.subr.mxu0 0.0
    %9973 = vmatpush1.msra.mxu0 0.0
    %9974 = vmatprep.subr.mxu0 0.0
    %9975 = vmatpush1.msra.mxu0 0.0
    %9976 = vmatprep.subr.mxu0 0.0
    %9977 = vmatpush1.msra.mxu0 0.0
    %9978 = vmatprep.subr.mxu0 0.0
    %9979 = vmatpush1.msra.mxu0 0.0
    %9980 = vmatprep.subr.mxu0 0.0
    %9981 = vmatpush1.msra.mxu0 0.0
    %9982 = vmatprep.subr.mxu0 0.0
    %9983 = vmatpush1.msra.mxu0 0.0
    %9984 = vmatprep.subr.mxu0 0.0
    %9985 = vmatpush1.msra.mxu0 0.0
    %9986 = vmatprep.subr.mxu0 0.0
    %9987 = vmatpush1.msra.mxu0 0.0
    %9988 = vmatprep.subr.mxu0 0.0
    %9989 = vmatpush1.msra.mxu0 0.0
    %9990 = vmatprep.subr.mxu0 0.0
    %9991 = vmatpush1.msra.mxu0 0.0
    %9992 = vmatprep.subr.mxu0 0.0
    %9993 = vmatpush1.msra.mxu0 0.0
    %9994 = vmatprep.subr.mxu0 0.0
    %9995 = vmatpush1.msra.mxu0 0.0
    %9996 = vmatprep.subr.mxu0 0.0
    %9997 = vmatpush1.msra.mxu0 0.0
    %9998 = vmatprep.subr.mxu0 0.0
    %9999 = vmatpush1.msra.mxu0 0.0
    %10000 = vmatprep.subr.mxu0 0.0
    %10001 = vmatpush1.msra.mxu0 0.0
    %10002 = vmatprep.subr.mxu0 0.0
    %10003 = vmatpush1.msra.mxu0 0.0
    %10004 = vmatprep.subr.mxu0 0.0
    %10005 = vmatpush1.msra.mxu0 0.0
    %10006 = vmatprep.subr.mxu0 0.0
    %10007 = vmatpush1.msra.mxu0 0.0
    %10008 = vmatprep.subr.mxu0 0.0
    %10009 = vmatpush1.msra.mxu0 0.0
    %10010 = vmatprep.subr.mxu0 0.0
    %10011 = vmatpush1.msra.mxu0 0.0
    %10012 = vmatprep.subr.mxu0 0.0
    %10013 = vmatpush1.msra.mxu0 0.0
    %10014 = vmatprep.subr.mxu0 0.0
    %10015 = vmatpush1.msra.mxu0 0.0
    %10016 = vmatprep.mubr.f32.mxu0 0.0
    %10017 = vmatmul.mubr.f32.gmra.mrb[0].mxu0 %v9311
    %v10018 = vpop.f32.mrb[0].mxu0
    %v10019 = vadd.f32 %v9948, %v10018
    %v10020 = vpop.f32.mrb[0].mxu0
    %v10021 = vadd.f32 %v9950, %v10020
    %10022 = vdwg.mxu0
    %10023 = vmatprep.subr.mxu0 0.0
    %10024 = vmatpush1.msra.mxu0 %v8900
    %10025 = vmatprep.subr.mxu0 0.0
    %10026 = vmatpush1.msra.mxu0 %v8911
    %10027 = vmatprep.subr.mxu0 0.0
    %10028 = vmatpush1.msra.mxu0 %v8922
    %10029 = vmatprep.subr.mxu0 0.0
    %10030 = vmatpush1.msra.mxu0 %v8933
    %10031 = vmatprep.subr.mxu0 0.0
    %10032 = vmatpush1.msra.mxu0 %v8944
    %10033 = vmatprep.subr.mxu0 0.0
    %10034 = vmatpush1.msra.mxu0 %v8955
    %10035 = vmatprep.subr.mxu0 0.0
    %10036 = vmatpush1.msra.mxu0 %v8966
    %10037 = vmatprep.subr.mxu0 0.0
    %10038 = vmatpush1.msra.mxu0 %v8977
    %10039 = vmatprep.subr.mxu0 0.0
    %10040 = vmatpush1.msra.mxu0 %v8988
    %10041 = vmatprep.subr.mxu0 0.0
    %10042 = vmatpush1.msra.mxu0 %v8999
    %10043 = vmatprep.subr.mxu0 0.0
    %10044 = vmatpush1.msra.mxu0 %v9010
    %10045 = vmatprep.subr.mxu0 0.0
    %10046 = vmatpush1.msra.mxu0 %v9021
    %10047 = vmatprep.subr.mxu0 0.0
    %10048 = vmatpush1.msra.mxu0 %v9032
    %10049 = vmatprep.subr.mxu0 0.0
    %10050 = vmatpush1.msra.mxu0 %v9043
    %10051 = vmatprep.subr.mxu0 0.0
    %10052 = vmatpush1.msra.mxu0 %v9054
    %10053 = vmatprep.subr.mxu0 0.0
    %10054 = vmatpush1.msra.mxu0 %v9065
    %10055 = vmatprep.subr.mxu0 0.0
    %10056 = vmatpush1.msra.mxu0 %v9076
    %10057 = vmatprep.subr.mxu0 0.0
    %10058 = vmatpush1.msra.mxu0 %v9087
    %10059 = vmatprep.subr.mxu0 0.0
    %10060 = vmatpush1.msra.mxu0 %v9098
    %10061 = vmatprep.subr.mxu0 0.0
    %10062 = vmatpush1.msra.mxu0 %v9109
    %10063 = vmatprep.subr.mxu0 0.0
    %10064 = vmatpush1.msra.mxu0 %v9120
    %10065 = vmatprep.subr.mxu0 0.0
    %10066 = vmatpush1.msra.mxu0 %v9131
    %10067 = vmatprep.subr.mxu0 0.0
    %10068 = vmatpush1.msra.mxu0 %v9142
    %10069 = vmatprep.subr.mxu0 0.0
    %10070 = vmatpush1.msra.mxu0 %v9153
    %10071 = vmatprep.subr.mxu0 0.0
    %10072 = vmatpush1.msra.mxu0 %v9164
    %10073 = vmatprep.subr.mxu0 0.0
    %10074 = vmatpush1.msra.mxu0 %v9175
    %10075 = vmatprep.subr.mxu0 0.0
    %10076 = vmatpush1.msra.mxu0 %v9186
    %10077 = vmatprep.subr.mxu0 0.0
    %10078 = vmatpush1.msra.mxu0 %v9197
    %10079 = vmatprep.subr.mxu0 0.0
    %10080 = vmatpush1.msra.mxu0 %v9208
    %10081 = vmatprep.subr.mxu0 0.0
    %10082 = vmatpush1.msra.mxu0 %v9219
    %10083 = vmatprep.subr.mxu0 0.0
    %10084 = vmatpush1.msra.mxu0 %v9230
    %10085 = vmatprep.subr.mxu0 0.0
    %10086 = vmatpush1.msra.mxu0 %v9241
    %10087 = vmatprep.mubr.f32.mxu0 %v9308
    %10088 = vmatmul.mubr.f32.gmra.mrb[0].mxu0 %v9300
    %v10089 = vpop.f32.mrb[0].mxu0
    %v10090 = vadd.f32 %v9290, %v10089
    %v10091 = vpop.f32.mrb[0].mxu0
    %10092 = vdwg.mxu0
    %10093 = vmatprep.subr.mxu0 0.0
    %10094 = vmatpush1.msra.mxu0 %v9252
    %10095 = vmatprep.subr.mxu0 0.0
    %10096 = vmatpush1.msra.mxu0 %v9263
    %10097 = vmatprep.subr.mxu0 0.0
    %10098 = vmatpush1.msra.mxu0 %v9274
    %10099 = vmatprep.subr.mxu0 0.0
    %10100 = vmatpush1.msra.mxu0 %v9285
    %10101 = vmatprep.subr.mxu0 0.0
    %10102 = vmatpush1.msra.mxu0 0.0
    %10103 = vmatprep.subr.mxu0 0.0
    %10104 = vmatpush1.msra.mxu0 0.0
    %10105 = vmatprep.subr.mxu0 0.0
    %10106 = vmatpush1.msra.mxu0 0.0
    %10107 = vmatprep.subr.mxu0 0.0
    %10108 = vmatpush1.msra.mxu0 0.0
    %10109 = vmatprep.subr.mxu0 0.0
    %10110 = vmatpush1.msra.mxu0 0.0
    %10111 = vmatprep.subr.mxu0 0.0
    %10112 = vmatpush1.msra.mxu0 0.0
    %10113 = vmatprep.subr.mxu0 0.0
    %10114 = vmatpush1.msra.mxu0 0.0
    %10115 = vmatprep.subr.mxu0 0.0
    %10116 = vmatpush1.msra.mxu0 0.0
    %10117 = vmatprep.subr.mxu0 0.0
    %10118 = vmatpush1.msra.mxu0 0.0
    %10119 = vmatprep.subr.mxu0 0.0
    %10120 = vmatpush1.msra.mxu0 0.0
    %10121 = vmatprep.subr.mxu0 0.0
    %10122 = vmatpush1.msra.mxu0 0.0
    %10123 = vmatprep.subr.mxu0 0.0
    %10124 = vmatpush1.msra.mxu0 0.0
    %10125 = vmatprep.subr.mxu0 0.0
    %10126 = vmatpush1.msra.mxu0 0.0
    %10127 = vmatprep.subr.mxu0 0.0
    %10128 = vmatpush1.msra.mxu0 0.0
    %10129 = vmatprep.subr.mxu0 0.0
    %10130 = vmatpush1.msra.mxu0 0.0
    %10131 = vmatprep.subr.mxu0 0.0
    %10132 = vmatpush1.msra.mxu0 0.0
    %10133 = vmatprep.subr.mxu0 0.0
    %10134 = vmatpush1.msra.mxu0 0.0
    %10135 = vmatprep.subr.mxu0 0.0
    %10136 = vmatpush1.msra.mxu0 0.0
    %10137 = vmatprep.subr.mxu0 0.0
    %10138 = vmatpush1.msra.mxu0 0.0
    %10139 = vmatprep.subr.mxu0 0.0
    %10140 = vmatpush1.msra.mxu0 0.0
    %10141 = vmatprep.subr.mxu0 0.0
    %10142 = vmatpush1.msra.mxu0 0.0
    %10143 = vmatprep.subr.mxu0 0.0
    %10144 = vmatpush1.msra.mxu0 0.0
    %10145 = vmatprep.subr.mxu0 0.0
    %10146 = vmatpush1.msra.mxu0 0.0
    %10147 = vmatprep.subr.mxu0 0.0
    %10148 = vmatpush1.msra.mxu0 0.0
    %10149 = vmatprep.subr.mxu0 0.0
    %10150 = vmatpush1.msra.mxu0 0.0
    %10151 = vmatprep.subr.mxu0 0.0
    %10152 = vmatpush1.msra.mxu0 0.0
    %10153 = vmatprep.subr.mxu0 0.0
    %10154 = vmatpush1.msra.mxu0 0.0
    %10155 = vmatprep.subr.mxu0 0.0
    %10156 = vmatpush1.msra.mxu0 0.0
    %10157 = vmatprep.mubr.f32.mxu0 0.0
    %10158 = vmatmul.mubr.f32.gmra.mrb[0].mxu0 %v9311
    %v10159 = vpop.f32.mrb[0].mxu0
    %v10160 = vadd.f32 %v10090, %v10159
    %v10161 = vpop.f32.mrb[0].mxu0
    %10162 = vdwg.mxu0
    %v10163 = vld [vmem:[%s2] sm:$0xff]
    %v10164 = vld [vmem:[%s2 + $0x8] sm:$0x7]
    %v10167 = vlaneseq
    %v10168 = vshrl.u32 %v10167, 7
    %v10169 = vsub.s32 0, %v10168
    %v10170 = vrot.slane %v10163, %v10169
    %v10171 = vlaneseq
    %v10172 = vshrl.u32 %v10171, 7
    %v10173 = vsub.s32 1, %v10172
    %v10174 = vrot.slane %v10163, %v10173
    %v10175 = vlaneseq
    %v10176 = vshrl.u32 %v10175, 7
    %v10177 = vsub.s32 2, %v10176
    %v10178 = vrot.slane %v10163, %v10177
    %v10179 = vlaneseq
    %v10180 = vshrl.u32 %v10179, 7
    %v10181 = vsub.s32 3, %v10180
    %v10182 = vrot.slane %v10163, %v10181
    %v10183 = vlaneseq
    %v10184 = vshrl.u32 %v10183, 7
    %v10185 = vsub.s32 4, %v10184
    %v10186 = vrot.slane %v10163, %v10185
    %v10187 = vlaneseq
    %v10188 = vshrl.u32 %v10187, 7
    %v10189 = vsub.s32 5, %v10188
    %v10190 = vrot.slane %v10163, %v10189
    %v10191 = vlaneseq
    %v10192 = vshrl.u32 %v10191, 7
    %v10193 = vsub.s32 6, %v10192
    %v10194 = vrot.slane %v10163, %v10193
    %v10195 = vlaneseq
    %v10196 = vshrl.u32 %v10195, 7
    %v10197 = vsub.s32 7, %v10196
    %v10198 = vrot.slane %v10163, %v10197
    %v10199 = vlaneseq
    %v10200 = vshrl.u32 %v10199, 7
    %v10201 = vsub.s32 0, %v10200
    %v10202 = vrot.slane %v10164, %v10201
    %v10203 = vlaneseq
    %v10204 = vshrl.u32 %v10203, 7
    %v10205 = vsub.s32 1, %v10204
    %v10206 = vrot.slane %v10164, %v10205
    %v10207 = vlaneseq
    %v10208 = vshrl.u32 %v10207, 7
    %v10209 = vsub.s32 2, %v10208
    %v10210 = vrot.slane %v10164, %v10209
    %v10222 = vmul.f32 %v9451, %v10170
    %v10223 = vmul.f32 %v9453, %v10174
    %v10224 = vmul.f32 %v9593, %v10178
    %v10225 = vmul.f32 %v9595, %v10182
    %v10226 = vmul.f32 %v9735, %v10186
    %v10227 = vmul.f32 %v9737, %v10190
    %v10228 = vmul.f32 %v9877, %v10194
    %v10229 = vmul.f32 %v9879, %v10198
    %v10230 = vmul.f32 %v10019, %v10202
    %v10231 = vmul.f32 %v10021, %v10206
    %v10232 = vmul.f32 %v10160, %v10210
    %v10244 = vcombine.low %v10222, %v10223
    %v10245 = vcombine.low %v10224, %v10225
    %v10247 = vunpack.c.l.s4 1983009808
    %v10248 = vunpack.c.0.s8 %v10247
    %v10249 = vlaneseq
    %v10250 = vshrl.u32 %v10249, 7
    %v10251 = vsub.s32 %v10248, %v10250
    %v10252 = vrot.slane %v10244, %v10251
    %v10254 = vunpack.c.l.s4 1983009808
    %v10255 = vunpack.c.0.s8 %v10254
    %v10256 = vlaneseq
    %v10257 = vshrl.u32 %v10256, 7
    %v10258 = vsub.s32 %v10255, %v10257
    %v10259 = vrot.slane %v10245, %v10258
    %v10260 = vcombine.low %v10252, %v10259
    %v10261 = vcombine.low %v10226, %v10227
    %v10262 = vcombine.low %v10228, %v10229
    %v10264 = vunpack.c.l.s4 1983009808
    %v10265 = vunpack.c.0.s8 %v10264
    %v10266 = vlaneseq
    %v10267 = vshrl.u32 %v10266, 7
    %v10268 = vsub.s32 %v10265, %v10267
    %v10269 = vrot.slane %v10261, %v10268
    %v10271 = vunpack.c.l.s4 1983009808
    %v10272 = vunpack.c.0.s8 %v10271
    %v10273 = vlaneseq
    %v10274 = vshrl.u32 %v10273, 7
    %v10275 = vsub.s32 %v10272, %v10274
    %v10276 = vrot.slane %v10262, %v10275
    %v10277 = vcombine.low %v10269, %v10276
    %v10278 = vcombine.low %v10230, %v10231
    %v10280 = vunpack.c.l.s4 1983009808
    %v10281 = vunpack.c.0.s8 %v10280
    %v10282 = vlaneseq
    %v10283 = vshrl.u32 %v10282, 7
    %v10284 = vsub.s32 %v10281, %v10283
    %v10285 = vrot.slane %v10278, %v10284
    %v10287 = vunpack.c.l.s4 1983009808
    %v10288 = vunpack.c.0.s8 %v10287
    %v10289 = vlaneseq
    %v10290 = vshrl.u32 %v10289, 7
    %v10291 = vsub.s32 %v10288, %v10290
    %v10292 = vrot.slane %v10232, %v10291
    %v10293 = vcombine.low %v10285, %v10292
    %10297 = vst [vmem:[%s10] sm:$0xff] %v10260
    %10298 = vst [vmem:[%s10 + $0x8] sm:$0xff] %v10277
    %10299 = vst [vmem:[%s10 + $0x10] sm:$0x3f] %v10293
    // Predicated region
    $region46: #{forward.1} parent=1 // pred_check
      _
    $region47: #{forward.1} parent=1 // pred_check_branch
      %10301 = sbr.rel (0) target = $region49
    $region48: #{forward.1} parent=1 // pred_region
      _
    $region49: #{forward.1} parent=1 // pred_fallthru
      _
    // Predicated region
    $region50: #{forward.1} parent=1 // pred_check
      _
    $region51: #{forward.1} parent=1 // pred_check_branch
      %10303 = sbr.rel (0) target = $region53
    $region52: #{forward.1} parent=1 // pred_region
      _
    $region53: #{forward.1} parent=1 // pred_fallthru
      _
    %10304 = vsyncpa [#allocation5], 1

</llo_original>
